<compile_context>
chip_gen: v5e
topology: v5e:2x2
jax: 0.10.0
libtpu: 0.0.40
codegen_flags: <defaults>
</compile_context>

<pallas_src>
import jax
import jax.numpy as jnp
import numpy as np
from jax.experimental import pallas as pl
from jax.experimental.pallas import tpu as pltpu

H_IN = 32              # input spatial size  => conv1 output is 16x16
S = 16                 # conv1 output spatial == conv2 spatial == conv2 in-channels
C1_IN, C1_OUT = 3, 16
C2_IN, C2_OUT = 16, 3
K1 = C1_IN * 9         # 27
K1P = 32               # K padded to a lane/sublane friendly size
K2 = C2_IN * 9         # 144


def _make_fused_kernel(n_batch):
    G = n_batch * S    # number of (n, j) row groups

    def kernel(a1_ref, w1_ref, b1_ref, w2_ref, b2_ref, out_ref,
               tmp_ref, v1t_ref, pat_ref):
        # ---- conv1: single MXU matmul over the K-padded im2col, + bias -----
        # tmp[(n*S + j)*S + i, c] = v1[n, c, i, j]
        tmp_ref[...] = (
            jnp.dot(a1_ref[...], w1_ref[...],
                    preferred_element_type=jnp.float32)
            + b1_ref[...]
        )

        # ---- permute(0,2,3,1): regroup rows into v1t[g=(n,j), c, i] --------
        for g in range(G):
            v1t_ref[g] = tmp_ref[g * S:(g + 1) * S, :].T

        # ---- conv2 im2col built entirely in VMEM (zero-padded borders) -----
        # pat[g=(n,s), t, (p*3+q)*16 + f] = v2pad[n, f, s+p-1, t+q-1]
        pat_ref[...] = jnp.zeros_like(pat_ref)
        for p in range(3):
            for q in range(3):
                dh, dw = p - 1, q - 1
                s_lo, s_hi = max(0, -dh), S - max(0, dh)
                t_lo, t_hi = max(0, -dw), S - max(0, dw)
                kb = (p * 3 + q) * C2_IN
                for n in range(n_batch):
                    pat_ref[n * S + s_lo:n * S + s_hi,
                            t_lo:t_hi,
                            kb:kb + C2_IN] = (
                        v1t_ref[n * S + s_lo + dh:n * S + s_hi + dh,
                                t_lo + dw:t_hi + dw,
                                :])

        # ---- conv2: batched (3,144)@(16,144)^T matmuls on the MXU + bias ---
        out_ref[...] = b2_ref[...] + jnp.einsum(
            "gek,gtk->get", w2_ref[...], pat_ref[...],
            preferred_element_type=jnp.float32)

    return kernel


def model_forward(x, params):
    w1, b1, w2, b2 = params
    n = x.shape[0]
    assert x.shape[1] == C1_IN and x.shape[2] == x.shape[3] == H_IN
    G = n * S
    M = G * S

    # conv1 im2col (depends only on the input; one small XLA gather).
    xp = jnp.pad(x, ((0, 0), (0, 0), (1, 1), (1, 1)))
    cols = []
    for p in range(3):
        for q in range(3):
            cols.append(xp[:, :, p:p + H_IN:2, q:q + H_IN:2])    # (n,3,16,16)
    pat1 = jnp.stack(cols, axis=2)                 # (n, d, pq, i, j)
    pat1 = pat1.transpose(0, 4, 3, 1, 2)           # (n, j, i, d, pq)
    a1 = pat1.reshape(M, K1)
    a1 = jnp.pad(a1, ((0, 0), (0, K1P - K1))).astype(jnp.float32)

    # conv1 weights: (K1P, 16); row index = d*9 + p*3 + q (matches a1 columns).
    w1m = jnp.pad(w1.reshape(C1_OUT, K1).T,
                  ((0, K1P - K1), (0, 0))).astype(jnp.float32)
    b1r = b1.reshape(1, C1_OUT).astype(jnp.float32)

    # conv2 weights: (G, 3, 144), k = (p*3+q)*16 + f, replicated over g.
    w2m = jnp.transpose(w2, (0, 2, 3, 1)).reshape(C2_OUT, K2)
    w2b = jnp.broadcast_to(w2m[None], (G, C2_OUT, K2)).astype(jnp.float32)
    b2b = jnp.broadcast_to(b2[None, :, None], (G, C2_OUT, S)).astype(jnp.float32)

    kernel = _make_fused_kernel(n)
    out_k = pl.pallas_call(
        kernel,
        out_shape=jax.ShapeDtypeStruct((G, C2_OUT, S), jnp.float32),
        grid_spec=pltpu.PrefetchScalarGridSpec(
            num_scalar_prefetch=0,
            grid=(1,),
            in_specs=[
                pl.BlockSpec((M, K1P), lambda i: (0, 0)),
                pl.BlockSpec((K1P, C1_OUT), lambda i: (0, 0)),
                pl.BlockSpec((1, C1_OUT), lambda i: (0, 0)),
                pl.BlockSpec((G, C2_OUT, K2), lambda i: (0, 0, 0)),
                pl.BlockSpec((G, C2_OUT, S), lambda i: (0, 0, 0)),
            ],
            out_specs=pl.BlockSpec((G, C2_OUT, S), lambda i: (0, 0, 0)),
            scratch_shapes=[
                pltpu.VMEM((M, C1_OUT), jnp.float32),      # conv1 output (flat)
                pltpu.VMEM((G, C1_OUT, S), jnp.float32),   # permuted intermediate
                pltpu.VMEM((G, S, K2), jnp.float32),       # conv2 im2col patches
            ],
        ),
        compiler_params=pltpu.CompilerParams(
            dimension_semantics=("arbitrary",)),
    )(a1, w1m, b1r, w2b, b2b)

    # (g=(n,s), e, t) -> (n, e, s, t)
    return out_k.reshape(n, S, C2_OUT, S).transpose(0, 2, 1, 3)


def ref_forward(x, params):
    """Pure-JAX reference (lax conv) for correctness check."""
    w1, b1, w2, b2 = params

    def conv(z, w, b, stride, pad):
        y = jax.lax.conv_general_dilated(
            z, w, (stride, stride), ((pad, pad), (pad, pad)),
            dimension_numbers=("NCHW", "OIHW", "NCHW"))
        return y + b[None, :, None, None]

    v1 = conv(x, w1, b1, 2, 1)
    v2 = jnp.transpose(v1, (0, 2, 3, 1))
    return conv(v2, w2, b2, 1, 1)


if __name__ == "__main__":
    key = jax.random.PRNGKey(0)
    k_x, k_w1, k_b1, k_w2, k_b2 = jax.random.split(key, 5)

    # Input spatial 32 so conv1's output height == 16 == conv2.in_channels.
    x = jax.random.normal(k_x, (2, 3, 32, 32), dtype=jnp.float32)
    w1 = 0.1 * jax.random.normal(k_w1, (16, 3, 3, 3), dtype=jnp.float32)
    b1 = 0.1 * jax.random.normal(k_b1, (16,), dtype=jnp.float32)
    w2 = 0.1 * jax.random.normal(k_w2, (3, 16, 3, 3), dtype=jnp.float32)
    b2 = 0.1 * jax.random.normal(k_b2, (3,), dtype=jnp.float32)
    params = (w1, b1, w2, b2)

    fwd = jax.jit(model_forward)
    out = jax.block_until_ready(fwd(x, params))
    ref = jax.block_until_ready(ref_forward(x, params))

    assert out.shape == (2, 3, 16, 16), out.shape
    np.testing.assert_allclose(np.asarray(out), np.asarray(ref),
                               rtol=1e-3, atol=1e-3)

    print("KERNEL_OK")
</pallas_src>

<mosaic_0001>
module attributes {stable_mosaic.version = 11 : i64} {
  func.func @kernel(%arg0: i32, %arg1: memref<512x32xf32, #tpu.memory_space<vmem>>, %arg2: memref<32x16xf32, #tpu.memory_space<vmem>>, %arg3: memref<1x16xf32, #tpu.memory_space<vmem>>, %arg4: memref<32x3x144xf32, #tpu.memory_space<vmem>>, %arg5: memref<32x3x16xf32, #tpu.memory_space<vmem>>, %arg6: memref<32x3x16xf32, #tpu.memory_space<vmem>>, %arg7: memref<512x16xf32, #tpu.memory_space<vmem>>, %arg8: memref<32x16x16xf32, #tpu.memory_space<vmem>>, %arg9: memref<32x16x144xf32, #tpu.memory_space<vmem>>) attributes {dimension_semantics = [#tpu.dimension_semantics<arbitrary>], iteration_bounds = array<i64: 1>, scalar_prefetch = 0 : i64, scratch_operands = 3 : i64, tpu.core_type = #tpu.core_type<tc>, window_params = [{pipeline_mode = #tpu.pipeline_mode<synchronous>, transform_indices = @transform_0, window_bounds = array<i64: 512, 32>}, {pipeline_mode = #tpu.pipeline_mode<synchronous>, transform_indices = @transform_1, window_bounds = array<i64: 32, 16>}, {pipeline_mode = #tpu.pipeline_mode<synchronous>, transform_indices = @transform_2, window_bounds = array<i64: 1, 16>}, {pipeline_mode = #tpu.pipeline_mode<synchronous>, transform_indices = @transform_3, window_bounds = array<i64: 32, 3, 144>}, {pipeline_mode = #tpu.pipeline_mode<synchronous>, transform_indices = @transform_4, window_bounds = array<i64: 32, 3, 16>}, {pipeline_mode = #tpu.pipeline_mode<synchronous>, transform_indices = @transform_5, window_bounds = array<i64: 32, 3, 16>}]} {
    %c0 = arith.constant 0 : index
    %c0_0 = arith.constant 0 : index
    %0 = vector.load %arg1[%c0, %c0_0] : memref<512x32xf32, #tpu.memory_space<vmem>>, vector<512x32xf32>
    %c0_1 = arith.constant 0 : index
    %c0_2 = arith.constant 0 : index
    %1 = vector.load %arg2[%c0_1, %c0_2] : memref<32x16xf32, #tpu.memory_space<vmem>>, vector<32x16xf32>
    %cst = arith.constant dense<0.000000e+00> : vector<512x16xf32>
    %2 = tpu.matmul %0, %1, %cst {dimension_numbers = #tpu.dot_dimension_numbers<[1], [0], [0], [1], [0, 0, 1, 1], [], []>} : vector<512x32xf32>, vector<32x16xf32>, vector<512x16xf32> -> vector<512x16xf32>
    %c0_3 = arith.constant 0 : index
    %c0_4 = arith.constant 0 : index
    %3 = vector.load %arg3[%c0_3, %c0_4] : memref<1x16xf32, #tpu.memory_space<vmem>>, vector<1x16xf32>
    %4 = vector.broadcast %3 : vector<1x16xf32> to vector<512x16xf32>
    %5 = arith.addf %2, %4 : vector<512x16xf32>
    %c0_5 = arith.constant 0 : index
    %c0_6 = arith.constant 0 : index
    %6 = vector.load %arg7[%c0_5, %c0_6] : memref<512x16xf32, #tpu.memory_space<vmem>>, vector<512x16xf32>
    tpu.vector_store %arg7[%c0_5, %c0_6], %5 {strides = array<i32>} : memref<512x16xf32, #tpu.memory_space<vmem>>, vector<512x16xf32>,
    %c0_7 = arith.constant 0 : index
    %c0_8 = arith.constant 0 : index
    %7 = vector.load %arg7[%c0_7, %c0_8] : memref<512x16xf32, #tpu.memory_space<vmem>>, vector<16x16xf32>
    %8 = tpu.transpose %7, [1, 0] : vector<16x16xf32> -> vector<16x16xf32>
    %c0_9 = arith.constant 0 : index
    %c0_10 = arith.constant 0 : index
    %c0_11 = arith.constant 0 : index
    %9 = vector.load %arg8[%c0_9, %c0_10, %c0_11] : memref<32x16x16xf32, #tpu.memory_space<vmem>>, vector<1x16x16xf32>
    %10 = vector.shape_cast %9 : vector<1x16x16xf32> to vector<16x16xf32>
    %11 = vector.shape_cast %8 : vector<16x16xf32> to vector<1x16x16xf32>
    tpu.vector_store %arg8[%c0_9, %c0_10, %c0_11], %11 {strides = array<i32>} : memref<32x16x16xf32, #tpu.memory_space<vmem>>, vector<1x16x16xf32>,
    %c16 = arith.constant 16 : index
    %c0_12 = arith.constant 0 : index
    %12 = vector.load %arg7[%c16, %c0_12] : memref<512x16xf32, #tpu.memory_space<vmem>>, vector<16x16xf32>
    %13 = tpu.transpose %12, [1, 0] : vector<16x16xf32> -> vector<16x16xf32>
    %c1 = arith.constant 1 : index
    %c0_13 = arith.constant 0 : index
    %c0_14 = arith.constant 0 : index
    %14 = vector.load %arg8[%c1, %c0_13, %c0_14] : memref<32x16x16xf32, #tpu.memory_space<vmem>>, vector<1x16x16xf32>
    %15 = vector.shape_cast %14 : vector<1x16x16xf32> to vector<16x16xf32>
    %16 = vector.shape_cast %13 : vector<16x16xf32> to vector<1x16x16xf32>
    tpu.vector_store %arg8[%c1, %c0_13, %c0_14], %16 {strides = array<i32>} : memref<32x16x16xf32, #tpu.memory_space<vmem>>, vector<1x16x16xf32>,
    %c32 = arith.constant 32 : index
    %c0_15 = arith.constant 0 : index
    %17 = vector.load %arg7[%c32, %c0_15] : memref<512x16xf32, #tpu.memory_space<vmem>>, vector<16x16xf32>
    %18 = tpu.transpose %17, [1, 0] : vector<16x16xf32> -> vector<16x16xf32>
    %c2 = arith.constant 2 : index
    %c0_16 = arith.constant 0 : index
    %c0_17 = arith.constant 0 : index
    %19 = vector.load %arg8[%c2, %c0_16, %c0_17] : memref<32x16x16xf32, #tpu.memory_space<vmem>>, vector<1x16x16xf32>
    %20 = vector.shape_cast %19 : vector<1x16x16xf32> to vector<16x16xf32>
    %21 = vector.shape_cast %18 : vector<16x16xf32> to vector<1x16x16xf32>
    tpu.vector_store %arg8[%c2, %c0_16, %c0_17], %21 {strides = array<i32>} : memref<32x16x16xf32, #tpu.memory_space<vmem>>, vector<1x16x16xf32>,
    %c48 = arith.constant 48 : index
    %c0_18 = arith.constant 0 : index
    %22 = vector.load %arg7[%c48, %c0_18] : memref<512x16xf32, #tpu.memory_space<vmem>>, vector<16x16xf32>
    %23 = tpu.transpose %22, [1, 0] : vector<16x16xf32> -> vector<16x16xf32>
    %c3 = arith.constant 3 : index
    %c0_19 = arith.constant 0 : index
    %c0_20 = arith.constant 0 : index
    %24 = vector.load %arg8[%c3, %c0_19, %c0_20] : memref<32x16x16xf32, #tpu.memory_space<vmem>>, vector<1x16x16xf32>
    %25 = vector.shape_cast %24 : vector<1x16x16xf32> to vector<16x16xf32>
    %26 = vector.shape_cast %23 : vector<16x16xf32> to vector<1x16x16xf32>
    tpu.vector_store %arg8[%c3, %c0_19, %c0_20], %26 {strides = array<i32>} : memref<32x16x16xf32, #tpu.memory_space<vmem>>, vector<1x16x16xf32>,
    %c64 = arith.constant 64 : index
    %c0_21 = arith.constant 0 : index
    %27 = vector.load %arg7[%c64, %c0_21] : memref<512x16xf32, #tpu.memory_space<vmem>>, vector<16x16xf32>
    %28 = tpu.transpose %27, [1, 0] : vector<16x16xf32> -> vector<16x16xf32>
    %c4 = arith.constant 4 : index
    %c0_22 = arith.constant 0 : index
    %c0_23 = arith.constant 0 : index
    %29 = vector.load %arg8[%c4, %c0_22, %c0_23] : memref<32x16x16xf32, #tpu.memory_space<vmem>>, vector<1x16x16xf32>
    %30 = vector.shape_cast %29 : vector<1x16x16xf32> to vector<16x16xf32>
    %31 = vector.shape_cast %28 : vector<16x16xf32> to vector<1x16x16xf32>
    tpu.vector_store %arg8[%c4, %c0_22, %c0_23], %31 {strides = array<i32>} : memref<32x16x16xf32, #tpu.memory_space<vmem>>, vector<1x16x16xf32>,
    %c80 = arith.constant 80 : index
    %c0_24 = arith.constant 0 : index
    %32 = vector.load %arg7[%c80, %c0_24] : memref<512x16xf32, #tpu.memory_space<vmem>>, vector<16x16xf32>
    %33 = tpu.transpose %32, [1, 0] : vector<16x16xf32> -> vector<16x16xf32>
    %c5 = arith.constant 5 : index
    %c0_25 = arith.constant 0 : index
    %c0_26 = arith.constant 0 : index
    %34 = vector.load %arg8[%c5, %c0_25, %c0_26] : memref<32x16x16xf32, #tpu.memory_space<vmem>>, vector<1x16x16xf32>
    %35 = vector.shape_cast %34 : vector<1x16x16xf32> to vector<16x16xf32>
    %36 = vector.shape_cast %33 : vector<16x16xf32> to vector<1x16x16xf32>
    tpu.vector_store %arg8[%c5, %c0_25, %c0_26], %36 {strides = array<i32>} : memref<32x16x16xf32, #tpu.memory_space<vmem>>, vector<1x16x16xf32>,
    %c96 = arith.constant 96 : index
    %c0_27 = arith.constant 0 : index
    %37 = vector.load %arg7[%c96, %c0_27] : memref<512x16xf32, #tpu.memory_space<vmem>>, vector<16x16xf32>
    %38 = tpu.transpose %37, [1, 0] : vector<16x16xf32> -> vector<16x16xf32>
    %c6 = arith.constant 6 : index
    %c0_28 = arith.constant 0 : index
    %c0_29 = arith.constant 0 : index
    %39 = vector.load %arg8[%c6, %c0_28, %c0_29] : memref<32x16x16xf32, #tpu.memory_space<vmem>>, vector<1x16x16xf32>
    %40 = vector.shape_cast %39 : vector<1x16x16xf32> to vector<16x16xf32>
    %41 = vector.shape_cast %38 : vector<16x16xf32> to vector<1x16x16xf32>
    tpu.vector_store %arg8[%c6, %c0_28, %c0_29], %41 {strides = array<i32>} : memref<32x16x16xf32, #tpu.memory_space<vmem>>, vector<1x16x16xf32>,
    %c112 = arith.constant 112 : index
    %c0_30 = arith.constant 0 : index
    %42 = vector.load %arg7[%c112, %c0_30] : memref<512x16xf32, #tpu.memory_space<vmem>>, vector<16x16xf32>
    %43 = tpu.transpose %42, [1, 0] : vector<16x16xf32> -> vector<16x16xf32>
    %c7 = arith.constant 7 : index
    %c0_31 = arith.constant 0 : index
    %c0_32 = arith.constant 0 : index
    %44 = vector.load %arg8[%c7, %c0_31, %c0_32] : memref<32x16x16xf32, #tpu.memory_space<vmem>>, vector<1x16x16xf32>
    %45 = vector.shape_cast %44 : vector<1x16x16xf32> to vector<16x16xf32>
    %46 = vector.shape_cast %43 : vector<16x16xf32> to vector<1x16x16xf32>
    tpu.vector_store %arg8[%c7, %c0_31, %c0_32], %46 {strides = array<i32>} : memref<32x16x16xf32, #tpu.memory_space<vmem>>, vector<1x16x16xf32>,
    %c128 = arith.constant 128 : index
    %c0_33 = arith.constant 0 : index
    %47 = vector.load %arg7[%c128, %c0_33] : memref<512x16xf32, #tpu.memory_space<vmem>>, vector<16x16xf32>
    %48 = tpu.transpose %47, [1, 0] : vector<16x16xf32> -> vector<16x16xf32>
    %c8 = arith.constant 8 : index
    %c0_34 = arith.constant 0 : index
    %c0_35 = arith.constant 0 : index
    %49 = vector.load %arg8[%c8, %c0_34, %c0_35] : memref<32x16x16xf32, #tpu.memory_space<vmem>>, vector<1x16x16xf32>
    %50 = vector.shape_cast %49 : vector<1x16x16xf32> to vector<16x16xf32>
    %51 = vector.shape_cast %48 : vector<16x16xf32> to vector<1x16x16xf32>
    tpu.vector_store %arg8[%c8, %c0_34, %c0_35], %51 {strides = array<i32>} : memref<32x16x16xf32, #tpu.memory_space<vmem>>, vector<1x16x16xf32>,
    %c144 = arith.constant 144 : index
    %c0_36 = arith.constant 0 : index
    %52 = vector.load %arg7[%c144, %c0_36] : memref<512x16xf32, #tpu.memory_space<vmem>>, vector<16x16xf32>
    %53 = tpu.transpose %52, [1, 0] : vector<16x16xf32> -> vector<16x16xf32>
    %c9 = arith.constant 9 : index
    %c0_37 = arith.constant 0 : index
    %c0_38 = arith.constant 0 : index
    %54 = vector.load %arg8[%c9, %c0_37, %c0_38] : memref<32x16x16xf32, #tpu.memory_space<vmem>>, vector<1x16x16xf32>
    %55 = vector.shape_cast %54 : vector<1x16x16xf32> to vector<16x16xf32>
    %56 = vector.shape_cast %53 : vector<16x16xf32> to vector<1x16x16xf32>
    tpu.vector_store %arg8[%c9, %c0_37, %c0_38], %56 {strides = array<i32>} : memref<32x16x16xf32, #tpu.memory_space<vmem>>, vector<1x16x16xf32>,
    %c160 = arith.constant 160 : index
    %c0_39 = arith.constant 0 : index
    %57 = vector.load %arg7[%c160, %c0_39] : memref<512x16xf32, #tpu.memory_space<vmem>>, vector<16x16xf32>
    %58 = tpu.transpose %57, [1, 0] : vector<16x16xf32> -> vector<16x16xf32>
    %c10 = arith.constant 10 : index
    %c0_40 = arith.constant 0 : index
    %c0_41 = arith.constant 0 : index
    %59 = vector.load %arg8[%c10, %c0_40, %c0_41] : memref<32x16x16xf32, #tpu.memory_space<vmem>>, vector<1x16x16xf32>
    %60 = vector.shape_cast %59 : vector<1x16x16xf32> to vector<16x16xf32>
    %61 = vector.shape_cast %58 : vector<16x16xf32> to vector<1x16x16xf32>
    tpu.vector_store %arg8[%c10, %c0_40, %c0_41], %61 {strides = array<i32>} : memref<32x16x16xf32, #tpu.memory_space<vmem>>, vector<1x16x16xf32>,
    %c176 = arith.constant 176 : index
    %c0_42 = arith.constant 0 : index
    %62 = vector.load %arg7[%c176, %c0_42] : memref<512x16xf32, #tpu.memory_space<vmem>>, vector<16x16xf32>
    %63 = tpu.transpose %62, [1, 0] : vector<16x16xf32> -> vector<16x16xf32>
    %c11 = arith.constant 11 : index
    %c0_43 = arith.constant 0 : index
    %c0_44 = arith.constant 0 : index
    %64 = vector.load %arg8[%c11, %c0_43, %c0_44] : memref<32x16x16xf32, #tpu.memory_space<vmem>>, vector<1x16x16xf32>
    %65 = vector.shape_cast %64 : vector<1x16x16xf32> to vector<16x16xf32>
    %66 = vector.shape_cast %63 : vector<16x16xf32> to vector<1x16x16xf32>
    tpu.vector_store %arg8[%c11, %c0_43, %c0_44], %66 {strides = array<i32>} : memref<32x16x16xf32, #tpu.memory_space<vmem>>, vector<1x16x16xf32>,
    %c192 = arith.constant 192 : index
    %c0_45 = arith.constant 0 : index
    %67 = vector.load %arg7[%c192, %c0_45] : memref<512x16xf32, #tpu.memory_space<vmem>>, vector<16x16xf32>
    %68 = tpu.transpose %67, [1, 0] : vector<16x16xf32> -> vector<16x16xf32>
    %c12 = arith.constant 12 : index
    %c0_46 = arith.constant 0 : index
    %c0_47 = arith.constant 0 : index
    %69 = vector.load %arg8[%c12, %c0_46, %c0_47] : memref<32x16x16xf32, #tpu.memory_space<vmem>>, vector<1x16x16xf32>
    %70 = vector.shape_cast %69 : vector<1x16x16xf32> to vector<16x16xf32>
    %71 = vector.shape_cast %68 : vector<16x16xf32> to vector<1x16x16xf32>
    tpu.vector_store %arg8[%c12, %c0_46, %c0_47], %71 {strides = array<i32>} : memref<32x16x16xf32, #tpu.memory_space<vmem>>, vector<1x16x16xf32>,
    %c208 = arith.constant 208 : index
    %c0_48 = arith.constant 0 : index
    %72 = vector.load %arg7[%c208, %c0_48] : memref<512x16xf32, #tpu.memory_space<vmem>>, vector<16x16xf32>
    %73 = tpu.transpose %72, [1, 0] : vector<16x16xf32> -> vector<16x16xf32>
    %c13 = arith.constant 13 : index
    %c0_49 = arith.constant 0 : index
    %c0_50 = arith.constant 0 : index
    %74 = vector.load %arg8[%c13, %c0_49, %c0_50] : memref<32x16x16xf32, #tpu.memory_space<vmem>>, vector<1x16x16xf32>
    %75 = vector.shape_cast %74 : vector<1x16x16xf32> to vector<16x16xf32>
    %76 = vector.shape_cast %73 : vector<16x16xf32> to vector<1x16x16xf32>
    tpu.vector_store %arg8[%c13, %c0_49, %c0_50], %76 {strides = array<i32>} : memref<32x16x16xf32, #tpu.memory_space<vmem>>, vector<1x16x16xf32>,
    %c224 = arith.constant 224 : index
    %c0_51 = arith.constant 0 : index
    %77 = vector.load %arg7[%c224, %c0_51] : memref<512x16xf32, #tpu.memory_space<vmem>>, vector<16x16xf32>
    %78 = tpu.transpose %77, [1, 0] : vector<16x16xf32> -> vector<16x16xf32>
    %c14 = arith.constant 14 : index
    %c0_52 = arith.constant 0 : index
    %c0_53 = arith.constant 0 : index
    %79 = vector.load %arg8[%c14, %c0_52, %c0_53] : memref<32x16x16xf32, #tpu.memory_space<vmem>>, vector<1x16x16xf32>
    %80 = vector.shape_cast %79 : vector<1x16x16xf32> to vector<16x16xf32>
    %81 = vector.shape_cast %78 : vector<16x16xf32> to vector<1x16x16xf32>
    tpu.vector_store %arg8[%c14, %c0_52, %c0_53], %81 {strides = array<i32>} : memref<32x16x16xf32, #tpu.memory_space<vmem>>, vector<1x16x16xf32>,
    %c240 = arith.constant 240 : index
    %c0_54 = arith.constant 0 : index
    %82 = vector.load %arg7[%c240, %c0_54] : memref<512x16xf32, #tpu.memory_space<vmem>>, vector<16x16xf32>
    %83 = tpu.transpose %82, [1, 0] : vector<16x16xf32> -> vector<16x16xf32>
    %c15 = arith.constant 15 : index
    %c0_55 = arith.constant 0 : index
    %c0_56 = arith.constant 0 : index
    %84 = vector.load %arg8[%c15, %c0_55, %c0_56] : memref<32x16x16xf32, #tpu.memory_space<vmem>>, vector<1x16x16xf32>
    %85 = vector.shape_cast %84 : vector<1x16x16xf32> to vector<16x16xf32>
    %86 = vector.shape_cast %83 : vector<16x16xf32> to vector<1x16x16xf32>
    tpu.vector_store %arg8[%c15, %c0_55, %c0_56], %86 {strides = array<i32>} : memref<32x16x16xf32, #tpu.memory_space<vmem>>, vector<1x16x16xf32>,
    %c256 = arith.constant 256 : index
    %c0_57 = arith.constant 0 : index
    %87 = vector.load %arg7[%c256, %c0_57] : memref<512x16xf32, #tpu.memory_space<vmem>>, vector<16x16xf32>
    %88 = tpu.transpose %87, [1, 0] : vector<16x16xf32> -> vector<16x16xf32>
    %c16_58 = arith.constant 16 : index
    %c0_59 = arith.constant 0 : index
    %c0_60 = arith.constant 0 : index
    %89 = vector.load %arg8[%c16_58, %c0_59, %c0_60] : memref<32x16x16xf32, #tpu.memory_space<vmem>>, vector<1x16x16xf32>
    %90 = vector.shape_cast %89 : vector<1x16x16xf32> to vector<16x16xf32>
    %91 = vector.shape_cast %88 : vector<16x16xf32> to vector<1x16x16xf32>
    tpu.vector_store %arg8[%c16_58, %c0_59, %c0_60], %91 {strides = array<i32>} : memref<32x16x16xf32, #tpu.memory_space<vmem>>, vector<1x16x16xf32>,
    %c272 = arith.constant 272 : index
    %c0_61 = arith.constant 0 : index
    %92 = vector.load %arg7[%c272, %c0_61] : memref<512x16xf32, #tpu.memory_space<vmem>>, vector<16x16xf32>
    %93 = tpu.transpose %92, [1, 0] : vector<16x16xf32> -> vector<16x16xf32>
    %c17 = arith.constant 17 : index
    %c0_62 = arith.constant 0 : index
    %c0_63 = arith.constant 0 : index
    %94 = vector.load %arg8[%c17, %c0_62, %c0_63] : memref<32x16x16xf32, #tpu.memory_space<vmem>>, vector<1x16x16xf32>
    %95 = vector.shape_cast %94 : vector<1x16x16xf32> to vector<16x16xf32>
    %96 = vector.shape_cast %93 : vector<16x16xf32> to vector<1x16x16xf32>
    tpu.vector_store %arg8[%c17, %c0_62, %c0_63], %96 {strides = array<i32>} : memref<32x16x16xf32, #tpu.memory_space<vmem>>, vector<1x16x16xf32>,
    %c288 = arith.constant 288 : index
    %c0_64 = arith.constant 0 : index
    %97 = vector.load %arg7[%c288, %c0_64] : memref<512x16xf32, #tpu.memory_space<vmem>>, vector<16x16xf32>
    %98 = tpu.transpose %97, [1, 0] : vector<16x16xf32> -> vector<16x16xf32>
    %c18 = arith.constant 18 : index
    %c0_65 = arith.constant 0 : index
    %c0_66 = arith.constant 0 : index
    %99 = vector.load %arg8[%c18, %c0_65, %c0_66] : memref<32x16x16xf32, #tpu.memory_space<vmem>>, vector<1x16x16xf32>
    %100 = vector.shape_cast %99 : vector<1x16x16xf32> to vector<16x16xf32>
    %101 = vector.shape_cast %98 : vector<16x16xf32> to vector<1x16x16xf32>
    tpu.vector_store %arg8[%c18, %c0_65, %c0_66], %101 {strides = array<i32>} : memref<32x16x16xf32, #tpu.memory_space<vmem>>, vector<1x16x16xf32>,
    %c304 = arith.constant 304 : index
    %c0_67 = arith.constant 0 : index
    %102 = vector.load %arg7[%c304, %c0_67] : memref<512x16xf32, #tpu.memory_space<vmem>>, vector<16x16xf32>
    %103 = tpu.transpose %102, [1, 0] : vector<16x16xf32> -> vector<16x16xf32>
    %c19 = arith.constant 19 : index
    %c0_68 = arith.constant 0 : index
    %c0_69 = arith.constant 0 : index
    %104 = vector.load %arg8[%c19, %c0_68, %c0_69] : memref<32x16x16xf32, #tpu.memory_space<vmem>>, vector<1x16x16xf32>
    %105 = vector.shape_cast %104 : vector<1x16x16xf32> to vector<16x16xf32>
    %106 = vector.shape_cast %103 : vector<16x16xf32> to vector<1x16x16xf32>
    tpu.vector_store %arg8[%c19, %c0_68, %c0_69], %106 {strides = array<i32>} : memref<32x16x16xf32, #tpu.memory_space<vmem>>, vector<1x16x16xf32>,
    %c320 = arith.constant 320 : index
    %c0_70 = arith.constant 0 : index
    %107 = vector.load %arg7[%c320, %c0_70] : memref<512x16xf32, #tpu.memory_space<vmem>>, vector<16x16xf32>
    %108 = tpu.transpose %107, [1, 0] : vector<16x16xf32> -> vector<16x16xf32>
    %c20 = arith.constant 20 : index
    %c0_71 = arith.constant 0 : index
    %c0_72 = arith.constant 0 : index
    %109 = vector.load %arg8[%c20, %c0_71, %c0_72] : memref<32x16x16xf32, #tpu.memory_space<vmem>>, vector<1x16x16xf32>
    %110 = vector.shape_cast %109 : vector<1x16x16xf32> to vector<16x16xf32>
    %111 = vector.shape_cast %108 : vector<16x16xf32> to vector<1x16x16xf32>
    tpu.vector_store %arg8[%c20, %c0_71, %c0_72], %111 {strides = array<i32>} : memref<32x16x16xf32, #tpu.memory_space<vmem>>, vector<1x16x16xf32>,
    %c336 = arith.constant 336 : index
    %c0_73 = arith.constant 0 : index
    %112 = vector.load %arg7[%c336, %c0_73] : memref<512x16xf32, #tpu.memory_space<vmem>>, vector<16x16xf32>
    %113 = tpu.transpose %112, [1, 0] : vector<16x16xf32> -> vector<16x16xf32>
    %c21 = arith.constant 21 : index
    %c0_74 = arith.constant 0 : index
    %c0_75 = arith.constant 0 : index
    %114 = vector.load %arg8[%c21, %c0_74, %c0_75] : memref<32x16x16xf32, #tpu.memory_space<vmem>>, vector<1x16x16xf32>
    %115 = vector.shape_cast %114 : vector<1x16x16xf32> to vector<16x16xf32>
    %116 = vector.shape_cast %113 : vector<16x16xf32> to vector<1x16x16xf32>
    tpu.vector_store %arg8[%c21, %c0_74, %c0_75], %116 {strides = array<i32>} : memref<32x16x16xf32, #tpu.memory_space<vmem>>, vector<1x16x16xf32>,
    %c352 = arith.constant 352 : index
    %c0_76 = arith.constant 0 : index
    %117 = vector.load %arg7[%c352, %c0_76] : memref<512x16xf32, #tpu.memory_space<vmem>>, vector<16x16xf32>
    %118 = tpu.transpose %117, [1, 0] : vector<16x16xf32> -> vector<16x16xf32>
    %c22 = arith.constant 22 : index
    %c0_77 = arith.constant 0 : index
    %c0_78 = arith.constant 0 : index
    %119 = vector.load %arg8[%c22, %c0_77, %c0_78] : memref<32x16x16xf32, #tpu.memory_space<vmem>>, vector<1x16x16xf32>
    %120 = vector.shape_cast %119 : vector<1x16x16xf32> to vector<16x16xf32>
    %121 = vector.shape_cast %118 : vector<16x16xf32> to vector<1x16x16xf32>
    tpu.vector_store %arg8[%c22, %c0_77, %c0_78], %121 {strides = array<i32>} : memref<32x16x16xf32, #tpu.memory_space<vmem>>, vector<1x16x16xf32>,
    %c368 = arith.constant 368 : index
    %c0_79 = arith.constant 0 : index
    %122 = vector.load %arg7[%c368, %c0_79] : memref<512x16xf32, #tpu.memory_space<vmem>>, vector<16x16xf32>
    %123 = tpu.transpose %122, [1, 0] : vector<16x16xf32> -> vector<16x16xf32>
    %c23 = arith.constant 23 : index
    %c0_80 = arith.constant 0 : index
    %c0_81 = arith.constant 0 : index
    %124 = vector.load %arg8[%c23, %c0_80, %c0_81] : memref<32x16x16xf32, #tpu.memory_space<vmem>>, vector<1x16x16xf32>
    %125 = vector.shape_cast %124 : vector<1x16x16xf32> to vector<16x16xf32>
    %126 = vector.shape_cast %123 : vector<16x16xf32> to vector<1x16x16xf32>
    tpu.vector_store %arg8[%c23, %c0_80, %c0_81], %126 {strides = array<i32>} : memref<32x16x16xf32, #tpu.memory_space<vmem>>, vector<1x16x16xf32>,
    %c384 = arith.constant 384 : index
    %c0_82 = arith.constant 0 : index
    %127 = vector.load %arg7[%c384, %c0_82] : memref<512x16xf32, #tpu.memory_space<vmem>>, vector<16x16xf32>
    %128 = tpu.transpose %127, [1, 0] : vector<16x16xf32> -> vector<16x16xf32>
    %c24 = arith.constant 24 : index
    %c0_83 = arith.constant 0 : index
    %c0_84 = arith.constant 0 : index
    %129 = vector.load %arg8[%c24, %c0_83, %c0_84] : memref<32x16x16xf32, #tpu.memory_space<vmem>>, vector<1x16x16xf32>
    %130 = vector.shape_cast %129 : vector<1x16x16xf32> to vector<16x16xf32>
    %131 = vector.shape_cast %128 : vector<16x16xf32> to vector<1x16x16xf32>
    tpu.vector_store %arg8[%c24, %c0_83, %c0_84], %131 {strides = array<i32>} : memref<32x16x16xf32, #tpu.memory_space<vmem>>, vector<1x16x16xf32>,
    %c400 = arith.constant 400 : index
    %c0_85 = arith.constant 0 : index
    %132 = vector.load %arg7[%c400, %c0_85] : memref<512x16xf32, #tpu.memory_space<vmem>>, vector<16x16xf32>
    %133 = tpu.transpose %132, [1, 0] : vector<16x16xf32> -> vector<16x16xf32>
    %c25 = arith.constant 25 : index
    %c0_86 = arith.constant 0 : index
    %c0_87 = arith.constant 0 : index
    %134 = vector.load %arg8[%c25, %c0_86, %c0_87] : memref<32x16x16xf32, #tpu.memory_space<vmem>>, vector<1x16x16xf32>
    %135 = vector.shape_cast %134 : vector<1x16x16xf32> to vector<16x16xf32>
    %136 = vector.shape_cast %133 : vector<16x16xf32> to vector<1x16x16xf32>
    tpu.vector_store %arg8[%c25, %c0_86, %c0_87], %136 {strides = array<i32>} : memref<32x16x16xf32, #tpu.memory_space<vmem>>, vector<1x16x16xf32>,
    %c416 = arith.constant 416 : index
    %c0_88 = arith.constant 0 : index
    %137 = vector.load %arg7[%c416, %c0_88] : memref<512x16xf32, #tpu.memory_space<vmem>>, vector<16x16xf32>
    %138 = tpu.transpose %137, [1, 0] : vector<16x16xf32> -> vector<16x16xf32>
    %c26 = arith.constant 26 : index
    %c0_89 = arith.constant 0 : index
    %c0_90 = arith.constant 0 : index
    %139 = vector.load %arg8[%c26, %c0_89, %c0_90] : memref<32x16x16xf32, #tpu.memory_space<vmem>>, vector<1x16x16xf32>
    %140 = vector.shape_cast %139 : vector<1x16x16xf32> to vector<16x16xf32>
    %141 = vector.shape_cast %138 : vector<16x16xf32> to vector<1x16x16xf32>
    tpu.vector_store %arg8[%c26, %c0_89, %c0_90], %141 {strides = array<i32>} : memref<32x16x16xf32, #tpu.memory_space<vmem>>, vector<1x16x16xf32>,
    %c432 = arith.constant 432 : index
    %c0_91 = arith.constant 0 : index
    %142 = vector.load %arg7[%c432, %c0_91] : memref<512x16xf32, #tpu.memory_space<vmem>>, vector<16x16xf32>
    %143 = tpu.transpose %142, [1, 0] : vector<16x16xf32> -> vector<16x16xf32>
    %c27 = arith.constant 27 : index
    %c0_92 = arith.constant 0 : index
    %c0_93 = arith.constant 0 : index
    %144 = vector.load %arg8[%c27, %c0_92, %c0_93] : memref<32x16x16xf32, #tpu.memory_space<vmem>>, vector<1x16x16xf32>
    %145 = vector.shape_cast %144 : vector<1x16x16xf32> to vector<16x16xf32>
    %146 = vector.shape_cast %143 : vector<16x16xf32> to vector<1x16x16xf32>
    tpu.vector_store %arg8[%c27, %c0_92, %c0_93], %146 {strides = array<i32>} : memref<32x16x16xf32, #tpu.memory_space<vmem>>, vector<1x16x16xf32>,
    %c448 = arith.constant 448 : index
    %c0_94 = arith.constant 0 : index
    %147 = vector.load %arg7[%c448, %c0_94] : memref<512x16xf32, #tpu.memory_space<vmem>>, vector<16x16xf32>
    %148 = tpu.transpose %147, [1, 0] : vector<16x16xf32> -> vector<16x16xf32>
    %c28 = arith.constant 28 : index
    %c0_95 = arith.constant 0 : index
    %c0_96 = arith.constant 0 : index
    %149 = vector.load %arg8[%c28, %c0_95, %c0_96] : memref<32x16x16xf32, #tpu.memory_space<vmem>>, vector<1x16x16xf32>
    %150 = vector.shape_cast %149 : vector<1x16x16xf32> to vector<16x16xf32>
    %151 = vector.shape_cast %148 : vector<16x16xf32> to vector<1x16x16xf32>
    tpu.vector_store %arg8[%c28, %c0_95, %c0_96], %151 {strides = array<i32>} : memref<32x16x16xf32, #tpu.memory_space<vmem>>, vector<1x16x16xf32>,
    %c464 = arith.constant 464 : index
    %c0_97 = arith.constant 0 : index
    %152 = vector.load %arg7[%c464, %c0_97] : memref<512x16xf32, #tpu.memory_space<vmem>>, vector<16x16xf32>
    %153 = tpu.transpose %152, [1, 0] : vector<16x16xf32> -> vector<16x16xf32>
    %c29 = arith.constant 29 : index
    %c0_98 = arith.constant 0 : index
    %c0_99 = arith.constant 0 : index
    %154 = vector.load %arg8[%c29, %c0_98, %c0_99] : memref<32x16x16xf32, #tpu.memory_space<vmem>>, vector<1x16x16xf32>
    %155 = vector.shape_cast %154 : vector<1x16x16xf32> to vector<16x16xf32>
    %156 = vector.shape_cast %153 : vector<16x16xf32> to vector<1x16x16xf32>
    tpu.vector_store %arg8[%c29, %c0_98, %c0_99], %156 {strides = array<i32>} : memref<32x16x16xf32, #tpu.memory_space<vmem>>, vector<1x16x16xf32>,
    %c480 = arith.constant 480 : index
    %c0_100 = arith.constant 0 : index
    %157 = vector.load %arg7[%c480, %c0_100] : memref<512x16xf32, #tpu.memory_space<vmem>>, vector<16x16xf32>
    %158 = tpu.transpose %157, [1, 0] : vector<16x16xf32> -> vector<16x16xf32>
    %c30 = arith.constant 30 : index
    %c0_101 = arith.constant 0 : index
    %c0_102 = arith.constant 0 : index
    %159 = vector.load %arg8[%c30, %c0_101, %c0_102] : memref<32x16x16xf32, #tpu.memory_space<vmem>>, vector<1x16x16xf32>
    %160 = vector.shape_cast %159 : vector<1x16x16xf32> to vector<16x16xf32>
    %161 = vector.shape_cast %158 : vector<16x16xf32> to vector<1x16x16xf32>
    tpu.vector_store %arg8[%c30, %c0_101, %c0_102], %161 {strides = array<i32>} : memref<32x16x16xf32, #tpu.memory_space<vmem>>, vector<1x16x16xf32>,
    %c496 = arith.constant 496 : index
    %c0_103 = arith.constant 0 : index
    %162 = vector.load %arg7[%c496, %c0_103] : memref<512x16xf32, #tpu.memory_space<vmem>>, vector<16x16xf32>
    %163 = tpu.transpose %162, [1, 0] : vector<16x16xf32> -> vector<16x16xf32>
    %c31 = arith.constant 31 : index
    %c0_104 = arith.constant 0 : index
    %c0_105 = arith.constant 0 : index
    %164 = vector.load %arg8[%c31, %c0_104, %c0_105] : memref<32x16x16xf32, #tpu.memory_space<vmem>>, vector<1x16x16xf32>
    %165 = vector.shape_cast %164 : vector<1x16x16xf32> to vector<16x16xf32>
    %166 = vector.shape_cast %163 : vector<16x16xf32> to vector<1x16x16xf32>
    tpu.vector_store %arg8[%c31, %c0_104, %c0_105], %166 {strides = array<i32>} : memref<32x16x16xf32, #tpu.memory_space<vmem>>, vector<1x16x16xf32>,
    %cst_106 = arith.constant 0.000000e+00 : f32
    %167 = vector.broadcast %cst_106 : f32 to vector<32x16x144xf32>
    %c0_107 = arith.constant 0 : index
    %c0_108 = arith.constant 0 : index
    %c0_109 = arith.constant 0 : index
    %168 = vector.load %arg9[%c0_107, %c0_108, %c0_109] : memref<32x16x144xf32, #tpu.memory_space<vmem>>, vector<32x16x144xf32>
    tpu.vector_store %arg9[%c0_107, %c0_108, %c0_109], %167 {strides = array<i32>} : memref<32x16x144xf32, #tpu.memory_space<vmem>>, vector<32x16x144xf32>,
    %c0_110 = arith.constant 0 : index
    %c0_111 = arith.constant 0 : index
    %c0_112 = arith.constant 0 : index
    %169 = vector.load %arg8[%c0_110, %c0_111, %c0_112] : memref<32x16x16xf32, #tpu.memory_space<vmem>>, vector<15x15x16xf32>
    %c1_113 = arith.constant 1 : index
    %c1_114 = arith.constant 1 : index
    %c0_115 = arith.constant 0 : index
    %170 = vector.load %arg9[%c1_113, %c1_114, %c0_115] : memref<32x16x144xf32, #tpu.memory_space<vmem>>, vector<15x15x16xf32>
    tpu.vector_store %arg9[%c1_113, %c1_114, %c0_115], %169 {strides = array<i32>} : memref<32x16x144xf32, #tpu.memory_space<vmem>>, vector<15x15x16xf32>,
    %c16_116 = arith.constant 16 : index
    %c0_117 = arith.constant 0 : index
    %c0_118 = arith.constant 0 : index
    %171 = vector.load %arg8[%c16_116, %c0_117, %c0_118] : memref<32x16x16xf32, #tpu.memory_space<vmem>>, vector<15x15x16xf32>
    %c17_119 = arith.constant 17 : index
    %c1_120 = arith.constant 1 : index
    %c0_121 = arith.constant 0 : index
    %172 = vector.load %arg9[%c17_119, %c1_120, %c0_121] : memref<32x16x144xf32, #tpu.memory_space<vmem>>, vector<15x15x16xf32>
    tpu.vector_store %arg9[%c17_119, %c1_120, %c0_121], %171 {strides = array<i32>} : memref<32x16x144xf32, #tpu.memory_space<vmem>>, vector<15x15x16xf32>,
    %c0_122 = arith.constant 0 : index
    %c0_123 = arith.constant 0 : index
    %c0_124 = arith.constant 0 : index
    %173 = vector.load %arg8[%c0_122, %c0_123, %c0_124] : memref<32x16x16xf32, #tpu.memory_space<vmem>>, vector<15x16x16xf32>
    %c1_125 = arith.constant 1 : index
    %c0_126 = arith.constant 0 : index
    %c16_127 = arith.constant 16 : index
    %174 = vector.load %arg9[%c1_125, %c0_126, %c16_127] : memref<32x16x144xf32, #tpu.memory_space<vmem>>, vector<15x16x16xf32>
    tpu.vector_store %arg9[%c1_125, %c0_126, %c16_127], %173 {strides = array<i32>} : memref<32x16x144xf32, #tpu.memory_space<vmem>>, vector<15x16x16xf32>,
    %c16_128 = arith.constant 16 : index
    %c0_129 = arith.constant 0 : index
    %c0_130 = arith.constant 0 : index
    %175 = vector.load %arg8[%c16_128, %c0_129, %c0_130] : memref<32x16x16xf32, #tpu.memory_space<vmem>>, vector<15x16x16xf32>
    %c17_131 = arith.constant 17 : index
    %c0_132 = arith.constant 0 : index
    %c16_133 = arith.constant 16 : index
    %176 = vector.load %arg9[%c17_131, %c0_132, %c16_133] : memref<32x16x144xf32, #tpu.memory_space<vmem>>, vector<15x16x16xf32>
    tpu.vector_store %arg9[%c17_131, %c0_132, %c16_133], %175 {strides = array<i32>} : memref<32x16x144xf32, #tpu.memory_space<vmem>>, vector<15x16x16xf32>,
    %c0_134 = arith.constant 0 : index
    %c1_135 = arith.constant 1 : index
    %c0_136 = arith.constant 0 : index
    %177 = vector.load %arg8[%c0_134, %c1_135, %c0_136] : memref<32x16x16xf32, #tpu.memory_space<vmem>>, vector<15x15x16xf32>
    %c1_137 = arith.constant 1 : index
    %c0_138 = arith.constant 0 : index
    %c32_139 = arith.constant 32 : index
    %178 = vector.load %arg9[%c1_137, %c0_138, %c32_139] : memref<32x16x144xf32, #tpu.memory_space<vmem>>, vector<15x15x16xf32>
    tpu.vector_store %arg9[%c1_137, %c0_138, %c32_139], %177 {strides = array<i32>} : memref<32x16x144xf32, #tpu.memory_space<vmem>>, vector<15x15x16xf32>,
    %c16_140 = arith.constant 16 : index
    %c1_141 = arith.constant 1 : index
    %c0_142 = arith.constant 0 : index
    %179 = vector.load %arg8[%c16_140, %c1_141, %c0_142] : memref<32x16x16xf32, #tpu.memory_space<vmem>>, vector<15x15x16xf32>
    %c17_143 = arith.constant 17 : index
    %c0_144 = arith.constant 0 : index
    %c32_145 = arith.constant 32 : index
    %180 = vector.load %arg9[%c17_143, %c0_144, %c32_145] : memref<32x16x144xf32, #tpu.memory_space<vmem>>, vector<15x15x16xf32>
    tpu.vector_store %arg9[%c17_143, %c0_144, %c32_145], %179 {strides = array<i32>} : memref<32x16x144xf32, #tpu.memory_space<vmem>>, vector<15x15x16xf32>,
    %c0_146 = arith.constant 0 : index
    %c0_147 = arith.constant 0 : index
    %c0_148 = arith.constant 0 : index
    %181 = vector.load %arg8[%c0_146, %c0_147, %c0_148] : memref<32x16x16xf32, #tpu.memory_space<vmem>>, vector<16x15x16xf32>
    %c0_149 = arith.constant 0 : index
    %c1_150 = arith.constant 1 : index
    %c48_151 = arith.constant 48 : index
    %182 = vector.load %arg9[%c0_149, %c1_150, %c48_151] : memref<32x16x144xf32, #tpu.memory_space<vmem>>, vector<16x15x16xf32>
    tpu.vector_store %arg9[%c0_149, %c1_150, %c48_151], %181 {strides = array<i32>} : memref<32x16x144xf32, #tpu.memory_space<vmem>>, vector<16x15x16xf32>,
    %c16_152 = arith.constant 16 : index
    %c0_153 = arith.constant 0 : index
    %c0_154 = arith.constant 0 : index
    %183 = vector.load %arg8[%c16_152, %c0_153, %c0_154] : memref<32x16x16xf32, #tpu.memory_space<vmem>>, vector<16x15x16xf32>
    %c16_155 = arith.constant 16 : index
    %c1_156 = arith.constant 1 : index
    %c48_157 = arith.constant 48 : index
    %184 = vector.load %arg9[%c16_155, %c1_156, %c48_157] : memref<32x16x144xf32, #tpu.memory_space<vmem>>, vector<16x15x16xf32>
    tpu.vector_store %arg9[%c16_155, %c1_156, %c48_157], %183 {strides = array<i32>} : memref<32x16x144xf32, #tpu.memory_space<vmem>>, vector<16x15x16xf32>,
    %c0_158 = arith.constant 0 : index
    %c0_159 = arith.constant 0 : index
    %c0_160 = arith.constant 0 : index
    %185 = vector.load %arg8[%c0_158, %c0_159, %c0_160] : memref<32x16x16xf32, #tpu.memory_space<vmem>>, vector<16x16x16xf32>
    %c0_161 = arith.constant 0 : index
    %c0_162 = arith.constant 0 : index
    %c64_163 = arith.constant 64 : index
    %186 = vector.load %arg9[%c0_161, %c0_162, %c64_163] : memref<32x16x144xf32, #tpu.memory_space<vmem>>, vector<16x16x16xf32>
    tpu.vector_store %arg9[%c0_161, %c0_162, %c64_163], %185 {strides = array<i32>} : memref<32x16x144xf32, #tpu.memory_space<vmem>>, vector<16x16x16xf32>,
    %c16_164 = arith.constant 16 : index
    %c0_165 = arith.constant 0 : index
    %c0_166 = arith.constant 0 : index
    %187 = vector.load %arg8[%c16_164, %c0_165, %c0_166] : memref<32x16x16xf32, #tpu.memory_space<vmem>>, vector<16x16x16xf32>
    %c16_167 = arith.constant 16 : index
    %c0_168 = arith.constant 0 : index
    %c64_169 = arith.constant 64 : index
    %188 = vector.load %arg9[%c16_167, %c0_168, %c64_169] : memref<32x16x144xf32, #tpu.memory_space<vmem>>, vector<16x16x16xf32>
    tpu.vector_store %arg9[%c16_167, %c0_168, %c64_169], %187 {strides = array<i32>} : memref<32x16x144xf32, #tpu.memory_space<vmem>>, vector<16x16x16xf32>,
    %c0_170 = arith.constant 0 : index
    %c1_171 = arith.constant 1 : index
    %c0_172 = arith.constant 0 : index
    %189 = vector.load %arg8[%c0_170, %c1_171, %c0_172] : memref<32x16x16xf32, #tpu.memory_space<vmem>>, vector<16x15x16xf32>
    %c0_173 = arith.constant 0 : index
    %c0_174 = arith.constant 0 : index
    %c80_175 = arith.constant 80 : index
    %190 = vector.load %arg9[%c0_173, %c0_174, %c80_175] : memref<32x16x144xf32, #tpu.memory_space<vmem>>, vector<16x15x16xf32>
    tpu.vector_store %arg9[%c0_173, %c0_174, %c80_175], %189 {strides = array<i32>} : memref<32x16x144xf32, #tpu.memory_space<vmem>>, vector<16x15x16xf32>,
    %c16_176 = arith.constant 16 : index
    %c1_177 = arith.constant 1 : index
    %c0_178 = arith.constant 0 : index
    %191 = vector.load %arg8[%c16_176, %c1_177, %c0_178] : memref<32x16x16xf32, #tpu.memory_space<vmem>>, vector<16x15x16xf32>
    %c16_179 = arith.constant 16 : index
    %c0_180 = arith.constant 0 : index
    %c80_181 = arith.constant 80 : index
    %192 = vector.load %arg9[%c16_179, %c0_180, %c80_181] : memref<32x16x144xf32, #tpu.memory_space<vmem>>, vector<16x15x16xf32>
    tpu.vector_store %arg9[%c16_179, %c0_180, %c80_181], %191 {strides = array<i32>} : memref<32x16x144xf32, #tpu.memory_space<vmem>>, vector<16x15x16xf32>,
    %c1_182 = arith.constant 1 : index
    %c0_183 = arith.constant 0 : index
    %c0_184 = arith.constant 0 : index
    %193 = vector.load %arg8[%c1_182, %c0_183, %c0_184] : memref<32x16x16xf32, #tpu.memory_space<vmem>>, vector<15x15x16xf32>
    %c0_185 = arith.constant 0 : index
    %c1_186 = arith.constant 1 : index
    %c96_187 = arith.constant 96 : index
    %194 = vector.load %arg9[%c0_185, %c1_186, %c96_187] : memref<32x16x144xf32, #tpu.memory_space<vmem>>, vector<15x15x16xf32>
    tpu.vector_store %arg9[%c0_185, %c1_186, %c96_187], %193 {strides = array<i32>} : memref<32x16x144xf32, #tpu.memory_space<vmem>>, vector<15x15x16xf32>,
    %c17_188 = arith.constant 17 : index
    %c0_189 = arith.constant 0 : index
    %c0_190 = arith.constant 0 : index
    %195 = vector.load %arg8[%c17_188, %c0_189, %c0_190] : memref<32x16x16xf32, #tpu.memory_space<vmem>>, vector<15x15x16xf32>
    %c16_191 = arith.constant 16 : index
    %c1_192 = arith.constant 1 : index
    %c96_193 = arith.constant 96 : index
    %196 = vector.load %arg9[%c16_191, %c1_192, %c96_193] : memref<32x16x144xf32, #tpu.memory_space<vmem>>, vector<15x15x16xf32>
    tpu.vector_store %arg9[%c16_191, %c1_192, %c96_193], %195 {strides = array<i32>} : memref<32x16x144xf32, #tpu.memory_space<vmem>>, vector<15x15x16xf32>,
    %c1_194 = arith.constant 1 : index
    %c0_195 = arith.constant 0 : index
    %c0_196 = arith.constant 0 : index
    %197 = vector.load %arg8[%c1_194, %c0_195, %c0_196] : memref<32x16x16xf32, #tpu.memory_space<vmem>>, vector<15x16x16xf32>
    %c0_197 = arith.constant 0 : index
    %c0_198 = arith.constant 0 : index
    %c112_199 = arith.constant 112 : index
    %198 = vector.load %arg9[%c0_197, %c0_198, %c112_199] : memref<32x16x144xf32, #tpu.memory_space<vmem>>, vector<15x16x16xf32>
    tpu.vector_store %arg9[%c0_197, %c0_198, %c112_199], %197 {strides = array<i32>} : memref<32x16x144xf32, #tpu.memory_space<vmem>>, vector<15x16x16xf32>,
    %c17_200 = arith.constant 17 : index
    %c0_201 = arith.constant 0 : index
    %c0_202 = arith.constant 0 : index
    %199 = vector.load %arg8[%c17_200, %c0_201, %c0_202] : memref<32x16x16xf32, #tpu.memory_space<vmem>>, vector<15x16x16xf32>
    %c16_203 = arith.constant 16 : index
    %c0_204 = arith.constant 0 : index
    %c112_205 = arith.constant 112 : index
    %200 = vector.load %arg9[%c16_203, %c0_204, %c112_205] : memref<32x16x144xf32, #tpu.memory_space<vmem>>, vector<15x16x16xf32>
    tpu.vector_store %arg9[%c16_203, %c0_204, %c112_205], %199 {strides = array<i32>} : memref<32x16x144xf32, #tpu.memory_space<vmem>>, vector<15x16x16xf32>,
    %c1_206 = arith.constant 1 : index
    %c1_207 = arith.constant 1 : index
    %c0_208 = arith.constant 0 : index
    %201 = vector.load %arg8[%c1_206, %c1_207, %c0_208] : memref<32x16x16xf32, #tpu.memory_space<vmem>>, vector<15x15x16xf32>
    %c0_209 = arith.constant 0 : index
    %c0_210 = arith.constant 0 : index
    %c128_211 = arith.constant 128 : index
    %202 = vector.load %arg9[%c0_209, %c0_210, %c128_211] : memref<32x16x144xf32, #tpu.memory_space<vmem>>, vector<15x15x16xf32>
    tpu.vector_store %arg9[%c0_209, %c0_210, %c128_211], %201 {strides = array<i32>} : memref<32x16x144xf32, #tpu.memory_space<vmem>>, vector<15x15x16xf32>,
    %c17_212 = arith.constant 17 : index
    %c1_213 = arith.constant 1 : index
    %c0_214 = arith.constant 0 : index
    %203 = vector.load %arg8[%c17_212, %c1_213, %c0_214] : memref<32x16x16xf32, #tpu.memory_space<vmem>>, vector<15x15x16xf32>
    %c16_215 = arith.constant 16 : index
    %c0_216 = arith.constant 0 : index
    %c128_217 = arith.constant 128 : index
    %204 = vector.load %arg9[%c16_215, %c0_216, %c128_217] : memref<32x16x144xf32, #tpu.memory_space<vmem>>, vector<15x15x16xf32>
    tpu.vector_store %arg9[%c16_215, %c0_216, %c128_217], %203 {strides = array<i32>} : memref<32x16x144xf32, #tpu.memory_space<vmem>>, vector<15x15x16xf32>,
    %c0_218 = arith.constant 0 : index
    %c0_219 = arith.constant 0 : index
    %c0_220 = arith.constant 0 : index
    %205 = vector.load %arg5[%c0_218, %c0_219, %c0_220] : memref<32x3x16xf32, #tpu.memory_space<vmem>>, vector<32x3x16xf32>
    %c0_221 = arith.constant 0 : index
    %c0_222 = arith.constant 0 : index
    %c0_223 = arith.constant 0 : index
    %206 = vector.load %arg4[%c0_221, %c0_222, %c0_223] : memref<32x3x144xf32, #tpu.memory_space<vmem>>, vector<32x3x144xf32>
    %c0_224 = arith.constant 0 : index
    %c0_225 = arith.constant 0 : index
    %c0_226 = arith.constant 0 : index
    %207 = vector.load %arg9[%c0_224, %c0_225, %c0_226] : memref<32x16x144xf32, #tpu.memory_space<vmem>>, vector<32x16x144xf32>
    "tpu.trace_start"() <{level = 10 : i32, message = "gek,gtk->get"}> : () -> ()
    %cst_227 = arith.constant dense<0.000000e+00> : vector<32x3x16xf32>
    %208 = tpu.matmul %206, %207, %cst_227 {dimension_numbers = #tpu.dot_dimension_numbers<[2], [2], [1], [1], [0, 0, 0, 1, 1, 1], [0], [0]>} : vector<32x3x144xf32>, vector<32x16x144xf32>, vector<32x3x16xf32> -> vector<32x3x16xf32>
    "tpu.trace_stop"() : () -> ()
    %209 = arith.addf %205, %208 : vector<32x3x16xf32>
    %c0_228 = arith.constant 0 : index
    %c0_229 = arith.constant 0 : index
    %c0_230 = arith.constant 0 : index
    %210 = vector.load %arg6[%c0_228, %c0_229, %c0_230] : memref<32x3x16xf32, #tpu.memory_space<vmem>>, vector<32x3x16xf32>
    tpu.vector_store %arg6[%c0_228, %c0_229, %c0_230], %209 {strides = array<i32>} : memref<32x3x16xf32, #tpu.memory_space<vmem>>, vector<32x3x16xf32>,
    return
  }
  func.func @transform_0(%arg0: i32) -> (i32, i32) {
    %c0_i32 = arith.constant 0 : i32
    %c0_i32_0 = arith.constant 0 : i32
    %c0_i32_1 = arith.constant 0 : i32
    return %c0_i32, %c0_i32_0 : i32, i32
  }
  func.func @transform_1(%arg0: i32) -> (i32, i32) {
    %c0_i32 = arith.constant 0 : i32
    %c0_i32_0 = arith.constant 0 : i32
    %c0_i32_1 = arith.constant 0 : i32
    return %c0_i32, %c0_i32_0 : i32, i32
  }
  func.func @transform_2(%arg0: i32) -> (i32, i32) {
    %c0_i32 = arith.constant 0 : i32
    %c0_i32_0 = arith.constant 0 : i32
    %c0_i32_1 = arith.constant 0 : i32
    return %c0_i32, %c0_i32_0 : i32, i32
  }
  func.func @transform_3(%arg0: i32) -> (i32, i32, i32) {
    %c0_i32 = arith.constant 0 : i32
    %c0_i32_0 = arith.constant 0 : i32
    %c0_i32_1 = arith.constant 0 : i32
    %c0_i32_2 = arith.constant 0 : i32
    return %c0_i32, %c0_i32_0, %c0_i32_1 : i32, i32, i32
  }
  func.func @transform_4(%arg0: i32) -> (i32, i32, i32) {
    %c0_i32 = arith.constant 0 : i32
    %c0_i32_0 = arith.constant 0 : i32
    %c0_i32_1 = arith.constant 0 : i32
    %c0_i32_2 = arith.constant 0 : i32
    return %c0_i32, %c0_i32_0, %c0_i32_1 : i32, i32, i32
  }
  func.func @transform_5(%arg0: i32) -> (i32, i32, i32) {
    %c0_i32 = arith.constant 0 : i32
    %c0_i32_0 = arith.constant 0 : i32
    %c0_i32_1 = arith.constant 0 : i32
    %c0_i32_2 = arith.constant 0 : i32
    return %c0_i32, %c0_i32_0, %c0_i32_1 : i32, i32, i32
  }
}

</mosaic_0001>

<llo_original>
// kernel: model_forward.1
$region0: #{model_forward.1}
  #allocation0 [shape = 'u32[]', space=smem, size = 0x4, offset = 0x4, fixed_abs, tag = 'smem constant byte address 0x4 - core index']
  #allocation1 [shape = 'u32[72,128]{1,0:T(1,128)}', space=vmem, size = 0x9000, scoped, tag = 'internal scratch']
  #allocation2 [shape = 'f32[512,16]{1,0:T(8,128)}', space=vmem, size = 0x40000, scoped, tag = 'scratch operand']
  #allocation3 [shape = 'f32[32,16,16]{2,1,0:T(8,128)}', space=vmem, size = 0x40000, scoped, tag = 'scratch operand']
  #allocation4 [shape = 'f32[32,16,144]{2,1,0:T(8,128)}', space=vmem, size = 0x80000, scoped, tag = 'scratch operand']
  %s0 = inlined_call_operand.vmem [shape: f32[512,32], index: 0, kind: input, shape index: {}]
  %s1 = inlined_call_operand.vmem [shape: f32[32,16], index: 1, kind: input, shape index: {}]
  %s2 = inlined_call_operand.vmem [shape: f32[1,16], index: 2, kind: input, shape index: {}]
  %s3 = inlined_call_operand.vmem [shape: f32[32,3,144], index: 3, kind: input, shape index: {}]
  %s4 = inlined_call_operand.vmem [shape: f32[32,3,16], index: 4, kind: input, shape index: {}]
  %s5 = inlined_call_operand.vmem [shape: f32[32,3,16], index: 5, kind: output, shape index: {}]
  %s6 = sld [smem:[#allocation0]]
  $region30: #{model_forward.1} parent=0
    _
  %s8 = ssub.s32 1, %s6
  %s9 = scalar_select 0, %s8, %s6
  // Predicated region
  $region2: #{model_forward.1} parent=0 // pred_check
    _
  $region3: #{model_forward.1} parent=0 // pred_check_branch
    %11 = sbr.rel (0) target = $region5
  $region4: #{model_forward.1} parent=0 // pred_region
    _
  $region5: #{model_forward.1} parent=0 // pred_fallthru
    _
  // Predicated region
  $region6: #{model_forward.1} parent=0 // pred_check
    _
  $region7: #{model_forward.1} parent=0 // pred_check_branch
    %13 = sbr.rel (0) target = $region9
  $region8: #{model_forward.1} parent=0 // pred_region
    _
  $region9: #{model_forward.1} parent=0 // pred_fallthru
    _
  // Predicated region
  $region10: #{model_forward.1} parent=0 // pred_check
    _
  $region11: #{model_forward.1} parent=0 // pred_check_branch
    %15 = sbr.rel (0) target = $region13
  $region12: #{model_forward.1} parent=0 // pred_region
    _
  $region13: #{model_forward.1} parent=0 // pred_fallthru
    _
  // Predicated region
  $region14: #{model_forward.1} parent=0 // pred_check
    _
  $region15: #{model_forward.1} parent=0 // pred_check_branch
    %17 = sbr.rel (0) target = $region17
  $region16: #{model_forward.1} parent=0 // pred_region
    _
  $region17: #{model_forward.1} parent=0 // pred_fallthru
    _
  // Predicated region
  $region18: #{model_forward.1} parent=0 // pred_check
    _
  $region19: #{model_forward.1} parent=0 // pred_check_branch
    %19 = sbr.rel (0) target = $region21
  $region20: #{model_forward.1} parent=0 // pred_region
    _
  $region21: #{model_forward.1} parent=0 // pred_fallthru
    _
  %v20 = vld [vmem:[%s0] sm:$0xff]
  %v21 = vld [vmem:[%s0 + $0x8] sm:$0xff]
  %v22 = vld [vmem:[%s0 + $0x10] sm:$0xff]
  %v23 = vld [vmem:[%s0 + $0x18] sm:$0xff]
  %v24 = vld [vmem:[%s0 + $0x20] sm:$0xff]
  %v25 = vld [vmem:[%s0 + $0x28] sm:$0xff]
  %v26 = vld [vmem:[%s0 + $0x30] sm:$0xff]
  %v27 = vld [vmem:[%s0 + $0x38] sm:$0xff]
  %v28 = vld [vmem:[%s0 + $0x40] sm:$0xff]
  %v29 = vld [vmem:[%s0 + $0x48] sm:$0xff]
  %v30 = vld [vmem:[%s0 + $0x50] sm:$0xff]
  %v31 = vld [vmem:[%s0 + $0x58] sm:$0xff]
  %v32 = vld [vmem:[%s0 + $0x60] sm:$0xff]
  %v33 = vld [vmem:[%s0 + $0x68] sm:$0xff]
  %v34 = vld [vmem:[%s0 + $0x70] sm:$0xff]
  %v35 = vld [vmem:[%s0 + $0x78] sm:$0xff]
  %v36 = vld [vmem:[%s0 + $0x80] sm:$0xff]
  %v37 = vld [vmem:[%s0 + $0x88] sm:$0xff]
  %v38 = vld [vmem:[%s0 + $0x90] sm:$0xff]
  %v39 = vld [vmem:[%s0 + $0x98] sm:$0xff]
  %v40 = vld [vmem:[%s0 + $0xa0] sm:$0xff]
  %v41 = vld [vmem:[%s0 + $0xa8] sm:$0xff]
  %v42 = vld [vmem:[%s0 + $0xb0] sm:$0xff]
  %v43 = vld [vmem:[%s0 + $0xb8] sm:$0xff]
  %v44 = vld [vmem:[%s0 + $0xc0] sm:$0xff]
  %v45 = vld [vmem:[%s0 + $0xc8] sm:$0xff]
  %v46 = vld [vmem:[%s0 + $0xd0] sm:$0xff]
  %v47 = vld [vmem:[%s0 + $0xd8] sm:$0xff]
  %v48 = vld [vmem:[%s0 + $0xe0] sm:$0xff]
  %v49 = vld [vmem:[%s0 + $0xe8] sm:$0xff]
  %v50 = vld [vmem:[%s0 + $0xf0] sm:$0xff]
  %v51 = vld [vmem:[%s0 + $0xf8] sm:$0xff]
  %v52 = vld [vmem:[%s0 + $0x100] sm:$0xff]
  %v53 = vld [vmem:[%s0 + $0x108] sm:$0xff]
  %v54 = vld [vmem:[%s0 + $0x110] sm:$0xff]
  %v55 = vld [vmem:[%s0 + $0x118] sm:$0xff]
  %v56 = vld [vmem:[%s0 + $0x120] sm:$0xff]
  %v57 = vld [vmem:[%s0 + $0x128] sm:$0xff]
  %v58 = vld [vmem:[%s0 + $0x130] sm:$0xff]
  %v59 = vld [vmem:[%s0 + $0x138] sm:$0xff]
  %v60 = vld [vmem:[%s0 + $0x140] sm:$0xff]
  %v61 = vld [vmem:[%s0 + $0x148] sm:$0xff]
  %v62 = vld [vmem:[%s0 + $0x150] sm:$0xff]
  %v63 = vld [vmem:[%s0 + $0x158] sm:$0xff]
  %v64 = vld [vmem:[%s0 + $0x160] sm:$0xff]
  %v65 = vld [vmem:[%s0 + $0x168] sm:$0xff]
  %v66 = vld [vmem:[%s0 + $0x170] sm:$0xff]
  %v67 = vld [vmem:[%s0 + $0x178] sm:$0xff]
  %v68 = vld [vmem:[%s0 + $0x180] sm:$0xff]
  %v69 = vld [vmem:[%s0 + $0x188] sm:$0xff]
  %v70 = vld [vmem:[%s0 + $0x190] sm:$0xff]
  %v71 = vld [vmem:[%s0 + $0x198] sm:$0xff]
  %v72 = vld [vmem:[%s0 + $0x1a0] sm:$0xff]
  %v73 = vld [vmem:[%s0 + $0x1a8] sm:$0xff]
  %v74 = vld [vmem:[%s0 + $0x1b0] sm:$0xff]
  %v75 = vld [vmem:[%s0 + $0x1b8] sm:$0xff]
  %v76 = vld [vmem:[%s0 + $0x1c0] sm:$0xff]
  %v77 = vld [vmem:[%s0 + $0x1c8] sm:$0xff]
  %v78 = vld [vmem:[%s0 + $0x1d0] sm:$0xff]
  %v79 = vld [vmem:[%s0 + $0x1d8] sm:$0xff]
  %v80 = vld [vmem:[%s0 + $0x1e0] sm:$0xff]
  %v81 = vld [vmem:[%s0 + $0x1e8] sm:$0xff]
  %v82 = vld [vmem:[%s0 + $0x1f0] sm:$0xff]
  %v83 = vld [vmem:[%s0 + $0x1f8] sm:$0xff]
  %v84 = vld [vmem:[%s1] sm:$0xff]
  %v85 = vld [vmem:[%s1 + $0x8] sm:$0xff]
  %v86 = vld [vmem:[%s1 + $0x10] sm:$0xff]
  %v87 = vld [vmem:[%s1 + $0x18] sm:$0xff]
  %v88 = vld [vmem:[%s2] sm:$0x1]
  %v90 = vperm.slane %v88, 0
  %vm92 = vcmask 261120
  %v94 = vsel %vm92, %v20, 0
  %v97 = vsel %vm92, %v21, 0
  %v100 = vsel %vm92, %v22, 0
  %v103 = vsel %vm92, %v23, 0
  %v106 = vsel %vm92, %v24, 0
  %v109 = vsel %vm92, %v25, 0
  %v112 = vsel %vm92, %v26, 0
  %v115 = vsel %vm92, %v27, 0
  %v118 = vsel %vm92, %v28, 0
  %v121 = vsel %vm92, %v29, 0
  %v124 = vsel %vm92, %v30, 0
  %v127 = vsel %vm92, %v31, 0
  %v130 = vsel %vm92, %v32, 0
  %v133 = vsel %vm92, %v33, 0
  %v136 = vsel %vm92, %v34, 0
  %v139 = vsel %vm92, %v35, 0
  %v142 = vsel %vm92, %v36, 0
  %v145 = vsel %vm92, %v37, 0
  %v148 = vsel %vm92, %v38, 0
  %v151 = vsel %vm92, %v39, 0
  %v154 = vsel %vm92, %v40, 0
  %v157 = vsel %vm92, %v41, 0
  %v160 = vsel %vm92, %v42, 0
  %v163 = vsel %vm92, %v43, 0
  %v166 = vsel %vm92, %v44, 0
  %v169 = vsel %vm92, %v45, 0
  %v172 = vsel %vm92, %v46, 0
  %v175 = vsel %vm92, %v47, 0
  %v178 = vsel %vm92, %v48, 0
  %v181 = vsel %vm92, %v49, 0
  %v184 = vsel %vm92, %v50, 0
  %v187 = vsel %vm92, %v51, 0
  %v190 = vsel %vm92, %v52, 0
  %v193 = vsel %vm92, %v53, 0
  %v196 = vsel %vm92, %v54, 0
  %v199 = vsel %vm92, %v55, 0
  %v202 = vsel %vm92, %v56, 0
  %v205 = vsel %vm92, %v57, 0
  %v208 = vsel %vm92, %v58, 0
  %v211 = vsel %vm92, %v59, 0
  %v214 = vsel %vm92, %v60, 0
  %v217 = vsel %vm92, %v61, 0
  %v220 = vsel %vm92, %v62, 0
  %v223 = vsel %vm92, %v63, 0
  %v226 = vsel %vm92, %v64, 0
  %v229 = vsel %vm92, %v65, 0
  %v232 = vsel %vm92, %v66, 0
  %v235 = vsel %vm92, %v67, 0
  %v238 = vsel %vm92, %v68, 0
  %v241 = vsel %vm92, %v69, 0
  %v244 = vsel %vm92, %v70, 0
  %v247 = vsel %vm92, %v71, 0
  %v250 = vsel %vm92, %v72, 0
  %v253 = vsel %vm92, %v73, 0
  %v256 = vsel %vm92, %v74, 0
  %v259 = vsel %vm92, %v75, 0
  %v262 = vsel %vm92, %v76, 0
  %v265 = vsel %vm92, %v77, 0
  %v268 = vsel %vm92, %v78, 0
  %v271 = vsel %vm92, %v79, 0
  %v274 = vsel %vm92, %v80, 0
  %v277 = vsel %vm92, %v81, 0
  %v280 = vsel %vm92, %v82, 0
  %v283 = vsel %vm92, %v83, 0
  %285 = vmatpush.msra.mxu0 0.0
  %286 = vmatpush.msra.mxu0 0.0
  %287 = vmatpush.msra.mxu0 0.0
  %288 = vmatpush.msra.mxu0 0.0
  %289 = vmatpush.msra.mxu0 0.0
  %290 = vmatpush.msra.mxu0 0.0
  %291 = vmatpush.msra.mxu0 0.0
  %292 = vmatpush.msra.mxu0 0.0
  %293 = vmatpush.msra.mxu0 0.0
  %294 = vmatpush.msra.mxu0 0.0
  %295 = vmatpush.msra.mxu0 0.0
  %296 = vmatpush.msra.mxu0 0.0
  %297 = vmatpush.msra.mxu0 %v87
  %298 = vmatpush.msra.mxu0 %v86
  %299 = vmatpush.msra.mxu0 %v85
  %300 = vmatpush.msra.mxu0 %v84
  %301 = vmatmul.f32.gmra.mxu0 %v94
  %v302 = vpop.f32.mrf.mxu0
  %v303 = vadd.f32 %v90, %v302
  %304 = vmatmul.f32.gmra.mxu0 %v97
  %v305 = vpop.f32.mrf.mxu0
  %v306 = vadd.f32 %v90, %v305
  %307 = vmatmul.f32.gmra.mxu0 %v100
  %v308 = vpop.f32.mrf.mxu0
  %v309 = vadd.f32 %v90, %v308
  %310 = vmatmul.f32.gmra.mxu0 %v103
  %v311 = vpop.f32.mrf.mxu0
  %v312 = vadd.f32 %v90, %v311
  %313 = vmatmul.f32.gmra.mxu0 %v106
  %v314 = vpop.f32.mrf.mxu0
  %v315 = vadd.f32 %v90, %v314
  %316 = vmatmul.f32.gmra.mxu0 %v109
  %v317 = vpop.f32.mrf.mxu0
  %v318 = vadd.f32 %v90, %v317
  %319 = vmatmul.f32.gmra.mxu0 %v112
  %v320 = vpop.f32.mrf.mxu0
  %v321 = vadd.f32 %v90, %v320
  %322 = vmatmul.f32.gmra.mxu0 %v115
  %v323 = vpop.f32.mrf.mxu0
  %v324 = vadd.f32 %v90, %v323
  %325 = vmatmul.f32.gmra.mxu0 %v118
  %v326 = vpop.f32.mrf.mxu0
  %v327 = vadd.f32 %v90, %v326
  %328 = vmatmul.f32.gmra.mxu0 %v121
  %v329 = vpop.f32.mrf.mxu0
  %v330 = vadd.f32 %v90, %v329
  %331 = vmatmul.f32.gmra.mxu0 %v124
  %v332 = vpop.f32.mrf.mxu0
  %v333 = vadd.f32 %v90, %v332
  %334 = vmatmul.f32.gmra.mxu0 %v127
  %v335 = vpop.f32.mrf.mxu0
  %v336 = vadd.f32 %v90, %v335
  %337 = vmatmul.f32.gmra.mxu0 %v130
  %v338 = vpop.f32.mrf.mxu0
  %v339 = vadd.f32 %v90, %v338
  %340 = vmatmul.f32.gmra.mxu0 %v133
  %v341 = vpop.f32.mrf.mxu0
  %v342 = vadd.f32 %v90, %v341
  %343 = vmatmul.f32.gmra.mxu0 %v136
  %v344 = vpop.f32.mrf.mxu0
  %v345 = vadd.f32 %v90, %v344
  %346 = vmatmul.f32.gmra.mxu0 %v139
  %v347 = vpop.f32.mrf.mxu0
  %v348 = vadd.f32 %v90, %v347
  %349 = vmatmul.f32.gmra.mxu0 %v142
  %v350 = vpop.f32.mrf.mxu0
  %v351 = vadd.f32 %v90, %v350
  %352 = vmatmul.f32.gmra.mxu0 %v145
  %v353 = vpop.f32.mrf.mxu0
  %v354 = vadd.f32 %v90, %v353
  %355 = vmatmul.f32.gmra.mxu0 %v148
  %v356 = vpop.f32.mrf.mxu0
  %v357 = vadd.f32 %v90, %v356
  %358 = vmatmul.f32.gmra.mxu0 %v151
  %v359 = vpop.f32.mrf.mxu0
  %v360 = vadd.f32 %v90, %v359
  %361 = vmatmul.f32.gmra.mxu0 %v154
  %v362 = vpop.f32.mrf.mxu0
  %v363 = vadd.f32 %v90, %v362
  %364 = vmatmul.f32.gmra.mxu0 %v157
  %v365 = vpop.f32.mrf.mxu0
  %v366 = vadd.f32 %v90, %v365
  %367 = vmatmul.f32.gmra.mxu0 %v160
  %v368 = vpop.f32.mrf.mxu0
  %v369 = vadd.f32 %v90, %v368
  %370 = vmatmul.f32.gmra.mxu0 %v163
  %v371 = vpop.f32.mrf.mxu0
  %v372 = vadd.f32 %v90, %v371
  %373 = vmatmul.f32.gmra.mxu0 %v166
  %v374 = vpop.f32.mrf.mxu0
  %v375 = vadd.f32 %v90, %v374
  %376 = vmatmul.f32.gmra.mxu0 %v169
  %v377 = vpop.f32.mrf.mxu0
  %v378 = vadd.f32 %v90, %v377
  %379 = vmatmul.f32.gmra.mxu0 %v172
  %v380 = vpop.f32.mrf.mxu0
  %v381 = vadd.f32 %v90, %v380
  %382 = vmatmul.f32.gmra.mxu0 %v175
  %v383 = vpop.f32.mrf.mxu0
  %v384 = vadd.f32 %v90, %v383
  %385 = vmatmul.f32.gmra.mxu0 %v178
  %v386 = vpop.f32.mrf.mxu0
  %v387 = vadd.f32 %v90, %v386
  %388 = vmatmul.f32.gmra.mxu0 %v181
  %v389 = vpop.f32.mrf.mxu0
  %v390 = vadd.f32 %v90, %v389
  %391 = vmatmul.f32.gmra.mxu0 %v184
  %v392 = vpop.f32.mrf.mxu0
  %v393 = vadd.f32 %v90, %v392
  %394 = vmatmul.f32.gmra.mxu0 %v187
  %v395 = vpop.f32.mrf.mxu0
  %v396 = vadd.f32 %v90, %v395
  %397 = vmatmul.f32.gmra.mxu0 %v190
  %v398 = vpop.f32.mrf.mxu0
  %v399 = vadd.f32 %v90, %v398
  %400 = vmatmul.f32.gmra.mxu0 %v193
  %v401 = vpop.f32.mrf.mxu0
  %v402 = vadd.f32 %v90, %v401
  %403 = vmatmul.f32.gmra.mxu0 %v196
  %v404 = vpop.f32.mrf.mxu0
  %v405 = vadd.f32 %v90, %v404
  %406 = vmatmul.f32.gmra.mxu0 %v199
  %v407 = vpop.f32.mrf.mxu0
  %v408 = vadd.f32 %v90, %v407
  %409 = vmatmul.f32.gmra.mxu0 %v202
  %v410 = vpop.f32.mrf.mxu0
  %v411 = vadd.f32 %v90, %v410
  %412 = vmatmul.f32.gmra.mxu0 %v205
  %v413 = vpop.f32.mrf.mxu0
  %v414 = vadd.f32 %v90, %v413
  %415 = vmatmul.f32.gmra.mxu0 %v208
  %v416 = vpop.f32.mrf.mxu0
  %v417 = vadd.f32 %v90, %v416
  %418 = vmatmul.f32.gmra.mxu0 %v211
  %v419 = vpop.f32.mrf.mxu0
  %v420 = vadd.f32 %v90, %v419
  %421 = vmatmul.f32.gmra.mxu0 %v214
  %v422 = vpop.f32.mrf.mxu0
  %v423 = vadd.f32 %v90, %v422
  %424 = vmatmul.f32.gmra.mxu0 %v217
  %v425 = vpop.f32.mrf.mxu0
  %v426 = vadd.f32 %v90, %v425
  %427 = vmatmul.f32.gmra.mxu0 %v220
  %v428 = vpop.f32.mrf.mxu0
  %v429 = vadd.f32 %v90, %v428
  %430 = vmatmul.f32.gmra.mxu0 %v223
  %v431 = vpop.f32.mrf.mxu0
  %v432 = vadd.f32 %v90, %v431
  %433 = vmatmul.f32.gmra.mxu0 %v226
  %v434 = vpop.f32.mrf.mxu0
  %v435 = vadd.f32 %v90, %v434
  %436 = vmatmul.f32.gmra.mxu0 %v229
  %v437 = vpop.f32.mrf.mxu0
  %v438 = vadd.f32 %v90, %v437
  %439 = vmatmul.f32.gmra.mxu0 %v232
  %v440 = vpop.f32.mrf.mxu0
  %v441 = vadd.f32 %v90, %v440
  %442 = vmatmul.f32.gmra.mxu0 %v235
  %v443 = vpop.f32.mrf.mxu0
  %v444 = vadd.f32 %v90, %v443
  %445 = vmatmul.f32.gmra.mxu0 %v238
  %v446 = vpop.f32.mrf.mxu0
  %v447 = vadd.f32 %v90, %v446
  %448 = vmatmul.f32.gmra.mxu0 %v241
  %v449 = vpop.f32.mrf.mxu0
  %v450 = vadd.f32 %v90, %v449
  %451 = vmatmul.f32.gmra.mxu0 %v244
  %v452 = vpop.f32.mrf.mxu0
  %v453 = vadd.f32 %v90, %v452
  %454 = vmatmul.f32.gmra.mxu0 %v247
  %v455 = vpop.f32.mrf.mxu0
  %v456 = vadd.f32 %v90, %v455
  %457 = vmatmul.f32.gmra.mxu0 %v250
  %v458 = vpop.f32.mrf.mxu0
  %v459 = vadd.f32 %v90, %v458
  %460 = vmatmul.f32.gmra.mxu0 %v253
  %v461 = vpop.f32.mrf.mxu0
  %v462 = vadd.f32 %v90, %v461
  %463 = vmatmul.f32.gmra.mxu0 %v256
  %v464 = vpop.f32.mrf.mxu0
  %v465 = vadd.f32 %v90, %v464
  %466 = vmatmul.f32.gmra.mxu0 %v259
  %v467 = vpop.f32.mrf.mxu0
  %v468 = vadd.f32 %v90, %v467
  %469 = vmatmul.f32.gmra.mxu0 %v262
  %v470 = vpop.f32.mrf.mxu0
  %v471 = vadd.f32 %v90, %v470
  %472 = vmatmul.f32.gmra.mxu0 %v265
  %v473 = vpop.f32.mrf.mxu0
  %v474 = vadd.f32 %v90, %v473
  %475 = vmatmul.f32.gmra.mxu0 %v268
  %v476 = vpop.f32.mrf.mxu0
  %v477 = vadd.f32 %v90, %v476
  %478 = vmatmul.f32.gmra.mxu0 %v271
  %v479 = vpop.f32.mrf.mxu0
  %v480 = vadd.f32 %v90, %v479
  %481 = vmatmul.f32.gmra.mxu0 %v274
  %v482 = vpop.f32.mrf.mxu0
  %v483 = vadd.f32 %v90, %v482
  %484 = vmatmul.f32.gmra.mxu0 %v277
  %v485 = vpop.f32.mrf.mxu0
  %v486 = vadd.f32 %v90, %v485
  %487 = vmatmul.f32.gmra.mxu0 %v280
  %v488 = vpop.f32.mrf.mxu0
  %v489 = vadd.f32 %v90, %v488
  %490 = vmatmul.f32.gmra.mxu0 %v283
  %v491 = vpop.f32.mrf.mxu0
  %v492 = vadd.f32 %v90, %v491
  %493 = vdwg.mxu0
  %vm494 = vcmask 130048
  %495 = vst.msk [vmem:[#allocation2] sm:$0xff] %vm494, %v303
  %496 = vst.msk [vmem:[#allocation2 + $0x8] sm:$0xff] %vm494, %v306
  %497 = vst.msk [vmem:[#allocation2 + $0x10] sm:$0xff] %vm494, %v309
  %498 = vst.msk [vmem:[#allocation2 + $0x18] sm:$0xff] %vm494, %v312
  %499 = vst.msk [vmem:[#allocation2 + $0x20] sm:$0xff] %vm494, %v315
  %500 = vst.msk [vmem:[#allocation2 + $0x28] sm:$0xff] %vm494, %v318
  %501 = vst.msk [vmem:[#allocation2 + $0x30] sm:$0xff] %vm494, %v321
  %502 = vst.msk [vmem:[#allocation2 + $0x38] sm:$0xff] %vm494, %v324
  %503 = vst.msk [vmem:[#allocation2 + $0x40] sm:$0xff] %vm494, %v327
  %504 = vst.msk [vmem:[#allocation2 + $0x48] sm:$0xff] %vm494, %v330
  %505 = vst.msk [vmem:[#allocation2 + $0x50] sm:$0xff] %vm494, %v333
  %506 = vst.msk [vmem:[#allocation2 + $0x58] sm:$0xff] %vm494, %v336
  %507 = vst.msk [vmem:[#allocation2 + $0x60] sm:$0xff] %vm494, %v339
  %508 = vst.msk [vmem:[#allocation2 + $0x68] sm:$0xff] %vm494, %v342
  %509 = vst.msk [vmem:[#allocation2 + $0x70] sm:$0xff] %vm494, %v345
  %510 = vst.msk [vmem:[#allocation2 + $0x78] sm:$0xff] %vm494, %v348
  %511 = vst.msk [vmem:[#allocation2 + $0x80] sm:$0xff] %vm494, %v351
  %512 = vst.msk [vmem:[#allocation2 + $0x88] sm:$0xff] %vm494, %v354
  %513 = vst.msk [vmem:[#allocation2 + $0x90] sm:$0xff] %vm494, %v357
  %514 = vst.msk [vmem:[#allocation2 + $0x98] sm:$0xff] %vm494, %v360
  %515 = vst.msk [vmem:[#allocation2 + $0xa0] sm:$0xff] %vm494, %v363
  %516 = vst.msk [vmem:[#allocation2 + $0xa8] sm:$0xff] %vm494, %v366
  %517 = vst.msk [vmem:[#allocation2 + $0xb0] sm:$0xff] %vm494, %v369
  %518 = vst.msk [vmem:[#allocation2 + $0xb8] sm:$0xff] %vm494, %v372
  %519 = vst.msk [vmem:[#allocation2 + $0xc0] sm:$0xff] %vm494, %v375
  %520 = vst.msk [vmem:[#allocation2 + $0xc8] sm:$0xff] %vm494, %v378
  %521 = vst.msk [vmem:[#allocation2 + $0xd0] sm:$0xff] %vm494, %v381
  %522 = vst.msk [vmem:[#allocation2 + $0xd8] sm:$0xff] %vm494, %v384
  %523 = vst.msk [vmem:[#allocation2 + $0xe0] sm:$0xff] %vm494, %v387
  %524 = vst.msk [vmem:[#allocation2 + $0xe8] sm:$0xff] %vm494, %v390
  %525 = vst.msk [vmem:[#allocation2 + $0xf0] sm:$0xff] %vm494, %v393
  %526 = vst.msk [vmem:[#allocation2 + $0xf8] sm:$0xff] %vm494, %v396
  %527 = vst.msk [vmem:[#allocation2 + $0x100] sm:$0xff] %vm494, %v399
  %528 = vst.msk [vmem:[#allocation2 + $0x108] sm:$0xff] %vm494, %v402
  %529 = vst.msk [vmem:[#allocation2 + $0x110] sm:$0xff] %vm494, %v405
  %530 = vst.msk [vmem:[#allocation2 + $0x118] sm:$0xff] %vm494, %v408
  %531 = vst.msk [vmem:[#allocation2 + $0x120] sm:$0xff] %vm494, %v411
  %532 = vst.msk [vmem:[#allocation2 + $0x128] sm:$0xff] %vm494, %v414
  %533 = vst.msk [vmem:[#allocation2 + $0x130] sm:$0xff] %vm494, %v417
  %534 = vst.msk [vmem:[#allocation2 + $0x138] sm:$0xff] %vm494, %v420
  %535 = vst.msk [vmem:[#allocation2 + $0x140] sm:$0xff] %vm494, %v423
  %536 = vst.msk [vmem:[#allocation2 + $0x148] sm:$0xff] %vm494, %v426
  %537 = vst.msk [vmem:[#allocation2 + $0x150] sm:$0xff] %vm494, %v429
  %538 = vst.msk [vmem:[#allocation2 + $0x158] sm:$0xff] %vm494, %v432
  %539 = vst.msk [vmem:[#allocation2 + $0x160] sm:$0xff] %vm494, %v435
  %540 = vst.msk [vmem:[#allocation2 + $0x168] sm:$0xff] %vm494, %v438
  %541 = vst.msk [vmem:[#allocation2 + $0x170] sm:$0xff] %vm494, %v441
  %542 = vst.msk [vmem:[#allocation2 + $0x178] sm:$0xff] %vm494, %v444
  %543 = vst.msk [vmem:[#allocation2 + $0x180] sm:$0xff] %vm494, %v447
  %544 = vst.msk [vmem:[#allocation2 + $0x188] sm:$0xff] %vm494, %v450
  %545 = vst.msk [vmem:[#allocation2 + $0x190] sm:$0xff] %vm494, %v453
  %546 = vst.msk [vmem:[#allocation2 + $0x198] sm:$0xff] %vm494, %v456
  %547 = vst.msk [vmem:[#allocation2 + $0x1a0] sm:$0xff] %vm494, %v459
  %548 = vst.msk [vmem:[#allocation2 + $0x1a8] sm:$0xff] %vm494, %v462
  %549 = vst.msk [vmem:[#allocation2 + $0x1b0] sm:$0xff] %vm494, %v465
  %550 = vst.msk [vmem:[#allocation2 + $0x1b8] sm:$0xff] %vm494, %v468
  %551 = vst.msk [vmem:[#allocation2 + $0x1c0] sm:$0xff] %vm494, %v471
  %552 = vst.msk [vmem:[#allocation2 + $0x1c8] sm:$0xff] %vm494, %v474
  %553 = vst.msk [vmem:[#allocation2 + $0x1d0] sm:$0xff] %vm494, %v477
  %554 = vst.msk [vmem:[#allocation2 + $0x1d8] sm:$0xff] %vm494, %v480
  %555 = vst.msk [vmem:[#allocation2 + $0x1e0] sm:$0xff] %vm494, %v483
  %556 = vst.msk [vmem:[#allocation2 + $0x1e8] sm:$0xff] %vm494, %v486
  %557 = vst.msk [vmem:[#allocation2 + $0x1f0] sm:$0xff] %vm494, %v489
  %558 = vst.msk [vmem:[#allocation2 + $0x1f8] sm:$0xff] %vm494, %v492
  %v559 = vld [vmem:[#allocation2] sm:$0xff]
  %v560 = vld [vmem:[#allocation2 + $0x8] sm:$0xff]
  %561 = vxpose.xlu0.b32.start [1/16] %v559, 128
  %562 = vxpose.xlu0.b32.cont [2/16] %v560, 128
  %563 = vxpose.xlu0.b32.cont [3/16] 0.0, 128
  %564 = vxpose.xlu0.b32.cont [4/16] 0.0, 128
  %565 = vxpose.xlu0.b32.cont [5/16] 0.0, 128
  %566 = vxpose.xlu0.b32.cont [6/16] 0.0, 128
  %567 = vxpose.xlu0.b32.cont [7/16] 0.0, 128
  %568 = vxpose.xlu0.b32.cont [8/16] 0.0, 128
  %569 = vxpose.xlu0.b32.cont [9/16] 0.0, 128
  %570 = vxpose.xlu0.b32.cont [10/16] 0.0, 128
  %571 = vxpose.xlu0.b32.cont [11/16] 0.0, 128
  %572 = vxpose.xlu0.b32.cont [12/16] 0.0, 128
  %573 = vxpose.xlu0.b32.cont [13/16] 0.0, 128
  %574 = vxpose.xlu0.b32.cont [14/16] 0.0, 128
  %575 = vxpose.xlu0.b32.cont [15/16] 0.0, 128
  %576 = vxpose.xlu0.b32.end [16/16] 0.0, 128
  %v577 = vpop.trf.xlu0
  %v578 = vpop.trf.xlu0
  %v579 = vpop.trf.xlu0
  %v580 = vpop.trf.xlu0
  %v581 = vpop.trf.xlu0
  %v582 = vpop.trf.xlu0
  %v583 = vpop.trf.xlu0
  %v584 = vpop.trf.xlu0
  %v585 = vpop.trf.xlu0
  %v586 = vpop.trf.xlu0
  %v587 = vpop.trf.xlu0
  %v588 = vpop.trf.xlu0
  %v589 = vpop.trf.xlu0
  %v590 = vpop.trf.xlu0
  %v591 = vpop.trf.xlu0
  %v592 = vpop.trf.xlu0
  %593 = vst.msk [vmem:[#allocation3] sm:$0xff] %vm494, %v577
  %594 = vst.msk [vmem:[#allocation3 + $0x8] sm:$0xff] %vm494, %v578
  %v595 = vld [vmem:[#allocation2 + $0x10] sm:$0xff]
  %v596 = vld [vmem:[#allocation2 + $0x18] sm:$0xff]
  %597 = vxpose.xlu0.b32.start [1/16] %v595, 128
  %598 = vxpose.xlu0.b32.cont [2/16] %v596, 128
  %599 = vxpose.xlu0.b32.cont [3/16] 0.0, 128
  %600 = vxpose.xlu0.b32.cont [4/16] 0.0, 128
  %601 = vxpose.xlu0.b32.cont [5/16] 0.0, 128
  %602 = vxpose.xlu0.b32.cont [6/16] 0.0, 128
  %603 = vxpose.xlu0.b32.cont [7/16] 0.0, 128
  %604 = vxpose.xlu0.b32.cont [8/16] 0.0, 128
  %605 = vxpose.xlu0.b32.cont [9/16] 0.0, 128
  %606 = vxpose.xlu0.b32.cont [10/16] 0.0, 128
  %607 = vxpose.xlu0.b32.cont [11/16] 0.0, 128
  %608 = vxpose.xlu0.b32.cont [12/16] 0.0, 128
  %609 = vxpose.xlu0.b32.cont [13/16] 0.0, 128
  %610 = vxpose.xlu0.b32.cont [14/16] 0.0, 128
  %611 = vxpose.xlu0.b32.cont [15/16] 0.0, 128
  %612 = vxpose.xlu0.b32.end [16/16] 0.0, 128
  %v613 = vpop.trf.xlu0
  %v614 = vpop.trf.xlu0
  %v615 = vpop.trf.xlu0
  %v616 = vpop.trf.xlu0
  %v617 = vpop.trf.xlu0
  %v618 = vpop.trf.xlu0
  %v619 = vpop.trf.xlu0
  %v620 = vpop.trf.xlu0
  %v621 = vpop.trf.xlu0
  %v622 = vpop.trf.xlu0
  %v623 = vpop.trf.xlu0
  %v624 = vpop.trf.xlu0
  %v625 = vpop.trf.xlu0
  %v626 = vpop.trf.xlu0
  %v627 = vpop.trf.xlu0
  %v628 = vpop.trf.xlu0
  %s629 = scalar_lea.vmem [#allocation3], 16
  %630 = vst.msk [vmem:[%s629] sm:$0xff] %vm494, %v613
  %631 = vst.msk [vmem:[%s629 + $0x8] sm:$0xff] %vm494, %v614
  %v632 = vld [vmem:[#allocation2 + $0x20] sm:$0xff]
  %v633 = vld [vmem:[#allocation2 + $0x28] sm:$0xff]
  %634 = vxpose.xlu0.b32.start [1/16] %v632, 128
  %635 = vxpose.xlu0.b32.cont [2/16] %v633, 128
  %636 = vxpose.xlu0.b32.cont [3/16] 0.0, 128
  %637 = vxpose.xlu0.b32.cont [4/16] 0.0, 128
  %638 = vxpose.xlu0.b32.cont [5/16] 0.0, 128
  %639 = vxpose.xlu0.b32.cont [6/16] 0.0, 128
  %640 = vxpose.xlu0.b32.cont [7/16] 0.0, 128
  %641 = vxpose.xlu0.b32.cont [8/16] 0.0, 128
  %642 = vxpose.xlu0.b32.cont [9/16] 0.0, 128
  %643 = vxpose.xlu0.b32.cont [10/16] 0.0, 128
  %644 = vxpose.xlu0.b32.cont [11/16] 0.0, 128
  %645 = vxpose.xlu0.b32.cont [12/16] 0.0, 128
  %646 = vxpose.xlu0.b32.cont [13/16] 0.0, 128
  %647 = vxpose.xlu0.b32.cont [14/16] 0.0, 128
  %648 = vxpose.xlu0.b32.cont [15/16] 0.0, 128
  %649 = vxpose.xlu0.b32.end [16/16] 0.0, 128
  %v650 = vpop.trf.xlu0
  %v651 = vpop.trf.xlu0
  %v652 = vpop.trf.xlu0
  %v653 = vpop.trf.xlu0
  %v654 = vpop.trf.xlu0
  %v655 = vpop.trf.xlu0
  %v656 = vpop.trf.xlu0
  %v657 = vpop.trf.xlu0
  %v658 = vpop.trf.xlu0
  %v659 = vpop.trf.xlu0
  %v660 = vpop.trf.xlu0
  %v661 = vpop.trf.xlu0
  %v662 = vpop.trf.xlu0
  %v663 = vpop.trf.xlu0
  %v664 = vpop.trf.xlu0
  %v665 = vpop.trf.xlu0
  %s666 = scalar_lea.vmem [#allocation3], 32
  %667 = vst.msk [vmem:[%s666] sm:$0xff] %vm494, %v650
  %668 = vst.msk [vmem:[%s666 + $0x8] sm:$0xff] %vm494, %v651
  %v669 = vld [vmem:[#allocation2 + $0x30] sm:$0xff]
  %v670 = vld [vmem:[#allocation2 + $0x38] sm:$0xff]
  %671 = vxpose.xlu0.b32.start [1/16] %v669, 128
  %672 = vxpose.xlu0.b32.cont [2/16] %v670, 128
  %673 = vxpose.xlu0.b32.cont [3/16] 0.0, 128
  %674 = vxpose.xlu0.b32.cont [4/16] 0.0, 128
  %675 = vxpose.xlu0.b32.cont [5/16] 0.0, 128
  %676 = vxpose.xlu0.b32.cont [6/16] 0.0, 128
  %677 = vxpose.xlu0.b32.cont [7/16] 0.0, 128
  %678 = vxpose.xlu0.b32.cont [8/16] 0.0, 128
  %679 = vxpose.xlu0.b32.cont [9/16] 0.0, 128
  %680 = vxpose.xlu0.b32.cont [10/16] 0.0, 128
  %681 = vxpose.xlu0.b32.cont [11/16] 0.0, 128
  %682 = vxpose.xlu0.b32.cont [12/16] 0.0, 128
  %683 = vxpose.xlu0.b32.cont [13/16] 0.0, 128
  %684 = vxpose.xlu0.b32.cont [14/16] 0.0, 128
  %685 = vxpose.xlu0.b32.cont [15/16] 0.0, 128
  %686 = vxpose.xlu0.b32.end [16/16] 0.0, 128
  %v687 = vpop.trf.xlu0
  %v688 = vpop.trf.xlu0
  %v689 = vpop.trf.xlu0
  %v690 = vpop.trf.xlu0
  %v691 = vpop.trf.xlu0
  %v692 = vpop.trf.xlu0
  %v693 = vpop.trf.xlu0
  %v694 = vpop.trf.xlu0
  %v695 = vpop.trf.xlu0
  %v696 = vpop.trf.xlu0
  %v697 = vpop.trf.xlu0
  %v698 = vpop.trf.xlu0
  %v699 = vpop.trf.xlu0
  %v700 = vpop.trf.xlu0
  %v701 = vpop.trf.xlu0
  %v702 = vpop.trf.xlu0
  %s703 = scalar_lea.vmem [#allocation3], 48
  %704 = vst.msk [vmem:[%s703] sm:$0xff] %vm494, %v687
  %705 = vst.msk [vmem:[%s703 + $0x8] sm:$0xff] %vm494, %v688
  %v706 = vld [vmem:[#allocation2 + $0x40] sm:$0xff]
  %v707 = vld [vmem:[#allocation2 + $0x48] sm:$0xff]
  %708 = vxpose.xlu0.b32.start [1/16] %v706, 128
  %709 = vxpose.xlu0.b32.cont [2/16] %v707, 128
  %710 = vxpose.xlu0.b32.cont [3/16] 0.0, 128
  %711 = vxpose.xlu0.b32.cont [4/16] 0.0, 128
  %712 = vxpose.xlu0.b32.cont [5/16] 0.0, 128
  %713 = vxpose.xlu0.b32.cont [6/16] 0.0, 128
  %714 = vxpose.xlu0.b32.cont [7/16] 0.0, 128
  %715 = vxpose.xlu0.b32.cont [8/16] 0.0, 128
  %716 = vxpose.xlu0.b32.cont [9/16] 0.0, 128
  %717 = vxpose.xlu0.b32.cont [10/16] 0.0, 128
  %718 = vxpose.xlu0.b32.cont [11/16] 0.0, 128
  %719 = vxpose.xlu0.b32.cont [12/16] 0.0, 128
  %720 = vxpose.xlu0.b32.cont [13/16] 0.0, 128
  %721 = vxpose.xlu0.b32.cont [14/16] 0.0, 128
  %722 = vxpose.xlu0.b32.cont [15/16] 0.0, 128
  %723 = vxpose.xlu0.b32.end [16/16] 0.0, 128
  %v724 = vpop.trf.xlu0
  %v725 = vpop.trf.xlu0
  %v726 = vpop.trf.xlu0
  %v727 = vpop.trf.xlu0
  %v728 = vpop.trf.xlu0
  %v729 = vpop.trf.xlu0
  %v730 = vpop.trf.xlu0
  %v731 = vpop.trf.xlu0
  %v732 = vpop.trf.xlu0
  %v733 = vpop.trf.xlu0
  %v734 = vpop.trf.xlu0
  %v735 = vpop.trf.xlu0
  %v736 = vpop.trf.xlu0
  %v737 = vpop.trf.xlu0
  %v738 = vpop.trf.xlu0
  %v739 = vpop.trf.xlu0
  %s740 = scalar_lea.vmem [#allocation3], 64
  %741 = vst.msk [vmem:[%s740] sm:$0xff] %vm494, %v724
  %742 = vst.msk [vmem:[%s740 + $0x8] sm:$0xff] %vm494, %v725
  %v743 = vld [vmem:[#allocation2 + $0x50] sm:$0xff]
  %v744 = vld [vmem:[#allocation2 + $0x58] sm:$0xff]
  %745 = vxpose.xlu0.b32.start [1/16] %v743, 128
  %746 = vxpose.xlu0.b32.cont [2/16] %v744, 128
  %747 = vxpose.xlu0.b32.cont [3/16] 0.0, 128
  %748 = vxpose.xlu0.b32.cont [4/16] 0.0, 128
  %749 = vxpose.xlu0.b32.cont [5/16] 0.0, 128
  %750 = vxpose.xlu0.b32.cont [6/16] 0.0, 128
  %751 = vxpose.xlu0.b32.cont [7/16] 0.0, 128
  %752 = vxpose.xlu0.b32.cont [8/16] 0.0, 128
  %753 = vxpose.xlu0.b32.cont [9/16] 0.0, 128
  %754 = vxpose.xlu0.b32.cont [10/16] 0.0, 128
  %755 = vxpose.xlu0.b32.cont [11/16] 0.0, 128
  %756 = vxpose.xlu0.b32.cont [12/16] 0.0, 128
  %757 = vxpose.xlu0.b32.cont [13/16] 0.0, 128
  %758 = vxpose.xlu0.b32.cont [14/16] 0.0, 128
  %759 = vxpose.xlu0.b32.cont [15/16] 0.0, 128
  %760 = vxpose.xlu0.b32.end [16/16] 0.0, 128
  %v761 = vpop.trf.xlu0
  %v762 = vpop.trf.xlu0
  %v763 = vpop.trf.xlu0
  %v764 = vpop.trf.xlu0
  %v765 = vpop.trf.xlu0
  %v766 = vpop.trf.xlu0
  %v767 = vpop.trf.xlu0
  %v768 = vpop.trf.xlu0
  %v769 = vpop.trf.xlu0
  %v770 = vpop.trf.xlu0
  %v771 = vpop.trf.xlu0
  %v772 = vpop.trf.xlu0
  %v773 = vpop.trf.xlu0
  %v774 = vpop.trf.xlu0
  %v775 = vpop.trf.xlu0
  %v776 = vpop.trf.xlu0
  %s777 = scalar_lea.vmem [#allocation3], 80
  %778 = vst.msk [vmem:[%s777] sm:$0xff] %vm494, %v761
  %779 = vst.msk [vmem:[%s777 + $0x8] sm:$0xff] %vm494, %v762
  %v780 = vld [vmem:[#allocation2 + $0x60] sm:$0xff]
  %v781 = vld [vmem:[#allocation2 + $0x68] sm:$0xff]
  %782 = vxpose.xlu0.b32.start [1/16] %v780, 128
  %783 = vxpose.xlu0.b32.cont [2/16] %v781, 128
  %784 = vxpose.xlu0.b32.cont [3/16] 0.0, 128
  %785 = vxpose.xlu0.b32.cont [4/16] 0.0, 128
  %786 = vxpose.xlu0.b32.cont [5/16] 0.0, 128
  %787 = vxpose.xlu0.b32.cont [6/16] 0.0, 128
  %788 = vxpose.xlu0.b32.cont [7/16] 0.0, 128
  %789 = vxpose.xlu0.b32.cont [8/16] 0.0, 128
  %790 = vxpose.xlu0.b32.cont [9/16] 0.0, 128
  %791 = vxpose.xlu0.b32.cont [10/16] 0.0, 128
  %792 = vxpose.xlu0.b32.cont [11/16] 0.0, 128
  %793 = vxpose.xlu0.b32.cont [12/16] 0.0, 128
  %794 = vxpose.xlu0.b32.cont [13/16] 0.0, 128
  %795 = vxpose.xlu0.b32.cont [14/16] 0.0, 128
  %796 = vxpose.xlu0.b32.cont [15/16] 0.0, 128
  %797 = vxpose.xlu0.b32.end [16/16] 0.0, 128
  %v798 = vpop.trf.xlu0
  %v799 = vpop.trf.xlu0
  %v800 = vpop.trf.xlu0
  %v801 = vpop.trf.xlu0
  %v802 = vpop.trf.xlu0
  %v803 = vpop.trf.xlu0
  %v804 = vpop.trf.xlu0
  %v805 = vpop.trf.xlu0
  %v806 = vpop.trf.xlu0
  %v807 = vpop.trf.xlu0
  %v808 = vpop.trf.xlu0
  %v809 = vpop.trf.xlu0
  %v810 = vpop.trf.xlu0
  %v811 = vpop.trf.xlu0
  %v812 = vpop.trf.xlu0
  %v813 = vpop.trf.xlu0
  %s814 = scalar_lea.vmem [#allocation3], 96
  %815 = vst.msk [vmem:[%s814] sm:$0xff] %vm494, %v798
  %816 = vst.msk [vmem:[%s814 + $0x8] sm:$0xff] %vm494, %v799
  %v817 = vld [vmem:[#allocation2 + $0x70] sm:$0xff]
  %v818 = vld [vmem:[#allocation2 + $0x78] sm:$0xff]
  %819 = vxpose.xlu0.b32.start [1/16] %v817, 128
  %820 = vxpose.xlu0.b32.cont [2/16] %v818, 128
  %821 = vxpose.xlu0.b32.cont [3/16] 0.0, 128
  %822 = vxpose.xlu0.b32.cont [4/16] 0.0, 128
  %823 = vxpose.xlu0.b32.cont [5/16] 0.0, 128
  %824 = vxpose.xlu0.b32.cont [6/16] 0.0, 128
  %825 = vxpose.xlu0.b32.cont [7/16] 0.0, 128
  %826 = vxpose.xlu0.b32.cont [8/16] 0.0, 128
  %827 = vxpose.xlu0.b32.cont [9/16] 0.0, 128
  %828 = vxpose.xlu0.b32.cont [10/16] 0.0, 128
  %829 = vxpose.xlu0.b32.cont [11/16] 0.0, 128
  %830 = vxpose.xlu0.b32.cont [12/16] 0.0, 128
  %831 = vxpose.xlu0.b32.cont [13/16] 0.0, 128
  %832 = vxpose.xlu0.b32.cont [14/16] 0.0, 128
  %833 = vxpose.xlu0.b32.cont [15/16] 0.0, 128
  %834 = vxpose.xlu0.b32.end [16/16] 0.0, 128
  %v835 = vpop.trf.xlu0
  %v836 = vpop.trf.xlu0
  %v837 = vpop.trf.xlu0
  %v838 = vpop.trf.xlu0
  %v839 = vpop.trf.xlu0
  %v840 = vpop.trf.xlu0
  %v841 = vpop.trf.xlu0
  %v842 = vpop.trf.xlu0
  %v843 = vpop.trf.xlu0
  %v844 = vpop.trf.xlu0
  %v845 = vpop.trf.xlu0
  %v846 = vpop.trf.xlu0
  %v847 = vpop.trf.xlu0
  %v848 = vpop.trf.xlu0
  %v849 = vpop.trf.xlu0
  %v850 = vpop.trf.xlu0
  %s851 = scalar_lea.vmem [#allocation3], 112
  %852 = vst.msk [vmem:[%s851] sm:$0xff] %vm494, %v835
  %853 = vst.msk [vmem:[%s851 + $0x8] sm:$0xff] %vm494, %v836
  %v854 = vld [vmem:[#allocation2 + $0x80] sm:$0xff]
  %v855 = vld [vmem:[#allocation2 + $0x88] sm:$0xff]
  %856 = vxpose.xlu0.b32.start [1/16] %v854, 128
  %857 = vxpose.xlu0.b32.cont [2/16] %v855, 128
  %858 = vxpose.xlu0.b32.cont [3/16] 0.0, 128
  %859 = vxpose.xlu0.b32.cont [4/16] 0.0, 128
  %860 = vxpose.xlu0.b32.cont [5/16] 0.0, 128
  %861 = vxpose.xlu0.b32.cont [6/16] 0.0, 128
  %862 = vxpose.xlu0.b32.cont [7/16] 0.0, 128
  %863 = vxpose.xlu0.b32.cont [8/16] 0.0, 128
  %864 = vxpose.xlu0.b32.cont [9/16] 0.0, 128
  %865 = vxpose.xlu0.b32.cont [10/16] 0.0, 128
  %866 = vxpose.xlu0.b32.cont [11/16] 0.0, 128
  %867 = vxpose.xlu0.b32.cont [12/16] 0.0, 128
  %868 = vxpose.xlu0.b32.cont [13/16] 0.0, 128
  %869 = vxpose.xlu0.b32.cont [14/16] 0.0, 128
  %870 = vxpose.xlu0.b32.cont [15/16] 0.0, 128
  %871 = vxpose.xlu0.b32.end [16/16] 0.0, 128
  %v872 = vpop.trf.xlu0
  %v873 = vpop.trf.xlu0
  %v874 = vpop.trf.xlu0
  %v875 = vpop.trf.xlu0
  %v876 = vpop.trf.xlu0
  %v877 = vpop.trf.xlu0
  %v878 = vpop.trf.xlu0
  %v879 = vpop.trf.xlu0
  %v880 = vpop.trf.xlu0
  %v881 = vpop.trf.xlu0
  %v882 = vpop.trf.xlu0
  %v883 = vpop.trf.xlu0
  %v884 = vpop.trf.xlu0
  %v885 = vpop.trf.xlu0
  %v886 = vpop.trf.xlu0
  %v887 = vpop.trf.xlu0
  %s888 = scalar_lea.vmem [#allocation3], 128
  %889 = vst.msk [vmem:[%s888] sm:$0xff] %vm494, %v872
  %890 = vst.msk [vmem:[%s888 + $0x8] sm:$0xff] %vm494, %v873
  %v891 = vld [vmem:[#allocation2 + $0x90] sm:$0xff]
  %v892 = vld [vmem:[#allocation2 + $0x98] sm:$0xff]
  %893 = vxpose.xlu0.b32.start [1/16] %v891, 128
  %894 = vxpose.xlu0.b32.cont [2/16] %v892, 128
  %895 = vxpose.xlu0.b32.cont [3/16] 0.0, 128
  %896 = vxpose.xlu0.b32.cont [4/16] 0.0, 128
  %897 = vxpose.xlu0.b32.cont [5/16] 0.0, 128
  %898 = vxpose.xlu0.b32.cont [6/16] 0.0, 128
  %899 = vxpose.xlu0.b32.cont [7/16] 0.0, 128
  %900 = vxpose.xlu0.b32.cont [8/16] 0.0, 128
  %901 = vxpose.xlu0.b32.cont [9/16] 0.0, 128
  %902 = vxpose.xlu0.b32.cont [10/16] 0.0, 128
  %903 = vxpose.xlu0.b32.cont [11/16] 0.0, 128
  %904 = vxpose.xlu0.b32.cont [12/16] 0.0, 128
  %905 = vxpose.xlu0.b32.cont [13/16] 0.0, 128
  %906 = vxpose.xlu0.b32.cont [14/16] 0.0, 128
  %907 = vxpose.xlu0.b32.cont [15/16] 0.0, 128
  %908 = vxpose.xlu0.b32.end [16/16] 0.0, 128
  %v909 = vpop.trf.xlu0
  %v910 = vpop.trf.xlu0
  %v911 = vpop.trf.xlu0
  %v912 = vpop.trf.xlu0
  %v913 = vpop.trf.xlu0
  %v914 = vpop.trf.xlu0
  %v915 = vpop.trf.xlu0
  %v916 = vpop.trf.xlu0
  %v917 = vpop.trf.xlu0
  %v918 = vpop.trf.xlu0
  %v919 = vpop.trf.xlu0
  %v920 = vpop.trf.xlu0
  %v921 = vpop.trf.xlu0
  %v922 = vpop.trf.xlu0
  %v923 = vpop.trf.xlu0
  %v924 = vpop.trf.xlu0
  %s925 = scalar_lea.vmem [#allocation3], 144
  %926 = vst.msk [vmem:[%s925] sm:$0xff] %vm494, %v909
  %927 = vst.msk [vmem:[%s925 + $0x8] sm:$0xff] %vm494, %v910
  %v928 = vld [vmem:[#allocation2 + $0xa0] sm:$0xff]
  %v929 = vld [vmem:[#allocation2 + $0xa8] sm:$0xff]
  %930 = vxpose.xlu0.b32.start [1/16] %v928, 128
  %931 = vxpose.xlu0.b32.cont [2/16] %v929, 128
  %932 = vxpose.xlu0.b32.cont [3/16] 0.0, 128
  %933 = vxpose.xlu0.b32.cont [4/16] 0.0, 128
  %934 = vxpose.xlu0.b32.cont [5/16] 0.0, 128
  %935 = vxpose.xlu0.b32.cont [6/16] 0.0, 128
  %936 = vxpose.xlu0.b32.cont [7/16] 0.0, 128
  %937 = vxpose.xlu0.b32.cont [8/16] 0.0, 128
  %938 = vxpose.xlu0.b32.cont [9/16] 0.0, 128
  %939 = vxpose.xlu0.b32.cont [10/16] 0.0, 128
  %940 = vxpose.xlu0.b32.cont [11/16] 0.0, 128
  %941 = vxpose.xlu0.b32.cont [12/16] 0.0, 128
  %942 = vxpose.xlu0.b32.cont [13/16] 0.0, 128
  %943 = vxpose.xlu0.b32.cont [14/16] 0.0, 128
  %944 = vxpose.xlu0.b32.cont [15/16] 0.0, 128
  %945 = vxpose.xlu0.b32.end [16/16] 0.0, 128
  %v946 = vpop.trf.xlu0
  %v947 = vpop.trf.xlu0
  %v948 = vpop.trf.xlu0
  %v949 = vpop.trf.xlu0
  %v950 = vpop.trf.xlu0
  %v951 = vpop.trf.xlu0
  %v952 = vpop.trf.xlu0
  %v953 = vpop.trf.xlu0
  %v954 = vpop.trf.xlu0
  %v955 = vpop.trf.xlu0
  %v956 = vpop.trf.xlu0
  %v957 = vpop.trf.xlu0
  %v958 = vpop.trf.xlu0
  %v959 = vpop.trf.xlu0
  %v960 = vpop.trf.xlu0
  %v961 = vpop.trf.xlu0
  %s962 = scalar_lea.vmem [#allocation3], 160
  %963 = vst.msk [vmem:[%s962] sm:$0xff] %vm494, %v946
  %964 = vst.msk [vmem:[%s962 + $0x8] sm:$0xff] %vm494, %v947
  %v965 = vld [vmem:[#allocation2 + $0xb0] sm:$0xff]
  %v966 = vld [vmem:[#allocation2 + $0xb8] sm:$0xff]
  %967 = vxpose.xlu0.b32.start [1/16] %v965, 128
  %968 = vxpose.xlu0.b32.cont [2/16] %v966, 128
  %969 = vxpose.xlu0.b32.cont [3/16] 0.0, 128
  %970 = vxpose.xlu0.b32.cont [4/16] 0.0, 128
  %971 = vxpose.xlu0.b32.cont [5/16] 0.0, 128
  %972 = vxpose.xlu0.b32.cont [6/16] 0.0, 128
  %973 = vxpose.xlu0.b32.cont [7/16] 0.0, 128
  %974 = vxpose.xlu0.b32.cont [8/16] 0.0, 128
  %975 = vxpose.xlu0.b32.cont [9/16] 0.0, 128
  %976 = vxpose.xlu0.b32.cont [10/16] 0.0, 128
  %977 = vxpose.xlu0.b32.cont [11/16] 0.0, 128
  %978 = vxpose.xlu0.b32.cont [12/16] 0.0, 128
  %979 = vxpose.xlu0.b32.cont [13/16] 0.0, 128
  %980 = vxpose.xlu0.b32.cont [14/16] 0.0, 128
  %981 = vxpose.xlu0.b32.cont [15/16] 0.0, 128
  %982 = vxpose.xlu0.b32.end [16/16] 0.0, 128
  %v983 = vpop.trf.xlu0
  %v984 = vpop.trf.xlu0
  %v985 = vpop.trf.xlu0
  %v986 = vpop.trf.xlu0
  %v987 = vpop.trf.xlu0
  %v988 = vpop.trf.xlu0
  %v989 = vpop.trf.xlu0
  %v990 = vpop.trf.xlu0
  %v991 = vpop.trf.xlu0
  %v992 = vpop.trf.xlu0
  %v993 = vpop.trf.xlu0
  %v994 = vpop.trf.xlu0
  %v995 = vpop.trf.xlu0
  %v996 = vpop.trf.xlu0
  %v997 = vpop.trf.xlu0
  %v998 = vpop.trf.xlu0
  %s999 = scalar_lea.vmem [#allocation3], 176
  %1000 = vst.msk [vmem:[%s999] sm:$0xff] %vm494, %v983
  %1001 = vst.msk [vmem:[%s999 + $0x8] sm:$0xff] %vm494, %v984
  %v1002 = vld [vmem:[#allocation2 + $0xc0] sm:$0xff]
  %v1003 = vld [vmem:[#allocation2 + $0xc8] sm:$0xff]
  %1004 = vxpose.xlu0.b32.start [1/16] %v1002, 128
  %1005 = vxpose.xlu0.b32.cont [2/16] %v1003, 128
  %1006 = vxpose.xlu0.b32.cont [3/16] 0.0, 128
  %1007 = vxpose.xlu0.b32.cont [4/16] 0.0, 128
  %1008 = vxpose.xlu0.b32.cont [5/16] 0.0, 128
  %1009 = vxpose.xlu0.b32.cont [6/16] 0.0, 128
  %1010 = vxpose.xlu0.b32.cont [7/16] 0.0, 128
  %1011 = vxpose.xlu0.b32.cont [8/16] 0.0, 128
  %1012 = vxpose.xlu0.b32.cont [9/16] 0.0, 128
  %1013 = vxpose.xlu0.b32.cont [10/16] 0.0, 128
  %1014 = vxpose.xlu0.b32.cont [11/16] 0.0, 128
  %1015 = vxpose.xlu0.b32.cont [12/16] 0.0, 128
  %1016 = vxpose.xlu0.b32.cont [13/16] 0.0, 128
  %1017 = vxpose.xlu0.b32.cont [14/16] 0.0, 128
  %1018 = vxpose.xlu0.b32.cont [15/16] 0.0, 128
  %1019 = vxpose.xlu0.b32.end [16/16] 0.0, 128
  %v1020 = vpop.trf.xlu0
  %v1021 = vpop.trf.xlu0
  %v1022 = vpop.trf.xlu0
  %v1023 = vpop.trf.xlu0
  %v1024 = vpop.trf.xlu0
  %v1025 = vpop.trf.xlu0
  %v1026 = vpop.trf.xlu0
  %v1027 = vpop.trf.xlu0
  %v1028 = vpop.trf.xlu0
  %v1029 = vpop.trf.xlu0
  %v1030 = vpop.trf.xlu0
  %v1031 = vpop.trf.xlu0
  %v1032 = vpop.trf.xlu0
  %v1033 = vpop.trf.xlu0
  %v1034 = vpop.trf.xlu0
  %v1035 = vpop.trf.xlu0
  %s1036 = scalar_lea.vmem [#allocation3], 192
  %1037 = vst.msk [vmem:[%s1036] sm:$0xff] %vm494, %v1020
  %1038 = vst.msk [vmem:[%s1036 + $0x8] sm:$0xff] %vm494, %v1021
  %v1039 = vld [vmem:[#allocation2 + $0xd0] sm:$0xff]
  %v1040 = vld [vmem:[#allocation2 + $0xd8] sm:$0xff]
  %1041 = vxpose.xlu0.b32.start [1/16] %v1039, 128
  %1042 = vxpose.xlu0.b32.cont [2/16] %v1040, 128
  %1043 = vxpose.xlu0.b32.cont [3/16] 0.0, 128
  %1044 = vxpose.xlu0.b32.cont [4/16] 0.0, 128
  %1045 = vxpose.xlu0.b32.cont [5/16] 0.0, 128
  %1046 = vxpose.xlu0.b32.cont [6/16] 0.0, 128
  %1047 = vxpose.xlu0.b32.cont [7/16] 0.0, 128
  %1048 = vxpose.xlu0.b32.cont [8/16] 0.0, 128
  %1049 = vxpose.xlu0.b32.cont [9/16] 0.0, 128
  %1050 = vxpose.xlu0.b32.cont [10/16] 0.0, 128
  %1051 = vxpose.xlu0.b32.cont [11/16] 0.0, 128
  %1052 = vxpose.xlu0.b32.cont [12/16] 0.0, 128
  %1053 = vxpose.xlu0.b32.cont [13/16] 0.0, 128
  %1054 = vxpose.xlu0.b32.cont [14/16] 0.0, 128
  %1055 = vxpose.xlu0.b32.cont [15/16] 0.0, 128
  %1056 = vxpose.xlu0.b32.end [16/16] 0.0, 128
  %v1057 = vpop.trf.xlu0
  %v1058 = vpop.trf.xlu0
  %v1059 = vpop.trf.xlu0
  %v1060 = vpop.trf.xlu0
  %v1061 = vpop.trf.xlu0
  %v1062 = vpop.trf.xlu0
  %v1063 = vpop.trf.xlu0
  %v1064 = vpop.trf.xlu0
  %v1065 = vpop.trf.xlu0
  %v1066 = vpop.trf.xlu0
  %v1067 = vpop.trf.xlu0
  %v1068 = vpop.trf.xlu0
  %v1069 = vpop.trf.xlu0
  %v1070 = vpop.trf.xlu0
  %v1071 = vpop.trf.xlu0
  %v1072 = vpop.trf.xlu0
  %s1073 = scalar_lea.vmem [#allocation3], 208
  %1074 = vst.msk [vmem:[%s1073] sm:$0xff] %vm494, %v1057
  %1075 = vst.msk [vmem:[%s1073 + $0x8] sm:$0xff] %vm494, %v1058
  %v1076 = vld [vmem:[#allocation2 + $0xe0] sm:$0xff]
  %v1077 = vld [vmem:[#allocation2 + $0xe8] sm:$0xff]
  %1078 = vxpose.xlu0.b32.start [1/16] %v1076, 128
  %1079 = vxpose.xlu0.b32.cont [2/16] %v1077, 128
  %1080 = vxpose.xlu0.b32.cont [3/16] 0.0, 128
  %1081 = vxpose.xlu0.b32.cont [4/16] 0.0, 128
  %1082 = vxpose.xlu0.b32.cont [5/16] 0.0, 128
  %1083 = vxpose.xlu0.b32.cont [6/16] 0.0, 128
  %1084 = vxpose.xlu0.b32.cont [7/16] 0.0, 128
  %1085 = vxpose.xlu0.b32.cont [8/16] 0.0, 128
  %1086 = vxpose.xlu0.b32.cont [9/16] 0.0, 128
  %1087 = vxpose.xlu0.b32.cont [10/16] 0.0, 128
  %1088 = vxpose.xlu0.b32.cont [11/16] 0.0, 128
  %1089 = vxpose.xlu0.b32.cont [12/16] 0.0, 128
  %1090 = vxpose.xlu0.b32.cont [13/16] 0.0, 128
  %1091 = vxpose.xlu0.b32.cont [14/16] 0.0, 128
  %1092 = vxpose.xlu0.b32.cont [15/16] 0.0, 128
  %1093 = vxpose.xlu0.b32.end [16/16] 0.0, 128
  %v1094 = vpop.trf.xlu0
  %v1095 = vpop.trf.xlu0
  %v1096 = vpop.trf.xlu0
  %v1097 = vpop.trf.xlu0
  %v1098 = vpop.trf.xlu0
  %v1099 = vpop.trf.xlu0
  %v1100 = vpop.trf.xlu0
  %v1101 = vpop.trf.xlu0
  %v1102 = vpop.trf.xlu0
  %v1103 = vpop.trf.xlu0
  %v1104 = vpop.trf.xlu0
  %v1105 = vpop.trf.xlu0
  %v1106 = vpop.trf.xlu0
  %v1107 = vpop.trf.xlu0
  %v1108 = vpop.trf.xlu0
  %v1109 = vpop.trf.xlu0
  %s1110 = scalar_lea.vmem [#allocation3], 224
  %1111 = vst.msk [vmem:[%s1110] sm:$0xff] %vm494, %v1094
  %1112 = vst.msk [vmem:[%s1110 + $0x8] sm:$0xff] %vm494, %v1095
  %v1113 = vld [vmem:[#allocation2 + $0xf0] sm:$0xff]
  %v1114 = vld [vmem:[#allocation2 + $0xf8] sm:$0xff]
  %1115 = vxpose.xlu0.b32.start [1/16] %v1113, 128
  %1116 = vxpose.xlu0.b32.cont [2/16] %v1114, 128
  %1117 = vxpose.xlu0.b32.cont [3/16] 0.0, 128
  %1118 = vxpose.xlu0.b32.cont [4/16] 0.0, 128
  %1119 = vxpose.xlu0.b32.cont [5/16] 0.0, 128
  %1120 = vxpose.xlu0.b32.cont [6/16] 0.0, 128
  %1121 = vxpose.xlu0.b32.cont [7/16] 0.0, 128
  %1122 = vxpose.xlu0.b32.cont [8/16] 0.0, 128
  %1123 = vxpose.xlu0.b32.cont [9/16] 0.0, 128
  %1124 = vxpose.xlu0.b32.cont [10/16] 0.0, 128
  %1125 = vxpose.xlu0.b32.cont [11/16] 0.0, 128
  %1126 = vxpose.xlu0.b32.cont [12/16] 0.0, 128
  %1127 = vxpose.xlu0.b32.cont [13/16] 0.0, 128
  %1128 = vxpose.xlu0.b32.cont [14/16] 0.0, 128
  %1129 = vxpose.xlu0.b32.cont [15/16] 0.0, 128
  %1130 = vxpose.xlu0.b32.end [16/16] 0.0, 128
  %v1131 = vpop.trf.xlu0
  %v1132 = vpop.trf.xlu0
  %v1133 = vpop.trf.xlu0
  %v1134 = vpop.trf.xlu0
  %v1135 = vpop.trf.xlu0
  %v1136 = vpop.trf.xlu0
  %v1137 = vpop.trf.xlu0
  %v1138 = vpop.trf.xlu0
  %v1139 = vpop.trf.xlu0
  %v1140 = vpop.trf.xlu0
  %v1141 = vpop.trf.xlu0
  %v1142 = vpop.trf.xlu0
  %v1143 = vpop.trf.xlu0
  %v1144 = vpop.trf.xlu0
  %v1145 = vpop.trf.xlu0
  %v1146 = vpop.trf.xlu0
  %s1147 = scalar_lea.vmem [#allocation3], 240
  %1148 = vst.msk [vmem:[%s1147] sm:$0xff] %vm494, %v1131
  %1149 = vst.msk [vmem:[%s1147 + $0x8] sm:$0xff] %vm494, %v1132
  %v1150 = vld [vmem:[#allocation2 + $0x100] sm:$0xff]
  %v1151 = vld [vmem:[#allocation2 + $0x108] sm:$0xff]
  %1152 = vxpose.xlu0.b32.start [1/16] %v1150, 128
  %1153 = vxpose.xlu0.b32.cont [2/16] %v1151, 128
  %1154 = vxpose.xlu0.b32.cont [3/16] 0.0, 128
  %1155 = vxpose.xlu0.b32.cont [4/16] 0.0, 128
  %1156 = vxpose.xlu0.b32.cont [5/16] 0.0, 128
  %1157 = vxpose.xlu0.b32.cont [6/16] 0.0, 128
  %1158 = vxpose.xlu0.b32.cont [7/16] 0.0, 128
  %1159 = vxpose.xlu0.b32.cont [8/16] 0.0, 128
  %1160 = vxpose.xlu0.b32.cont [9/16] 0.0, 128
  %1161 = vxpose.xlu0.b32.cont [10/16] 0.0, 128
  %1162 = vxpose.xlu0.b32.cont [11/16] 0.0, 128
  %1163 = vxpose.xlu0.b32.cont [12/16] 0.0, 128
  %1164 = vxpose.xlu0.b32.cont [13/16] 0.0, 128
  %1165 = vxpose.xlu0.b32.cont [14/16] 0.0, 128
  %1166 = vxpose.xlu0.b32.cont [15/16] 0.0, 128
  %1167 = vxpose.xlu0.b32.end [16/16] 0.0, 128
  %v1168 = vpop.trf.xlu0
  %v1169 = vpop.trf.xlu0
  %v1170 = vpop.trf.xlu0
  %v1171 = vpop.trf.xlu0
  %v1172 = vpop.trf.xlu0
  %v1173 = vpop.trf.xlu0
  %v1174 = vpop.trf.xlu0
  %v1175 = vpop.trf.xlu0
  %v1176 = vpop.trf.xlu0
  %v1177 = vpop.trf.xlu0
  %v1178 = vpop.trf.xlu0
  %v1179 = vpop.trf.xlu0
  %v1180 = vpop.trf.xlu0
  %v1181 = vpop.trf.xlu0
  %v1182 = vpop.trf.xlu0
  %v1183 = vpop.trf.xlu0
  %s1184 = scalar_lea.vmem [#allocation3], 256
  %1185 = vst.msk [vmem:[%s1184] sm:$0xff] %vm494, %v1168
  %1186 = vst.msk [vmem:[%s1184 + $0x8] sm:$0xff] %vm494, %v1169
  %v1187 = vld [vmem:[#allocation2 + $0x110] sm:$0xff]
  %v1188 = vld [vmem:[#allocation2 + $0x118] sm:$0xff]
  %1189 = vxpose.xlu0.b32.start [1/16] %v1187, 128
  %1190 = vxpose.xlu0.b32.cont [2/16] %v1188, 128
  %1191 = vxpose.xlu0.b32.cont [3/16] 0.0, 128
  %1192 = vxpose.xlu0.b32.cont [4/16] 0.0, 128
  %1193 = vxpose.xlu0.b32.cont [5/16] 0.0, 128
  %1194 = vxpose.xlu0.b32.cont [6/16] 0.0, 128
  %1195 = vxpose.xlu0.b32.cont [7/16] 0.0, 128
  %1196 = vxpose.xlu0.b32.cont [8/16] 0.0, 128
  %1197 = vxpose.xlu0.b32.cont [9/16] 0.0, 128
  %1198 = vxpose.xlu0.b32.cont [10/16] 0.0, 128
  %1199 = vxpose.xlu0.b32.cont [11/16] 0.0, 128
  %1200 = vxpose.xlu0.b32.cont [12/16] 0.0, 128
  %1201 = vxpose.xlu0.b32.cont [13/16] 0.0, 128
  %1202 = vxpose.xlu0.b32.cont [14/16] 0.0, 128
  %1203 = vxpose.xlu0.b32.cont [15/16] 0.0, 128
  %1204 = vxpose.xlu0.b32.end [16/16] 0.0, 128
  %v1205 = vpop.trf.xlu0
  %v1206 = vpop.trf.xlu0
  %v1207 = vpop.trf.xlu0
  %v1208 = vpop.trf.xlu0
  %v1209 = vpop.trf.xlu0
  %v1210 = vpop.trf.xlu0
  %v1211 = vpop.trf.xlu0
  %v1212 = vpop.trf.xlu0
  %v1213 = vpop.trf.xlu0
  %v1214 = vpop.trf.xlu0
  %v1215 = vpop.trf.xlu0
  %v1216 = vpop.trf.xlu0
  %v1217 = vpop.trf.xlu0
  %v1218 = vpop.trf.xlu0
  %v1219 = vpop.trf.xlu0
  %v1220 = vpop.trf.xlu0
  %s1221 = scalar_lea.vmem [#allocation3], 272
  %1222 = vst.msk [vmem:[%s1221] sm:$0xff] %vm494, %v1205
  %1223 = vst.msk [vmem:[%s1221 + $0x8] sm:$0xff] %vm494, %v1206
  %v1224 = vld [vmem:[#allocation2 + $0x120] sm:$0xff]
  %v1225 = vld [vmem:[#allocation2 + $0x128] sm:$0xff]
  %1226 = vxpose.xlu0.b32.start [1/16] %v1224, 128
  %1227 = vxpose.xlu0.b32.cont [2/16] %v1225, 128
  %1228 = vxpose.xlu0.b32.cont [3/16] 0.0, 128
  %1229 = vxpose.xlu0.b32.cont [4/16] 0.0, 128
  %1230 = vxpose.xlu0.b32.cont [5/16] 0.0, 128
  %1231 = vxpose.xlu0.b32.cont [6/16] 0.0, 128
  %1232 = vxpose.xlu0.b32.cont [7/16] 0.0, 128
  %1233 = vxpose.xlu0.b32.cont [8/16] 0.0, 128
  %1234 = vxpose.xlu0.b32.cont [9/16] 0.0, 128
  %1235 = vxpose.xlu0.b32.cont [10/16] 0.0, 128
  %1236 = vxpose.xlu0.b32.cont [11/16] 0.0, 128
  %1237 = vxpose.xlu0.b32.cont [12/16] 0.0, 128
  %1238 = vxpose.xlu0.b32.cont [13/16] 0.0, 128
  %1239 = vxpose.xlu0.b32.cont [14/16] 0.0, 128
  %1240 = vxpose.xlu0.b32.cont [15/16] 0.0, 128
  %1241 = vxpose.xlu0.b32.end [16/16] 0.0, 128
  %v1242 = vpop.trf.xlu0
  %v1243 = vpop.trf.xlu0
  %v1244 = vpop.trf.xlu0
  %v1245 = vpop.trf.xlu0
  %v1246 = vpop.trf.xlu0
  %v1247 = vpop.trf.xlu0
  %v1248 = vpop.trf.xlu0
  %v1249 = vpop.trf.xlu0
  %v1250 = vpop.trf.xlu0
  %v1251 = vpop.trf.xlu0
  %v1252 = vpop.trf.xlu0
  %v1253 = vpop.trf.xlu0
  %v1254 = vpop.trf.xlu0
  %v1255 = vpop.trf.xlu0
  %v1256 = vpop.trf.xlu0
  %v1257 = vpop.trf.xlu0
  %s1258 = scalar_lea.vmem [#allocation3], 288
  %1259 = vst.msk [vmem:[%s1258] sm:$0xff] %vm494, %v1242
  %1260 = vst.msk [vmem:[%s1258 + $0x8] sm:$0xff] %vm494, %v1243
  %v1261 = vld [vmem:[#allocation2 + $0x130] sm:$0xff]
  %v1262 = vld [vmem:[#allocation2 + $0x138] sm:$0xff]
  %1263 = vxpose.xlu0.b32.start [1/16] %v1261, 128
  %1264 = vxpose.xlu0.b32.cont [2/16] %v1262, 128
  %1265 = vxpose.xlu0.b32.cont [3/16] 0.0, 128
  %1266 = vxpose.xlu0.b32.cont [4/16] 0.0, 128
  %1267 = vxpose.xlu0.b32.cont [5/16] 0.0, 128
  %1268 = vxpose.xlu0.b32.cont [6/16] 0.0, 128
  %1269 = vxpose.xlu0.b32.cont [7/16] 0.0, 128
  %1270 = vxpose.xlu0.b32.cont [8/16] 0.0, 128
  %1271 = vxpose.xlu0.b32.cont [9/16] 0.0, 128
  %1272 = vxpose.xlu0.b32.cont [10/16] 0.0, 128
  %1273 = vxpose.xlu0.b32.cont [11/16] 0.0, 128
  %1274 = vxpose.xlu0.b32.cont [12/16] 0.0, 128
  %1275 = vxpose.xlu0.b32.cont [13/16] 0.0, 128
  %1276 = vxpose.xlu0.b32.cont [14/16] 0.0, 128
  %1277 = vxpose.xlu0.b32.cont [15/16] 0.0, 128
  %1278 = vxpose.xlu0.b32.end [16/16] 0.0, 128
  %v1279 = vpop.trf.xlu0
  %v1280 = vpop.trf.xlu0
  %v1281 = vpop.trf.xlu0
  %v1282 = vpop.trf.xlu0
  %v1283 = vpop.trf.xlu0
  %v1284 = vpop.trf.xlu0
  %v1285 = vpop.trf.xlu0
  %v1286 = vpop.trf.xlu0
  %v1287 = vpop.trf.xlu0
  %v1288 = vpop.trf.xlu0
  %v1289 = vpop.trf.xlu0
  %v1290 = vpop.trf.xlu0
  %v1291 = vpop.trf.xlu0
  %v1292 = vpop.trf.xlu0
  %v1293 = vpop.trf.xlu0
  %v1294 = vpop.trf.xlu0
  %s1295 = scalar_lea.vmem [#allocation3], 304
  %1296 = vst.msk [vmem:[%s1295] sm:$0xff] %vm494, %v1279
  %1297 = vst.msk [vmem:[%s1295 + $0x8] sm:$0xff] %vm494, %v1280
  %v1298 = vld [vmem:[#allocation2 + $0x140] sm:$0xff]
  %v1299 = vld [vmem:[#allocation2 + $0x148] sm:$0xff]
  %1300 = vxpose.xlu0.b32.start [1/16] %v1298, 128
  %1301 = vxpose.xlu0.b32.cont [2/16] %v1299, 128
  %1302 = vxpose.xlu0.b32.cont [3/16] 0.0, 128
  %1303 = vxpose.xlu0.b32.cont [4/16] 0.0, 128
  %1304 = vxpose.xlu0.b32.cont [5/16] 0.0, 128
  %1305 = vxpose.xlu0.b32.cont [6/16] 0.0, 128
  %1306 = vxpose.xlu0.b32.cont [7/16] 0.0, 128
  %1307 = vxpose.xlu0.b32.cont [8/16] 0.0, 128
  %1308 = vxpose.xlu0.b32.cont [9/16] 0.0, 128
  %1309 = vxpose.xlu0.b32.cont [10/16] 0.0, 128
  %1310 = vxpose.xlu0.b32.cont [11/16] 0.0, 128
  %1311 = vxpose.xlu0.b32.cont [12/16] 0.0, 128
  %1312 = vxpose.xlu0.b32.cont [13/16] 0.0, 128
  %1313 = vxpose.xlu0.b32.cont [14/16] 0.0, 128
  %1314 = vxpose.xlu0.b32.cont [15/16] 0.0, 128
  %1315 = vxpose.xlu0.b32.end [16/16] 0.0, 128
  %v1316 = vpop.trf.xlu0
  %v1317 = vpop.trf.xlu0
  %v1318 = vpop.trf.xlu0
  %v1319 = vpop.trf.xlu0
  %v1320 = vpop.trf.xlu0
  %v1321 = vpop.trf.xlu0
  %v1322 = vpop.trf.xlu0
  %v1323 = vpop.trf.xlu0
  %v1324 = vpop.trf.xlu0
  %v1325 = vpop.trf.xlu0
  %v1326 = vpop.trf.xlu0
  %v1327 = vpop.trf.xlu0
  %v1328 = vpop.trf.xlu0
  %v1329 = vpop.trf.xlu0
  %v1330 = vpop.trf.xlu0
  %v1331 = vpop.trf.xlu0
  %s1332 = scalar_lea.vmem [#allocation3], 320
  %1333 = vst.msk [vmem:[%s1332] sm:$0xff] %vm494, %v1316
  %1334 = vst.msk [vmem:[%s1332 + $0x8] sm:$0xff] %vm494, %v1317
  %v1335 = vld [vmem:[#allocation2 + $0x150] sm:$0xff]
  %v1336 = vld [vmem:[#allocation2 + $0x158] sm:$0xff]
  %1337 = vxpose.xlu0.b32.start [1/16] %v1335, 128
  %1338 = vxpose.xlu0.b32.cont [2/16] %v1336, 128
  %1339 = vxpose.xlu0.b32.cont [3/16] 0.0, 128
  %1340 = vxpose.xlu0.b32.cont [4/16] 0.0, 128
  %1341 = vxpose.xlu0.b32.cont [5/16] 0.0, 128
  %1342 = vxpose.xlu0.b32.cont [6/16] 0.0, 128
  %1343 = vxpose.xlu0.b32.cont [7/16] 0.0, 128
  %1344 = vxpose.xlu0.b32.cont [8/16] 0.0, 128
  %1345 = vxpose.xlu0.b32.cont [9/16] 0.0, 128
  %1346 = vxpose.xlu0.b32.cont [10/16] 0.0, 128
  %1347 = vxpose.xlu0.b32.cont [11/16] 0.0, 128
  %1348 = vxpose.xlu0.b32.cont [12/16] 0.0, 128
  %1349 = vxpose.xlu0.b32.cont [13/16] 0.0, 128
  %1350 = vxpose.xlu0.b32.cont [14/16] 0.0, 128
  %1351 = vxpose.xlu0.b32.cont [15/16] 0.0, 128
  %1352 = vxpose.xlu0.b32.end [16/16] 0.0, 128
  %v1353 = vpop.trf.xlu0
  %v1354 = vpop.trf.xlu0
  %v1355 = vpop.trf.xlu0
  %v1356 = vpop.trf.xlu0
  %v1357 = vpop.trf.xlu0
  %v1358 = vpop.trf.xlu0
  %v1359 = vpop.trf.xlu0
  %v1360 = vpop.trf.xlu0
  %v1361 = vpop.trf.xlu0
  %v1362 = vpop.trf.xlu0
  %v1363 = vpop.trf.xlu0
  %v1364 = vpop.trf.xlu0
  %v1365 = vpop.trf.xlu0
  %v1366 = vpop.trf.xlu0
  %v1367 = vpop.trf.xlu0
  %v1368 = vpop.trf.xlu0
  %s1369 = scalar_lea.vmem [#allocation3], 336
  %1370 = vst.msk [vmem:[%s1369] sm:$0xff] %vm494, %v1353
  %1371 = vst.msk [vmem:[%s1369 + $0x8] sm:$0xff] %vm494, %v1354
  %v1372 = vld [vmem:[#allocation2 + $0x160] sm:$0xff]
  %v1373 = vld [vmem:[#allocation2 + $0x168] sm:$0xff]
  %1374 = vxpose.xlu0.b32.start [1/16] %v1372, 128
  %1375 = vxpose.xlu0.b32.cont [2/16] %v1373, 128
  %1376 = vxpose.xlu0.b32.cont [3/16] 0.0, 128
  %1377 = vxpose.xlu0.b32.cont [4/16] 0.0, 128
  %1378 = vxpose.xlu0.b32.cont [5/16] 0.0, 128
  %1379 = vxpose.xlu0.b32.cont [6/16] 0.0, 128
  %1380 = vxpose.xlu0.b32.cont [7/16] 0.0, 128
  %1381 = vxpose.xlu0.b32.cont [8/16] 0.0, 128
  %1382 = vxpose.xlu0.b32.cont [9/16] 0.0, 128
  %1383 = vxpose.xlu0.b32.cont [10/16] 0.0, 128
  %1384 = vxpose.xlu0.b32.cont [11/16] 0.0, 128
  %1385 = vxpose.xlu0.b32.cont [12/16] 0.0, 128
  %1386 = vxpose.xlu0.b32.cont [13/16] 0.0, 128
  %1387 = vxpose.xlu0.b32.cont [14/16] 0.0, 128
  %1388 = vxpose.xlu0.b32.cont [15/16] 0.0, 128
  %1389 = vxpose.xlu0.b32.end [16/16] 0.0, 128
  %v1390 = vpop.trf.xlu0
  %v1391 = vpop.trf.xlu0
  %v1392 = vpop.trf.xlu0
  %v1393 = vpop.trf.xlu0
  %v1394 = vpop.trf.xlu0
  %v1395 = vpop.trf.xlu0
  %v1396 = vpop.trf.xlu0
  %v1397 = vpop.trf.xlu0
  %v1398 = vpop.trf.xlu0
  %v1399 = vpop.trf.xlu0
  %v1400 = vpop.trf.xlu0
  %v1401 = vpop.trf.xlu0
  %v1402 = vpop.trf.xlu0
  %v1403 = vpop.trf.xlu0
  %v1404 = vpop.trf.xlu0
  %v1405 = vpop.trf.xlu0
  %s1406 = scalar_lea.vmem [#allocation3], 352
  %1407 = vst.msk [vmem:[%s1406] sm:$0xff] %vm494, %v1390
  %1408 = vst.msk [vmem:[%s1406 + $0x8] sm:$0xff] %vm494, %v1391
  %v1409 = vld [vmem:[#allocation2 + $0x170] sm:$0xff]
  %v1410 = vld [vmem:[#allocation2 + $0x178] sm:$0xff]
  %1411 = vxpose.xlu0.b32.start [1/16] %v1409, 128
  %1412 = vxpose.xlu0.b32.cont [2/16] %v1410, 128
  %1413 = vxpose.xlu0.b32.cont [3/16] 0.0, 128
  %1414 = vxpose.xlu0.b32.cont [4/16] 0.0, 128
  %1415 = vxpose.xlu0.b32.cont [5/16] 0.0, 128
  %1416 = vxpose.xlu0.b32.cont [6/16] 0.0, 128
  %1417 = vxpose.xlu0.b32.cont [7/16] 0.0, 128
  %1418 = vxpose.xlu0.b32.cont [8/16] 0.0, 128
  %1419 = vxpose.xlu0.b32.cont [9/16] 0.0, 128
  %1420 = vxpose.xlu0.b32.cont [10/16] 0.0, 128
  %1421 = vxpose.xlu0.b32.cont [11/16] 0.0, 128
  %1422 = vxpose.xlu0.b32.cont [12/16] 0.0, 128
  %1423 = vxpose.xlu0.b32.cont [13/16] 0.0, 128
  %1424 = vxpose.xlu0.b32.cont [14/16] 0.0, 128
  %1425 = vxpose.xlu0.b32.cont [15/16] 0.0, 128
  %1426 = vxpose.xlu0.b32.end [16/16] 0.0, 128
  %v1427 = vpop.trf.xlu0
  %v1428 = vpop.trf.xlu0
  %v1429 = vpop.trf.xlu0
  %v1430 = vpop.trf.xlu0
  %v1431 = vpop.trf.xlu0
  %v1432 = vpop.trf.xlu0
  %v1433 = vpop.trf.xlu0
  %v1434 = vpop.trf.xlu0
  %v1435 = vpop.trf.xlu0
  %v1436 = vpop.trf.xlu0
  %v1437 = vpop.trf.xlu0
  %v1438 = vpop.trf.xlu0
  %v1439 = vpop.trf.xlu0
  %v1440 = vpop.trf.xlu0
  %v1441 = vpop.trf.xlu0
  %v1442 = vpop.trf.xlu0
  %s1443 = scalar_lea.vmem [#allocation3], 368
  %1444 = vst.msk [vmem:[%s1443] sm:$0xff] %vm494, %v1427
  %1445 = vst.msk [vmem:[%s1443 + $0x8] sm:$0xff] %vm494, %v1428
  %v1446 = vld [vmem:[#allocation2 + $0x180] sm:$0xff]
  %v1447 = vld [vmem:[#allocation2 + $0x188] sm:$0xff]
  %1448 = vxpose.xlu0.b32.start [1/16] %v1446, 128
  %1449 = vxpose.xlu0.b32.cont [2/16] %v1447, 128
  %1450 = vxpose.xlu0.b32.cont [3/16] 0.0, 128
  %1451 = vxpose.xlu0.b32.cont [4/16] 0.0, 128
  %1452 = vxpose.xlu0.b32.cont [5/16] 0.0, 128
  %1453 = vxpose.xlu0.b32.cont [6/16] 0.0, 128
  %1454 = vxpose.xlu0.b32.cont [7/16] 0.0, 128
  %1455 = vxpose.xlu0.b32.cont [8/16] 0.0, 128
  %1456 = vxpose.xlu0.b32.cont [9/16] 0.0, 128
  %1457 = vxpose.xlu0.b32.cont [10/16] 0.0, 128
  %1458 = vxpose.xlu0.b32.cont [11/16] 0.0, 128
  %1459 = vxpose.xlu0.b32.cont [12/16] 0.0, 128
  %1460 = vxpose.xlu0.b32.cont [13/16] 0.0, 128
  %1461 = vxpose.xlu0.b32.cont [14/16] 0.0, 128
  %1462 = vxpose.xlu0.b32.cont [15/16] 0.0, 128
  %1463 = vxpose.xlu0.b32.end [16/16] 0.0, 128
  %v1464 = vpop.trf.xlu0
  %v1465 = vpop.trf.xlu0
  %v1466 = vpop.trf.xlu0
  %v1467 = vpop.trf.xlu0
  %v1468 = vpop.trf.xlu0
  %v1469 = vpop.trf.xlu0
  %v1470 = vpop.trf.xlu0
  %v1471 = vpop.trf.xlu0
  %v1472 = vpop.trf.xlu0
  %v1473 = vpop.trf.xlu0
  %v1474 = vpop.trf.xlu0
  %v1475 = vpop.trf.xlu0
  %v1476 = vpop.trf.xlu0
  %v1477 = vpop.trf.xlu0
  %v1478 = vpop.trf.xlu0
  %v1479 = vpop.trf.xlu0
  %s1480 = scalar_lea.vmem [#allocation3], 384
  %1481 = vst.msk [vmem:[%s1480] sm:$0xff] %vm494, %v1464
  %1482 = vst.msk [vmem:[%s1480 + $0x8] sm:$0xff] %vm494, %v1465
  %v1483 = vld [vmem:[#allocation2 + $0x190] sm:$0xff]
  %v1484 = vld [vmem:[#allocation2 + $0x198] sm:$0xff]
  %1485 = vxpose.xlu0.b32.start [1/16] %v1483, 128
  %1486 = vxpose.xlu0.b32.cont [2/16] %v1484, 128
  %1487 = vxpose.xlu0.b32.cont [3/16] 0.0, 128
  %1488 = vxpose.xlu0.b32.cont [4/16] 0.0, 128
  %1489 = vxpose.xlu0.b32.cont [5/16] 0.0, 128
  %1490 = vxpose.xlu0.b32.cont [6/16] 0.0, 128
  %1491 = vxpose.xlu0.b32.cont [7/16] 0.0, 128
  %1492 = vxpose.xlu0.b32.cont [8/16] 0.0, 128
  %1493 = vxpose.xlu0.b32.cont [9/16] 0.0, 128
  %1494 = vxpose.xlu0.b32.cont [10/16] 0.0, 128
  %1495 = vxpose.xlu0.b32.cont [11/16] 0.0, 128
  %1496 = vxpose.xlu0.b32.cont [12/16] 0.0, 128
  %1497 = vxpose.xlu0.b32.cont [13/16] 0.0, 128
  %1498 = vxpose.xlu0.b32.cont [14/16] 0.0, 128
  %1499 = vxpose.xlu0.b32.cont [15/16] 0.0, 128
  %1500 = vxpose.xlu0.b32.end [16/16] 0.0, 128
  %v1501 = vpop.trf.xlu0
  %v1502 = vpop.trf.xlu0
  %v1503 = vpop.trf.xlu0
  %v1504 = vpop.trf.xlu0
  %v1505 = vpop.trf.xlu0
  %v1506 = vpop.trf.xlu0
  %v1507 = vpop.trf.xlu0
  %v1508 = vpop.trf.xlu0
  %v1509 = vpop.trf.xlu0
  %v1510 = vpop.trf.xlu0
  %v1511 = vpop.trf.xlu0
  %v1512 = vpop.trf.xlu0
  %v1513 = vpop.trf.xlu0
  %v1514 = vpop.trf.xlu0
  %v1515 = vpop.trf.xlu0
  %v1516 = vpop.trf.xlu0
  %s1517 = scalar_lea.vmem [#allocation3], 400
  %1518 = vst.msk [vmem:[%s1517] sm:$0xff] %vm494, %v1501
  %1519 = vst.msk [vmem:[%s1517 + $0x8] sm:$0xff] %vm494, %v1502
  %v1520 = vld [vmem:[#allocation2 + $0x1a0] sm:$0xff]
  %v1521 = vld [vmem:[#allocation2 + $0x1a8] sm:$0xff]
  %1522 = vxpose.xlu0.b32.start [1/16] %v1520, 128
  %1523 = vxpose.xlu0.b32.cont [2/16] %v1521, 128
  %1524 = vxpose.xlu0.b32.cont [3/16] 0.0, 128
  %1525 = vxpose.xlu0.b32.cont [4/16] 0.0, 128
  %1526 = vxpose.xlu0.b32.cont [5/16] 0.0, 128
  %1527 = vxpose.xlu0.b32.cont [6/16] 0.0, 128
  %1528 = vxpose.xlu0.b32.cont [7/16] 0.0, 128
  %1529 = vxpose.xlu0.b32.cont [8/16] 0.0, 128
  %1530 = vxpose.xlu0.b32.cont [9/16] 0.0, 128
  %1531 = vxpose.xlu0.b32.cont [10/16] 0.0, 128
  %1532 = vxpose.xlu0.b32.cont [11/16] 0.0, 128
  %1533 = vxpose.xlu0.b32.cont [12/16] 0.0, 128
  %1534 = vxpose.xlu0.b32.cont [13/16] 0.0, 128
  %1535 = vxpose.xlu0.b32.cont [14/16] 0.0, 128
  %1536 = vxpose.xlu0.b32.cont [15/16] 0.0, 128
  %1537 = vxpose.xlu0.b32.end [16/16] 0.0, 128
  %v1538 = vpop.trf.xlu0
  %v1539 = vpop.trf.xlu0
  %v1540 = vpop.trf.xlu0
  %v1541 = vpop.trf.xlu0
  %v1542 = vpop.trf.xlu0
  %v1543 = vpop.trf.xlu0
  %v1544 = vpop.trf.xlu0
  %v1545 = vpop.trf.xlu0
  %v1546 = vpop.trf.xlu0
  %v1547 = vpop.trf.xlu0
  %v1548 = vpop.trf.xlu0
  %v1549 = vpop.trf.xlu0
  %v1550 = vpop.trf.xlu0
  %v1551 = vpop.trf.xlu0
  %v1552 = vpop.trf.xlu0
  %v1553 = vpop.trf.xlu0
  %s1554 = scalar_lea.vmem [#allocation3], 416
  %1555 = vst.msk [vmem:[%s1554] sm:$0xff] %vm494, %v1538
  %1556 = vst.msk [vmem:[%s1554 + $0x8] sm:$0xff] %vm494, %v1539
  %v1557 = vld [vmem:[#allocation2 + $0x1b0] sm:$0xff]
  %v1558 = vld [vmem:[#allocation2 + $0x1b8] sm:$0xff]
  %1559 = vxpose.xlu0.b32.start [1/16] %v1557, 128
  %1560 = vxpose.xlu0.b32.cont [2/16] %v1558, 128
  %1561 = vxpose.xlu0.b32.cont [3/16] 0.0, 128
  %1562 = vxpose.xlu0.b32.cont [4/16] 0.0, 128
  %1563 = vxpose.xlu0.b32.cont [5/16] 0.0, 128
  %1564 = vxpose.xlu0.b32.cont [6/16] 0.0, 128
  %1565 = vxpose.xlu0.b32.cont [7/16] 0.0, 128
  %1566 = vxpose.xlu0.b32.cont [8/16] 0.0, 128
  %1567 = vxpose.xlu0.b32.cont [9/16] 0.0, 128
  %1568 = vxpose.xlu0.b32.cont [10/16] 0.0, 128
  %1569 = vxpose.xlu0.b32.cont [11/16] 0.0, 128
  %1570 = vxpose.xlu0.b32.cont [12/16] 0.0, 128
  %1571 = vxpose.xlu0.b32.cont [13/16] 0.0, 128
  %1572 = vxpose.xlu0.b32.cont [14/16] 0.0, 128
  %1573 = vxpose.xlu0.b32.cont [15/16] 0.0, 128
  %1574 = vxpose.xlu0.b32.end [16/16] 0.0, 128
  %v1575 = vpop.trf.xlu0
  %v1576 = vpop.trf.xlu0
  %v1577 = vpop.trf.xlu0
  %v1578 = vpop.trf.xlu0
  %v1579 = vpop.trf.xlu0
  %v1580 = vpop.trf.xlu0
  %v1581 = vpop.trf.xlu0
  %v1582 = vpop.trf.xlu0
  %v1583 = vpop.trf.xlu0
  %v1584 = vpop.trf.xlu0
  %v1585 = vpop.trf.xlu0
  %v1586 = vpop.trf.xlu0
  %v1587 = vpop.trf.xlu0
  %v1588 = vpop.trf.xlu0
  %v1589 = vpop.trf.xlu0
  %v1590 = vpop.trf.xlu0
  %s1591 = scalar_lea.vmem [#allocation3], 432
  %1592 = vst.msk [vmem:[%s1591] sm:$0xff] %vm494, %v1575
  %1593 = vst.msk [vmem:[%s1591 + $0x8] sm:$0xff] %vm494, %v1576
  %v1594 = vld [vmem:[#allocation2 + $0x1c0] sm:$0xff]
  %v1595 = vld [vmem:[#allocation2 + $0x1c8] sm:$0xff]
  %1596 = vxpose.xlu0.b32.start [1/16] %v1594, 128
  %1597 = vxpose.xlu0.b32.cont [2/16] %v1595, 128
  %1598 = vxpose.xlu0.b32.cont [3/16] 0.0, 128
  %1599 = vxpose.xlu0.b32.cont [4/16] 0.0, 128
  %1600 = vxpose.xlu0.b32.cont [5/16] 0.0, 128
  %1601 = vxpose.xlu0.b32.cont [6/16] 0.0, 128
  %1602 = vxpose.xlu0.b32.cont [7/16] 0.0, 128
  %1603 = vxpose.xlu0.b32.cont [8/16] 0.0, 128
  %1604 = vxpose.xlu0.b32.cont [9/16] 0.0, 128
  %1605 = vxpose.xlu0.b32.cont [10/16] 0.0, 128
  %1606 = vxpose.xlu0.b32.cont [11/16] 0.0, 128
  %1607 = vxpose.xlu0.b32.cont [12/16] 0.0, 128
  %1608 = vxpose.xlu0.b32.cont [13/16] 0.0, 128
  %1609 = vxpose.xlu0.b32.cont [14/16] 0.0, 128
  %1610 = vxpose.xlu0.b32.cont [15/16] 0.0, 128
  %1611 = vxpose.xlu0.b32.end [16/16] 0.0, 128
  %v1612 = vpop.trf.xlu0
  %v1613 = vpop.trf.xlu0
  %v1614 = vpop.trf.xlu0
  %v1615 = vpop.trf.xlu0
  %v1616 = vpop.trf.xlu0
  %v1617 = vpop.trf.xlu0
  %v1618 = vpop.trf.xlu0
  %v1619 = vpop.trf.xlu0
  %v1620 = vpop.trf.xlu0
  %v1621 = vpop.trf.xlu0
  %v1622 = vpop.trf.xlu0
  %v1623 = vpop.trf.xlu0
  %v1624 = vpop.trf.xlu0
  %v1625 = vpop.trf.xlu0
  %v1626 = vpop.trf.xlu0
  %v1627 = vpop.trf.xlu0
  %s1628 = scalar_lea.vmem [#allocation3], 448
  %1629 = vst.msk [vmem:[%s1628] sm:$0xff] %vm494, %v1612
  %1630 = vst.msk [vmem:[%s1628 + $0x8] sm:$0xff] %vm494, %v1613
  %v1631 = vld [vmem:[#allocation2 + $0x1d0] sm:$0xff]
  %v1632 = vld [vmem:[#allocation2 + $0x1d8] sm:$0xff]
  %1633 = vxpose.xlu0.b32.start [1/16] %v1631, 128
  %1634 = vxpose.xlu0.b32.cont [2/16] %v1632, 128
  %1635 = vxpose.xlu0.b32.cont [3/16] 0.0, 128
  %1636 = vxpose.xlu0.b32.cont [4/16] 0.0, 128
  %1637 = vxpose.xlu0.b32.cont [5/16] 0.0, 128
  %1638 = vxpose.xlu0.b32.cont [6/16] 0.0, 128
  %1639 = vxpose.xlu0.b32.cont [7/16] 0.0, 128
  %1640 = vxpose.xlu0.b32.cont [8/16] 0.0, 128
  %1641 = vxpose.xlu0.b32.cont [9/16] 0.0, 128
  %1642 = vxpose.xlu0.b32.cont [10/16] 0.0, 128
  %1643 = vxpose.xlu0.b32.cont [11/16] 0.0, 128
  %1644 = vxpose.xlu0.b32.cont [12/16] 0.0, 128
  %1645 = vxpose.xlu0.b32.cont [13/16] 0.0, 128
  %1646 = vxpose.xlu0.b32.cont [14/16] 0.0, 128
  %1647 = vxpose.xlu0.b32.cont [15/16] 0.0, 128
  %1648 = vxpose.xlu0.b32.end [16/16] 0.0, 128
  %v1649 = vpop.trf.xlu0
  %v1650 = vpop.trf.xlu0
  %v1651 = vpop.trf.xlu0
  %v1652 = vpop.trf.xlu0
  %v1653 = vpop.trf.xlu0
  %v1654 = vpop.trf.xlu0
  %v1655 = vpop.trf.xlu0
  %v1656 = vpop.trf.xlu0
  %v1657 = vpop.trf.xlu0
  %v1658 = vpop.trf.xlu0
  %v1659 = vpop.trf.xlu0
  %v1660 = vpop.trf.xlu0
  %v1661 = vpop.trf.xlu0
  %v1662 = vpop.trf.xlu0
  %v1663 = vpop.trf.xlu0
  %v1664 = vpop.trf.xlu0
  %s1665 = scalar_lea.vmem [#allocation3], 464
  %1666 = vst.msk [vmem:[%s1665] sm:$0xff] %vm494, %v1649
  %1667 = vst.msk [vmem:[%s1665 + $0x8] sm:$0xff] %vm494, %v1650
  %v1668 = vld [vmem:[#allocation2 + $0x1e0] sm:$0xff]
  %v1669 = vld [vmem:[#allocation2 + $0x1e8] sm:$0xff]
  %1670 = vxpose.xlu0.b32.start [1/16] %v1668, 128
  %1671 = vxpose.xlu0.b32.cont [2/16] %v1669, 128
  %1672 = vxpose.xlu0.b32.cont [3/16] 0.0, 128
  %1673 = vxpose.xlu0.b32.cont [4/16] 0.0, 128
  %1674 = vxpose.xlu0.b32.cont [5/16] 0.0, 128
  %1675 = vxpose.xlu0.b32.cont [6/16] 0.0, 128
  %1676 = vxpose.xlu0.b32.cont [7/16] 0.0, 128
  %1677 = vxpose.xlu0.b32.cont [8/16] 0.0, 128
  %1678 = vxpose.xlu0.b32.cont [9/16] 0.0, 128
  %1679 = vxpose.xlu0.b32.cont [10/16] 0.0, 128
  %1680 = vxpose.xlu0.b32.cont [11/16] 0.0, 128
  %1681 = vxpose.xlu0.b32.cont [12/16] 0.0, 128
  %1682 = vxpose.xlu0.b32.cont [13/16] 0.0, 128
  %1683 = vxpose.xlu0.b32.cont [14/16] 0.0, 128
  %1684 = vxpose.xlu0.b32.cont [15/16] 0.0, 128
  %1685 = vxpose.xlu0.b32.end [16/16] 0.0, 128
  %v1686 = vpop.trf.xlu0
  %v1687 = vpop.trf.xlu0
  %v1688 = vpop.trf.xlu0
  %v1689 = vpop.trf.xlu0
  %v1690 = vpop.trf.xlu0
  %v1691 = vpop.trf.xlu0
  %v1692 = vpop.trf.xlu0
  %v1693 = vpop.trf.xlu0
  %v1694 = vpop.trf.xlu0
  %v1695 = vpop.trf.xlu0
  %v1696 = vpop.trf.xlu0
  %v1697 = vpop.trf.xlu0
  %v1698 = vpop.trf.xlu0
  %v1699 = vpop.trf.xlu0
  %v1700 = vpop.trf.xlu0
  %v1701 = vpop.trf.xlu0
  %s1702 = scalar_lea.vmem [#allocation3], 480
  %1703 = vst.msk [vmem:[%s1702] sm:$0xff] %vm494, %v1686
  %1704 = vst.msk [vmem:[%s1702 + $0x8] sm:$0xff] %vm494, %v1687
  %v1705 = vld [vmem:[#allocation2 + $0x1f0] sm:$0xff]
  %v1706 = vld [vmem:[#allocation2 + $0x1f8] sm:$0xff]
  %1707 = vxpose.xlu0.b32.start [1/16] %v1705, 128
  %1708 = vxpose.xlu0.b32.cont [2/16] %v1706, 128
  %1709 = vxpose.xlu0.b32.cont [3/16] 0.0, 128
  %1710 = vxpose.xlu0.b32.cont [4/16] 0.0, 128
  %1711 = vxpose.xlu0.b32.cont [5/16] 0.0, 128
  %1712 = vxpose.xlu0.b32.cont [6/16] 0.0, 128
  %1713 = vxpose.xlu0.b32.cont [7/16] 0.0, 128
  %1714 = vxpose.xlu0.b32.cont [8/16] 0.0, 128
  %1715 = vxpose.xlu0.b32.cont [9/16] 0.0, 128
  %1716 = vxpose.xlu0.b32.cont [10/16] 0.0, 128
  %1717 = vxpose.xlu0.b32.cont [11/16] 0.0, 128
  %1718 = vxpose.xlu0.b32.cont [12/16] 0.0, 128
  %1719 = vxpose.xlu0.b32.cont [13/16] 0.0, 128
  %1720 = vxpose.xlu0.b32.cont [14/16] 0.0, 128
  %1721 = vxpose.xlu0.b32.cont [15/16] 0.0, 128
  %1722 = vxpose.xlu0.b32.end [16/16] 0.0, 128
  %v1723 = vpop.trf.xlu0
  %v1724 = vpop.trf.xlu0
  %v1725 = vpop.trf.xlu0
  %v1726 = vpop.trf.xlu0
  %v1727 = vpop.trf.xlu0
  %v1728 = vpop.trf.xlu0
  %v1729 = vpop.trf.xlu0
  %v1730 = vpop.trf.xlu0
  %v1731 = vpop.trf.xlu0
  %v1732 = vpop.trf.xlu0
  %v1733 = vpop.trf.xlu0
  %v1734 = vpop.trf.xlu0
  %v1735 = vpop.trf.xlu0
  %v1736 = vpop.trf.xlu0
  %v1737 = vpop.trf.xlu0
  %v1738 = vpop.trf.xlu0
  %s1739 = scalar_lea.vmem [#allocation3], 496
  %1740 = vst.msk [vmem:[%s1739] sm:$0xff] %vm494, %v1723
  %1741 = vst.msk [vmem:[%s1739 + $0x8] sm:$0xff] %vm494, %v1724
  %1742 = vst [vmem:[#allocation4] sm:$0xff] 0.0
  %1743 = vst.msk [vmem:[#allocation4 + $0x8] sm:$0xff] %vm494, 0.0
  %1744 = vst [vmem:[#allocation4 + $0x10] sm:$0xff] 0.0
  %1745 = vst.msk [vmem:[#allocation4 + $0x18] sm:$0xff] %vm494, 0.0
  %1746 = vst [vmem:[#allocation4 + $0x20] sm:$0xff] 0.0
  %1747 = vst.msk [vmem:[#allocation4 + $0x28] sm:$0xff] %vm494, 0.0
  %1748 = vst [vmem:[#allocation4 + $0x30] sm:$0xff] 0.0
  %1749 = vst.msk [vmem:[#allocation4 + $0x38] sm:$0xff] %vm494, 0.0
  %1750 = vst [vmem:[#allocation4 + $0x40] sm:$0xff] 0.0
  %1751 = vst.msk [vmem:[#allocation4 + $0x48] sm:$0xff] %vm494, 0.0
  %1752 = vst [vmem:[#allocation4 + $0x50] sm:$0xff] 0.0
  %1753 = vst.msk [vmem:[#allocation4 + $0x58] sm:$0xff] %vm494, 0.0
  %1754 = vst [vmem:[#allocation4 + $0x60] sm:$0xff] 0.0
  %1755 = vst.msk [vmem:[#allocation4 + $0x68] sm:$0xff] %vm494, 0.0
  %1756 = vst [vmem:[#allocation4 + $0x70] sm:$0xff] 0.0
  %1757 = vst.msk [vmem:[#allocation4 + $0x78] sm:$0xff] %vm494, 0.0
  %1758 = vst [vmem:[#allocation4 + $0x80] sm:$0xff] 0.0
  %1759 = vst.msk [vmem:[#allocation4 + $0x88] sm:$0xff] %vm494, 0.0
  %1760 = vst [vmem:[#allocation4 + $0x90] sm:$0xff] 0.0
  %1761 = vst.msk [vmem:[#allocation4 + $0x98] sm:$0xff] %vm494, 0.0
  %1762 = vst [vmem:[#allocation4 + $0xa0] sm:$0xff] 0.0
  %1763 = vst.msk [vmem:[#allocation4 + $0xa8] sm:$0xff] %vm494, 0.0
  %1764 = vst [vmem:[#allocation4 + $0xb0] sm:$0xff] 0.0
  %1765 = vst.msk [vmem:[#allocation4 + $0xb8] sm:$0xff] %vm494, 0.0
  %1766 = vst [vmem:[#allocation4 + $0xc0] sm:$0xff] 0.0
  %1767 = vst.msk [vmem:[#allocation4 + $0xc8] sm:$0xff] %vm494, 0.0
  %1768 = vst [vmem:[#allocation4 + $0xd0] sm:$0xff] 0.0
  %1769 = vst.msk [vmem:[#allocation4 + $0xd8] sm:$0xff] %vm494, 0.0
  %1770 = vst [vmem:[#allocation4 + $0xe0] sm:$0xff] 0.0
  %1771 = vst.msk [vmem:[#allocation4 + $0xe8] sm:$0xff] %vm494, 0.0
  %1772 = vst [vmem:[#allocation4 + $0xf0] sm:$0xff] 0.0
  %1773 = vst.msk [vmem:[#allocation4 + $0xf8] sm:$0xff] %vm494, 0.0
  %1774 = vst [vmem:[#allocation4 + $0x100] sm:$0xff] 0.0
  %1775 = vst.msk [vmem:[#allocation4 + $0x108] sm:$0xff] %vm494, 0.0
  %1776 = vst [vmem:[#allocation4 + $0x110] sm:$0xff] 0.0
  %1777 = vst.msk [vmem:[#allocation4 + $0x118] sm:$0xff] %vm494, 0.0
  %1778 = vst [vmem:[#allocation4 + $0x120] sm:$0xff] 0.0
  %1779 = vst.msk [vmem:[#allocation4 + $0x128] sm:$0xff] %vm494, 0.0
  %1780 = vst [vmem:[#allocation4 + $0x130] sm:$0xff] 0.0
  %1781 = vst.msk [vmem:[#allocation4 + $0x138] sm:$0xff] %vm494, 0.0
  %1782 = vst [vmem:[#allocation4 + $0x140] sm:$0xff] 0.0
  %1783 = vst.msk [vmem:[#allocation4 + $0x148] sm:$0xff] %vm494, 0.0
  %1784 = vst [vmem:[#allocation4 + $0x150] sm:$0xff] 0.0
  %1785 = vst.msk [vmem:[#allocation4 + $0x158] sm:$0xff] %vm494, 0.0
  %1786 = vst [vmem:[#allocation4 + $0x160] sm:$0xff] 0.0
  %1787 = vst.msk [vmem:[#allocation4 + $0x168] sm:$0xff] %vm494, 0.0
  %1788 = vst [vmem:[#allocation4 + $0x170] sm:$0xff] 0.0
  %1789 = vst.msk [vmem:[#allocation4 + $0x178] sm:$0xff] %vm494, 0.0
  %1790 = vst [vmem:[#allocation4 + $0x180] sm:$0xff] 0.0
  %1791 = vst.msk [vmem:[#allocation4 + $0x188] sm:$0xff] %vm494, 0.0
  %1792 = vst [vmem:[#allocation4 + $0x190] sm:$0xff] 0.0
  %1793 = vst.msk [vmem:[#allocation4 + $0x198] sm:$0xff] %vm494, 0.0
  %1794 = vst [vmem:[#allocation4 + $0x1a0] sm:$0xff] 0.0
  %1795 = vst.msk [vmem:[#allocation4 + $0x1a8] sm:$0xff] %vm494, 0.0
  %1796 = vst [vmem:[#allocation4 + $0x1b0] sm:$0xff] 0.0
  %1797 = vst.msk [vmem:[#allocation4 + $0x1b8] sm:$0xff] %vm494, 0.0
  %1798 = vst [vmem:[#allocation4 + $0x1c0] sm:$0xff] 0.0
  %1799 = vst.msk [vmem:[#allocation4 + $0x1c8] sm:$0xff] %vm494, 0.0
  %1800 = vst [vmem:[#allocation4 + $0x1d0] sm:$0xff] 0.0
  %1801 = vst.msk [vmem:[#allocation4 + $0x1d8] sm:$0xff] %vm494, 0.0
  %1802 = vst [vmem:[#allocation4 + $0x1e0] sm:$0xff] 0.0
  %1803 = vst.msk [vmem:[#allocation4 + $0x1e8] sm:$0xff] %vm494, 0.0
  %1804 = vst [vmem:[#allocation4 + $0x1f0] sm:$0xff] 0.0
  %1805 = vst.msk [vmem:[#allocation4 + $0x1f8] sm:$0xff] %vm494, 0.0
  %1806 = vst [vmem:[#allocation4 + $0x200] sm:$0xff] 0.0
  %1807 = vst.msk [vmem:[#allocation4 + $0x208] sm:$0xff] %vm494, 0.0
  %1808 = vst [vmem:[#allocation4 + $0x210] sm:$0xff] 0.0
  %1809 = vst.msk [vmem:[#allocation4 + $0x218] sm:$0xff] %vm494, 0.0
  %1810 = vst [vmem:[#allocation4 + $0x220] sm:$0xff] 0.0
  %1811 = vst.msk [vmem:[#allocation4 + $0x228] sm:$0xff] %vm494, 0.0
  %1812 = vst [vmem:[#allocation4 + $0x230] sm:$0xff] 0.0
  %1813 = vst.msk [vmem:[#allocation4 + $0x238] sm:$0xff] %vm494, 0.0
  %1814 = vst [vmem:[#allocation4 + $0x240] sm:$0xff] 0.0
  %1815 = vst.msk [vmem:[#allocation4 + $0x248] sm:$0xff] %vm494, 0.0
  %1816 = vst [vmem:[#allocation4 + $0x250] sm:$0xff] 0.0
  %1817 = vst.msk [vmem:[#allocation4 + $0x258] sm:$0xff] %vm494, 0.0
  %1818 = vst [vmem:[#allocation4 + $0x260] sm:$0xff] 0.0
  %1819 = vst.msk [vmem:[#allocation4 + $0x268] sm:$0xff] %vm494, 0.0
  %1820 = vst [vmem:[#allocation4 + $0x270] sm:$0xff] 0.0
  %1821 = vst.msk [vmem:[#allocation4 + $0x278] sm:$0xff] %vm494, 0.0
  %1822 = vst [vmem:[#allocation4 + $0x280] sm:$0xff] 0.0
  %1823 = vst.msk [vmem:[#allocation4 + $0x288] sm:$0xff] %vm494, 0.0
  %1824 = vst [vmem:[#allocation4 + $0x290] sm:$0xff] 0.0
  %1825 = vst.msk [vmem:[#allocation4 + $0x298] sm:$0xff] %vm494, 0.0
  %1826 = vst [vmem:[#allocation4 + $0x2a0] sm:$0xff] 0.0
  %1827 = vst.msk [vmem:[#allocation4 + $0x2a8] sm:$0xff] %vm494, 0.0
  %1828 = vst [vmem:[#allocation4 + $0x2b0] sm:$0xff] 0.0
  %1829 = vst.msk [vmem:[#allocation4 + $0x2b8] sm:$0xff] %vm494, 0.0
  %1830 = vst [vmem:[#allocation4 + $0x2c0] sm:$0xff] 0.0
  %1831 = vst.msk [vmem:[#allocation4 + $0x2c8] sm:$0xff] %vm494, 0.0
  %1832 = vst [vmem:[#allocation4 + $0x2d0] sm:$0xff] 0.0
  %1833 = vst.msk [vmem:[#allocation4 + $0x2d8] sm:$0xff] %vm494, 0.0
  %1834 = vst [vmem:[#allocation4 + $0x2e0] sm:$0xff] 0.0
  %1835 = vst.msk [vmem:[#allocation4 + $0x2e8] sm:$0xff] %vm494, 0.0
  %1836 = vst [vmem:[#allocation4 + $0x2f0] sm:$0xff] 0.0
  %1837 = vst.msk [vmem:[#allocation4 + $0x2f8] sm:$0xff] %vm494, 0.0
  %1838 = vst [vmem:[#allocation4 + $0x300] sm:$0xff] 0.0
  %1839 = vst.msk [vmem:[#allocation4 + $0x308] sm:$0xff] %vm494, 0.0
  %1840 = vst [vmem:[#allocation4 + $0x310] sm:$0xff] 0.0
  %1841 = vst.msk [vmem:[#allocation4 + $0x318] sm:$0xff] %vm494, 0.0
  %1842 = vst [vmem:[#allocation4 + $0x320] sm:$0xff] 0.0
  %1843 = vst.msk [vmem:[#allocation4 + $0x328] sm:$0xff] %vm494, 0.0
  %1844 = vst [vmem:[#allocation4 + $0x330] sm:$0xff] 0.0
  %1845 = vst.msk [vmem:[#allocation4 + $0x338] sm:$0xff] %vm494, 0.0
  %1846 = vst [vmem:[#allocation4 + $0x340] sm:$0xff] 0.0
  %1847 = vst.msk [vmem:[#allocation4 + $0x348] sm:$0xff] %vm494, 0.0
  %1848 = vst [vmem:[#allocation4 + $0x350] sm:$0xff] 0.0
  %1849 = vst.msk [vmem:[#allocation4 + $0x358] sm:$0xff] %vm494, 0.0
  %1850 = vst [vmem:[#allocation4 + $0x360] sm:$0xff] 0.0
  %1851 = vst.msk [vmem:[#allocation4 + $0x368] sm:$0xff] %vm494, 0.0
  %1852 = vst [vmem:[#allocation4 + $0x370] sm:$0xff] 0.0
  %1853 = vst.msk [vmem:[#allocation4 + $0x378] sm:$0xff] %vm494, 0.0
  %1854 = vst [vmem:[#allocation4 + $0x380] sm:$0xff] 0.0
  %1855 = vst.msk [vmem:[#allocation4 + $0x388] sm:$0xff] %vm494, 0.0
  %1856 = vst [vmem:[#allocation4 + $0x390] sm:$0xff] 0.0
  %1857 = vst.msk [vmem:[#allocation4 + $0x398] sm:$0xff] %vm494, 0.0
  %1858 = vst [vmem:[#allocation4 + $0x3a0] sm:$0xff] 0.0
  %1859 = vst.msk [vmem:[#allocation4 + $0x3a8] sm:$0xff] %vm494, 0.0
  %1860 = vst [vmem:[#allocation4 + $0x3b0] sm:$0xff] 0.0
  %1861 = vst.msk [vmem:[#allocation4 + $0x3b8] sm:$0xff] %vm494, 0.0
  %1862 = vst [vmem:[#allocation4 + $0x3c0] sm:$0xff] 0.0
  %1863 = vst.msk [vmem:[#allocation4 + $0x3c8] sm:$0xff] %vm494, 0.0
  %1864 = vst [vmem:[#allocation4 + $0x3d0] sm:$0xff] 0.0
  %1865 = vst.msk [vmem:[#allocation4 + $0x3d8] sm:$0xff] %vm494, 0.0
  %1866 = vst [vmem:[#allocation4 + $0x3e0] sm:$0xff] 0.0
  %1867 = vst.msk [vmem:[#allocation4 + $0x3e8] sm:$0xff] %vm494, 0.0
  %1868 = vst [vmem:[#allocation4 + $0x3f0] sm:$0xff] 0.0
  %1869 = vst.msk [vmem:[#allocation4 + $0x3f8] sm:$0xff] %vm494, 0.0
  %v1870 = vld [vmem:[#allocation3] sm:$0xff]
  %v1871 = vld [vmem:[#allocation3 + $0x8] sm:$0x7f]
  %v1872 = vld [vmem:[#allocation3 + $0x10] sm:$0xff]
  %v1873 = vld [vmem:[#allocation3 + $0x18] sm:$0x7f]
  %v1874 = vld [vmem:[#allocation3 + $0x20] sm:$0xff]
  %v1875 = vld [vmem:[#allocation3 + $0x28] sm:$0x7f]
  %v1876 = vld [vmem:[#allocation3 + $0x30] sm:$0xff]
  %v1877 = vld [vmem:[#allocation3 + $0x38] sm:$0x7f]
  %v1878 = vld [vmem:[#allocation3 + $0x40] sm:$0xff]
  %v1879 = vld [vmem:[#allocation3 + $0x48] sm:$0x7f]
  %v1880 = vld [vmem:[#allocation3 + $0x50] sm:$0xff]
  %v1881 = vld [vmem:[#allocation3 + $0x58] sm:$0x7f]
  %v1882 = vld [vmem:[#allocation3 + $0x60] sm:$0xff]
  %v1883 = vld [vmem:[#allocation3 + $0x68] sm:$0x7f]
  %v1884 = vld [vmem:[#allocation3 + $0x70] sm:$0xff]
  %v1885 = vld [vmem:[#allocation3 + $0x78] sm:$0x7f]
  %v1886 = vld [vmem:[#allocation3 + $0x80] sm:$0xff]
  %v1887 = vld [vmem:[#allocation3 + $0x88] sm:$0x7f]
  %v1888 = vld [vmem:[#allocation3 + $0x90] sm:$0xff]
  %v1889 = vld [vmem:[#allocation3 + $0x98] sm:$0x7f]
  %v1890 = vld [vmem:[#allocation3 + $0xa0] sm:$0xff]
  %v1891 = vld [vmem:[#allocation3 + $0xa8] sm:$0x7f]
  %v1892 = vld [vmem:[#allocation3 + $0xb0] sm:$0xff]
  %v1893 = vld [vmem:[#allocation3 + $0xb8] sm:$0x7f]
  %v1894 = vld [vmem:[#allocation3 + $0xc0] sm:$0xff]
  %v1895 = vld [vmem:[#allocation3 + $0xc8] sm:$0x7f]
  %v1896 = vld [vmem:[#allocation3 + $0xd0] sm:$0xff]
  %v1897 = vld [vmem:[#allocation3 + $0xd8] sm:$0x7f]
  %v1898 = vld [vmem:[#allocation3 + $0xe0] sm:$0xff]
  %v1899 = vld [vmem:[#allocation3 + $0xe8] sm:$0x7f]
  %vm1930 = vcmask 1040384
  %v1931 = vrot.slane %v1870, 7
  %v1932 = vrot.slane %v1871, 7
  %v1933 = vsel %vm1930, %v1931, %v1932
  %v1934 = vrot.slane %v1872, 7
  %v1935 = vrot.slane %v1873, 7
  %v1936 = vsel %vm1930, %v1934, %v1935
  %v1937 = vrot.slane %v1874, 7
  %v1938 = vrot.slane %v1875, 7
  %v1939 = vsel %vm1930, %v1937, %v1938
  %v1940 = vrot.slane %v1876, 7
  %v1941 = vrot.slane %v1877, 7
  %v1942 = vsel %vm1930, %v1940, %v1941
  %v1943 = vrot.slane %v1878, 7
  %v1944 = vrot.slane %v1879, 7
  %v1945 = vsel %vm1930, %v1943, %v1944
  %v1946 = vrot.slane %v1880, 7
  %v1947 = vrot.slane %v1881, 7
  %v1948 = vsel %vm1930, %v1946, %v1947
  %v1949 = vrot.slane %v1882, 7
  %v1950 = vrot.slane %v1883, 7
  %v1951 = vsel %vm1930, %v1949, %v1950
  %v1952 = vrot.slane %v1884, 7
  %v1953 = vrot.slane %v1885, 7
  %v1954 = vsel %vm1930, %v1952, %v1953
  %v1955 = vrot.slane %v1886, 7
  %v1956 = vrot.slane %v1887, 7
  %v1957 = vsel %vm1930, %v1955, %v1956
  %v1958 = vrot.slane %v1888, 7
  %v1959 = vrot.slane %v1889, 7
  %v1960 = vsel %vm1930, %v1958, %v1959
  %v1961 = vrot.slane %v1890, 7
  %v1962 = vrot.slane %v1891, 7
  %v1963 = vsel %vm1930, %v1961, %v1962
  %v1964 = vrot.slane %v1892, 7
  %v1965 = vrot.slane %v1893, 7
  %v1966 = vsel %vm1930, %v1964, %v1965
  %v1967 = vrot.slane %v1894, 7
  %v1968 = vrot.slane %v1895, 7
  %v1969 = vsel %vm1930, %v1967, %v1968
  %v1970 = vrot.slane %v1896, 7
  %v1971 = vrot.slane %v1897, 7
  %v1972 = vsel %vm1930, %v1970, %v1971
  %v1973 = vrot.slane %v1898, 7
  %v1974 = vrot.slane %v1899, 7
  %v1975 = vsel %vm1930, %v1973, %v1974
  %s2006 = scalar_lea.vmem [#allocation4], 32
  %vm2007 = vcmask 130049
  %2008 = vst.msk [vmem:[%s2006] sm:$0xfe] %vm2007, %v1931
  %2009 = vst.msk [vmem:[%s2006 + $0x10] sm:$0xff] %vm494, %v1933
  %2010 = vst.msk [vmem:[%s2006 + $0x20] sm:$0xfe] %vm2007, %v1934
  %2011 = vst.msk [vmem:[%s2006 + $0x30] sm:$0xff] %vm494, %v1936
  %2012 = vst.msk [vmem:[%s2006 + $0x40] sm:$0xfe] %vm2007, %v1937
  %2013 = vst.msk [vmem:[%s2006 + $0x50] sm:$0xff] %vm494, %v1939
  %2014 = vst.msk [vmem:[%s2006 + $0x60] sm:$0xfe] %vm2007, %v1940
  %2015 = vst.msk [vmem:[%s2006 + $0x70] sm:$0xff] %vm494, %v1942
  %2016 = vst.msk [vmem:[%s2006 + $0x80] sm:$0xfe] %vm2007, %v1943
  %2017 = vst.msk [vmem:[%s2006 + $0x90] sm:$0xff] %vm494, %v1945
  %2018 = vst.msk [vmem:[%s2006 + $0xa0] sm:$0xfe] %vm2007, %v1946
  %2019 = vst.msk [vmem:[%s2006 + $0xb0] sm:$0xff] %vm494, %v1948
  %2020 = vst.msk [vmem:[%s2006 + $0xc0] sm:$0xfe] %vm2007, %v1949
  %2021 = vst.msk [vmem:[%s2006 + $0xd0] sm:$0xff] %vm494, %v1951
  %2022 = vst.msk [vmem:[%s2006 + $0xe0] sm:$0xfe] %vm2007, %v1952
  %2023 = vst.msk [vmem:[%s2006 + $0xf0] sm:$0xff] %vm494, %v1954
  %2024 = vst.msk [vmem:[%s2006 + $0x100] sm:$0xfe] %vm2007, %v1955
  %2025 = vst.msk [vmem:[%s2006 + $0x110] sm:$0xff] %vm494, %v1957
  %2026 = vst.msk [vmem:[%s2006 + $0x120] sm:$0xfe] %vm2007, %v1958
  %2027 = vst.msk [vmem:[%s2006 + $0x130] sm:$0xff] %vm494, %v1960
  %2028 = vst.msk [vmem:[%s2006 + $0x140] sm:$0xfe] %vm2007, %v1961
  %2029 = vst.msk [vmem:[%s2006 + $0x150] sm:$0xff] %vm494, %v1963
  %2030 = vst.msk [vmem:[%s2006 + $0x160] sm:$0xfe] %vm2007, %v1964
  %2031 = vst.msk [vmem:[%s2006 + $0x170] sm:$0xff] %vm494, %v1966
  %2032 = vst.msk [vmem:[%s2006 + $0x180] sm:$0xfe] %vm2007, %v1967
  %2033 = vst.msk [vmem:[%s2006 + $0x190] sm:$0xff] %vm494, %v1969
  %2034 = vst.msk [vmem:[%s2006 + $0x1a0] sm:$0xfe] %vm2007, %v1970
  %2035 = vst.msk [vmem:[%s2006 + $0x1b0] sm:$0xff] %vm494, %v1972
  %2036 = vst.msk [vmem:[%s2006 + $0x1c0] sm:$0xfe] %vm2007, %v1973
  %2037 = vst.msk [vmem:[%s2006 + $0x1d0] sm:$0xff] %vm494, %v1975
  %v2038 = vld [vmem:[%s1184] sm:$0xff]
  %v2039 = vld [vmem:[%s1184 + $0x8] sm:$0x7f]
  %v2040 = vld [vmem:[%s1184 + $0x10] sm:$0xff]
  %v2041 = vld [vmem:[%s1184 + $0x18] sm:$0x7f]
  %v2042 = vld [vmem:[%s1184 + $0x20] sm:$0xff]
  %v2043 = vld [vmem:[%s1184 + $0x28] sm:$0x7f]
  %v2044 = vld [vmem:[%s1184 + $0x30] sm:$0xff]
  %v2045 = vld [vmem:[%s1184 + $0x38] sm:$0x7f]
  %v2046 = vld [vmem:[%s1184 + $0x40] sm:$0xff]
  %v2047 = vld [vmem:[%s1184 + $0x48] sm:$0x7f]
  %v2048 = vld [vmem:[%s1184 + $0x50] sm:$0xff]
  %v2049 = vld [vmem:[%s1184 + $0x58] sm:$0x7f]
  %v2050 = vld [vmem:[%s1184 + $0x60] sm:$0xff]
  %v2051 = vld [vmem:[%s1184 + $0x68] sm:$0x7f]
  %v2052 = vld [vmem:[%s1184 + $0x70] sm:$0xff]
  %v2053 = vld [vmem:[%s1184 + $0x78] sm:$0x7f]
  %v2054 = vld [vmem:[%s1184 + $0x80] sm:$0xff]
  %v2055 = vld [vmem:[%s1184 + $0x88] sm:$0x7f]
  %v2056 = vld [vmem:[%s1184 + $0x90] sm:$0xff]
  %v2057 = vld [vmem:[%s1184 + $0x98] sm:$0x7f]
  %v2058 = vld [vmem:[%s1184 + $0xa0] sm:$0xff]
  %v2059 = vld [vmem:[%s1184 + $0xa8] sm:$0x7f]
  %v2060 = vld [vmem:[%s1184 + $0xb0] sm:$0xff]
  %v2061 = vld [vmem:[%s1184 + $0xb8] sm:$0x7f]
  %v2062 = vld [vmem:[%s1184 + $0xc0] sm:$0xff]
  %v2063 = vld [vmem:[%s1184 + $0xc8] sm:$0x7f]
  %v2064 = vld [vmem:[%s1184 + $0xd0] sm:$0xff]
  %v2065 = vld [vmem:[%s1184 + $0xd8] sm:$0x7f]
  %v2066 = vld [vmem:[%s1184 + $0xe0] sm:$0xff]
  %v2067 = vld [vmem:[%s1184 + $0xe8] sm:$0x7f]
  %v2098 = vrot.slane %v2038, 7
  %v2099 = vrot.slane %v2039, 7
  %v2100 = vsel %vm1930, %v2098, %v2099
  %v2101 = vrot.slane %v2040, 7
  %v2102 = vrot.slane %v2041, 7
  %v2103 = vsel %vm1930, %v2101, %v2102
  %v2104 = vrot.slane %v2042, 7
  %v2105 = vrot.slane %v2043, 7
  %v2106 = vsel %vm1930, %v2104, %v2105
  %v2107 = vrot.slane %v2044, 7
  %v2108 = vrot.slane %v2045, 7
  %v2109 = vsel %vm1930, %v2107, %v2108
  %v2110 = vrot.slane %v2046, 7
  %v2111 = vrot.slane %v2047, 7
  %v2112 = vsel %vm1930, %v2110, %v2111
  %v2113 = vrot.slane %v2048, 7
  %v2114 = vrot.slane %v2049, 7
  %v2115 = vsel %vm1930, %v2113, %v2114
  %v2116 = vrot.slane %v2050, 7
  %v2117 = vrot.slane %v2051, 7
  %v2118 = vsel %vm1930, %v2116, %v2117
  %v2119 = vrot.slane %v2052, 7
  %v2120 = vrot.slane %v2053, 7
  %v2121 = vsel %vm1930, %v2119, %v2120
  %v2122 = vrot.slane %v2054, 7
  %v2123 = vrot.slane %v2055, 7
  %v2124 = vsel %vm1930, %v2122, %v2123
  %v2125 = vrot.slane %v2056, 7
  %v2126 = vrot.slane %v2057, 7
  %v2127 = vsel %vm1930, %v2125, %v2126
  %v2128 = vrot.slane %v2058, 7
  %v2129 = vrot.slane %v2059, 7
  %v2130 = vsel %vm1930, %v2128, %v2129
  %v2131 = vrot.slane %v2060, 7
  %v2132 = vrot.slane %v2061, 7
  %v2133 = vsel %vm1930, %v2131, %v2132
  %v2134 = vrot.slane %v2062, 7
  %v2135 = vrot.slane %v2063, 7
  %v2136 = vsel %vm1930, %v2134, %v2135
  %v2137 = vrot.slane %v2064, 7
  %v2138 = vrot.slane %v2065, 7
  %v2139 = vsel %vm1930, %v2137, %v2138
  %v2140 = vrot.slane %v2066, 7
  %v2141 = vrot.slane %v2067, 7
  %v2142 = vsel %vm1930, %v2140, %v2141
  %s2173 = scalar_lea.vmem [#allocation4], 544
  %2174 = vst.msk [vmem:[%s2173] sm:$0xfe] %vm2007, %v2098
  %2175 = vst.msk [vmem:[%s2173 + $0x10] sm:$0xff] %vm494, %v2100
  %2176 = vst.msk [vmem:[%s2173 + $0x20] sm:$0xfe] %vm2007, %v2101
  %2177 = vst.msk [vmem:[%s2173 + $0x30] sm:$0xff] %vm494, %v2103
  %2178 = vst.msk [vmem:[%s2173 + $0x40] sm:$0xfe] %vm2007, %v2104
  %2179 = vst.msk [vmem:[%s2173 + $0x50] sm:$0xff] %vm494, %v2106
  %2180 = vst.msk [vmem:[%s2173 + $0x60] sm:$0xfe] %vm2007, %v2107
  %2181 = vst.msk [vmem:[%s2173 + $0x70] sm:$0xff] %vm494, %v2109
  %2182 = vst.msk [vmem:[%s2173 + $0x80] sm:$0xfe] %vm2007, %v2110
  %2183 = vst.msk [vmem:[%s2173 + $0x90] sm:$0xff] %vm494, %v2112
  %2184 = vst.msk [vmem:[%s2173 + $0xa0] sm:$0xfe] %vm2007, %v2113
  %2185 = vst.msk [vmem:[%s2173 + $0xb0] sm:$0xff] %vm494, %v2115
  %2186 = vst.msk [vmem:[%s2173 + $0xc0] sm:$0xfe] %vm2007, %v2116
  %2187 = vst.msk [vmem:[%s2173 + $0xd0] sm:$0xff] %vm494, %v2118
  %2188 = vst.msk [vmem:[%s2173 + $0xe0] sm:$0xfe] %vm2007, %v2119
  %2189 = vst.msk [vmem:[%s2173 + $0xf0] sm:$0xff] %vm494, %v2121
  %2190 = vst.msk [vmem:[%s2173 + $0x100] sm:$0xfe] %vm2007, %v2122
  %2191 = vst.msk [vmem:[%s2173 + $0x110] sm:$0xff] %vm494, %v2124
  %2192 = vst.msk [vmem:[%s2173 + $0x120] sm:$0xfe] %vm2007, %v2125
  %2193 = vst.msk [vmem:[%s2173 + $0x130] sm:$0xff] %vm494, %v2127
  %2194 = vst.msk [vmem:[%s2173 + $0x140] sm:$0xfe] %vm2007, %v2128
  %2195 = vst.msk [vmem:[%s2173 + $0x150] sm:$0xff] %vm494, %v2130
  %2196 = vst.msk [vmem:[%s2173 + $0x160] sm:$0xfe] %vm2007, %v2131
  %2197 = vst.msk [vmem:[%s2173 + $0x170] sm:$0xff] %vm494, %v2133
  %2198 = vst.msk [vmem:[%s2173 + $0x180] sm:$0xfe] %vm2007, %v2134
  %2199 = vst.msk [vmem:[%s2173 + $0x190] sm:$0xff] %vm494, %v2136
  %2200 = vst.msk [vmem:[%s2173 + $0x1a0] sm:$0xfe] %vm2007, %v2137
  %2201 = vst.msk [vmem:[%s2173 + $0x1b0] sm:$0xff] %vm494, %v2139
  %2202 = vst.msk [vmem:[%s2173 + $0x1c0] sm:$0xfe] %vm2007, %v2140
  %2203 = vst.msk [vmem:[%s2173 + $0x1d0] sm:$0xff] %vm494, %v2142
  %v2204 = vld [vmem:[#allocation3] sm:$0xff]
  %v2205 = vld [vmem:[#allocation3 + $0x8] sm:$0xff]
  %v2206 = vld [vmem:[#allocation3 + $0x10] sm:$0xff]
  %v2207 = vld [vmem:[#allocation3 + $0x18] sm:$0xff]
  %v2208 = vld [vmem:[#allocation3 + $0x20] sm:$0xff]
  %v2209 = vld [vmem:[#allocation3 + $0x28] sm:$0xff]
  %v2210 = vld [vmem:[#allocation3 + $0x30] sm:$0xff]
  %v2211 = vld [vmem:[#allocation3 + $0x38] sm:$0xff]
  %v2212 = vld [vmem:[#allocation3 + $0x40] sm:$0xff]
  %v2213 = vld [vmem:[#allocation3 + $0x48] sm:$0xff]
  %v2214 = vld [vmem:[#allocation3 + $0x50] sm:$0xff]
  %v2215 = vld [vmem:[#allocation3 + $0x58] sm:$0xff]
  %v2216 = vld [vmem:[#allocation3 + $0x60] sm:$0xff]
  %v2217 = vld [vmem:[#allocation3 + $0x68] sm:$0xff]
  %v2218 = vld [vmem:[#allocation3 + $0x70] sm:$0xff]
  %v2219 = vld [vmem:[#allocation3 + $0x78] sm:$0xff]
  %v2220 = vld [vmem:[#allocation3 + $0x80] sm:$0xff]
  %v2221 = vld [vmem:[#allocation3 + $0x88] sm:$0xff]
  %v2222 = vld [vmem:[#allocation3 + $0x90] sm:$0xff]
  %v2223 = vld [vmem:[#allocation3 + $0x98] sm:$0xff]
  %v2224 = vld [vmem:[#allocation3 + $0xa0] sm:$0xff]
  %v2225 = vld [vmem:[#allocation3 + $0xa8] sm:$0xff]
  %v2226 = vld [vmem:[#allocation3 + $0xb0] sm:$0xff]
  %v2227 = vld [vmem:[#allocation3 + $0xb8] sm:$0xff]
  %v2228 = vld [vmem:[#allocation3 + $0xc0] sm:$0xff]
  %v2229 = vld [vmem:[#allocation3 + $0xc8] sm:$0xff]
  %v2230 = vld [vmem:[#allocation3 + $0xd0] sm:$0xff]
  %v2231 = vld [vmem:[#allocation3 + $0xd8] sm:$0xff]
  %v2232 = vld [vmem:[#allocation3 + $0xe0] sm:$0xff]
  %v2233 = vld [vmem:[#allocation3 + $0xe8] sm:$0xff]
  %2264 = vrot.lane.b32.xlu0 %v2204, 16
  %v2265 = vpop.permute.xlu0 %2264
  %2266 = vrot.lane.b32.xlu0 %v2205, 16
  %v2267 = vpop.permute.xlu0 %2266
  %2268 = vrot.lane.b32.xlu0 %v2206, 16
  %v2269 = vpop.permute.xlu0 %2268
  %2270 = vrot.lane.b32.xlu0 %v2207, 16
  %v2271 = vpop.permute.xlu0 %2270
  %2272 = vrot.lane.b32.xlu0 %v2208, 16
  %v2273 = vpop.permute.xlu0 %2272
  %2274 = vrot.lane.b32.xlu0 %v2209, 16
  %v2275 = vpop.permute.xlu0 %2274
  %2276 = vrot.lane.b32.xlu0 %v2210, 16
  %v2277 = vpop.permute.xlu0 %2276
  %2278 = vrot.lane.b32.xlu0 %v2211, 16
  %v2279 = vpop.permute.xlu0 %2278
  %2280 = vrot.lane.b32.xlu0 %v2212, 16
  %v2281 = vpop.permute.xlu0 %2280
  %2282 = vrot.lane.b32.xlu0 %v2213, 16
  %v2283 = vpop.permute.xlu0 %2282
  %2284 = vrot.lane.b32.xlu0 %v2214, 16
  %v2285 = vpop.permute.xlu0 %2284
  %2286 = vrot.lane.b32.xlu0 %v2215, 16
  %v2287 = vpop.permute.xlu0 %2286
  %2288 = vrot.lane.b32.xlu0 %v2216, 16
  %v2289 = vpop.permute.xlu0 %2288
  %2290 = vrot.lane.b32.xlu0 %v2217, 16
  %v2291 = vpop.permute.xlu0 %2290
  %2292 = vrot.lane.b32.xlu0 %v2218, 16
  %v2293 = vpop.permute.xlu0 %2292
  %2294 = vrot.lane.b32.xlu0 %v2219, 16
  %v2295 = vpop.permute.xlu0 %2294
  %2296 = vrot.lane.b32.xlu0 %v2220, 16
  %v2297 = vpop.permute.xlu0 %2296
  %2298 = vrot.lane.b32.xlu0 %v2221, 16
  %v2299 = vpop.permute.xlu0 %2298
  %2300 = vrot.lane.b32.xlu0 %v2222, 16
  %v2301 = vpop.permute.xlu0 %2300
  %2302 = vrot.lane.b32.xlu0 %v2223, 16
  %v2303 = vpop.permute.xlu0 %2302
  %2304 = vrot.lane.b32.xlu0 %v2224, 16
  %v2305 = vpop.permute.xlu0 %2304
  %2306 = vrot.lane.b32.xlu0 %v2225, 16
  %v2307 = vpop.permute.xlu0 %2306
  %2308 = vrot.lane.b32.xlu0 %v2226, 16
  %v2309 = vpop.permute.xlu0 %2308
  %2310 = vrot.lane.b32.xlu0 %v2227, 16
  %v2311 = vpop.permute.xlu0 %2310
  %2312 = vrot.lane.b32.xlu0 %v2228, 16
  %v2313 = vpop.permute.xlu0 %2312
  %2314 = vrot.lane.b32.xlu0 %v2229, 16
  %v2315 = vpop.permute.xlu0 %2314
  %2316 = vrot.lane.b32.xlu0 %v2230, 16
  %v2317 = vpop.permute.xlu0 %2316
  %2318 = vrot.lane.b32.xlu0 %v2231, 16
  %v2319 = vpop.permute.xlu0 %2318
  %2320 = vrot.lane.b32.xlu0 %v2232, 16
  %v2321 = vpop.permute.xlu0 %2320
  %2322 = vrot.lane.b32.xlu0 %v2233, 16
  %v2323 = vpop.permute.xlu0 %2322
  %vm2354 = vcmask 261248
  %2355 = vst.msk [vmem:[%s2006] sm:$0xff] %vm2354, %v2265
  %2356 = vst.msk [vmem:[%s2006 + $0x10] sm:$0xff] %vm2354, %v2267
  %2357 = vst.msk [vmem:[%s2006 + $0x20] sm:$0xff] %vm2354, %v2269
  %2358 = vst.msk [vmem:[%s2006 + $0x30] sm:$0xff] %vm2354, %v2271
  %2359 = vst.msk [vmem:[%s2006 + $0x40] sm:$0xff] %vm2354, %v2273
  %2360 = vst.msk [vmem:[%s2006 + $0x50] sm:$0xff] %vm2354, %v2275
  %2361 = vst.msk [vmem:[%s2006 + $0x60] sm:$0xff] %vm2354, %v2277
  %2362 = vst.msk [vmem:[%s2006 + $0x70] sm:$0xff] %vm2354, %v2279
  %2363 = vst.msk [vmem:[%s2006 + $0x80] sm:$0xff] %vm2354, %v2281
  %2364 = vst.msk [vmem:[%s2006 + $0x90] sm:$0xff] %vm2354, %v2283
  %2365 = vst.msk [vmem:[%s2006 + $0xa0] sm:$0xff] %vm2354, %v2285
  %2366 = vst.msk [vmem:[%s2006 + $0xb0] sm:$0xff] %vm2354, %v2287
  %2367 = vst.msk [vmem:[%s2006 + $0xc0] sm:$0xff] %vm2354, %v2289
  %2368 = vst.msk [vmem:[%s2006 + $0xd0] sm:$0xff] %vm2354, %v2291
  %2369 = vst.msk [vmem:[%s2006 + $0xe0] sm:$0xff] %vm2354, %v2293
  %2370 = vst.msk [vmem:[%s2006 + $0xf0] sm:$0xff] %vm2354, %v2295
  %2371 = vst.msk [vmem:[%s2006 + $0x100] sm:$0xff] %vm2354, %v2297
  %2372 = vst.msk [vmem:[%s2006 + $0x110] sm:$0xff] %vm2354, %v2299
  %2373 = vst.msk [vmem:[%s2006 + $0x120] sm:$0xff] %vm2354, %v2301
  %2374 = vst.msk [vmem:[%s2006 + $0x130] sm:$0xff] %vm2354, %v2303
  %2375 = vst.msk [vmem:[%s2006 + $0x140] sm:$0xff] %vm2354, %v2305
  %2376 = vst.msk [vmem:[%s2006 + $0x150] sm:$0xff] %vm2354, %v2307
  %2377 = vst.msk [vmem:[%s2006 + $0x160] sm:$0xff] %vm2354, %v2309
  %2378 = vst.msk [vmem:[%s2006 + $0x170] sm:$0xff] %vm2354, %v2311
  %2379 = vst.msk [vmem:[%s2006 + $0x180] sm:$0xff] %vm2354, %v2313
  %2380 = vst.msk [vmem:[%s2006 + $0x190] sm:$0xff] %vm2354, %v2315
  %2381 = vst.msk [vmem:[%s2006 + $0x1a0] sm:$0xff] %vm2354, %v2317
  %2382 = vst.msk [vmem:[%s2006 + $0x1b0] sm:$0xff] %vm2354, %v2319
  %2383 = vst.msk [vmem:[%s2006 + $0x1c0] sm:$0xff] %vm2354, %v2321
  %2384 = vst.msk [vmem:[%s2006 + $0x1d0] sm:$0xff] %vm2354, %v2323
  %v2385 = vld [vmem:[%s1184] sm:$0xff]
  %v2386 = vld [vmem:[%s1184 + $0x8] sm:$0xff]
  %v2387 = vld [vmem:[%s1184 + $0x10] sm:$0xff]
  %v2388 = vld [vmem:[%s1184 + $0x18] sm:$0xff]
  %v2389 = vld [vmem:[%s1184 + $0x20] sm:$0xff]
  %v2390 = vld [vmem:[%s1184 + $0x28] sm:$0xff]
  %v2391 = vld [vmem:[%s1184 + $0x30] sm:$0xff]
  %v2392 = vld [vmem:[%s1184 + $0x38] sm:$0xff]
  %v2393 = vld [vmem:[%s1184 + $0x40] sm:$0xff]
  %v2394 = vld [vmem:[%s1184 + $0x48] sm:$0xff]
  %v2395 = vld [vmem:[%s1184 + $0x50] sm:$0xff]
  %v2396 = vld [vmem:[%s1184 + $0x58] sm:$0xff]
  %v2397 = vld [vmem:[%s1184 + $0x60] sm:$0xff]
  %v2398 = vld [vmem:[%s1184 + $0x68] sm:$0xff]
  %v2399 = vld [vmem:[%s1184 + $0x70] sm:$0xff]
  %v2400 = vld [vmem:[%s1184 + $0x78] sm:$0xff]
  %v2401 = vld [vmem:[%s1184 + $0x80] sm:$0xff]
  %v2402 = vld [vmem:[%s1184 + $0x88] sm:$0xff]
  %v2403 = vld [vmem:[%s1184 + $0x90] sm:$0xff]
  %v2404 = vld [vmem:[%s1184 + $0x98] sm:$0xff]
  %v2405 = vld [vmem:[%s1184 + $0xa0] sm:$0xff]
  %v2406 = vld [vmem:[%s1184 + $0xa8] sm:$0xff]
  %v2407 = vld [vmem:[%s1184 + $0xb0] sm:$0xff]
  %v2408 = vld [vmem:[%s1184 + $0xb8] sm:$0xff]
  %v2409 = vld [vmem:[%s1184 + $0xc0] sm:$0xff]
  %v2410 = vld [vmem:[%s1184 + $0xc8] sm:$0xff]
  %v2411 = vld [vmem:[%s1184 + $0xd0] sm:$0xff]
  %v2412 = vld [vmem:[%s1184 + $0xd8] sm:$0xff]
  %v2413 = vld [vmem:[%s1184 + $0xe0] sm:$0xff]
  %v2414 = vld [vmem:[%s1184 + $0xe8] sm:$0xff]
  %2445 = vrot.lane.b32.xlu0 %v2385, 16
  %v2446 = vpop.permute.xlu0 %2445
  %2447 = vrot.lane.b32.xlu0 %v2386, 16
  %v2448 = vpop.permute.xlu0 %2447
  %2449 = vrot.lane.b32.xlu0 %v2387, 16
  %v2450 = vpop.permute.xlu0 %2449
  %2451 = vrot.lane.b32.xlu0 %v2388, 16
  %v2452 = vpop.permute.xlu0 %2451
  %2453 = vrot.lane.b32.xlu0 %v2389, 16
  %v2454 = vpop.permute.xlu0 %2453
  %2455 = vrot.lane.b32.xlu0 %v2390, 16
  %v2456 = vpop.permute.xlu0 %2455
  %2457 = vrot.lane.b32.xlu0 %v2391, 16
  %v2458 = vpop.permute.xlu0 %2457
  %2459 = vrot.lane.b32.xlu0 %v2392, 16
  %v2460 = vpop.permute.xlu0 %2459
  %2461 = vrot.lane.b32.xlu0 %v2393, 16
  %v2462 = vpop.permute.xlu0 %2461
  %2463 = vrot.lane.b32.xlu0 %v2394, 16
  %v2464 = vpop.permute.xlu0 %2463
  %2465 = vrot.lane.b32.xlu0 %v2395, 16
  %v2466 = vpop.permute.xlu0 %2465
  %2467 = vrot.lane.b32.xlu0 %v2396, 16
  %v2468 = vpop.permute.xlu0 %2467
  %2469 = vrot.lane.b32.xlu0 %v2397, 16
  %v2470 = vpop.permute.xlu0 %2469
  %2471 = vrot.lane.b32.xlu0 %v2398, 16
  %v2472 = vpop.permute.xlu0 %2471
  %2473 = vrot.lane.b32.xlu0 %v2399, 16
  %v2474 = vpop.permute.xlu0 %2473
  %2475 = vrot.lane.b32.xlu0 %v2400, 16
  %v2476 = vpop.permute.xlu0 %2475
  %2477 = vrot.lane.b32.xlu0 %v2401, 16
  %v2478 = vpop.permute.xlu0 %2477
  %2479 = vrot.lane.b32.xlu0 %v2402, 16
  %v2480 = vpop.permute.xlu0 %2479
  %2481 = vrot.lane.b32.xlu0 %v2403, 16
  %v2482 = vpop.permute.xlu0 %2481
  %2483 = vrot.lane.b32.xlu0 %v2404, 16
  %v2484 = vpop.permute.xlu0 %2483
  %2485 = vrot.lane.b32.xlu0 %v2405, 16
  %v2486 = vpop.permute.xlu0 %2485
  %2487 = vrot.lane.b32.xlu0 %v2406, 16
  %v2488 = vpop.permute.xlu0 %2487
  %2489 = vrot.lane.b32.xlu0 %v2407, 16
  %v2490 = vpop.permute.xlu0 %2489
  %2491 = vrot.lane.b32.xlu0 %v2408, 16
  %v2492 = vpop.permute.xlu0 %2491
  %2493 = vrot.lane.b32.xlu0 %v2409, 16
  %v2494 = vpop.permute.xlu0 %2493
  %2495 = vrot.lane.b32.xlu0 %v2410, 16
  %v2496 = vpop.permute.xlu0 %2495
  %2497 = vrot.lane.b32.xlu0 %v2411, 16
  %v2498 = vpop.permute.xlu0 %2497
  %2499 = vrot.lane.b32.xlu0 %v2412, 16
  %v2500 = vpop.permute.xlu0 %2499
  %2501 = vrot.lane.b32.xlu0 %v2413, 16
  %v2502 = vpop.permute.xlu0 %2501
  %2503 = vrot.lane.b32.xlu0 %v2414, 16
  %v2504 = vpop.permute.xlu0 %2503
  %2535 = vst.msk [vmem:[%s2173] sm:$0xff] %vm2354, %v2446
  %2536 = vst.msk [vmem:[%s2173 + $0x10] sm:$0xff] %vm2354, %v2448
  %2537 = vst.msk [vmem:[%s2173 + $0x20] sm:$0xff] %vm2354, %v2450
  %2538 = vst.msk [vmem:[%s2173 + $0x30] sm:$0xff] %vm2354, %v2452
  %2539 = vst.msk [vmem:[%s2173 + $0x40] sm:$0xff] %vm2354, %v2454
  %2540 = vst.msk [vmem:[%s2173 + $0x50] sm:$0xff] %vm2354, %v2456
  %2541 = vst.msk [vmem:[%s2173 + $0x60] sm:$0xff] %vm2354, %v2458
  %2542 = vst.msk [vmem:[%s2173 + $0x70] sm:$0xff] %vm2354, %v2460
  %2543 = vst.msk [vmem:[%s2173 + $0x80] sm:$0xff] %vm2354, %v2462
  %2544 = vst.msk [vmem:[%s2173 + $0x90] sm:$0xff] %vm2354, %v2464
  %2545 = vst.msk [vmem:[%s2173 + $0xa0] sm:$0xff] %vm2354, %v2466
  %2546 = vst.msk [vmem:[%s2173 + $0xb0] sm:$0xff] %vm2354, %v2468
  %2547 = vst.msk [vmem:[%s2173 + $0xc0] sm:$0xff] %vm2354, %v2470
  %2548 = vst.msk [vmem:[%s2173 + $0xd0] sm:$0xff] %vm2354, %v2472
  %2549 = vst.msk [vmem:[%s2173 + $0xe0] sm:$0xff] %vm2354, %v2474
  %2550 = vst.msk [vmem:[%s2173 + $0xf0] sm:$0xff] %vm2354, %v2476
  %2551 = vst.msk [vmem:[%s2173 + $0x100] sm:$0xff] %vm2354, %v2478
  %2552 = vst.msk [vmem:[%s2173 + $0x110] sm:$0xff] %vm2354, %v2480
  %2553 = vst.msk [vmem:[%s2173 + $0x120] sm:$0xff] %vm2354, %v2482
  %2554 = vst.msk [vmem:[%s2173 + $0x130] sm:$0xff] %vm2354, %v2484
  %2555 = vst.msk [vmem:[%s2173 + $0x140] sm:$0xff] %vm2354, %v2486
  %2556 = vst.msk [vmem:[%s2173 + $0x150] sm:$0xff] %vm2354, %v2488
  %2557 = vst.msk [vmem:[%s2173 + $0x160] sm:$0xff] %vm2354, %v2490
  %2558 = vst.msk [vmem:[%s2173 + $0x170] sm:$0xff] %vm2354, %v2492
  %2559 = vst.msk [vmem:[%s2173 + $0x180] sm:$0xff] %vm2354, %v2494
  %2560 = vst.msk [vmem:[%s2173 + $0x190] sm:$0xff] %vm2354, %v2496
  %2561 = vst.msk [vmem:[%s2173 + $0x1a0] sm:$0xff] %vm2354, %v2498
  %2562 = vst.msk [vmem:[%s2173 + $0x1b0] sm:$0xff] %vm2354, %v2500
  %2563 = vst.msk [vmem:[%s2173 + $0x1c0] sm:$0xff] %vm2354, %v2502
  %2564 = vst.msk [vmem:[%s2173 + $0x1d0] sm:$0xff] %vm2354, %v2504
  %v2565 = vld [vmem:[#allocation3 + $0x1] sm:$0xff]
  %v2566 = vld [vmem:[#allocation3 + $0x9] sm:$0x7f]
  %v2567 = vld [vmem:[#allocation3 + $0x11] sm:$0xff]
  %v2568 = vld [vmem:[#allocation3 + $0x19] sm:$0x7f]
  %v2569 = vld [vmem:[#allocation3 + $0x21] sm:$0xff]
  %v2570 = vld [vmem:[#allocation3 + $0x29] sm:$0x7f]
  %v2571 = vld [vmem:[#allocation3 + $0x31] sm:$0xff]
  %v2572 = vld [vmem:[#allocation3 + $0x39] sm:$0x7f]
  %v2573 = vld [vmem:[#allocation3 + $0x41] sm:$0xff]
  %v2574 = vld [vmem:[#allocation3 + $0x49] sm:$0x7f]
  %v2575 = vld [vmem:[#allocation3 + $0x51] sm:$0xff]
  %v2576 = vld [vmem:[#allocation3 + $0x59] sm:$0x7f]
  %v2577 = vld [vmem:[#allocation3 + $0x61] sm:$0xff]
  %v2578 = vld [vmem:[#allocation3 + $0x69] sm:$0x7f]
  %v2579 = vld [vmem:[#allocation3 + $0x71] sm:$0xff]
  %v2580 = vld [vmem:[#allocation3 + $0x79] sm:$0x7f]
  %v2581 = vld [vmem:[#allocation3 + $0x81] sm:$0xff]
  %v2582 = vld [vmem:[#allocation3 + $0x89] sm:$0x7f]
  %v2583 = vld [vmem:[#allocation3 + $0x91] sm:$0xff]
  %v2584 = vld [vmem:[#allocation3 + $0x99] sm:$0x7f]
  %v2585 = vld [vmem:[#allocation3 + $0xa1] sm:$0xff]
  %v2586 = vld [vmem:[#allocation3 + $0xa9] sm:$0x7f]
  %v2587 = vld [vmem:[#allocation3 + $0xb1] sm:$0xff]
  %v2588 = vld [vmem:[#allocation3 + $0xb9] sm:$0x7f]
  %v2589 = vld [vmem:[#allocation3 + $0xc1] sm:$0xff]
  %v2590 = vld [vmem:[#allocation3 + $0xc9] sm:$0x7f]
  %v2591 = vld [vmem:[#allocation3 + $0xd1] sm:$0xff]
  %v2592 = vld [vmem:[#allocation3 + $0xd9] sm:$0x7f]
  %v2593 = vld [vmem:[#allocation3 + $0xe1] sm:$0xff]
  %v2594 = vld [vmem:[#allocation3 + $0xe9] sm:$0x7f]
  %2625 = vrot.lane.b32.xlu0 %v2565, 32
  %v2626 = vpop.permute.xlu0 %2625
  %2627 = vrot.lane.b32.xlu0 %v2566, 32
  %v2628 = vpop.permute.xlu0 %2627
  %2629 = vrot.lane.b32.xlu0 %v2567, 32
  %v2630 = vpop.permute.xlu0 %2629
  %2631 = vrot.lane.b32.xlu0 %v2568, 32
  %v2632 = vpop.permute.xlu0 %2631
  %2633 = vrot.lane.b32.xlu0 %v2569, 32
  %v2634 = vpop.permute.xlu0 %2633
  %2635 = vrot.lane.b32.xlu0 %v2570, 32
  %v2636 = vpop.permute.xlu0 %2635
  %2637 = vrot.lane.b32.xlu0 %v2571, 32
  %v2638 = vpop.permute.xlu0 %2637
  %2639 = vrot.lane.b32.xlu0 %v2572, 32
  %v2640 = vpop.permute.xlu0 %2639
  %2641 = vrot.lane.b32.xlu0 %v2573, 32
  %v2642 = vpop.permute.xlu0 %2641
  %2643 = vrot.lane.b32.xlu0 %v2574, 32
  %v2644 = vpop.permute.xlu0 %2643
  %2645 = vrot.lane.b32.xlu0 %v2575, 32
  %v2646 = vpop.permute.xlu0 %2645
  %2647 = vrot.lane.b32.xlu0 %v2576, 32
  %v2648 = vpop.permute.xlu0 %2647
  %2649 = vrot.lane.b32.xlu0 %v2577, 32
  %v2650 = vpop.permute.xlu0 %2649
  %2651 = vrot.lane.b32.xlu0 %v2578, 32
  %v2652 = vpop.permute.xlu0 %2651
  %2653 = vrot.lane.b32.xlu0 %v2579, 32
  %v2654 = vpop.permute.xlu0 %2653
  %2655 = vrot.lane.b32.xlu0 %v2580, 32
  %v2656 = vpop.permute.xlu0 %2655
  %2657 = vrot.lane.b32.xlu0 %v2581, 32
  %v2658 = vpop.permute.xlu0 %2657
  %2659 = vrot.lane.b32.xlu0 %v2582, 32
  %v2660 = vpop.permute.xlu0 %2659
  %2661 = vrot.lane.b32.xlu0 %v2583, 32
  %v2662 = vpop.permute.xlu0 %2661
  %2663 = vrot.lane.b32.xlu0 %v2584, 32
  %v2664 = vpop.permute.xlu0 %2663
  %2665 = vrot.lane.b32.xlu0 %v2585, 32
  %v2666 = vpop.permute.xlu0 %2665
  %2667 = vrot.lane.b32.xlu0 %v2586, 32
  %v2668 = vpop.permute.xlu0 %2667
  %2669 = vrot.lane.b32.xlu0 %v2587, 32
  %v2670 = vpop.permute.xlu0 %2669
  %2671 = vrot.lane.b32.xlu0 %v2588, 32
  %v2672 = vpop.permute.xlu0 %2671
  %2673 = vrot.lane.b32.xlu0 %v2589, 32
  %v2674 = vpop.permute.xlu0 %2673
  %2675 = vrot.lane.b32.xlu0 %v2590, 32
  %v2676 = vpop.permute.xlu0 %2675
  %2677 = vrot.lane.b32.xlu0 %v2591, 32
  %v2678 = vpop.permute.xlu0 %2677
  %2679 = vrot.lane.b32.xlu0 %v2592, 32
  %v2680 = vpop.permute.xlu0 %2679
  %2681 = vrot.lane.b32.xlu0 %v2593, 32
  %v2682 = vpop.permute.xlu0 %2681
  %2683 = vrot.lane.b32.xlu0 %v2594, 32
  %v2684 = vpop.permute.xlu0 %2683
  %vm2715 = vcmask 392448
  %2716 = vst.msk [vmem:[%s2006] sm:$0xff] %vm2715, %v2626
  %vm2717 = vcmask 391424
  %2718 = vst.msk [vmem:[%s2006 + $0x10] sm:$0x7f] %vm2717, %v2628
  %2719 = vst.msk [vmem:[%s2006 + $0x20] sm:$0xff] %vm2715, %v2630
  %2720 = vst.msk [vmem:[%s2006 + $0x30] sm:$0x7f] %vm2717, %v2632
  %2721 = vst.msk [vmem:[%s2006 + $0x40] sm:$0xff] %vm2715, %v2634
  %2722 = vst.msk [vmem:[%s2006 + $0x50] sm:$0x7f] %vm2717, %v2636
  %2723 = vst.msk [vmem:[%s2006 + $0x60] sm:$0xff] %vm2715, %v2638
  %2724 = vst.msk [vmem:[%s2006 + $0x70] sm:$0x7f] %vm2717, %v2640
  %2725 = vst.msk [vmem:[%s2006 + $0x80] sm:$0xff] %vm2715, %v2642
  %2726 = vst.msk [vmem:[%s2006 + $0x90] sm:$0x7f] %vm2717, %v2644
  %2727 = vst.msk [vmem:[%s2006 + $0xa0] sm:$0xff] %vm2715, %v2646
  %2728 = vst.msk [vmem:[%s2006 + $0xb0] sm:$0x7f] %vm2717, %v2648
  %2729 = vst.msk [vmem:[%s2006 + $0xc0] sm:$0xff] %vm2715, %v2650
  %2730 = vst.msk [vmem:[%s2006 + $0xd0] sm:$0x7f] %vm2717, %v2652
  %2731 = vst.msk [vmem:[%s2006 + $0xe0] sm:$0xff] %vm2715, %v2654
  %2732 = vst.msk [vmem:[%s2006 + $0xf0] sm:$0x7f] %vm2717, %v2656
  %2733 = vst.msk [vmem:[%s2006 + $0x100] sm:$0xff] %vm2715, %v2658
  %2734 = vst.msk [vmem:[%s2006 + $0x110] sm:$0x7f] %vm2717, %v2660
  %2735 = vst.msk [vmem:[%s2006 + $0x120] sm:$0xff] %vm2715, %v2662
  %2736 = vst.msk [vmem:[%s2006 + $0x130] sm:$0x7f] %vm2717, %v2664
  %2737 = vst.msk [vmem:[%s2006 + $0x140] sm:$0xff] %vm2715, %v2666
  %2738 = vst.msk [vmem:[%s2006 + $0x150] sm:$0x7f] %vm2717, %v2668
  %2739 = vst.msk [vmem:[%s2006 + $0x160] sm:$0xff] %vm2715, %v2670
  %2740 = vst.msk [vmem:[%s2006 + $0x170] sm:$0x7f] %vm2717, %v2672
  %2741 = vst.msk [vmem:[%s2006 + $0x180] sm:$0xff] %vm2715, %v2674
  %2742 = vst.msk [vmem:[%s2006 + $0x190] sm:$0x7f] %vm2717, %v2676
  %2743 = vst.msk [vmem:[%s2006 + $0x1a0] sm:$0xff] %vm2715, %v2678
  %2744 = vst.msk [vmem:[%s2006 + $0x1b0] sm:$0x7f] %vm2717, %v2680
  %2745 = vst.msk [vmem:[%s2006 + $0x1c0] sm:$0xff] %vm2715, %v2682
  %2746 = vst.msk [vmem:[%s2006 + $0x1d0] sm:$0x7f] %vm2717, %v2684
  %v2747 = vld [vmem:[%s1184 + $0x1] sm:$0xff]
  %v2748 = vld [vmem:[%s1184 + $0x9] sm:$0x7f]
  %v2749 = vld [vmem:[%s1184 + $0x11] sm:$0xff]
  %v2750 = vld [vmem:[%s1184 + $0x19] sm:$0x7f]
  %v2751 = vld [vmem:[%s1184 + $0x21] sm:$0xff]
  %v2752 = vld [vmem:[%s1184 + $0x29] sm:$0x7f]
  %v2753 = vld [vmem:[%s1184 + $0x31] sm:$0xff]
  %v2754 = vld [vmem:[%s1184 + $0x39] sm:$0x7f]
  %v2755 = vld [vmem:[%s1184 + $0x41] sm:$0xff]
  %v2756 = vld [vmem:[%s1184 + $0x49] sm:$0x7f]
  %v2757 = vld [vmem:[%s1184 + $0x51] sm:$0xff]
  %v2758 = vld [vmem:[%s1184 + $0x59] sm:$0x7f]
  %v2759 = vld [vmem:[%s1184 + $0x61] sm:$0xff]
  %v2760 = vld [vmem:[%s1184 + $0x69] sm:$0x7f]
  %v2761 = vld [vmem:[%s1184 + $0x71] sm:$0xff]
  %v2762 = vld [vmem:[%s1184 + $0x79] sm:$0x7f]
  %v2763 = vld [vmem:[%s1184 + $0x81] sm:$0xff]
  %v2764 = vld [vmem:[%s1184 + $0x89] sm:$0x7f]
  %v2765 = vld [vmem:[%s1184 + $0x91] sm:$0xff]
  %v2766 = vld [vmem:[%s1184 + $0x99] sm:$0x7f]
  %v2767 = vld [vmem:[%s1184 + $0xa1] sm:$0xff]
  %v2768 = vld [vmem:[%s1184 + $0xa9] sm:$0x7f]
  %v2769 = vld [vmem:[%s1184 + $0xb1] sm:$0xff]
  %v2770 = vld [vmem:[%s1184 + $0xb9] sm:$0x7f]
  %v2771 = vld [vmem:[%s1184 + $0xc1] sm:$0xff]
  %v2772 = vld [vmem:[%s1184 + $0xc9] sm:$0x7f]
  %v2773 = vld [vmem:[%s1184 + $0xd1] sm:$0xff]
  %v2774 = vld [vmem:[%s1184 + $0xd9] sm:$0x7f]
  %v2775 = vld [vmem:[%s1184 + $0xe1] sm:$0xff]
  %v2776 = vld [vmem:[%s1184 + $0xe9] sm:$0x7f]
  %2807 = vrot.lane.b32.xlu0 %v2747, 32
  %v2808 = vpop.permute.xlu0 %2807
  %2809 = vrot.lane.b32.xlu0 %v2748, 32
  %v2810 = vpop.permute.xlu0 %2809
  %2811 = vrot.lane.b32.xlu0 %v2749, 32
  %v2812 = vpop.permute.xlu0 %2811
  %2813 = vrot.lane.b32.xlu0 %v2750, 32
  %v2814 = vpop.permute.xlu0 %2813
  %2815 = vrot.lane.b32.xlu0 %v2751, 32
  %v2816 = vpop.permute.xlu0 %2815
  %2817 = vrot.lane.b32.xlu0 %v2752, 32
  %v2818 = vpop.permute.xlu0 %2817
  %2819 = vrot.lane.b32.xlu0 %v2753, 32
  %v2820 = vpop.permute.xlu0 %2819
  %2821 = vrot.lane.b32.xlu0 %v2754, 32
  %v2822 = vpop.permute.xlu0 %2821
  %2823 = vrot.lane.b32.xlu0 %v2755, 32
  %v2824 = vpop.permute.xlu0 %2823
  %2825 = vrot.lane.b32.xlu0 %v2756, 32
  %v2826 = vpop.permute.xlu0 %2825
  %2827 = vrot.lane.b32.xlu0 %v2757, 32
  %v2828 = vpop.permute.xlu0 %2827
  %2829 = vrot.lane.b32.xlu0 %v2758, 32
  %v2830 = vpop.permute.xlu0 %2829
  %2831 = vrot.lane.b32.xlu0 %v2759, 32
  %v2832 = vpop.permute.xlu0 %2831
  %2833 = vrot.lane.b32.xlu0 %v2760, 32
  %v2834 = vpop.permute.xlu0 %2833
  %2835 = vrot.lane.b32.xlu0 %v2761, 32
  %v2836 = vpop.permute.xlu0 %2835
  %2837 = vrot.lane.b32.xlu0 %v2762, 32
  %v2838 = vpop.permute.xlu0 %2837
  %2839 = vrot.lane.b32.xlu0 %v2763, 32
  %v2840 = vpop.permute.xlu0 %2839
  %2841 = vrot.lane.b32.xlu0 %v2764, 32
  %v2842 = vpop.permute.xlu0 %2841
  %2843 = vrot.lane.b32.xlu0 %v2765, 32
  %v2844 = vpop.permute.xlu0 %2843
  %2845 = vrot.lane.b32.xlu0 %v2766, 32
  %v2846 = vpop.permute.xlu0 %2845
  %2847 = vrot.lane.b32.xlu0 %v2767, 32
  %v2848 = vpop.permute.xlu0 %2847
  %2849 = vrot.lane.b32.xlu0 %v2768, 32
  %v2850 = vpop.permute.xlu0 %2849
  %2851 = vrot.lane.b32.xlu0 %v2769, 32
  %v2852 = vpop.permute.xlu0 %2851
  %2853 = vrot.lane.b32.xlu0 %v2770, 32
  %v2854 = vpop.permute.xlu0 %2853
  %2855 = vrot.lane.b32.xlu0 %v2771, 32
  %v2856 = vpop.permute.xlu0 %2855
  %2857 = vrot.lane.b32.xlu0 %v2772, 32
  %v2858 = vpop.permute.xlu0 %2857
  %2859 = vrot.lane.b32.xlu0 %v2773, 32
  %v2860 = vpop.permute.xlu0 %2859
  %2861 = vrot.lane.b32.xlu0 %v2774, 32
  %v2862 = vpop.permute.xlu0 %2861
  %2863 = vrot.lane.b32.xlu0 %v2775, 32
  %v2864 = vpop.permute.xlu0 %2863
  %2865 = vrot.lane.b32.xlu0 %v2776, 32
  %v2866 = vpop.permute.xlu0 %2865
  %2897 = vst.msk [vmem:[%s2173] sm:$0xff] %vm2715, %v2808
  %2898 = vst.msk [vmem:[%s2173 + $0x10] sm:$0x7f] %vm2717, %v2810
  %2899 = vst.msk [vmem:[%s2173 + $0x20] sm:$0xff] %vm2715, %v2812
  %2900 = vst.msk [vmem:[%s2173 + $0x30] sm:$0x7f] %vm2717, %v2814
  %2901 = vst.msk [vmem:[%s2173 + $0x40] sm:$0xff] %vm2715, %v2816
  %2902 = vst.msk [vmem:[%s2173 + $0x50] sm:$0x7f] %vm2717, %v2818
  %2903 = vst.msk [vmem:[%s2173 + $0x60] sm:$0xff] %vm2715, %v2820
  %2904 = vst.msk [vmem:[%s2173 + $0x70] sm:$0x7f] %vm2717, %v2822
  %2905 = vst.msk [vmem:[%s2173 + $0x80] sm:$0xff] %vm2715, %v2824
  %2906 = vst.msk [vmem:[%s2173 + $0x90] sm:$0x7f] %vm2717, %v2826
  %2907 = vst.msk [vmem:[%s2173 + $0xa0] sm:$0xff] %vm2715, %v2828
  %2908 = vst.msk [vmem:[%s2173 + $0xb0] sm:$0x7f] %vm2717, %v2830
  %2909 = vst.msk [vmem:[%s2173 + $0xc0] sm:$0xff] %vm2715, %v2832
  %2910 = vst.msk [vmem:[%s2173 + $0xd0] sm:$0x7f] %vm2717, %v2834
  %2911 = vst.msk [vmem:[%s2173 + $0xe0] sm:$0xff] %vm2715, %v2836
  %2912 = vst.msk [vmem:[%s2173 + $0xf0] sm:$0x7f] %vm2717, %v2838
  %2913 = vst.msk [vmem:[%s2173 + $0x100] sm:$0xff] %vm2715, %v2840
  %2914 = vst.msk [vmem:[%s2173 + $0x110] sm:$0x7f] %vm2717, %v2842
  %2915 = vst.msk [vmem:[%s2173 + $0x120] sm:$0xff] %vm2715, %v2844
  %2916 = vst.msk [vmem:[%s2173 + $0x130] sm:$0x7f] %vm2717, %v2846
  %2917 = vst.msk [vmem:[%s2173 + $0x140] sm:$0xff] %vm2715, %v2848
  %2918 = vst.msk [vmem:[%s2173 + $0x150] sm:$0x7f] %vm2717, %v2850
  %2919 = vst.msk [vmem:[%s2173 + $0x160] sm:$0xff] %vm2715, %v2852
  %2920 = vst.msk [vmem:[%s2173 + $0x170] sm:$0x7f] %vm2717, %v2854
  %2921 = vst.msk [vmem:[%s2173 + $0x180] sm:$0xff] %vm2715, %v2856
  %2922 = vst.msk [vmem:[%s2173 + $0x190] sm:$0x7f] %vm2717, %v2858
  %2923 = vst.msk [vmem:[%s2173 + $0x1a0] sm:$0xff] %vm2715, %v2860
  %2924 = vst.msk [vmem:[%s2173 + $0x1b0] sm:$0x7f] %vm2717, %v2862
  %2925 = vst.msk [vmem:[%s2173 + $0x1c0] sm:$0xff] %vm2715, %v2864
  %2926 = vst.msk [vmem:[%s2173 + $0x1d0] sm:$0x7f] %vm2717, %v2866
  %v2927 = vld [vmem:[#allocation3] sm:$0xff]
  %v2928 = vld [vmem:[#allocation3 + $0x8] sm:$0x7f]
  %v2929 = vld [vmem:[#allocation3 + $0x10] sm:$0xff]
  %v2930 = vld [vmem:[#allocation3 + $0x18] sm:$0x7f]
  %v2931 = vld [vmem:[#allocation3 + $0x20] sm:$0xff]
  %v2932 = vld [vmem:[#allocation3 + $0x28] sm:$0x7f]
  %v2933 = vld [vmem:[#allocation3 + $0x30] sm:$0xff]
  %v2934 = vld [vmem:[#allocation3 + $0x38] sm:$0x7f]
  %v2935 = vld [vmem:[#allocation3 + $0x40] sm:$0xff]
  %v2936 = vld [vmem:[#allocation3 + $0x48] sm:$0x7f]
  %v2937 = vld [vmem:[#allocation3 + $0x50] sm:$0xff]
  %v2938 = vld [vmem:[#allocation3 + $0x58] sm:$0x7f]
  %v2939 = vld [vmem:[#allocation3 + $0x60] sm:$0xff]
  %v2940 = vld [vmem:[#allocation3 + $0x68] sm:$0x7f]
  %v2941 = vld [vmem:[#allocation3 + $0x70] sm:$0xff]
  %v2942 = vld [vmem:[#allocation3 + $0x78] sm:$0x7f]
  %v2943 = vld [vmem:[#allocation3 + $0x80] sm:$0xff]
  %v2944 = vld [vmem:[#allocation3 + $0x88] sm:$0x7f]
  %v2945 = vld [vmem:[#allocation3 + $0x90] sm:$0xff]
  %v2946 = vld [vmem:[#allocation3 + $0x98] sm:$0x7f]
  %v2947 = vld [vmem:[#allocation3 + $0xa0] sm:$0xff]
  %v2948 = vld [vmem:[#allocation3 + $0xa8] sm:$0x7f]
  %v2949 = vld [vmem:[#allocation3 + $0xb0] sm:$0xff]
  %v2950 = vld [vmem:[#allocation3 + $0xb8] sm:$0x7f]
  %v2951 = vld [vmem:[#allocation3 + $0xc0] sm:$0xff]
  %v2952 = vld [vmem:[#allocation3 + $0xc8] sm:$0x7f]
  %v2953 = vld [vmem:[#allocation3 + $0xd0] sm:$0xff]
  %v2954 = vld [vmem:[#allocation3 + $0xd8] sm:$0x7f]
  %v2955 = vld [vmem:[#allocation3 + $0xe0] sm:$0xff]
  %v2956 = vld [vmem:[#allocation3 + $0xe8] sm:$0x7f]
  %v2957 = vld [vmem:[#allocation3 + $0xf0] sm:$0xff]
  %v2958 = vld [vmem:[#allocation3 + $0xf8] sm:$0x7f]
  %v2991 = vrot.slane %v2927, 7
  %v2992 = vrot.slane %v2928, 7
  %v2993 = vsel %vm1930, %v2991, %v2992
  %v2994 = vrot.slane %v2929, 7
  %v2995 = vrot.slane %v2930, 7
  %v2996 = vsel %vm1930, %v2994, %v2995
  %v2997 = vrot.slane %v2931, 7
  %v2998 = vrot.slane %v2932, 7
  %v2999 = vsel %vm1930, %v2997, %v2998
  %v3000 = vrot.slane %v2933, 7
  %v3001 = vrot.slane %v2934, 7
  %v3002 = vsel %vm1930, %v3000, %v3001
  %v3003 = vrot.slane %v2935, 7
  %v3004 = vrot.slane %v2936, 7
  %v3005 = vsel %vm1930, %v3003, %v3004
  %v3006 = vrot.slane %v2937, 7
  %v3007 = vrot.slane %v2938, 7
  %v3008 = vsel %vm1930, %v3006, %v3007
  %v3009 = vrot.slane %v2939, 7
  %v3010 = vrot.slane %v2940, 7
  %v3011 = vsel %vm1930, %v3009, %v3010
  %v3012 = vrot.slane %v2941, 7
  %v3013 = vrot.slane %v2942, 7
  %v3014 = vsel %vm1930, %v3012, %v3013
  %v3015 = vrot.slane %v2943, 7
  %v3016 = vrot.slane %v2944, 7
  %v3017 = vsel %vm1930, %v3015, %v3016
  %v3018 = vrot.slane %v2945, 7
  %v3019 = vrot.slane %v2946, 7
  %v3020 = vsel %vm1930, %v3018, %v3019
  %v3021 = vrot.slane %v2947, 7
  %v3022 = vrot.slane %v2948, 7
  %v3023 = vsel %vm1930, %v3021, %v3022
  %v3024 = vrot.slane %v2949, 7
  %v3025 = vrot.slane %v2950, 7
  %v3026 = vsel %vm1930, %v3024, %v3025
  %v3027 = vrot.slane %v2951, 7
  %v3028 = vrot.slane %v2952, 7
  %v3029 = vsel %vm1930, %v3027, %v3028
  %v3030 = vrot.slane %v2953, 7
  %v3031 = vrot.slane %v2954, 7
  %v3032 = vsel %vm1930, %v3030, %v3031
  %v3033 = vrot.slane %v2955, 7
  %v3034 = vrot.slane %v2956, 7
  %v3035 = vsel %vm1930, %v3033, %v3034
  %v3036 = vrot.slane %v2957, 7
  %v3037 = vrot.slane %v2958, 7
  %v3038 = vsel %vm1930, %v3036, %v3037
  %3039 = vrot.lane.b32.xlu0 %v2991, 48
  %v3040 = vpop.permute.xlu0 %3039
  %3041 = vrot.lane.b32.xlu0 %v2993, 48
  %v3042 = vpop.permute.xlu0 %3041
  %3043 = vrot.lane.b32.xlu0 %v2994, 48
  %v3044 = vpop.permute.xlu0 %3043
  %3045 = vrot.lane.b32.xlu0 %v2996, 48
  %v3046 = vpop.permute.xlu0 %3045
  %3047 = vrot.lane.b32.xlu0 %v2997, 48
  %v3048 = vpop.permute.xlu0 %3047
  %3049 = vrot.lane.b32.xlu0 %v2999, 48
  %v3050 = vpop.permute.xlu0 %3049
  %3051 = vrot.lane.b32.xlu0 %v3000, 48
  %v3052 = vpop.permute.xlu0 %3051
  %3053 = vrot.lane.b32.xlu0 %v3002, 48
  %v3054 = vpop.permute.xlu0 %3053
  %3055 = vrot.lane.b32.xlu0 %v3003, 48
  %v3056 = vpop.permute.xlu0 %3055
  %3057 = vrot.lane.b32.xlu0 %v3005, 48
  %v3058 = vpop.permute.xlu0 %3057
  %3059 = vrot.lane.b32.xlu0 %v3006, 48
  %v3060 = vpop.permute.xlu0 %3059
  %3061 = vrot.lane.b32.xlu0 %v3008, 48
  %v3062 = vpop.permute.xlu0 %3061
  %3063 = vrot.lane.b32.xlu0 %v3009, 48
  %v3064 = vpop.permute.xlu0 %3063
  %3065 = vrot.lane.b32.xlu0 %v3011, 48
  %v3066 = vpop.permute.xlu0 %3065
  %3067 = vrot.lane.b32.xlu0 %v3012, 48
  %v3068 = vpop.permute.xlu0 %3067
  %3069 = vrot.lane.b32.xlu0 %v3014, 48
  %v3070 = vpop.permute.xlu0 %3069
  %3071 = vrot.lane.b32.xlu0 %v3015, 48
  %v3072 = vpop.permute.xlu0 %3071
  %3073 = vrot.lane.b32.xlu0 %v3017, 48
  %v3074 = vpop.permute.xlu0 %3073
  %3075 = vrot.lane.b32.xlu0 %v3018, 48
  %v3076 = vpop.permute.xlu0 %3075
  %3077 = vrot.lane.b32.xlu0 %v3020, 48
  %v3078 = vpop.permute.xlu0 %3077
  %3079 = vrot.lane.b32.xlu0 %v3021, 48
  %v3080 = vpop.permute.xlu0 %3079
  %3081 = vrot.lane.b32.xlu0 %v3023, 48
  %v3082 = vpop.permute.xlu0 %3081
  %3083 = vrot.lane.b32.xlu0 %v3024, 48
  %v3084 = vpop.permute.xlu0 %3083
  %3085 = vrot.lane.b32.xlu0 %v3026, 48
  %v3086 = vpop.permute.xlu0 %3085
  %3087 = vrot.lane.b32.xlu0 %v3027, 48
  %v3088 = vpop.permute.xlu0 %3087
  %3089 = vrot.lane.b32.xlu0 %v3029, 48
  %v3090 = vpop.permute.xlu0 %3089
  %3091 = vrot.lane.b32.xlu0 %v3030, 48
  %v3092 = vpop.permute.xlu0 %3091
  %3093 = vrot.lane.b32.xlu0 %v3032, 48
  %v3094 = vpop.permute.xlu0 %3093
  %3095 = vrot.lane.b32.xlu0 %v3033, 48
  %v3096 = vpop.permute.xlu0 %3095
  %3097 = vrot.lane.b32.xlu0 %v3035, 48
  %v3098 = vpop.permute.xlu0 %3097
  %3099 = vrot.lane.b32.xlu0 %v3036, 48
  %v3100 = vpop.permute.xlu0 %3099
  %3101 = vrot.lane.b32.xlu0 %v3038, 48
  %v3102 = vpop.permute.xlu0 %3101
  %vm3135 = vcmask 523649
  %3136 = vst.msk [vmem:[#allocation4] sm:$0xfe] %vm3135, %v3040
  %vm3137 = vcmask 523648
  %3138 = vst.msk [vmem:[#allocation4 + $0x10] sm:$0xff] %vm3137, %v3042
  %3139 = vst.msk [vmem:[#allocation4 + $0x20] sm:$0xfe] %vm3135, %v3044
  %3140 = vst.msk [vmem:[#allocation4 + $0x30] sm:$0xff] %vm3137, %v3046
  %3141 = vst.msk [vmem:[#allocation4 + $0x40] sm:$0xfe] %vm3135, %v3048
  %3142 = vst.msk [vmem:[#allocation4 + $0x50] sm:$0xff] %vm3137, %v3050
  %3143 = vst.msk [vmem:[#allocation4 + $0x60] sm:$0xfe] %vm3135, %v3052
  %3144 = vst.msk [vmem:[#allocation4 + $0x70] sm:$0xff] %vm3137, %v3054
  %3145 = vst.msk [vmem:[#allocation4 + $0x80] sm:$0xfe] %vm3135, %v3056
  %3146 = vst.msk [vmem:[#allocation4 + $0x90] sm:$0xff] %vm3137, %v3058
  %3147 = vst.msk [vmem:[#allocation4 + $0xa0] sm:$0xfe] %vm3135, %v3060
  %3148 = vst.msk [vmem:[#allocation4 + $0xb0] sm:$0xff] %vm3137, %v3062
  %3149 = vst.msk [vmem:[#allocation4 + $0xc0] sm:$0xfe] %vm3135, %v3064
  %3150 = vst.msk [vmem:[#allocation4 + $0xd0] sm:$0xff] %vm3137, %v3066
  %3151 = vst.msk [vmem:[#allocation4 + $0xe0] sm:$0xfe] %vm3135, %v3068
  %3152 = vst.msk [vmem:[#allocation4 + $0xf0] sm:$0xff] %vm3137, %v3070
  %3153 = vst.msk [vmem:[#allocation4 + $0x100] sm:$0xfe] %vm3135, %v3072
  %3154 = vst.msk [vmem:[#allocation4 + $0x110] sm:$0xff] %vm3137, %v3074
  %3155 = vst.msk [vmem:[#allocation4 + $0x120] sm:$0xfe] %vm3135, %v3076
  %3156 = vst.msk [vmem:[#allocation4 + $0x130] sm:$0xff] %vm3137, %v3078
  %3157 = vst.msk [vmem:[#allocation4 + $0x140] sm:$0xfe] %vm3135, %v3080
  %3158 = vst.msk [vmem:[#allocation4 + $0x150] sm:$0xff] %vm3137, %v3082
  %3159 = vst.msk [vmem:[#allocation4 + $0x160] sm:$0xfe] %vm3135, %v3084
  %3160 = vst.msk [vmem:[#allocation4 + $0x170] sm:$0xff] %vm3137, %v3086
  %3161 = vst.msk [vmem:[#allocation4 + $0x180] sm:$0xfe] %vm3135, %v3088
  %3162 = vst.msk [vmem:[#allocation4 + $0x190] sm:$0xff] %vm3137, %v3090
  %3163 = vst.msk [vmem:[#allocation4 + $0x1a0] sm:$0xfe] %vm3135, %v3092
  %3164 = vst.msk [vmem:[#allocation4 + $0x1b0] sm:$0xff] %vm3137, %v3094
  %3165 = vst.msk [vmem:[#allocation4 + $0x1c0] sm:$0xfe] %vm3135, %v3096
  %3166 = vst.msk [vmem:[#allocation4 + $0x1d0] sm:$0xff] %vm3137, %v3098
  %3167 = vst.msk [vmem:[#allocation4 + $0x1e0] sm:$0xfe] %vm3135, %v3100
  %3168 = vst.msk [vmem:[#allocation4 + $0x1f0] sm:$0xff] %vm3137, %v3102
  %v3169 = vld [vmem:[%s1184] sm:$0xff]
  %v3170 = vld [vmem:[%s1184 + $0x8] sm:$0x7f]
  %v3171 = vld [vmem:[%s1184 + $0x10] sm:$0xff]
  %v3172 = vld [vmem:[%s1184 + $0x18] sm:$0x7f]
  %v3173 = vld [vmem:[%s1184 + $0x20] sm:$0xff]
  %v3174 = vld [vmem:[%s1184 + $0x28] sm:$0x7f]
  %v3175 = vld [vmem:[%s1184 + $0x30] sm:$0xff]
  %v3176 = vld [vmem:[%s1184 + $0x38] sm:$0x7f]
  %v3177 = vld [vmem:[%s1184 + $0x40] sm:$0xff]
  %v3178 = vld [vmem:[%s1184 + $0x48] sm:$0x7f]
  %v3179 = vld [vmem:[%s1184 + $0x50] sm:$0xff]
  %v3180 = vld [vmem:[%s1184 + $0x58] sm:$0x7f]
  %v3181 = vld [vmem:[%s1184 + $0x60] sm:$0xff]
  %v3182 = vld [vmem:[%s1184 + $0x68] sm:$0x7f]
  %v3183 = vld [vmem:[%s1184 + $0x70] sm:$0xff]
  %v3184 = vld [vmem:[%s1184 + $0x78] sm:$0x7f]
  %v3185 = vld [vmem:[%s1184 + $0x80] sm:$0xff]
  %v3186 = vld [vmem:[%s1184 + $0x88] sm:$0x7f]
  %v3187 = vld [vmem:[%s1184 + $0x90] sm:$0xff]
  %v3188 = vld [vmem:[%s1184 + $0x98] sm:$0x7f]
  %v3189 = vld [vmem:[%s1184 + $0xa0] sm:$0xff]
  %v3190 = vld [vmem:[%s1184 + $0xa8] sm:$0x7f]
  %v3191 = vld [vmem:[%s1184 + $0xb0] sm:$0xff]
  %v3192 = vld [vmem:[%s1184 + $0xb8] sm:$0x7f]
  %v3193 = vld [vmem:[%s1184 + $0xc0] sm:$0xff]
  %v3194 = vld [vmem:[%s1184 + $0xc8] sm:$0x7f]
  %v3195 = vld [vmem:[%s1184 + $0xd0] sm:$0xff]
  %v3196 = vld [vmem:[%s1184 + $0xd8] sm:$0x7f]
  %v3197 = vld [vmem:[%s1184 + $0xe0] sm:$0xff]
  %v3198 = vld [vmem:[%s1184 + $0xe8] sm:$0x7f]
  %v3199 = vld [vmem:[%s1184 + $0xf0] sm:$0xff]
  %v3200 = vld [vmem:[%s1184 + $0xf8] sm:$0x7f]
  %v3233 = vrot.slane %v3169, 7
  %v3234 = vrot.slane %v3170, 7
  %v3235 = vsel %vm1930, %v3233, %v3234
  %v3236 = vrot.slane %v3171, 7
  %v3237 = vrot.slane %v3172, 7
  %v3238 = vsel %vm1930, %v3236, %v3237
  %v3239 = vrot.slane %v3173, 7
  %v3240 = vrot.slane %v3174, 7
  %v3241 = vsel %vm1930, %v3239, %v3240
  %v3242 = vrot.slane %v3175, 7
  %v3243 = vrot.slane %v3176, 7
  %v3244 = vsel %vm1930, %v3242, %v3243
  %v3245 = vrot.slane %v3177, 7
  %v3246 = vrot.slane %v3178, 7
  %v3247 = vsel %vm1930, %v3245, %v3246
  %v3248 = vrot.slane %v3179, 7
  %v3249 = vrot.slane %v3180, 7
  %v3250 = vsel %vm1930, %v3248, %v3249
  %v3251 = vrot.slane %v3181, 7
  %v3252 = vrot.slane %v3182, 7
  %v3253 = vsel %vm1930, %v3251, %v3252
  %v3254 = vrot.slane %v3183, 7
  %v3255 = vrot.slane %v3184, 7
  %v3256 = vsel %vm1930, %v3254, %v3255
  %v3257 = vrot.slane %v3185, 7
  %v3258 = vrot.slane %v3186, 7
  %v3259 = vsel %vm1930, %v3257, %v3258
  %v3260 = vrot.slane %v3187, 7
  %v3261 = vrot.slane %v3188, 7
  %v3262 = vsel %vm1930, %v3260, %v3261
  %v3263 = vrot.slane %v3189, 7
  %v3264 = vrot.slane %v3190, 7
  %v3265 = vsel %vm1930, %v3263, %v3264
  %v3266 = vrot.slane %v3191, 7
  %v3267 = vrot.slane %v3192, 7
  %v3268 = vsel %vm1930, %v3266, %v3267
  %v3269 = vrot.slane %v3193, 7
  %v3270 = vrot.slane %v3194, 7
  %v3271 = vsel %vm1930, %v3269, %v3270
  %v3272 = vrot.slane %v3195, 7
  %v3273 = vrot.slane %v3196, 7
  %v3274 = vsel %vm1930, %v3272, %v3273
  %v3275 = vrot.slane %v3197, 7
  %v3276 = vrot.slane %v3198, 7
  %v3277 = vsel %vm1930, %v3275, %v3276
  %v3278 = vrot.slane %v3199, 7
  %v3279 = vrot.slane %v3200, 7
  %v3280 = vsel %vm1930, %v3278, %v3279
  %3281 = vrot.lane.b32.xlu0 %v3233, 48
  %v3282 = vpop.permute.xlu0 %3281
  %3283 = vrot.lane.b32.xlu0 %v3235, 48
  %v3284 = vpop.permute.xlu0 %3283
  %3285 = vrot.lane.b32.xlu0 %v3236, 48
  %v3286 = vpop.permute.xlu0 %3285
  %3287 = vrot.lane.b32.xlu0 %v3238, 48
  %v3288 = vpop.permute.xlu0 %3287
  %3289 = vrot.lane.b32.xlu0 %v3239, 48
  %v3290 = vpop.permute.xlu0 %3289
  %3291 = vrot.lane.b32.xlu0 %v3241, 48
  %v3292 = vpop.permute.xlu0 %3291
  %3293 = vrot.lane.b32.xlu0 %v3242, 48
  %v3294 = vpop.permute.xlu0 %3293
  %3295 = vrot.lane.b32.xlu0 %v3244, 48
  %v3296 = vpop.permute.xlu0 %3295
  %3297 = vrot.lane.b32.xlu0 %v3245, 48
  %v3298 = vpop.permute.xlu0 %3297
  %3299 = vrot.lane.b32.xlu0 %v3247, 48
  %v3300 = vpop.permute.xlu0 %3299
  %3301 = vrot.lane.b32.xlu0 %v3248, 48
  %v3302 = vpop.permute.xlu0 %3301
  %3303 = vrot.lane.b32.xlu0 %v3250, 48
  %v3304 = vpop.permute.xlu0 %3303
  %3305 = vrot.lane.b32.xlu0 %v3251, 48
  %v3306 = vpop.permute.xlu0 %3305
  %3307 = vrot.lane.b32.xlu0 %v3253, 48
  %v3308 = vpop.permute.xlu0 %3307
  %3309 = vrot.lane.b32.xlu0 %v3254, 48
  %v3310 = vpop.permute.xlu0 %3309
  %3311 = vrot.lane.b32.xlu0 %v3256, 48
  %v3312 = vpop.permute.xlu0 %3311
  %3313 = vrot.lane.b32.xlu0 %v3257, 48
  %v3314 = vpop.permute.xlu0 %3313
  %3315 = vrot.lane.b32.xlu0 %v3259, 48
  %v3316 = vpop.permute.xlu0 %3315
  %3317 = vrot.lane.b32.xlu0 %v3260, 48
  %v3318 = vpop.permute.xlu0 %3317
  %3319 = vrot.lane.b32.xlu0 %v3262, 48
  %v3320 = vpop.permute.xlu0 %3319
  %3321 = vrot.lane.b32.xlu0 %v3263, 48
  %v3322 = vpop.permute.xlu0 %3321
  %3323 = vrot.lane.b32.xlu0 %v3265, 48
  %v3324 = vpop.permute.xlu0 %3323
  %3325 = vrot.lane.b32.xlu0 %v3266, 48
  %v3326 = vpop.permute.xlu0 %3325
  %3327 = vrot.lane.b32.xlu0 %v3268, 48
  %v3328 = vpop.permute.xlu0 %3327
  %3329 = vrot.lane.b32.xlu0 %v3269, 48
  %v3330 = vpop.permute.xlu0 %3329
  %3331 = vrot.lane.b32.xlu0 %v3271, 48
  %v3332 = vpop.permute.xlu0 %3331
  %3333 = vrot.lane.b32.xlu0 %v3272, 48
  %v3334 = vpop.permute.xlu0 %3333
  %3335 = vrot.lane.b32.xlu0 %v3274, 48
  %v3336 = vpop.permute.xlu0 %3335
  %3337 = vrot.lane.b32.xlu0 %v3275, 48
  %v3338 = vpop.permute.xlu0 %3337
  %3339 = vrot.lane.b32.xlu0 %v3277, 48
  %v3340 = vpop.permute.xlu0 %3339
  %3341 = vrot.lane.b32.xlu0 %v3278, 48
  %v3342 = vpop.permute.xlu0 %3341
  %3343 = vrot.lane.b32.xlu0 %v3280, 48
  %v3344 = vpop.permute.xlu0 %3343
  %s3377 = scalar_lea.vmem [#allocation4], 512
  %3378 = vst.msk [vmem:[%s3377] sm:$0xfe] %vm3135, %v3282
  %3379 = vst.msk [vmem:[%s3377 + $0x10] sm:$0xff] %vm3137, %v3284
  %3380 = vst.msk [vmem:[%s3377 + $0x20] sm:$0xfe] %vm3135, %v3286
  %3381 = vst.msk [vmem:[%s3377 + $0x30] sm:$0xff] %vm3137, %v3288
  %3382 = vst.msk [vmem:[%s3377 + $0x40] sm:$0xfe] %vm3135, %v3290
  %3383 = vst.msk [vmem:[%s3377 + $0x50] sm:$0xff] %vm3137, %v3292
  %3384 = vst.msk [vmem:[%s3377 + $0x60] sm:$0xfe] %vm3135, %v3294
  %3385 = vst.msk [vmem:[%s3377 + $0x70] sm:$0xff] %vm3137, %v3296
  %3386 = vst.msk [vmem:[%s3377 + $0x80] sm:$0xfe] %vm3135, %v3298
  %3387 = vst.msk [vmem:[%s3377 + $0x90] sm:$0xff] %vm3137, %v3300
  %3388 = vst.msk [vmem:[%s3377 + $0xa0] sm:$0xfe] %vm3135, %v3302
  %3389 = vst.msk [vmem:[%s3377 + $0xb0] sm:$0xff] %vm3137, %v3304
  %3390 = vst.msk [vmem:[%s3377 + $0xc0] sm:$0xfe] %vm3135, %v3306
  %3391 = vst.msk [vmem:[%s3377 + $0xd0] sm:$0xff] %vm3137, %v3308
  %3392 = vst.msk [vmem:[%s3377 + $0xe0] sm:$0xfe] %vm3135, %v3310
  %3393 = vst.msk [vmem:[%s3377 + $0xf0] sm:$0xff] %vm3137, %v3312
  %3394 = vst.msk [vmem:[%s3377 + $0x100] sm:$0xfe] %vm3135, %v3314
  %3395 = vst.msk [vmem:[%s3377 + $0x110] sm:$0xff] %vm3137, %v3316
  %3396 = vst.msk [vmem:[%s3377 + $0x120] sm:$0xfe] %vm3135, %v3318
  %3397 = vst.msk [vmem:[%s3377 + $0x130] sm:$0xff] %vm3137, %v3320
  %3398 = vst.msk [vmem:[%s3377 + $0x140] sm:$0xfe] %vm3135, %v3322
  %3399 = vst.msk [vmem:[%s3377 + $0x150] sm:$0xff] %vm3137, %v3324
  %3400 = vst.msk [vmem:[%s3377 + $0x160] sm:$0xfe] %vm3135, %v3326
  %3401 = vst.msk [vmem:[%s3377 + $0x170] sm:$0xff] %vm3137, %v3328
  %3402 = vst.msk [vmem:[%s3377 + $0x180] sm:$0xfe] %vm3135, %v3330
  %3403 = vst.msk [vmem:[%s3377 + $0x190] sm:$0xff] %vm3137, %v3332
  %3404 = vst.msk [vmem:[%s3377 + $0x1a0] sm:$0xfe] %vm3135, %v3334
  %3405 = vst.msk [vmem:[%s3377 + $0x1b0] sm:$0xff] %vm3137, %v3336
  %3406 = vst.msk [vmem:[%s3377 + $0x1c0] sm:$0xfe] %vm3135, %v3338
  %3407 = vst.msk [vmem:[%s3377 + $0x1d0] sm:$0xff] %vm3137, %v3340
  %3408 = vst.msk [vmem:[%s3377 + $0x1e0] sm:$0xfe] %vm3135, %v3342
  %3409 = vst.msk [vmem:[%s3377 + $0x1f0] sm:$0xff] %vm3137, %v3344
  %v3410 = vld [vmem:[#allocation3] sm:$0xff]
  %v3411 = vld [vmem:[#allocation3 + $0x8] sm:$0xff]
  %v3412 = vld [vmem:[#allocation3 + $0x10] sm:$0xff]
  %v3413 = vld [vmem:[#allocation3 + $0x18] sm:$0xff]
  %v3414 = vld [vmem:[#allocation3 + $0x20] sm:$0xff]
  %v3415 = vld [vmem:[#allocation3 + $0x28] sm:$0xff]
  %v3416 = vld [vmem:[#allocation3 + $0x30] sm:$0xff]
  %v3417 = vld [vmem:[#allocation3 + $0x38] sm:$0xff]
  %v3418 = vld [vmem:[#allocation3 + $0x40] sm:$0xff]
  %v3419 = vld [vmem:[#allocation3 + $0x48] sm:$0xff]
  %v3420 = vld [vmem:[#allocation3 + $0x50] sm:$0xff]
  %v3421 = vld [vmem:[#allocation3 + $0x58] sm:$0xff]
  %v3422 = vld [vmem:[#allocation3 + $0x60] sm:$0xff]
  %v3423 = vld [vmem:[#allocation3 + $0x68] sm:$0xff]
  %v3424 = vld [vmem:[#allocation3 + $0x70] sm:$0xff]
  %v3425 = vld [vmem:[#allocation3 + $0x78] sm:$0xff]
  %v3426 = vld [vmem:[#allocation3 + $0x80] sm:$0xff]
  %v3427 = vld [vmem:[#allocation3 + $0x88] sm:$0xff]
  %v3428 = vld [vmem:[#allocation3 + $0x90] sm:$0xff]
  %v3429 = vld [vmem:[#allocation3 + $0x98] sm:$0xff]
  %v3430 = vld [vmem:[#allocation3 + $0xa0] sm:$0xff]
  %v3431 = vld [vmem:[#allocation3 + $0xa8] sm:$0xff]
  %v3432 = vld [vmem:[#allocation3 + $0xb0] sm:$0xff]
  %v3433 = vld [vmem:[#allocation3 + $0xb8] sm:$0xff]
  %v3434 = vld [vmem:[#allocation3 + $0xc0] sm:$0xff]
  %v3435 = vld [vmem:[#allocation3 + $0xc8] sm:$0xff]
  %v3436 = vld [vmem:[#allocation3 + $0xd0] sm:$0xff]
  %v3437 = vld [vmem:[#allocation3 + $0xd8] sm:$0xff]
  %v3438 = vld [vmem:[#allocation3 + $0xe0] sm:$0xff]
  %v3439 = vld [vmem:[#allocation3 + $0xe8] sm:$0xff]
  %v3440 = vld [vmem:[#allocation3 + $0xf0] sm:$0xff]
  %v3441 = vld [vmem:[#allocation3 + $0xf8] sm:$0xff]
  %3474 = vrot.lane.b32.xlu0 %v3410, 64
  %v3475 = vpop.permute.xlu0 %3474
  %3476 = vrot.lane.b32.xlu0 %v3411, 64
  %v3477 = vpop.permute.xlu0 %3476
  %3478 = vrot.lane.b32.xlu0 %v3412, 64
  %v3479 = vpop.permute.xlu0 %3478
  %3480 = vrot.lane.b32.xlu0 %v3413, 64
  %v3481 = vpop.permute.xlu0 %3480
  %3482 = vrot.lane.b32.xlu0 %v3414, 64
  %v3483 = vpop.permute.xlu0 %3482
  %3484 = vrot.lane.b32.xlu0 %v3415, 64
  %v3485 = vpop.permute.xlu0 %3484
  %3486 = vrot.lane.b32.xlu0 %v3416, 64
  %v3487 = vpop.permute.xlu0 %3486
  %3488 = vrot.lane.b32.xlu0 %v3417, 64
  %v3489 = vpop.permute.xlu0 %3488
  %3490 = vrot.lane.b32.xlu0 %v3418, 64
  %v3491 = vpop.permute.xlu0 %3490
  %3492 = vrot.lane.b32.xlu0 %v3419, 64
  %v3493 = vpop.permute.xlu0 %3492
  %3494 = vrot.lane.b32.xlu0 %v3420, 64
  %v3495 = vpop.permute.xlu0 %3494
  %3496 = vrot.lane.b32.xlu0 %v3421, 64
  %v3497 = vpop.permute.xlu0 %3496
  %3498 = vrot.lane.b32.xlu0 %v3422, 64
  %v3499 = vpop.permute.xlu0 %3498
  %3500 = vrot.lane.b32.xlu0 %v3423, 64
  %v3501 = vpop.permute.xlu0 %3500
  %3502 = vrot.lane.b32.xlu0 %v3424, 64
  %v3503 = vpop.permute.xlu0 %3502
  %3504 = vrot.lane.b32.xlu0 %v3425, 64
  %v3505 = vpop.permute.xlu0 %3504
  %3506 = vrot.lane.b32.xlu0 %v3426, 64
  %v3507 = vpop.permute.xlu0 %3506
  %3508 = vrot.lane.b32.xlu0 %v3427, 64
  %v3509 = vpop.permute.xlu0 %3508
  %3510 = vrot.lane.b32.xlu0 %v3428, 64
  %v3511 = vpop.permute.xlu0 %3510
  %3512 = vrot.lane.b32.xlu0 %v3429, 64
  %v3513 = vpop.permute.xlu0 %3512
  %3514 = vrot.lane.b32.xlu0 %v3430, 64
  %v3515 = vpop.permute.xlu0 %3514
  %3516 = vrot.lane.b32.xlu0 %v3431, 64
  %v3517 = vpop.permute.xlu0 %3516
  %3518 = vrot.lane.b32.xlu0 %v3432, 64
  %v3519 = vpop.permute.xlu0 %3518
  %3520 = vrot.lane.b32.xlu0 %v3433, 64
  %v3521 = vpop.permute.xlu0 %3520
  %3522 = vrot.lane.b32.xlu0 %v3434, 64
  %v3523 = vpop.permute.xlu0 %3522
  %3524 = vrot.lane.b32.xlu0 %v3435, 64
  %v3525 = vpop.permute.xlu0 %3524
  %3526 = vrot.lane.b32.xlu0 %v3436, 64
  %v3527 = vpop.permute.xlu0 %3526
  %3528 = vrot.lane.b32.xlu0 %v3437, 64
  %v3529 = vpop.permute.xlu0 %3528
  %3530 = vrot.lane.b32.xlu0 %v3438, 64
  %v3531 = vpop.permute.xlu0 %3530
  %3532 = vrot.lane.b32.xlu0 %v3439, 64
  %v3533 = vpop.permute.xlu0 %3532
  %3534 = vrot.lane.b32.xlu0 %v3440, 64
  %v3535 = vpop.permute.xlu0 %3534
  %3536 = vrot.lane.b32.xlu0 %v3441, 64
  %v3537 = vpop.permute.xlu0 %3536
  %vm3570 = vcmask 654848
  %3571 = vst.msk [vmem:[#allocation4] sm:$0xff] %vm3570, %v3475
  %3572 = vst.msk [vmem:[#allocation4 + $0x10] sm:$0xff] %vm3570, %v3477
  %3573 = vst.msk [vmem:[#allocation4 + $0x20] sm:$0xff] %vm3570, %v3479
  %3574 = vst.msk [vmem:[#allocation4 + $0x30] sm:$0xff] %vm3570, %v3481
  %3575 = vst.msk [vmem:[#allocation4 + $0x40] sm:$0xff] %vm3570, %v3483
  %3576 = vst.msk [vmem:[#allocation4 + $0x50] sm:$0xff] %vm3570, %v3485
  %3577 = vst.msk [vmem:[#allocation4 + $0x60] sm:$0xff] %vm3570, %v3487
  %3578 = vst.msk [vmem:[#allocation4 + $0x70] sm:$0xff] %vm3570, %v3489
  %3579 = vst.msk [vmem:[#allocation4 + $0x80] sm:$0xff] %vm3570, %v3491
  %3580 = vst.msk [vmem:[#allocation4 + $0x90] sm:$0xff] %vm3570, %v3493
  %3581 = vst.msk [vmem:[#allocation4 + $0xa0] sm:$0xff] %vm3570, %v3495
  %3582 = vst.msk [vmem:[#allocation4 + $0xb0] sm:$0xff] %vm3570, %v3497
  %3583 = vst.msk [vmem:[#allocation4 + $0xc0] sm:$0xff] %vm3570, %v3499
  %3584 = vst.msk [vmem:[#allocation4 + $0xd0] sm:$0xff] %vm3570, %v3501
  %3585 = vst.msk [vmem:[#allocation4 + $0xe0] sm:$0xff] %vm3570, %v3503
  %3586 = vst.msk [vmem:[#allocation4 + $0xf0] sm:$0xff] %vm3570, %v3505
  %3587 = vst.msk [vmem:[#allocation4 + $0x100] sm:$0xff] %vm3570, %v3507
  %3588 = vst.msk [vmem:[#allocation4 + $0x110] sm:$0xff] %vm3570, %v3509
  %3589 = vst.msk [vmem:[#allocation4 + $0x120] sm:$0xff] %vm3570, %v3511
  %3590 = vst.msk [vmem:[#allocation4 + $0x130] sm:$0xff] %vm3570, %v3513
  %3591 = vst.msk [vmem:[#allocation4 + $0x140] sm:$0xff] %vm3570, %v3515
  %3592 = vst.msk [vmem:[#allocation4 + $0x150] sm:$0xff] %vm3570, %v3517
  %3593 = vst.msk [vmem:[#allocation4 + $0x160] sm:$0xff] %vm3570, %v3519
  %3594 = vst.msk [vmem:[#allocation4 + $0x170] sm:$0xff] %vm3570, %v3521
  %3595 = vst.msk [vmem:[#allocation4 + $0x180] sm:$0xff] %vm3570, %v3523
  %3596 = vst.msk [vmem:[#allocation4 + $0x190] sm:$0xff] %vm3570, %v3525
  %3597 = vst.msk [vmem:[#allocation4 + $0x1a0] sm:$0xff] %vm3570, %v3527
  %3598 = vst.msk [vmem:[#allocation4 + $0x1b0] sm:$0xff] %vm3570, %v3529
  %3599 = vst.msk [vmem:[#allocation4 + $0x1c0] sm:$0xff] %vm3570, %v3531
  %3600 = vst.msk [vmem:[#allocation4 + $0x1d0] sm:$0xff] %vm3570, %v3533
  %3601 = vst.msk [vmem:[#allocation4 + $0x1e0] sm:$0xff] %vm3570, %v3535
  %3602 = vst.msk [vmem:[#allocation4 + $0x1f0] sm:$0xff] %vm3570, %v3537
  %v3603 = vld [vmem:[%s1184] sm:$0xff]
  %v3604 = vld [vmem:[%s1184 + $0x8] sm:$0xff]
  %v3605 = vld [vmem:[%s1184 + $0x10] sm:$0xff]
  %v3606 = vld [vmem:[%s1184 + $0x18] sm:$0xff]
  %v3607 = vld [vmem:[%s1184 + $0x20] sm:$0xff]
  %v3608 = vld [vmem:[%s1184 + $0x28] sm:$0xff]
  %v3609 = vld [vmem:[%s1184 + $0x30] sm:$0xff]
  %v3610 = vld [vmem:[%s1184 + $0x38] sm:$0xff]
  %v3611 = vld [vmem:[%s1184 + $0x40] sm:$0xff]
  %v3612 = vld [vmem:[%s1184 + $0x48] sm:$0xff]
  %v3613 = vld [vmem:[%s1184 + $0x50] sm:$0xff]
  %v3614 = vld [vmem:[%s1184 + $0x58] sm:$0xff]
  %v3615 = vld [vmem:[%s1184 + $0x60] sm:$0xff]
  %v3616 = vld [vmem:[%s1184 + $0x68] sm:$0xff]
  %v3617 = vld [vmem:[%s1184 + $0x70] sm:$0xff]
  %v3618 = vld [vmem:[%s1184 + $0x78] sm:$0xff]
  %v3619 = vld [vmem:[%s1184 + $0x80] sm:$0xff]
  %v3620 = vld [vmem:[%s1184 + $0x88] sm:$0xff]
  %v3621 = vld [vmem:[%s1184 + $0x90] sm:$0xff]
  %v3622 = vld [vmem:[%s1184 + $0x98] sm:$0xff]
  %v3623 = vld [vmem:[%s1184 + $0xa0] sm:$0xff]
  %v3624 = vld [vmem:[%s1184 + $0xa8] sm:$0xff]
  %v3625 = vld [vmem:[%s1184 + $0xb0] sm:$0xff]
  %v3626 = vld [vmem:[%s1184 + $0xb8] sm:$0xff]
  %v3627 = vld [vmem:[%s1184 + $0xc0] sm:$0xff]
  %v3628 = vld [vmem:[%s1184 + $0xc8] sm:$0xff]
  %v3629 = vld [vmem:[%s1184 + $0xd0] sm:$0xff]
  %v3630 = vld [vmem:[%s1184 + $0xd8] sm:$0xff]
  %v3631 = vld [vmem:[%s1184 + $0xe0] sm:$0xff]
  %v3632 = vld [vmem:[%s1184 + $0xe8] sm:$0xff]
  %v3633 = vld [vmem:[%s1184 + $0xf0] sm:$0xff]
  %v3634 = vld [vmem:[%s1184 + $0xf8] sm:$0xff]
  %3667 = vrot.lane.b32.xlu0 %v3603, 64
  %v3668 = vpop.permute.xlu0 %3667
  %3669 = vrot.lane.b32.xlu0 %v3604, 64
  %v3670 = vpop.permute.xlu0 %3669
  %3671 = vrot.lane.b32.xlu0 %v3605, 64
  %v3672 = vpop.permute.xlu0 %3671
  %3673 = vrot.lane.b32.xlu0 %v3606, 64
  %v3674 = vpop.permute.xlu0 %3673
  %3675 = vrot.lane.b32.xlu0 %v3607, 64
  %v3676 = vpop.permute.xlu0 %3675
  %3677 = vrot.lane.b32.xlu0 %v3608, 64
  %v3678 = vpop.permute.xlu0 %3677
  %3679 = vrot.lane.b32.xlu0 %v3609, 64
  %v3680 = vpop.permute.xlu0 %3679
  %3681 = vrot.lane.b32.xlu0 %v3610, 64
  %v3682 = vpop.permute.xlu0 %3681
  %3683 = vrot.lane.b32.xlu0 %v3611, 64
  %v3684 = vpop.permute.xlu0 %3683
  %3685 = vrot.lane.b32.xlu0 %v3612, 64
  %v3686 = vpop.permute.xlu0 %3685
  %3687 = vrot.lane.b32.xlu0 %v3613, 64
  %v3688 = vpop.permute.xlu0 %3687
  %3689 = vrot.lane.b32.xlu0 %v3614, 64
  %v3690 = vpop.permute.xlu0 %3689
  %3691 = vrot.lane.b32.xlu0 %v3615, 64
  %v3692 = vpop.permute.xlu0 %3691
  %3693 = vrot.lane.b32.xlu0 %v3616, 64
  %v3694 = vpop.permute.xlu0 %3693
  %3695 = vrot.lane.b32.xlu0 %v3617, 64
  %v3696 = vpop.permute.xlu0 %3695
  %3697 = vrot.lane.b32.xlu0 %v3618, 64
  %v3698 = vpop.permute.xlu0 %3697
  %3699 = vrot.lane.b32.xlu0 %v3619, 64
  %v3700 = vpop.permute.xlu0 %3699
  %3701 = vrot.lane.b32.xlu0 %v3620, 64
  %v3702 = vpop.permute.xlu0 %3701
  %3703 = vrot.lane.b32.xlu0 %v3621, 64
  %v3704 = vpop.permute.xlu0 %3703
  %3705 = vrot.lane.b32.xlu0 %v3622, 64
  %v3706 = vpop.permute.xlu0 %3705
  %3707 = vrot.lane.b32.xlu0 %v3623, 64
  %v3708 = vpop.permute.xlu0 %3707
  %3709 = vrot.lane.b32.xlu0 %v3624, 64
  %v3710 = vpop.permute.xlu0 %3709
  %3711 = vrot.lane.b32.xlu0 %v3625, 64
  %v3712 = vpop.permute.xlu0 %3711
  %3713 = vrot.lane.b32.xlu0 %v3626, 64
  %v3714 = vpop.permute.xlu0 %3713
  %3715 = vrot.lane.b32.xlu0 %v3627, 64
  %v3716 = vpop.permute.xlu0 %3715
  %3717 = vrot.lane.b32.xlu0 %v3628, 64
  %v3718 = vpop.permute.xlu0 %3717
  %3719 = vrot.lane.b32.xlu0 %v3629, 64
  %v3720 = vpop.permute.xlu0 %3719
  %3721 = vrot.lane.b32.xlu0 %v3630, 64
  %v3722 = vpop.permute.xlu0 %3721
  %3723 = vrot.lane.b32.xlu0 %v3631, 64
  %v3724 = vpop.permute.xlu0 %3723
  %3725 = vrot.lane.b32.xlu0 %v3632, 64
  %v3726 = vpop.permute.xlu0 %3725
  %3727 = vrot.lane.b32.xlu0 %v3633, 64
  %v3728 = vpop.permute.xlu0 %3727
  %3729 = vrot.lane.b32.xlu0 %v3634, 64
  %v3730 = vpop.permute.xlu0 %3729
  %3763 = vst.msk [vmem:[%s3377] sm:$0xff] %vm3570, %v3668
  %3764 = vst.msk [vmem:[%s3377 + $0x10] sm:$0xff] %vm3570, %v3670
  %3765 = vst.msk [vmem:[%s3377 + $0x20] sm:$0xff] %vm3570, %v3672
  %3766 = vst.msk [vmem:[%s3377 + $0x30] sm:$0xff] %vm3570, %v3674
  %3767 = vst.msk [vmem:[%s3377 + $0x40] sm:$0xff] %vm3570, %v3676
  %3768 = vst.msk [vmem:[%s3377 + $0x50] sm:$0xff] %vm3570, %v3678
  %3769 = vst.msk [vmem:[%s3377 + $0x60] sm:$0xff] %vm3570, %v3680
  %3770 = vst.msk [vmem:[%s3377 + $0x70] sm:$0xff] %vm3570, %v3682
  %3771 = vst.msk [vmem:[%s3377 + $0x80] sm:$0xff] %vm3570, %v3684
  %3772 = vst.msk [vmem:[%s3377 + $0x90] sm:$0xff] %vm3570, %v3686
  %3773 = vst.msk [vmem:[%s3377 + $0xa0] sm:$0xff] %vm3570, %v3688
  %3774 = vst.msk [vmem:[%s3377 + $0xb0] sm:$0xff] %vm3570, %v3690
  %3775 = vst.msk [vmem:[%s3377 + $0xc0] sm:$0xff] %vm3570, %v3692
  %3776 = vst.msk [vmem:[%s3377 + $0xd0] sm:$0xff] %vm3570, %v3694
  %3777 = vst.msk [vmem:[%s3377 + $0xe0] sm:$0xff] %vm3570, %v3696
  %3778 = vst.msk [vmem:[%s3377 + $0xf0] sm:$0xff] %vm3570, %v3698
  %3779 = vst.msk [vmem:[%s3377 + $0x100] sm:$0xff] %vm3570, %v3700
  %3780 = vst.msk [vmem:[%s3377 + $0x110] sm:$0xff] %vm3570, %v3702
  %3781 = vst.msk [vmem:[%s3377 + $0x120] sm:$0xff] %vm3570, %v3704
  %3782 = vst.msk [vmem:[%s3377 + $0x130] sm:$0xff] %vm3570, %v3706
  %3783 = vst.msk [vmem:[%s3377 + $0x140] sm:$0xff] %vm3570, %v3708
  %3784 = vst.msk [vmem:[%s3377 + $0x150] sm:$0xff] %vm3570, %v3710
  %3785 = vst.msk [vmem:[%s3377 + $0x160] sm:$0xff] %vm3570, %v3712
  %3786 = vst.msk [vmem:[%s3377 + $0x170] sm:$0xff] %vm3570, %v3714
  %3787 = vst.msk [vmem:[%s3377 + $0x180] sm:$0xff] %vm3570, %v3716
  %3788 = vst.msk [vmem:[%s3377 + $0x190] sm:$0xff] %vm3570, %v3718
  %3789 = vst.msk [vmem:[%s3377 + $0x1a0] sm:$0xff] %vm3570, %v3720
  %3790 = vst.msk [vmem:[%s3377 + $0x1b0] sm:$0xff] %vm3570, %v3722
  %3791 = vst.msk [vmem:[%s3377 + $0x1c0] sm:$0xff] %vm3570, %v3724
  %3792 = vst.msk [vmem:[%s3377 + $0x1d0] sm:$0xff] %vm3570, %v3726
  %3793 = vst.msk [vmem:[%s3377 + $0x1e0] sm:$0xff] %vm3570, %v3728
  %3794 = vst.msk [vmem:[%s3377 + $0x1f0] sm:$0xff] %vm3570, %v3730
  %v3795 = vld [vmem:[#allocation3 + $0x1] sm:$0xff]
  %v3796 = vld [vmem:[#allocation3 + $0x9] sm:$0x7f]
  %v3797 = vld [vmem:[#allocation3 + $0x11] sm:$0xff]
  %v3798 = vld [vmem:[#allocation3 + $0x19] sm:$0x7f]
  %v3799 = vld [vmem:[#allocation3 + $0x21] sm:$0xff]
  %v3800 = vld [vmem:[#allocation3 + $0x29] sm:$0x7f]
  %v3801 = vld [vmem:[#allocation3 + $0x31] sm:$0xff]
  %v3802 = vld [vmem:[#allocation3 + $0x39] sm:$0x7f]
  %v3803 = vld [vmem:[#allocation3 + $0x41] sm:$0xff]
  %v3804 = vld [vmem:[#allocation3 + $0x49] sm:$0x7f]
  %v3805 = vld [vmem:[#allocation3 + $0x51] sm:$0xff]
  %v3806 = vld [vmem:[#allocation3 + $0x59] sm:$0x7f]
  %v3807 = vld [vmem:[#allocation3 + $0x61] sm:$0xff]
  %v3808 = vld [vmem:[#allocation3 + $0x69] sm:$0x7f]
  %v3809 = vld [vmem:[#allocation3 + $0x71] sm:$0xff]
  %v3810 = vld [vmem:[#allocation3 + $0x79] sm:$0x7f]
  %v3811 = vld [vmem:[#allocation3 + $0x81] sm:$0xff]
  %v3812 = vld [vmem:[#allocation3 + $0x89] sm:$0x7f]
  %v3813 = vld [vmem:[#allocation3 + $0x91] sm:$0xff]
  %v3814 = vld [vmem:[#allocation3 + $0x99] sm:$0x7f]
  %v3815 = vld [vmem:[#allocation3 + $0xa1] sm:$0xff]
  %v3816 = vld [vmem:[#allocation3 + $0xa9] sm:$0x7f]
  %v3817 = vld [vmem:[#allocation3 + $0xb1] sm:$0xff]
  %v3818 = vld [vmem:[#allocation3 + $0xb9] sm:$0x7f]
  %v3819 = vld [vmem:[#allocation3 + $0xc1] sm:$0xff]
  %v3820 = vld [vmem:[#allocation3 + $0xc9] sm:$0x7f]
  %v3821 = vld [vmem:[#allocation3 + $0xd1] sm:$0xff]
  %v3822 = vld [vmem:[#allocation3 + $0xd9] sm:$0x7f]
  %v3823 = vld [vmem:[#allocation3 + $0xe1] sm:$0xff]
  %v3824 = vld [vmem:[#allocation3 + $0xe9] sm:$0x7f]
  %v3825 = vld [vmem:[#allocation3 + $0xf1] sm:$0xff]
  %v3826 = vld [vmem:[#allocation3 + $0xf9] sm:$0x7f]
  %3859 = vrot.lane.b32.xlu0 %v3795, 80
  %v3860 = vpop.permute.xlu0 %3859
  %3861 = vrot.lane.b32.xlu0 %v3796, 80
  %v3862 = vpop.permute.xlu0 %3861
  %3863 = vrot.lane.b32.xlu0 %v3797, 80
  %v3864 = vpop.permute.xlu0 %3863
  %3865 = vrot.lane.b32.xlu0 %v3798, 80
  %v3866 = vpop.permute.xlu0 %3865
  %3867 = vrot.lane.b32.xlu0 %v3799, 80
  %v3868 = vpop.permute.xlu0 %3867
  %3869 = vrot.lane.b32.xlu0 %v3800, 80
  %v3870 = vpop.permute.xlu0 %3869
  %3871 = vrot.lane.b32.xlu0 %v3801, 80
  %v3872 = vpop.permute.xlu0 %3871
  %3873 = vrot.lane.b32.xlu0 %v3802, 80
  %v3874 = vpop.permute.xlu0 %3873
  %3875 = vrot.lane.b32.xlu0 %v3803, 80
  %v3876 = vpop.permute.xlu0 %3875
  %3877 = vrot.lane.b32.xlu0 %v3804, 80
  %v3878 = vpop.permute.xlu0 %3877
  %3879 = vrot.lane.b32.xlu0 %v3805, 80
  %v3880 = vpop.permute.xlu0 %3879
  %3881 = vrot.lane.b32.xlu0 %v3806, 80
  %v3882 = vpop.permute.xlu0 %3881
  %3883 = vrot.lane.b32.xlu0 %v3807, 80
  %v3884 = vpop.permute.xlu0 %3883
  %3885 = vrot.lane.b32.xlu0 %v3808, 80
  %v3886 = vpop.permute.xlu0 %3885
  %3887 = vrot.lane.b32.xlu0 %v3809, 80
  %v3888 = vpop.permute.xlu0 %3887
  %3889 = vrot.lane.b32.xlu0 %v3810, 80
  %v3890 = vpop.permute.xlu0 %3889
  %3891 = vrot.lane.b32.xlu0 %v3811, 80
  %v3892 = vpop.permute.xlu0 %3891
  %3893 = vrot.lane.b32.xlu0 %v3812, 80
  %v3894 = vpop.permute.xlu0 %3893
  %3895 = vrot.lane.b32.xlu0 %v3813, 80
  %v3896 = vpop.permute.xlu0 %3895
  %3897 = vrot.lane.b32.xlu0 %v3814, 80
  %v3898 = vpop.permute.xlu0 %3897
  %3899 = vrot.lane.b32.xlu0 %v3815, 80
  %v3900 = vpop.permute.xlu0 %3899
  %3901 = vrot.lane.b32.xlu0 %v3816, 80
  %v3902 = vpop.permute.xlu0 %3901
  %3903 = vrot.lane.b32.xlu0 %v3817, 80
  %v3904 = vpop.permute.xlu0 %3903
  %3905 = vrot.lane.b32.xlu0 %v3818, 80
  %v3906 = vpop.permute.xlu0 %3905
  %3907 = vrot.lane.b32.xlu0 %v3819, 80
  %v3908 = vpop.permute.xlu0 %3907
  %3909 = vrot.lane.b32.xlu0 %v3820, 80
  %v3910 = vpop.permute.xlu0 %3909
  %3911 = vrot.lane.b32.xlu0 %v3821, 80
  %v3912 = vpop.permute.xlu0 %3911
  %3913 = vrot.lane.b32.xlu0 %v3822, 80
  %v3914 = vpop.permute.xlu0 %3913
  %3915 = vrot.lane.b32.xlu0 %v3823, 80
  %v3916 = vpop.permute.xlu0 %3915
  %3917 = vrot.lane.b32.xlu0 %v3824, 80
  %v3918 = vpop.permute.xlu0 %3917
  %3919 = vrot.lane.b32.xlu0 %v3825, 80
  %v3920 = vpop.permute.xlu0 %3919
  %3921 = vrot.lane.b32.xlu0 %v3826, 80
  %v3922 = vpop.permute.xlu0 %3921
  %vm3955 = vcmask 786048
  %3956 = vst.msk [vmem:[#allocation4] sm:$0xff] %vm3955, %v3860
  %vm3957 = vcmask 785024
  %3958 = vst.msk [vmem:[#allocation4 + $0x10] sm:$0x7f] %vm3957, %v3862
  %3959 = vst.msk [vmem:[#allocation4 + $0x20] sm:$0xff] %vm3955, %v3864
  %3960 = vst.msk [vmem:[#allocation4 + $0x30] sm:$0x7f] %vm3957, %v3866
  %3961 = vst.msk [vmem:[#allocation4 + $0x40] sm:$0xff] %vm3955, %v3868
  %3962 = vst.msk [vmem:[#allocation4 + $0x50] sm:$0x7f] %vm3957, %v3870
  %3963 = vst.msk [vmem:[#allocation4 + $0x60] sm:$0xff] %vm3955, %v3872
  %3964 = vst.msk [vmem:[#allocation4 + $0x70] sm:$0x7f] %vm3957, %v3874
  %3965 = vst.msk [vmem:[#allocation4 + $0x80] sm:$0xff] %vm3955, %v3876
  %3966 = vst.msk [vmem:[#allocation4 + $0x90] sm:$0x7f] %vm3957, %v3878
  %3967 = vst.msk [vmem:[#allocation4 + $0xa0] sm:$0xff] %vm3955, %v3880
  %3968 = vst.msk [vmem:[#allocation4 + $0xb0] sm:$0x7f] %vm3957, %v3882
  %3969 = vst.msk [vmem:[#allocation4 + $0xc0] sm:$0xff] %vm3955, %v3884
  %3970 = vst.msk [vmem:[#allocation4 + $0xd0] sm:$0x7f] %vm3957, %v3886
  %3971 = vst.msk [vmem:[#allocation4 + $0xe0] sm:$0xff] %vm3955, %v3888
  %3972 = vst.msk [vmem:[#allocation4 + $0xf0] sm:$0x7f] %vm3957, %v3890
  %3973 = vst.msk [vmem:[#allocation4 + $0x100] sm:$0xff] %vm3955, %v3892
  %3974 = vst.msk [vmem:[#allocation4 + $0x110] sm:$0x7f] %vm3957, %v3894
  %3975 = vst.msk [vmem:[#allocation4 + $0x120] sm:$0xff] %vm3955, %v3896
  %3976 = vst.msk [vmem:[#allocation4 + $0x130] sm:$0x7f] %vm3957, %v3898
  %3977 = vst.msk [vmem:[#allocation4 + $0x140] sm:$0xff] %vm3955, %v3900
  %3978 = vst.msk [vmem:[#allocation4 + $0x150] sm:$0x7f] %vm3957, %v3902
  %3979 = vst.msk [vmem:[#allocation4 + $0x160] sm:$0xff] %vm3955, %v3904
  %3980 = vst.msk [vmem:[#allocation4 + $0x170] sm:$0x7f] %vm3957, %v3906
  %3981 = vst.msk [vmem:[#allocation4 + $0x180] sm:$0xff] %vm3955, %v3908
  %3982 = vst.msk [vmem:[#allocation4 + $0x190] sm:$0x7f] %vm3957, %v3910
  %3983 = vst.msk [vmem:[#allocation4 + $0x1a0] sm:$0xff] %vm3955, %v3912
  %3984 = vst.msk [vmem:[#allocation4 + $0x1b0] sm:$0x7f] %vm3957, %v3914
  %3985 = vst.msk [vmem:[#allocation4 + $0x1c0] sm:$0xff] %vm3955, %v3916
  %3986 = vst.msk [vmem:[#allocation4 + $0x1d0] sm:$0x7f] %vm3957, %v3918
  %3987 = vst.msk [vmem:[#allocation4 + $0x1e0] sm:$0xff] %vm3955, %v3920
  %3988 = vst.msk [vmem:[#allocation4 + $0x1f0] sm:$0x7f] %vm3957, %v3922
  %v3989 = vld [vmem:[%s1184 + $0x1] sm:$0xff]
  %v3990 = vld [vmem:[%s1184 + $0x9] sm:$0x7f]
  %v3991 = vld [vmem:[%s1184 + $0x11] sm:$0xff]
  %v3992 = vld [vmem:[%s1184 + $0x19] sm:$0x7f]
  %v3993 = vld [vmem:[%s1184 + $0x21] sm:$0xff]
  %v3994 = vld [vmem:[%s1184 + $0x29] sm:$0x7f]
  %v3995 = vld [vmem:[%s1184 + $0x31] sm:$0xff]
  %v3996 = vld [vmem:[%s1184 + $0x39] sm:$0x7f]
  %v3997 = vld [vmem:[%s1184 + $0x41] sm:$0xff]
  %v3998 = vld [vmem:[%s1184 + $0x49] sm:$0x7f]
  %v3999 = vld [vmem:[%s1184 + $0x51] sm:$0xff]
  %v4000 = vld [vmem:[%s1184 + $0x59] sm:$0x7f]
  %v4001 = vld [vmem:[%s1184 + $0x61] sm:$0xff]
  %v4002 = vld [vmem:[%s1184 + $0x69] sm:$0x7f]
  %v4003 = vld [vmem:[%s1184 + $0x71] sm:$0xff]
  %v4004 = vld [vmem:[%s1184 + $0x79] sm:$0x7f]
  %v4005 = vld [vmem:[%s1184 + $0x81] sm:$0xff]
  %v4006 = vld [vmem:[%s1184 + $0x89] sm:$0x7f]
  %v4007 = vld [vmem:[%s1184 + $0x91] sm:$0xff]
  %v4008 = vld [vmem:[%s1184 + $0x99] sm:$0x7f]
  %v4009 = vld [vmem:[%s1184 + $0xa1] sm:$0xff]
  %v4010 = vld [vmem:[%s1184 + $0xa9] sm:$0x7f]
  %v4011 = vld [vmem:[%s1184 + $0xb1] sm:$0xff]
  %v4012 = vld [vmem:[%s1184 + $0xb9] sm:$0x7f]
  %v4013 = vld [vmem:[%s1184 + $0xc1] sm:$0xff]
  %v4014 = vld [vmem:[%s1184 + $0xc9] sm:$0x7f]
  %v4015 = vld [vmem:[%s1184 + $0xd1] sm:$0xff]
  %v4016 = vld [vmem:[%s1184 + $0xd9] sm:$0x7f]
  %v4017 = vld [vmem:[%s1184 + $0xe1] sm:$0xff]
  %v4018 = vld [vmem:[%s1184 + $0xe9] sm:$0x7f]
  %v4019 = vld [vmem:[%s1184 + $0xf1] sm:$0xff]
  %v4020 = vld [vmem:[%s1184 + $0xf9] sm:$0x7f]
  %4053 = vrot.lane.b32.xlu0 %v3989, 80
  %v4054 = vpop.permute.xlu0 %4053
  %4055 = vrot.lane.b32.xlu0 %v3990, 80
  %v4056 = vpop.permute.xlu0 %4055
  %4057 = vrot.lane.b32.xlu0 %v3991, 80
  %v4058 = vpop.permute.xlu0 %4057
  %4059 = vrot.lane.b32.xlu0 %v3992, 80
  %v4060 = vpop.permute.xlu0 %4059
  %4061 = vrot.lane.b32.xlu0 %v3993, 80
  %v4062 = vpop.permute.xlu0 %4061
  %4063 = vrot.lane.b32.xlu0 %v3994, 80
  %v4064 = vpop.permute.xlu0 %4063
  %4065 = vrot.lane.b32.xlu0 %v3995, 80
  %v4066 = vpop.permute.xlu0 %4065
  %4067 = vrot.lane.b32.xlu0 %v3996, 80
  %v4068 = vpop.permute.xlu0 %4067
  %4069 = vrot.lane.b32.xlu0 %v3997, 80
  %v4070 = vpop.permute.xlu0 %4069
  %4071 = vrot.lane.b32.xlu0 %v3998, 80
  %v4072 = vpop.permute.xlu0 %4071
  %4073 = vrot.lane.b32.xlu0 %v3999, 80
  %v4074 = vpop.permute.xlu0 %4073
  %4075 = vrot.lane.b32.xlu0 %v4000, 80
  %v4076 = vpop.permute.xlu0 %4075
  %4077 = vrot.lane.b32.xlu0 %v4001, 80
  %v4078 = vpop.permute.xlu0 %4077
  %4079 = vrot.lane.b32.xlu0 %v4002, 80
  %v4080 = vpop.permute.xlu0 %4079
  %4081 = vrot.lane.b32.xlu0 %v4003, 80
  %v4082 = vpop.permute.xlu0 %4081
  %4083 = vrot.lane.b32.xlu0 %v4004, 80
  %v4084 = vpop.permute.xlu0 %4083
  %4085 = vrot.lane.b32.xlu0 %v4005, 80
  %v4086 = vpop.permute.xlu0 %4085
  %4087 = vrot.lane.b32.xlu0 %v4006, 80
  %v4088 = vpop.permute.xlu0 %4087
  %4089 = vrot.lane.b32.xlu0 %v4007, 80
  %v4090 = vpop.permute.xlu0 %4089
  %4091 = vrot.lane.b32.xlu0 %v4008, 80
  %v4092 = vpop.permute.xlu0 %4091
  %4093 = vrot.lane.b32.xlu0 %v4009, 80
  %v4094 = vpop.permute.xlu0 %4093
  %4095 = vrot.lane.b32.xlu0 %v4010, 80
  %v4096 = vpop.permute.xlu0 %4095
  %4097 = vrot.lane.b32.xlu0 %v4011, 80
  %v4098 = vpop.permute.xlu0 %4097
  %4099 = vrot.lane.b32.xlu0 %v4012, 80
  %v4100 = vpop.permute.xlu0 %4099
  %4101 = vrot.lane.b32.xlu0 %v4013, 80
  %v4102 = vpop.permute.xlu0 %4101
  %4103 = vrot.lane.b32.xlu0 %v4014, 80
  %v4104 = vpop.permute.xlu0 %4103
  %4105 = vrot.lane.b32.xlu0 %v4015, 80
  %v4106 = vpop.permute.xlu0 %4105
  %4107 = vrot.lane.b32.xlu0 %v4016, 80
  %v4108 = vpop.permute.xlu0 %4107
  %4109 = vrot.lane.b32.xlu0 %v4017, 80
  %v4110 = vpop.permute.xlu0 %4109
  %4111 = vrot.lane.b32.xlu0 %v4018, 80
  %v4112 = vpop.permute.xlu0 %4111
  %4113 = vrot.lane.b32.xlu0 %v4019, 80
  %v4114 = vpop.permute.xlu0 %4113
  %4115 = vrot.lane.b32.xlu0 %v4020, 80
  %v4116 = vpop.permute.xlu0 %4115
  %4149 = vst.msk [vmem:[%s3377] sm:$0xff] %vm3955, %v4054
  %4150 = vst.msk [vmem:[%s3377 + $0x10] sm:$0x7f] %vm3957, %v4056
  %4151 = vst.msk [vmem:[%s3377 + $0x20] sm:$0xff] %vm3955, %v4058
  %4152 = vst.msk [vmem:[%s3377 + $0x30] sm:$0x7f] %vm3957, %v4060
  %4153 = vst.msk [vmem:[%s3377 + $0x40] sm:$0xff] %vm3955, %v4062
  %4154 = vst.msk [vmem:[%s3377 + $0x50] sm:$0x7f] %vm3957, %v4064
  %4155 = vst.msk [vmem:[%s3377 + $0x60] sm:$0xff] %vm3955, %v4066
  %4156 = vst.msk [vmem:[%s3377 + $0x70] sm:$0x7f] %vm3957, %v4068
  %4157 = vst.msk [vmem:[%s3377 + $0x80] sm:$0xff] %vm3955, %v4070
  %4158 = vst.msk [vmem:[%s3377 + $0x90] sm:$0x7f] %vm3957, %v4072
  %4159 = vst.msk [vmem:[%s3377 + $0xa0] sm:$0xff] %vm3955, %v4074
  %4160 = vst.msk [vmem:[%s3377 + $0xb0] sm:$0x7f] %vm3957, %v4076
  %4161 = vst.msk [vmem:[%s3377 + $0xc0] sm:$0xff] %vm3955, %v4078
  %4162 = vst.msk [vmem:[%s3377 + $0xd0] sm:$0x7f] %vm3957, %v4080
  %4163 = vst.msk [vmem:[%s3377 + $0xe0] sm:$0xff] %vm3955, %v4082
  %4164 = vst.msk [vmem:[%s3377 + $0xf0] sm:$0x7f] %vm3957, %v4084
  %4165 = vst.msk [vmem:[%s3377 + $0x100] sm:$0xff] %vm3955, %v4086
  %4166 = vst.msk [vmem:[%s3377 + $0x110] sm:$0x7f] %vm3957, %v4088
  %4167 = vst.msk [vmem:[%s3377 + $0x120] sm:$0xff] %vm3955, %v4090
  %4168 = vst.msk [vmem:[%s3377 + $0x130] sm:$0x7f] %vm3957, %v4092
  %4169 = vst.msk [vmem:[%s3377 + $0x140] sm:$0xff] %vm3955, %v4094
  %4170 = vst.msk [vmem:[%s3377 + $0x150] sm:$0x7f] %vm3957, %v4096
  %4171 = vst.msk [vmem:[%s3377 + $0x160] sm:$0xff] %vm3955, %v4098
  %4172 = vst.msk [vmem:[%s3377 + $0x170] sm:$0x7f] %vm3957, %v4100
  %4173 = vst.msk [vmem:[%s3377 + $0x180] sm:$0xff] %vm3955, %v4102
  %4174 = vst.msk [vmem:[%s3377 + $0x190] sm:$0x7f] %vm3957, %v4104
  %4175 = vst.msk [vmem:[%s3377 + $0x1a0] sm:$0xff] %vm3955, %v4106
  %4176 = vst.msk [vmem:[%s3377 + $0x1b0] sm:$0x7f] %vm3957, %v4108
  %4177 = vst.msk [vmem:[%s3377 + $0x1c0] sm:$0xff] %vm3955, %v4110
  %4178 = vst.msk [vmem:[%s3377 + $0x1d0] sm:$0x7f] %vm3957, %v4112
  %4179 = vst.msk [vmem:[%s3377 + $0x1e0] sm:$0xff] %vm3955, %v4114
  %4180 = vst.msk [vmem:[%s3377 + $0x1f0] sm:$0x7f] %vm3957, %v4116
  %v4181 = vld [vmem:[%s629] sm:$0xff]
  %v4182 = vld [vmem:[%s629 + $0x8] sm:$0x7f]
  %v4183 = vld [vmem:[%s629 + $0x10] sm:$0xff]
  %v4184 = vld [vmem:[%s629 + $0x18] sm:$0x7f]
  %v4185 = vld [vmem:[%s629 + $0x20] sm:$0xff]
  %v4186 = vld [vmem:[%s629 + $0x28] sm:$0x7f]
  %v4187 = vld [vmem:[%s629 + $0x30] sm:$0xff]
  %v4188 = vld [vmem:[%s629 + $0x38] sm:$0x7f]
  %v4189 = vld [vmem:[%s629 + $0x40] sm:$0xff]
  %v4190 = vld [vmem:[%s629 + $0x48] sm:$0x7f]
  %v4191 = vld [vmem:[%s629 + $0x50] sm:$0xff]
  %v4192 = vld [vmem:[%s629 + $0x58] sm:$0x7f]
  %v4193 = vld [vmem:[%s629 + $0x60] sm:$0xff]
  %v4194 = vld [vmem:[%s629 + $0x68] sm:$0x7f]
  %v4195 = vld [vmem:[%s629 + $0x70] sm:$0xff]
  %v4196 = vld [vmem:[%s629 + $0x78] sm:$0x7f]
  %v4197 = vld [vmem:[%s629 + $0x80] sm:$0xff]
  %v4198 = vld [vmem:[%s629 + $0x88] sm:$0x7f]
  %v4199 = vld [vmem:[%s629 + $0x90] sm:$0xff]
  %v4200 = vld [vmem:[%s629 + $0x98] sm:$0x7f]
  %v4201 = vld [vmem:[%s629 + $0xa0] sm:$0xff]
  %v4202 = vld [vmem:[%s629 + $0xa8] sm:$0x7f]
  %v4203 = vld [vmem:[%s629 + $0xb0] sm:$0xff]
  %v4204 = vld [vmem:[%s629 + $0xb8] sm:$0x7f]
  %v4205 = vld [vmem:[%s629 + $0xc0] sm:$0xff]
  %v4206 = vld [vmem:[%s629 + $0xc8] sm:$0x7f]
  %v4207 = vld [vmem:[%s629 + $0xd0] sm:$0xff]
  %v4208 = vld [vmem:[%s629 + $0xd8] sm:$0x7f]
  %v4209 = vld [vmem:[%s629 + $0xe0] sm:$0xff]
  %v4210 = vld [vmem:[%s629 + $0xe8] sm:$0x7f]
  %v4241 = vrot.slane %v4181, 7
  %v4242 = vrot.slane %v4182, 7
  %v4243 = vsel %vm1930, %v4241, %v4242
  %v4244 = vrot.slane %v4183, 7
  %v4245 = vrot.slane %v4184, 7
  %v4246 = vsel %vm1930, %v4244, %v4245
  %v4247 = vrot.slane %v4185, 7
  %v4248 = vrot.slane %v4186, 7
  %v4249 = vsel %vm1930, %v4247, %v4248
  %v4250 = vrot.slane %v4187, 7
  %v4251 = vrot.slane %v4188, 7
  %v4252 = vsel %vm1930, %v4250, %v4251
  %v4253 = vrot.slane %v4189, 7
  %v4254 = vrot.slane %v4190, 7
  %v4255 = vsel %vm1930, %v4253, %v4254
  %v4256 = vrot.slane %v4191, 7
  %v4257 = vrot.slane %v4192, 7
  %v4258 = vsel %vm1930, %v4256, %v4257
  %v4259 = vrot.slane %v4193, 7
  %v4260 = vrot.slane %v4194, 7
  %v4261 = vsel %vm1930, %v4259, %v4260
  %v4262 = vrot.slane %v4195, 7
  %v4263 = vrot.slane %v4196, 7
  %v4264 = vsel %vm1930, %v4262, %v4263
  %v4265 = vrot.slane %v4197, 7
  %v4266 = vrot.slane %v4198, 7
  %v4267 = vsel %vm1930, %v4265, %v4266
  %v4268 = vrot.slane %v4199, 7
  %v4269 = vrot.slane %v4200, 7
  %v4270 = vsel %vm1930, %v4268, %v4269
  %v4271 = vrot.slane %v4201, 7
  %v4272 = vrot.slane %v4202, 7
  %v4273 = vsel %vm1930, %v4271, %v4272
  %v4274 = vrot.slane %v4203, 7
  %v4275 = vrot.slane %v4204, 7
  %v4276 = vsel %vm1930, %v4274, %v4275
  %v4277 = vrot.slane %v4205, 7
  %v4278 = vrot.slane %v4206, 7
  %v4279 = vsel %vm1930, %v4277, %v4278
  %v4280 = vrot.slane %v4207, 7
  %v4281 = vrot.slane %v4208, 7
  %v4282 = vsel %vm1930, %v4280, %v4281
  %v4283 = vrot.slane %v4209, 7
  %v4284 = vrot.slane %v4210, 7
  %v4285 = vsel %vm1930, %v4283, %v4284
  %4286 = vrot.lane.b32.xlu0 %v4241, 96
  %v4287 = vpop.permute.xlu0 %4286
  %4288 = vrot.lane.b32.xlu0 %v4243, 96
  %v4289 = vpop.permute.xlu0 %4288
  %4290 = vrot.lane.b32.xlu0 %v4244, 96
  %v4291 = vpop.permute.xlu0 %4290
  %4292 = vrot.lane.b32.xlu0 %v4246, 96
  %v4293 = vpop.permute.xlu0 %4292
  %4294 = vrot.lane.b32.xlu0 %v4247, 96
  %v4295 = vpop.permute.xlu0 %4294
  %4296 = vrot.lane.b32.xlu0 %v4249, 96
  %v4297 = vpop.permute.xlu0 %4296
  %4298 = vrot.lane.b32.xlu0 %v4250, 96
  %v4299 = vpop.permute.xlu0 %4298
  %4300 = vrot.lane.b32.xlu0 %v4252, 96
  %v4301 = vpop.permute.xlu0 %4300
  %4302 = vrot.lane.b32.xlu0 %v4253, 96
  %v4303 = vpop.permute.xlu0 %4302
  %4304 = vrot.lane.b32.xlu0 %v4255, 96
  %v4305 = vpop.permute.xlu0 %4304
  %4306 = vrot.lane.b32.xlu0 %v4256, 96
  %v4307 = vpop.permute.xlu0 %4306
  %4308 = vrot.lane.b32.xlu0 %v4258, 96
  %v4309 = vpop.permute.xlu0 %4308
  %4310 = vrot.lane.b32.xlu0 %v4259, 96
  %v4311 = vpop.permute.xlu0 %4310
  %4312 = vrot.lane.b32.xlu0 %v4261, 96
  %v4313 = vpop.permute.xlu0 %4312
  %4314 = vrot.lane.b32.xlu0 %v4262, 96
  %v4315 = vpop.permute.xlu0 %4314
  %4316 = vrot.lane.b32.xlu0 %v4264, 96
  %v4317 = vpop.permute.xlu0 %4316
  %4318 = vrot.lane.b32.xlu0 %v4265, 96
  %v4319 = vpop.permute.xlu0 %4318
  %4320 = vrot.lane.b32.xlu0 %v4267, 96
  %v4321 = vpop.permute.xlu0 %4320
  %4322 = vrot.lane.b32.xlu0 %v4268, 96
  %v4323 = vpop.permute.xlu0 %4322
  %4324 = vrot.lane.b32.xlu0 %v4270, 96
  %v4325 = vpop.permute.xlu0 %4324
  %4326 = vrot.lane.b32.xlu0 %v4271, 96
  %v4327 = vpop.permute.xlu0 %4326
  %4328 = vrot.lane.b32.xlu0 %v4273, 96
  %v4329 = vpop.permute.xlu0 %4328
  %4330 = vrot.lane.b32.xlu0 %v4274, 96
  %v4331 = vpop.permute.xlu0 %4330
  %4332 = vrot.lane.b32.xlu0 %v4276, 96
  %v4333 = vpop.permute.xlu0 %4332
  %4334 = vrot.lane.b32.xlu0 %v4277, 96
  %v4335 = vpop.permute.xlu0 %4334
  %4336 = vrot.lane.b32.xlu0 %v4279, 96
  %v4337 = vpop.permute.xlu0 %4336
  %4338 = vrot.lane.b32.xlu0 %v4280, 96
  %v4339 = vpop.permute.xlu0 %4338
  %4340 = vrot.lane.b32.xlu0 %v4282, 96
  %v4341 = vpop.permute.xlu0 %4340
  %4342 = vrot.lane.b32.xlu0 %v4283, 96
  %v4343 = vpop.permute.xlu0 %4342
  %4344 = vrot.lane.b32.xlu0 %v4285, 96
  %v4345 = vpop.permute.xlu0 %4344
  %vm4376 = vcmask 917249
  %4377 = vst.msk [vmem:[#allocation4] sm:$0xfe] %vm4376, %v4287
  %vm4378 = vcmask 917248
  %4379 = vst.msk [vmem:[#allocation4 + $0x10] sm:$0xff] %vm4378, %v4289
  %4380 = vst.msk [vmem:[#allocation4 + $0x20] sm:$0xfe] %vm4376, %v4291
  %4381 = vst.msk [vmem:[#allocation4 + $0x30] sm:$0xff] %vm4378, %v4293
  %4382 = vst.msk [vmem:[#allocation4 + $0x40] sm:$0xfe] %vm4376, %v4295
  %4383 = vst.msk [vmem:[#allocation4 + $0x50] sm:$0xff] %vm4378, %v4297
  %4384 = vst.msk [vmem:[#allocation4 + $0x60] sm:$0xfe] %vm4376, %v4299
  %4385 = vst.msk [vmem:[#allocation4 + $0x70] sm:$0xff] %vm4378, %v4301
  %4386 = vst.msk [vmem:[#allocation4 + $0x80] sm:$0xfe] %vm4376, %v4303
  %4387 = vst.msk [vmem:[#allocation4 + $0x90] sm:$0xff] %vm4378, %v4305
  %4388 = vst.msk [vmem:[#allocation4 + $0xa0] sm:$0xfe] %vm4376, %v4307
  %4389 = vst.msk [vmem:[#allocation4 + $0xb0] sm:$0xff] %vm4378, %v4309
  %4390 = vst.msk [vmem:[#allocation4 + $0xc0] sm:$0xfe] %vm4376, %v4311
  %4391 = vst.msk [vmem:[#allocation4 + $0xd0] sm:$0xff] %vm4378, %v4313
  %4392 = vst.msk [vmem:[#allocation4 + $0xe0] sm:$0xfe] %vm4376, %v4315
  %4393 = vst.msk [vmem:[#allocation4 + $0xf0] sm:$0xff] %vm4378, %v4317
  %4394 = vst.msk [vmem:[#allocation4 + $0x100] sm:$0xfe] %vm4376, %v4319
  %4395 = vst.msk [vmem:[#allocation4 + $0x110] sm:$0xff] %vm4378, %v4321
  %4396 = vst.msk [vmem:[#allocation4 + $0x120] sm:$0xfe] %vm4376, %v4323
  %4397 = vst.msk [vmem:[#allocation4 + $0x130] sm:$0xff] %vm4378, %v4325
  %4398 = vst.msk [vmem:[#allocation4 + $0x140] sm:$0xfe] %vm4376, %v4327
  %4399 = vst.msk [vmem:[#allocation4 + $0x150] sm:$0xff] %vm4378, %v4329
  %4400 = vst.msk [vmem:[#allocation4 + $0x160] sm:$0xfe] %vm4376, %v4331
  %4401 = vst.msk [vmem:[#allocation4 + $0x170] sm:$0xff] %vm4378, %v4333
  %4402 = vst.msk [vmem:[#allocation4 + $0x180] sm:$0xfe] %vm4376, %v4335
  %4403 = vst.msk [vmem:[#allocation4 + $0x190] sm:$0xff] %vm4378, %v4337
  %4404 = vst.msk [vmem:[#allocation4 + $0x1a0] sm:$0xfe] %vm4376, %v4339
  %4405 = vst.msk [vmem:[#allocation4 + $0x1b0] sm:$0xff] %vm4378, %v4341
  %4406 = vst.msk [vmem:[#allocation4 + $0x1c0] sm:$0xfe] %vm4376, %v4343
  %4407 = vst.msk [vmem:[#allocation4 + $0x1d0] sm:$0xff] %vm4378, %v4345
  %v4408 = vld [vmem:[%s1221] sm:$0xff]
  %v4409 = vld [vmem:[%s1221 + $0x8] sm:$0x7f]
  %v4410 = vld [vmem:[%s1221 + $0x10] sm:$0xff]
  %v4411 = vld [vmem:[%s1221 + $0x18] sm:$0x7f]
  %v4412 = vld [vmem:[%s1221 + $0x20] sm:$0xff]
  %v4413 = vld [vmem:[%s1221 + $0x28] sm:$0x7f]
  %v4414 = vld [vmem:[%s1221 + $0x30] sm:$0xff]
  %v4415 = vld [vmem:[%s1221 + $0x38] sm:$0x7f]
  %v4416 = vld [vmem:[%s1221 + $0x40] sm:$0xff]
  %v4417 = vld [vmem:[%s1221 + $0x48] sm:$0x7f]
  %v4418 = vld [vmem:[%s1221 + $0x50] sm:$0xff]
  %v4419 = vld [vmem:[%s1221 + $0x58] sm:$0x7f]
  %v4420 = vld [vmem:[%s1221 + $0x60] sm:$0xff]
  %v4421 = vld [vmem:[%s1221 + $0x68] sm:$0x7f]
  %v4422 = vld [vmem:[%s1221 + $0x70] sm:$0xff]
  %v4423 = vld [vmem:[%s1221 + $0x78] sm:$0x7f]
  %v4424 = vld [vmem:[%s1221 + $0x80] sm:$0xff]
  %v4425 = vld [vmem:[%s1221 + $0x88] sm:$0x7f]
  %v4426 = vld [vmem:[%s1221 + $0x90] sm:$0xff]
  %v4427 = vld [vmem:[%s1221 + $0x98] sm:$0x7f]
  %v4428 = vld [vmem:[%s1221 + $0xa0] sm:$0xff]
  %v4429 = vld [vmem:[%s1221 + $0xa8] sm:$0x7f]
  %v4430 = vld [vmem:[%s1221 + $0xb0] sm:$0xff]
  %v4431 = vld [vmem:[%s1221 + $0xb8] sm:$0x7f]
  %v4432 = vld [vmem:[%s1221 + $0xc0] sm:$0xff]
  %v4433 = vld [vmem:[%s1221 + $0xc8] sm:$0x7f]
  %v4434 = vld [vmem:[%s1221 + $0xd0] sm:$0xff]
  %v4435 = vld [vmem:[%s1221 + $0xd8] sm:$0x7f]
  %v4436 = vld [vmem:[%s1221 + $0xe0] sm:$0xff]
  %v4437 = vld [vmem:[%s1221 + $0xe8] sm:$0x7f]
  %v4468 = vrot.slane %v4408, 7
  %v4469 = vrot.slane %v4409, 7
  %v4470 = vsel %vm1930, %v4468, %v4469
  %v4471 = vrot.slane %v4410, 7
  %v4472 = vrot.slane %v4411, 7
  %v4473 = vsel %vm1930, %v4471, %v4472
  %v4474 = vrot.slane %v4412, 7
  %v4475 = vrot.slane %v4413, 7
  %v4476 = vsel %vm1930, %v4474, %v4475
  %v4477 = vrot.slane %v4414, 7
  %v4478 = vrot.slane %v4415, 7
  %v4479 = vsel %vm1930, %v4477, %v4478
  %v4480 = vrot.slane %v4416, 7
  %v4481 = vrot.slane %v4417, 7
  %v4482 = vsel %vm1930, %v4480, %v4481
  %v4483 = vrot.slane %v4418, 7
  %v4484 = vrot.slane %v4419, 7
  %v4485 = vsel %vm1930, %v4483, %v4484
  %v4486 = vrot.slane %v4420, 7
  %v4487 = vrot.slane %v4421, 7
  %v4488 = vsel %vm1930, %v4486, %v4487
  %v4489 = vrot.slane %v4422, 7
  %v4490 = vrot.slane %v4423, 7
  %v4491 = vsel %vm1930, %v4489, %v4490
  %v4492 = vrot.slane %v4424, 7
  %v4493 = vrot.slane %v4425, 7
  %v4494 = vsel %vm1930, %v4492, %v4493
  %v4495 = vrot.slane %v4426, 7
  %v4496 = vrot.slane %v4427, 7
  %v4497 = vsel %vm1930, %v4495, %v4496
  %v4498 = vrot.slane %v4428, 7
  %v4499 = vrot.slane %v4429, 7
  %v4500 = vsel %vm1930, %v4498, %v4499
  %v4501 = vrot.slane %v4430, 7
  %v4502 = vrot.slane %v4431, 7
  %v4503 = vsel %vm1930, %v4501, %v4502
  %v4504 = vrot.slane %v4432, 7
  %v4505 = vrot.slane %v4433, 7
  %v4506 = vsel %vm1930, %v4504, %v4505
  %v4507 = vrot.slane %v4434, 7
  %v4508 = vrot.slane %v4435, 7
  %v4509 = vsel %vm1930, %v4507, %v4508
  %v4510 = vrot.slane %v4436, 7
  %v4511 = vrot.slane %v4437, 7
  %v4512 = vsel %vm1930, %v4510, %v4511
  %4513 = vrot.lane.b32.xlu0 %v4468, 96
  %v4514 = vpop.permute.xlu0 %4513
  %4515 = vrot.lane.b32.xlu0 %v4470, 96
  %v4516 = vpop.permute.xlu0 %4515
  %4517 = vrot.lane.b32.xlu0 %v4471, 96
  %v4518 = vpop.permute.xlu0 %4517
  %4519 = vrot.lane.b32.xlu0 %v4473, 96
  %v4520 = vpop.permute.xlu0 %4519
  %4521 = vrot.lane.b32.xlu0 %v4474, 96
  %v4522 = vpop.permute.xlu0 %4521
  %4523 = vrot.lane.b32.xlu0 %v4476, 96
  %v4524 = vpop.permute.xlu0 %4523
  %4525 = vrot.lane.b32.xlu0 %v4477, 96
  %v4526 = vpop.permute.xlu0 %4525
  %4527 = vrot.lane.b32.xlu0 %v4479, 96
  %v4528 = vpop.permute.xlu0 %4527
  %4529 = vrot.lane.b32.xlu0 %v4480, 96
  %v4530 = vpop.permute.xlu0 %4529
  %4531 = vrot.lane.b32.xlu0 %v4482, 96
  %v4532 = vpop.permute.xlu0 %4531
  %4533 = vrot.lane.b32.xlu0 %v4483, 96
  %v4534 = vpop.permute.xlu0 %4533
  %4535 = vrot.lane.b32.xlu0 %v4485, 96
  %v4536 = vpop.permute.xlu0 %4535
  %4537 = vrot.lane.b32.xlu0 %v4486, 96
  %v4538 = vpop.permute.xlu0 %4537
  %4539 = vrot.lane.b32.xlu0 %v4488, 96
  %v4540 = vpop.permute.xlu0 %4539
  %4541 = vrot.lane.b32.xlu0 %v4489, 96
  %v4542 = vpop.permute.xlu0 %4541
  %4543 = vrot.lane.b32.xlu0 %v4491, 96
  %v4544 = vpop.permute.xlu0 %4543
  %4545 = vrot.lane.b32.xlu0 %v4492, 96
  %v4546 = vpop.permute.xlu0 %4545
  %4547 = vrot.lane.b32.xlu0 %v4494, 96
  %v4548 = vpop.permute.xlu0 %4547
  %4549 = vrot.lane.b32.xlu0 %v4495, 96
  %v4550 = vpop.permute.xlu0 %4549
  %4551 = vrot.lane.b32.xlu0 %v4497, 96
  %v4552 = vpop.permute.xlu0 %4551
  %4553 = vrot.lane.b32.xlu0 %v4498, 96
  %v4554 = vpop.permute.xlu0 %4553
  %4555 = vrot.lane.b32.xlu0 %v4500, 96
  %v4556 = vpop.permute.xlu0 %4555
  %4557 = vrot.lane.b32.xlu0 %v4501, 96
  %v4558 = vpop.permute.xlu0 %4557
  %4559 = vrot.lane.b32.xlu0 %v4503, 96
  %v4560 = vpop.permute.xlu0 %4559
  %4561 = vrot.lane.b32.xlu0 %v4504, 96
  %v4562 = vpop.permute.xlu0 %4561
  %4563 = vrot.lane.b32.xlu0 %v4506, 96
  %v4564 = vpop.permute.xlu0 %4563
  %4565 = vrot.lane.b32.xlu0 %v4507, 96
  %v4566 = vpop.permute.xlu0 %4565
  %4567 = vrot.lane.b32.xlu0 %v4509, 96
  %v4568 = vpop.permute.xlu0 %4567
  %4569 = vrot.lane.b32.xlu0 %v4510, 96
  %v4570 = vpop.permute.xlu0 %4569
  %4571 = vrot.lane.b32.xlu0 %v4512, 96
  %v4572 = vpop.permute.xlu0 %4571
  %4603 = vst.msk [vmem:[%s3377] sm:$0xfe] %vm4376, %v4514
  %4604 = vst.msk [vmem:[%s3377 + $0x10] sm:$0xff] %vm4378, %v4516
  %4605 = vst.msk [vmem:[%s3377 + $0x20] sm:$0xfe] %vm4376, %v4518
  %4606 = vst.msk [vmem:[%s3377 + $0x30] sm:$0xff] %vm4378, %v4520
  %4607 = vst.msk [vmem:[%s3377 + $0x40] sm:$0xfe] %vm4376, %v4522
  %4608 = vst.msk [vmem:[%s3377 + $0x50] sm:$0xff] %vm4378, %v4524
  %4609 = vst.msk [vmem:[%s3377 + $0x60] sm:$0xfe] %vm4376, %v4526
  %4610 = vst.msk [vmem:[%s3377 + $0x70] sm:$0xff] %vm4378, %v4528
  %4611 = vst.msk [vmem:[%s3377 + $0x80] sm:$0xfe] %vm4376, %v4530
  %4612 = vst.msk [vmem:[%s3377 + $0x90] sm:$0xff] %vm4378, %v4532
  %4613 = vst.msk [vmem:[%s3377 + $0xa0] sm:$0xfe] %vm4376, %v4534
  %4614 = vst.msk [vmem:[%s3377 + $0xb0] sm:$0xff] %vm4378, %v4536
  %4615 = vst.msk [vmem:[%s3377 + $0xc0] sm:$0xfe] %vm4376, %v4538
  %4616 = vst.msk [vmem:[%s3377 + $0xd0] sm:$0xff] %vm4378, %v4540
  %4617 = vst.msk [vmem:[%s3377 + $0xe0] sm:$0xfe] %vm4376, %v4542
  %4618 = vst.msk [vmem:[%s3377 + $0xf0] sm:$0xff] %vm4378, %v4544
  %4619 = vst.msk [vmem:[%s3377 + $0x100] sm:$0xfe] %vm4376, %v4546
  %4620 = vst.msk [vmem:[%s3377 + $0x110] sm:$0xff] %vm4378, %v4548
  %4621 = vst.msk [vmem:[%s3377 + $0x120] sm:$0xfe] %vm4376, %v4550
  %4622 = vst.msk [vmem:[%s3377 + $0x130] sm:$0xff] %vm4378, %v4552
  %4623 = vst.msk [vmem:[%s3377 + $0x140] sm:$0xfe] %vm4376, %v4554
  %4624 = vst.msk [vmem:[%s3377 + $0x150] sm:$0xff] %vm4378, %v4556
  %4625 = vst.msk [vmem:[%s3377 + $0x160] sm:$0xfe] %vm4376, %v4558
  %4626 = vst.msk [vmem:[%s3377 + $0x170] sm:$0xff] %vm4378, %v4560
  %4627 = vst.msk [vmem:[%s3377 + $0x180] sm:$0xfe] %vm4376, %v4562
  %4628 = vst.msk [vmem:[%s3377 + $0x190] sm:$0xff] %vm4378, %v4564
  %4629 = vst.msk [vmem:[%s3377 + $0x1a0] sm:$0xfe] %vm4376, %v4566
  %4630 = vst.msk [vmem:[%s3377 + $0x1b0] sm:$0xff] %vm4378, %v4568
  %4631 = vst.msk [vmem:[%s3377 + $0x1c0] sm:$0xfe] %vm4376, %v4570
  %4632 = vst.msk [vmem:[%s3377 + $0x1d0] sm:$0xff] %vm4378, %v4572
  %v4633 = vld [vmem:[%s629] sm:$0xff]
  %v4634 = vld [vmem:[%s629 + $0x8] sm:$0xff]
  %v4635 = vld [vmem:[%s629 + $0x10] sm:$0xff]
  %v4636 = vld [vmem:[%s629 + $0x18] sm:$0xff]
  %v4637 = vld [vmem:[%s629 + $0x20] sm:$0xff]
  %v4638 = vld [vmem:[%s629 + $0x28] sm:$0xff]
  %v4639 = vld [vmem:[%s629 + $0x30] sm:$0xff]
  %v4640 = vld [vmem:[%s629 + $0x38] sm:$0xff]
  %v4641 = vld [vmem:[%s629 + $0x40] sm:$0xff]
  %v4642 = vld [vmem:[%s629 + $0x48] sm:$0xff]
  %v4643 = vld [vmem:[%s629 + $0x50] sm:$0xff]
  %v4644 = vld [vmem:[%s629 + $0x58] sm:$0xff]
  %v4645 = vld [vmem:[%s629 + $0x60] sm:$0xff]
  %v4646 = vld [vmem:[%s629 + $0x68] sm:$0xff]
  %v4647 = vld [vmem:[%s629 + $0x70] sm:$0xff]
  %v4648 = vld [vmem:[%s629 + $0x78] sm:$0xff]
  %v4649 = vld [vmem:[%s629 + $0x80] sm:$0xff]
  %v4650 = vld [vmem:[%s629 + $0x88] sm:$0xff]
  %v4651 = vld [vmem:[%s629 + $0x90] sm:$0xff]
  %v4652 = vld [vmem:[%s629 + $0x98] sm:$0xff]
  %v4653 = vld [vmem:[%s629 + $0xa0] sm:$0xff]
  %v4654 = vld [vmem:[%s629 + $0xa8] sm:$0xff]
  %v4655 = vld [vmem:[%s629 + $0xb0] sm:$0xff]
  %v4656 = vld [vmem:[%s629 + $0xb8] sm:$0xff]
  %v4657 = vld [vmem:[%s629 + $0xc0] sm:$0xff]
  %v4658 = vld [vmem:[%s629 + $0xc8] sm:$0xff]
  %v4659 = vld [vmem:[%s629 + $0xd0] sm:$0xff]
  %v4660 = vld [vmem:[%s629 + $0xd8] sm:$0xff]
  %v4661 = vld [vmem:[%s629 + $0xe0] sm:$0xff]
  %v4662 = vld [vmem:[%s629 + $0xe8] sm:$0xff]
  %4693 = vrot.lane.b32.xlu0 %v4633, 112
  %v4694 = vpop.permute.xlu0 %4693
  %4695 = vrot.lane.b32.xlu0 %v4634, 112
  %v4696 = vpop.permute.xlu0 %4695
  %4697 = vrot.lane.b32.xlu0 %v4635, 112
  %v4698 = vpop.permute.xlu0 %4697
  %4699 = vrot.lane.b32.xlu0 %v4636, 112
  %v4700 = vpop.permute.xlu0 %4699
  %4701 = vrot.lane.b32.xlu0 %v4637, 112
  %v4702 = vpop.permute.xlu0 %4701
  %4703 = vrot.lane.b32.xlu0 %v4638, 112
  %v4704 = vpop.permute.xlu0 %4703
  %4705 = vrot.lane.b32.xlu0 %v4639, 112
  %v4706 = vpop.permute.xlu0 %4705
  %4707 = vrot.lane.b32.xlu0 %v4640, 112
  %v4708 = vpop.permute.xlu0 %4707
  %4709 = vrot.lane.b32.xlu0 %v4641, 112
  %v4710 = vpop.permute.xlu0 %4709
  %4711 = vrot.lane.b32.xlu0 %v4642, 112
  %v4712 = vpop.permute.xlu0 %4711
  %4713 = vrot.lane.b32.xlu0 %v4643, 112
  %v4714 = vpop.permute.xlu0 %4713
  %4715 = vrot.lane.b32.xlu0 %v4644, 112
  %v4716 = vpop.permute.xlu0 %4715
  %4717 = vrot.lane.b32.xlu0 %v4645, 112
  %v4718 = vpop.permute.xlu0 %4717
  %4719 = vrot.lane.b32.xlu0 %v4646, 112
  %v4720 = vpop.permute.xlu0 %4719
  %4721 = vrot.lane.b32.xlu0 %v4647, 112
  %v4722 = vpop.permute.xlu0 %4721
  %4723 = vrot.lane.b32.xlu0 %v4648, 112
  %v4724 = vpop.permute.xlu0 %4723
  %4725 = vrot.lane.b32.xlu0 %v4649, 112
  %v4726 = vpop.permute.xlu0 %4725
  %4727 = vrot.lane.b32.xlu0 %v4650, 112
  %v4728 = vpop.permute.xlu0 %4727
  %4729 = vrot.lane.b32.xlu0 %v4651, 112
  %v4730 = vpop.permute.xlu0 %4729
  %4731 = vrot.lane.b32.xlu0 %v4652, 112
  %v4732 = vpop.permute.xlu0 %4731
  %4733 = vrot.lane.b32.xlu0 %v4653, 112
  %v4734 = vpop.permute.xlu0 %4733
  %4735 = vrot.lane.b32.xlu0 %v4654, 112
  %v4736 = vpop.permute.xlu0 %4735
  %4737 = vrot.lane.b32.xlu0 %v4655, 112
  %v4738 = vpop.permute.xlu0 %4737
  %4739 = vrot.lane.b32.xlu0 %v4656, 112
  %v4740 = vpop.permute.xlu0 %4739
  %4741 = vrot.lane.b32.xlu0 %v4657, 112
  %v4742 = vpop.permute.xlu0 %4741
  %4743 = vrot.lane.b32.xlu0 %v4658, 112
  %v4744 = vpop.permute.xlu0 %4743
  %4745 = vrot.lane.b32.xlu0 %v4659, 112
  %v4746 = vpop.permute.xlu0 %4745
  %4747 = vrot.lane.b32.xlu0 %v4660, 112
  %v4748 = vpop.permute.xlu0 %4747
  %4749 = vrot.lane.b32.xlu0 %v4661, 112
  %v4750 = vpop.permute.xlu0 %4749
  %4751 = vrot.lane.b32.xlu0 %v4662, 112
  %v4752 = vpop.permute.xlu0 %4751
  %vm4783 = vcmask 1048448
  %4784 = vst.msk [vmem:[#allocation4] sm:$0xff] %vm4783, %v4694
  %4785 = vst.msk [vmem:[#allocation4 + $0x10] sm:$0xff] %vm4783, %v4696
  %4786 = vst.msk [vmem:[#allocation4 + $0x20] sm:$0xff] %vm4783, %v4698
  %4787 = vst.msk [vmem:[#allocation4 + $0x30] sm:$0xff] %vm4783, %v4700
  %4788 = vst.msk [vmem:[#allocation4 + $0x40] sm:$0xff] %vm4783, %v4702
  %4789 = vst.msk [vmem:[#allocation4 + $0x50] sm:$0xff] %vm4783, %v4704
  %4790 = vst.msk [vmem:[#allocation4 + $0x60] sm:$0xff] %vm4783, %v4706
  %4791 = vst.msk [vmem:[#allocation4 + $0x70] sm:$0xff] %vm4783, %v4708
  %4792 = vst.msk [vmem:[#allocation4 + $0x80] sm:$0xff] %vm4783, %v4710
  %4793 = vst.msk [vmem:[#allocation4 + $0x90] sm:$0xff] %vm4783, %v4712
  %4794 = vst.msk [vmem:[#allocation4 + $0xa0] sm:$0xff] %vm4783, %v4714
  %4795 = vst.msk [vmem:[#allocation4 + $0xb0] sm:$0xff] %vm4783, %v4716
  %4796 = vst.msk [vmem:[#allocation4 + $0xc0] sm:$0xff] %vm4783, %v4718
  %4797 = vst.msk [vmem:[#allocation4 + $0xd0] sm:$0xff] %vm4783, %v4720
  %4798 = vst.msk [vmem:[#allocation4 + $0xe0] sm:$0xff] %vm4783, %v4722
  %4799 = vst.msk [vmem:[#allocation4 + $0xf0] sm:$0xff] %vm4783, %v4724
  %4800 = vst.msk [vmem:[#allocation4 + $0x100] sm:$0xff] %vm4783, %v4726
  %4801 = vst.msk [vmem:[#allocation4 + $0x110] sm:$0xff] %vm4783, %v4728
  %4802 = vst.msk [vmem:[#allocation4 + $0x120] sm:$0xff] %vm4783, %v4730
  %4803 = vst.msk [vmem:[#allocation4 + $0x130] sm:$0xff] %vm4783, %v4732
  %4804 = vst.msk [vmem:[#allocation4 + $0x140] sm:$0xff] %vm4783, %v4734
  %4805 = vst.msk [vmem:[#allocation4 + $0x150] sm:$0xff] %vm4783, %v4736
  %4806 = vst.msk [vmem:[#allocation4 + $0x160] sm:$0xff] %vm4783, %v4738
  %4807 = vst.msk [vmem:[#allocation4 + $0x170] sm:$0xff] %vm4783, %v4740
  %4808 = vst.msk [vmem:[#allocation4 + $0x180] sm:$0xff] %vm4783, %v4742
  %4809 = vst.msk [vmem:[#allocation4 + $0x190] sm:$0xff] %vm4783, %v4744
  %4810 = vst.msk [vmem:[#allocation4 + $0x1a0] sm:$0xff] %vm4783, %v4746
  %4811 = vst.msk [vmem:[#allocation4 + $0x1b0] sm:$0xff] %vm4783, %v4748
  %4812 = vst.msk [vmem:[#allocation4 + $0x1c0] sm:$0xff] %vm4783, %v4750
  %4813 = vst.msk [vmem:[#allocation4 + $0x1d0] sm:$0xff] %vm4783, %v4752
  %v4814 = vld [vmem:[%s1221] sm:$0xff]
  %v4815 = vld [vmem:[%s1221 + $0x8] sm:$0xff]
  %v4816 = vld [vmem:[%s1221 + $0x10] sm:$0xff]
  %v4817 = vld [vmem:[%s1221 + $0x18] sm:$0xff]
  %v4818 = vld [vmem:[%s1221 + $0x20] sm:$0xff]
  %v4819 = vld [vmem:[%s1221 + $0x28] sm:$0xff]
  %v4820 = vld [vmem:[%s1221 + $0x30] sm:$0xff]
  %v4821 = vld [vmem:[%s1221 + $0x38] sm:$0xff]
  %v4822 = vld [vmem:[%s1221 + $0x40] sm:$0xff]
  %v4823 = vld [vmem:[%s1221 + $0x48] sm:$0xff]
  %v4824 = vld [vmem:[%s1221 + $0x50] sm:$0xff]
  %v4825 = vld [vmem:[%s1221 + $0x58] sm:$0xff]
  %v4826 = vld [vmem:[%s1221 + $0x60] sm:$0xff]
  %v4827 = vld [vmem:[%s1221 + $0x68] sm:$0xff]
  %v4828 = vld [vmem:[%s1221 + $0x70] sm:$0xff]
  %v4829 = vld [vmem:[%s1221 + $0x78] sm:$0xff]
  %v4830 = vld [vmem:[%s1221 + $0x80] sm:$0xff]
  %v4831 = vld [vmem:[%s1221 + $0x88] sm:$0xff]
  %v4832 = vld [vmem:[%s1221 + $0x90] sm:$0xff]
  %v4833 = vld [vmem:[%s1221 + $0x98] sm:$0xff]
  %v4834 = vld [vmem:[%s1221 + $0xa0] sm:$0xff]
  %v4835 = vld [vmem:[%s1221 + $0xa8] sm:$0xff]
  %v4836 = vld [vmem:[%s1221 + $0xb0] sm:$0xff]
  %v4837 = vld [vmem:[%s1221 + $0xb8] sm:$0xff]
  %v4838 = vld [vmem:[%s1221 + $0xc0] sm:$0xff]
  %v4839 = vld [vmem:[%s1221 + $0xc8] sm:$0xff]
  %v4840 = vld [vmem:[%s1221 + $0xd0] sm:$0xff]
  %v4841 = vld [vmem:[%s1221 + $0xd8] sm:$0xff]
  %v4842 = vld [vmem:[%s1221 + $0xe0] sm:$0xff]
  %v4843 = vld [vmem:[%s1221 + $0xe8] sm:$0xff]
  %4874 = vrot.lane.b32.xlu0 %v4814, 112
  %v4875 = vpop.permute.xlu0 %4874
  %4876 = vrot.lane.b32.xlu0 %v4815, 112
  %v4877 = vpop.permute.xlu0 %4876
  %4878 = vrot.lane.b32.xlu0 %v4816, 112
  %v4879 = vpop.permute.xlu0 %4878
  %4880 = vrot.lane.b32.xlu0 %v4817, 112
  %v4881 = vpop.permute.xlu0 %4880
  %4882 = vrot.lane.b32.xlu0 %v4818, 112
  %v4883 = vpop.permute.xlu0 %4882
  %4884 = vrot.lane.b32.xlu0 %v4819, 112
  %v4885 = vpop.permute.xlu0 %4884
  %4886 = vrot.lane.b32.xlu0 %v4820, 112
  %v4887 = vpop.permute.xlu0 %4886
  %4888 = vrot.lane.b32.xlu0 %v4821, 112
  %v4889 = vpop.permute.xlu0 %4888
  %4890 = vrot.lane.b32.xlu0 %v4822, 112
  %v4891 = vpop.permute.xlu0 %4890
  %4892 = vrot.lane.b32.xlu0 %v4823, 112
  %v4893 = vpop.permute.xlu0 %4892
  %4894 = vrot.lane.b32.xlu0 %v4824, 112
  %v4895 = vpop.permute.xlu0 %4894
  %4896 = vrot.lane.b32.xlu0 %v4825, 112
  %v4897 = vpop.permute.xlu0 %4896
  %4898 = vrot.lane.b32.xlu0 %v4826, 112
  %v4899 = vpop.permute.xlu0 %4898
  %4900 = vrot.lane.b32.xlu0 %v4827, 112
  %v4901 = vpop.permute.xlu0 %4900
  %4902 = vrot.lane.b32.xlu0 %v4828, 112
  %v4903 = vpop.permute.xlu0 %4902
  %4904 = vrot.lane.b32.xlu0 %v4829, 112
  %v4905 = vpop.permute.xlu0 %4904
  %4906 = vrot.lane.b32.xlu0 %v4830, 112
  %v4907 = vpop.permute.xlu0 %4906
  %4908 = vrot.lane.b32.xlu0 %v4831, 112
  %v4909 = vpop.permute.xlu0 %4908
  %4910 = vrot.lane.b32.xlu0 %v4832, 112
  %v4911 = vpop.permute.xlu0 %4910
  %4912 = vrot.lane.b32.xlu0 %v4833, 112
  %v4913 = vpop.permute.xlu0 %4912
  %4914 = vrot.lane.b32.xlu0 %v4834, 112
  %v4915 = vpop.permute.xlu0 %4914
  %4916 = vrot.lane.b32.xlu0 %v4835, 112
  %v4917 = vpop.permute.xlu0 %4916
  %4918 = vrot.lane.b32.xlu0 %v4836, 112
  %v4919 = vpop.permute.xlu0 %4918
  %4920 = vrot.lane.b32.xlu0 %v4837, 112
  %v4921 = vpop.permute.xlu0 %4920
  %4922 = vrot.lane.b32.xlu0 %v4838, 112
  %v4923 = vpop.permute.xlu0 %4922
  %4924 = vrot.lane.b32.xlu0 %v4839, 112
  %v4925 = vpop.permute.xlu0 %4924
  %4926 = vrot.lane.b32.xlu0 %v4840, 112
  %v4927 = vpop.permute.xlu0 %4926
  %4928 = vrot.lane.b32.xlu0 %v4841, 112
  %v4929 = vpop.permute.xlu0 %4928
  %4930 = vrot.lane.b32.xlu0 %v4842, 112
  %v4931 = vpop.permute.xlu0 %4930
  %4932 = vrot.lane.b32.xlu0 %v4843, 112
  %v4933 = vpop.permute.xlu0 %4932
  %4964 = vst.msk [vmem:[%s3377] sm:$0xff] %vm4783, %v4875
  %4965 = vst.msk [vmem:[%s3377 + $0x10] sm:$0xff] %vm4783, %v4877
  %4966 = vst.msk [vmem:[%s3377 + $0x20] sm:$0xff] %vm4783, %v4879
  %4967 = vst.msk [vmem:[%s3377 + $0x30] sm:$0xff] %vm4783, %v4881
  %4968 = vst.msk [vmem:[%s3377 + $0x40] sm:$0xff] %vm4783, %v4883
  %4969 = vst.msk [vmem:[%s3377 + $0x50] sm:$0xff] %vm4783, %v4885
  %4970 = vst.msk [vmem:[%s3377 + $0x60] sm:$0xff] %vm4783, %v4887
  %4971 = vst.msk [vmem:[%s3377 + $0x70] sm:$0xff] %vm4783, %v4889
  %4972 = vst.msk [vmem:[%s3377 + $0x80] sm:$0xff] %vm4783, %v4891
  %4973 = vst.msk [vmem:[%s3377 + $0x90] sm:$0xff] %vm4783, %v4893
  %4974 = vst.msk [vmem:[%s3377 + $0xa0] sm:$0xff] %vm4783, %v4895
  %4975 = vst.msk [vmem:[%s3377 + $0xb0] sm:$0xff] %vm4783, %v4897
  %4976 = vst.msk [vmem:[%s3377 + $0xc0] sm:$0xff] %vm4783, %v4899
  %4977 = vst.msk [vmem:[%s3377 + $0xd0] sm:$0xff] %vm4783, %v4901
  %4978 = vst.msk [vmem:[%s3377 + $0xe0] sm:$0xff] %vm4783, %v4903
  %4979 = vst.msk [vmem:[%s3377 + $0xf0] sm:$0xff] %vm4783, %v4905
  %4980 = vst.msk [vmem:[%s3377 + $0x100] sm:$0xff] %vm4783, %v4907
  %4981 = vst.msk [vmem:[%s3377 + $0x110] sm:$0xff] %vm4783, %v4909
  %4982 = vst.msk [vmem:[%s3377 + $0x120] sm:$0xff] %vm4783, %v4911
  %4983 = vst.msk [vmem:[%s3377 + $0x130] sm:$0xff] %vm4783, %v4913
  %4984 = vst.msk [vmem:[%s3377 + $0x140] sm:$0xff] %vm4783, %v4915
  %4985 = vst.msk [vmem:[%s3377 + $0x150] sm:$0xff] %vm4783, %v4917
  %4986 = vst.msk [vmem:[%s3377 + $0x160] sm:$0xff] %vm4783, %v4919
  %4987 = vst.msk [vmem:[%s3377 + $0x170] sm:$0xff] %vm4783, %v4921
  %4988 = vst.msk [vmem:[%s3377 + $0x180] sm:$0xff] %vm4783, %v4923
  %4989 = vst.msk [vmem:[%s3377 + $0x190] sm:$0xff] %vm4783, %v4925
  %4990 = vst.msk [vmem:[%s3377 + $0x1a0] sm:$0xff] %vm4783, %v4927
  %4991 = vst.msk [vmem:[%s3377 + $0x1b0] sm:$0xff] %vm4783, %v4929
  %4992 = vst.msk [vmem:[%s3377 + $0x1c0] sm:$0xff] %vm4783, %v4931
  %4993 = vst.msk [vmem:[%s3377 + $0x1d0] sm:$0xff] %vm4783, %v4933
  %v4994 = vld [vmem:[%s629 + $0x1] sm:$0xff]
  %v4995 = vld [vmem:[%s629 + $0x9] sm:$0x7f]
  %v4996 = vld [vmem:[%s629 + $0x11] sm:$0xff]
  %v4997 = vld [vmem:[%s629 + $0x19] sm:$0x7f]
  %v4998 = vld [vmem:[%s629 + $0x21] sm:$0xff]
  %v4999 = vld [vmem:[%s629 + $0x29] sm:$0x7f]
  %v5000 = vld [vmem:[%s629 + $0x31] sm:$0xff]
  %v5001 = vld [vmem:[%s629 + $0x39] sm:$0x7f]
  %v5002 = vld [vmem:[%s629 + $0x41] sm:$0xff]
  %v5003 = vld [vmem:[%s629 + $0x49] sm:$0x7f]
  %v5004 = vld [vmem:[%s629 + $0x51] sm:$0xff]
  %v5005 = vld [vmem:[%s629 + $0x59] sm:$0x7f]
  %v5006 = vld [vmem:[%s629 + $0x61] sm:$0xff]
  %v5007 = vld [vmem:[%s629 + $0x69] sm:$0x7f]
  %v5008 = vld [vmem:[%s629 + $0x71] sm:$0xff]
  %v5009 = vld [vmem:[%s629 + $0x79] sm:$0x7f]
  %v5010 = vld [vmem:[%s629 + $0x81] sm:$0xff]
  %v5011 = vld [vmem:[%s629 + $0x89] sm:$0x7f]
  %v5012 = vld [vmem:[%s629 + $0x91] sm:$0xff]
  %v5013 = vld [vmem:[%s629 + $0x99] sm:$0x7f]
  %v5014 = vld [vmem:[%s629 + $0xa1] sm:$0xff]
  %v5015 = vld [vmem:[%s629 + $0xa9] sm:$0x7f]
  %v5016 = vld [vmem:[%s629 + $0xb1] sm:$0xff]
  %v5017 = vld [vmem:[%s629 + $0xb9] sm:$0x7f]
  %v5018 = vld [vmem:[%s629 + $0xc1] sm:$0xff]
  %v5019 = vld [vmem:[%s629 + $0xc9] sm:$0x7f]
  %v5020 = vld [vmem:[%s629 + $0xd1] sm:$0xff]
  %v5021 = vld [vmem:[%s629 + $0xd9] sm:$0x7f]
  %v5022 = vld [vmem:[%s629 + $0xe1] sm:$0xff]
  %v5023 = vld [vmem:[%s629 + $0xe9] sm:$0x7f]
  %5024 = vst.msk [vmem:[#allocation4 + $0x8] sm:$0xff] %vm494, %v4994
  %vm5025 = vcmask 129024
  %5026 = vst.msk [vmem:[#allocation4 + $0x18] sm:$0x7f] %vm5025, %v4995
  %5027 = vst.msk [vmem:[#allocation4 + $0x28] sm:$0xff] %vm494, %v4996
  %5028 = vst.msk [vmem:[#allocation4 + $0x38] sm:$0x7f] %vm5025, %v4997
  %5029 = vst.msk [vmem:[#allocation4 + $0x48] sm:$0xff] %vm494, %v4998
  %5030 = vst.msk [vmem:[#allocation4 + $0x58] sm:$0x7f] %vm5025, %v4999
  %5031 = vst.msk [vmem:[#allocation4 + $0x68] sm:$0xff] %vm494, %v5000
  %5032 = vst.msk [vmem:[#allocation4 + $0x78] sm:$0x7f] %vm5025, %v5001
  %5033 = vst.msk [vmem:[#allocation4 + $0x88] sm:$0xff] %vm494, %v5002
  %5034 = vst.msk [vmem:[#allocation4 + $0x98] sm:$0x7f] %vm5025, %v5003
  %5035 = vst.msk [vmem:[#allocation4 + $0xa8] sm:$0xff] %vm494, %v5004
  %5036 = vst.msk [vmem:[#allocation4 + $0xb8] sm:$0x7f] %vm5025, %v5005
  %5037 = vst.msk [vmem:[#allocation4 + $0xc8] sm:$0xff] %vm494, %v5006
  %5038 = vst.msk [vmem:[#allocation4 + $0xd8] sm:$0x7f] %vm5025, %v5007
  %5039 = vst.msk [vmem:[#allocation4 + $0xe8] sm:$0xff] %vm494, %v5008
  %5040 = vst.msk [vmem:[#allocation4 + $0xf8] sm:$0x7f] %vm5025, %v5009
  %5041 = vst.msk [vmem:[#allocation4 + $0x108] sm:$0xff] %vm494, %v5010
  %5042 = vst.msk [vmem:[#allocation4 + $0x118] sm:$0x7f] %vm5025, %v5011
  %5043 = vst.msk [vmem:[#allocation4 + $0x128] sm:$0xff] %vm494, %v5012
  %5044 = vst.msk [vmem:[#allocation4 + $0x138] sm:$0x7f] %vm5025, %v5013
  %5045 = vst.msk [vmem:[#allocation4 + $0x148] sm:$0xff] %vm494, %v5014
  %5046 = vst.msk [vmem:[#allocation4 + $0x158] sm:$0x7f] %vm5025, %v5015
  %5047 = vst.msk [vmem:[#allocation4 + $0x168] sm:$0xff] %vm494, %v5016
  %5048 = vst.msk [vmem:[#allocation4 + $0x178] sm:$0x7f] %vm5025, %v5017
  %5049 = vst.msk [vmem:[#allocation4 + $0x188] sm:$0xff] %vm494, %v5018
  %5050 = vst.msk [vmem:[#allocation4 + $0x198] sm:$0x7f] %vm5025, %v5019
  %5051 = vst.msk [vmem:[#allocation4 + $0x1a8] sm:$0xff] %vm494, %v5020
  %5052 = vst.msk [vmem:[#allocation4 + $0x1b8] sm:$0x7f] %vm5025, %v5021
  %5053 = vst.msk [vmem:[#allocation4 + $0x1c8] sm:$0xff] %vm494, %v5022
  %5054 = vst.msk [vmem:[#allocation4 + $0x1d8] sm:$0x7f] %vm5025, %v5023
  %v5055 = vld [vmem:[%s1221 + $0x1] sm:$0xff]
  %v5056 = vld [vmem:[%s1221 + $0x9] sm:$0x7f]
  %v5057 = vld [vmem:[%s1221 + $0x11] sm:$0xff]
  %v5058 = vld [vmem:[%s1221 + $0x19] sm:$0x7f]
  %v5059 = vld [vmem:[%s1221 + $0x21] sm:$0xff]
  %v5060 = vld [vmem:[%s1221 + $0x29] sm:$0x7f]
  %v5061 = vld [vmem:[%s1221 + $0x31] sm:$0xff]
  %v5062 = vld [vmem:[%s1221 + $0x39] sm:$0x7f]
  %v5063 = vld [vmem:[%s1221 + $0x41] sm:$0xff]
  %v5064 = vld [vmem:[%s1221 + $0x49] sm:$0x7f]
  %v5065 = vld [vmem:[%s1221 + $0x51] sm:$0xff]
  %v5066 = vld [vmem:[%s1221 + $0x59] sm:$0x7f]
  %v5067 = vld [vmem:[%s1221 + $0x61] sm:$0xff]
  %v5068 = vld [vmem:[%s1221 + $0x69] sm:$0x7f]
  %v5069 = vld [vmem:[%s1221 + $0x71] sm:$0xff]
  %v5070 = vld [vmem:[%s1221 + $0x79] sm:$0x7f]
  %v5071 = vld [vmem:[%s1221 + $0x81] sm:$0xff]
  %v5072 = vld [vmem:[%s1221 + $0x89] sm:$0x7f]
  %v5073 = vld [vmem:[%s1221 + $0x91] sm:$0xff]
  %v5074 = vld [vmem:[%s1221 + $0x99] sm:$0x7f]
  %v5075 = vld [vmem:[%s1221 + $0xa1] sm:$0xff]
  %v5076 = vld [vmem:[%s1221 + $0xa9] sm:$0x7f]
  %v5077 = vld [vmem:[%s1221 + $0xb1] sm:$0xff]
  %v5078 = vld [vmem:[%s1221 + $0xb9] sm:$0x7f]
  %v5079 = vld [vmem:[%s1221 + $0xc1] sm:$0xff]
  %v5080 = vld [vmem:[%s1221 + $0xc9] sm:$0x7f]
  %v5081 = vld [vmem:[%s1221 + $0xd1] sm:$0xff]
  %v5082 = vld [vmem:[%s1221 + $0xd9] sm:$0x7f]
  %v5083 = vld [vmem:[%s1221 + $0xe1] sm:$0xff]
  %v5084 = vld [vmem:[%s1221 + $0xe9] sm:$0x7f]
  %5085 = vst.msk [vmem:[%s3377 + $0x8] sm:$0xff] %vm494, %v5055
  %5086 = vst.msk [vmem:[%s3377 + $0x18] sm:$0x7f] %vm5025, %v5056
  %5087 = vst.msk [vmem:[%s3377 + $0x28] sm:$0xff] %vm494, %v5057
  %5088 = vst.msk [vmem:[%s3377 + $0x38] sm:$0x7f] %vm5025, %v5058
  %5089 = vst.msk [vmem:[%s3377 + $0x48] sm:$0xff] %vm494, %v5059
  %5090 = vst.msk [vmem:[%s3377 + $0x58] sm:$0x7f] %vm5025, %v5060
  %5091 = vst.msk [vmem:[%s3377 + $0x68] sm:$0xff] %vm494, %v5061
  %5092 = vst.msk [vmem:[%s3377 + $0x78] sm:$0x7f] %vm5025, %v5062
  %5093 = vst.msk [vmem:[%s3377 + $0x88] sm:$0xff] %vm494, %v5063
  %5094 = vst.msk [vmem:[%s3377 + $0x98] sm:$0x7f] %vm5025, %v5064
  %5095 = vst.msk [vmem:[%s3377 + $0xa8] sm:$0xff] %vm494, %v5065
  %5096 = vst.msk [vmem:[%s3377 + $0xb8] sm:$0x7f] %vm5025, %v5066
  %5097 = vst.msk [vmem:[%s3377 + $0xc8] sm:$0xff] %vm494, %v5067
  %5098 = vst.msk [vmem:[%s3377 + $0xd8] sm:$0x7f] %vm5025, %v5068
  %5099 = vst.msk [vmem:[%s3377 + $0xe8] sm:$0xff] %vm494, %v5069
  %5100 = vst.msk [vmem:[%s3377 + $0xf8] sm:$0x7f] %vm5025, %v5070
  %5101 = vst.msk [vmem:[%s3377 + $0x108] sm:$0xff] %vm494, %v5071
  %5102 = vst.msk [vmem:[%s3377 + $0x118] sm:$0x7f] %vm5025, %v5072
  %5103 = vst.msk [vmem:[%s3377 + $0x128] sm:$0xff] %vm494, %v5073
  %5104 = vst.msk [vmem:[%s3377 + $0x138] sm:$0x7f] %vm5025, %v5074
  %5105 = vst.msk [vmem:[%s3377 + $0x148] sm:$0xff] %vm494, %v5075
  %5106 = vst.msk [vmem:[%s3377 + $0x158] sm:$0x7f] %vm5025, %v5076
  %5107 = vst.msk [vmem:[%s3377 + $0x168] sm:$0xff] %vm494, %v5077
  %5108 = vst.msk [vmem:[%s3377 + $0x178] sm:$0x7f] %vm5025, %v5078
  %5109 = vst.msk [vmem:[%s3377 + $0x188] sm:$0xff] %vm494, %v5079
  %5110 = vst.msk [vmem:[%s3377 + $0x198] sm:$0x7f] %vm5025, %v5080
  %5111 = vst.msk [vmem:[%s3377 + $0x1a8] sm:$0xff] %vm494, %v5081
  %5112 = vst.msk [vmem:[%s3377 + $0x1b8] sm:$0x7f] %vm5025, %v5082
  %5113 = vst.msk [vmem:[%s3377 + $0x1c8] sm:$0xff] %vm494, %v5083
  %5114 = vst.msk [vmem:[%s3377 + $0x1d8] sm:$0x7f] %vm5025, %v5084
  %v5115 = vld [vmem:[%s4] sm:$0x7]
  %v5116 = vld [vmem:[%s4 + $0x4] sm:$0x7]
  %v5117 = vld [vmem:[%s4 + $0x8] sm:$0x7]
  %v5118 = vld [vmem:[%s4 + $0xc] sm:$0x7]
  %v5119 = vld [vmem:[%s4 + $0x10] sm:$0x7]
  %v5120 = vld [vmem:[%s4 + $0x14] sm:$0x7]
  %v5121 = vld [vmem:[%s4 + $0x18] sm:$0x7]
  %v5122 = vld [vmem:[%s4 + $0x1c] sm:$0x7]
  %v5123 = vld [vmem:[%s4 + $0x20] sm:$0x7]
  %v5124 = vld [vmem:[%s4 + $0x24] sm:$0x7]
  %v5125 = vld [vmem:[%s4 + $0x28] sm:$0x7]
  %v5126 = vld [vmem:[%s4 + $0x2c] sm:$0x7]
  %v5127 = vld [vmem:[%s4 + $0x30] sm:$0x7]
  %v5128 = vld [vmem:[%s4 + $0x34] sm:$0x7]
  %v5129 = vld [vmem:[%s4 + $0x38] sm:$0x7]
  %v5130 = vld [vmem:[%s4 + $0x3c] sm:$0x7]
  %v5131 = vld [vmem:[%s4 + $0x40] sm:$0x7]
  %v5132 = vld [vmem:[%s4 + $0x44] sm:$0x7]
  %v5133 = vld [vmem:[%s4 + $0x48] sm:$0x7]
  %v5134 = vld [vmem:[%s4 + $0x4c] sm:$0x7]
  %v5135 = vld [vmem:[%s4 + $0x50] sm:$0x7]
  %v5136 = vld [vmem:[%s4 + $0x54] sm:$0x7]
  %v5137 = vld [vmem:[%s4 + $0x58] sm:$0x7]
  %v5138 = vld [vmem:[%s4 + $0x5c] sm:$0x7]
  %v5139 = vld [vmem:[%s4 + $0x60] sm:$0x7]
  %v5140 = vld [vmem:[%s4 + $0x64] sm:$0x7]
  %v5141 = vld [vmem:[%s4 + $0x68] sm:$0x7]
  %v5142 = vld [vmem:[%s4 + $0x6c] sm:$0x7]
  %v5143 = vld [vmem:[%s4 + $0x70] sm:$0x7]
  %v5144 = vld [vmem:[%s4 + $0x74] sm:$0x7]
  %v5145 = vld [vmem:[%s4 + $0x78] sm:$0x7]
  %v5146 = vld [vmem:[%s4 + $0x7c] sm:$0x7]
  %v5147 = vld [vmem:[%s3] sm:$0x77]
  %v5148 = vld [vmem:[%s3 + $0x8] sm:$0x77]
  %v5149 = vld [vmem:[%s3 + $0x10] sm:$0x77]
  %v5150 = vld [vmem:[%s3 + $0x18] sm:$0x77]
  %v5151 = vld [vmem:[%s3 + $0x20] sm:$0x77]
  %v5152 = vld [vmem:[%s3 + $0x28] sm:$0x77]
  %v5153 = vld [vmem:[%s3 + $0x30] sm:$0x77]
  %v5154 = vld [vmem:[%s3 + $0x38] sm:$0x77]
  %v5155 = vld [vmem:[%s3 + $0x40] sm:$0x77]
  %v5156 = vld [vmem:[%s3 + $0x48] sm:$0x77]
  %v5157 = vld [vmem:[%s3 + $0x50] sm:$0x77]
  %v5158 = vld [vmem:[%s3 + $0x58] sm:$0x77]
  %v5159 = vld [vmem:[%s3 + $0x60] sm:$0x77]
  %v5160 = vld [vmem:[%s3 + $0x68] sm:$0x77]
  %v5161 = vld [vmem:[%s3 + $0x70] sm:$0x77]
  %v5162 = vld [vmem:[%s3 + $0x78] sm:$0x77]
  %v5163 = vld [vmem:[%s3 + $0x80] sm:$0x77]
  %v5164 = vld [vmem:[%s3 + $0x88] sm:$0x77]
  %v5165 = vld [vmem:[%s3 + $0x90] sm:$0x77]
  %v5166 = vld [vmem:[%s3 + $0x98] sm:$0x77]
  %v5167 = vld [vmem:[%s3 + $0xa0] sm:$0x77]
  %v5168 = vld [vmem:[%s3 + $0xa8] sm:$0x77]
  %v5169 = vld [vmem:[%s3 + $0xb0] sm:$0x77]
  %v5170 = vld [vmem:[%s3 + $0xb8] sm:$0x77]
  %v5171 = vld [vmem:[%s3 + $0xc0] sm:$0x77]
  %v5172 = vld [vmem:[%s3 + $0xc8] sm:$0x77]
  %v5173 = vld [vmem:[%s3 + $0xd0] sm:$0x77]
  %v5174 = vld [vmem:[%s3 + $0xd8] sm:$0x77]
  %v5175 = vld [vmem:[%s3 + $0xe0] sm:$0x77]
  %v5176 = vld [vmem:[%s3 + $0xe8] sm:$0x77]
  %v5177 = vld [vmem:[%s3 + $0xf0] sm:$0x77]
  %v5178 = vld [vmem:[%s3 + $0xf8] sm:$0x77]
  %v5179 = vld [vmem:[#allocation4] sm:$0xff]
  %v5180 = vld [vmem:[#allocation4 + $0x8] sm:$0xff]
  %v5181 = vld [vmem:[#allocation4 + $0x10] sm:$0xff]
  %v5182 = vld [vmem:[#allocation4 + $0x18] sm:$0xff]
  %v5183 = vld [vmem:[#allocation4 + $0x20] sm:$0xff]
  %v5184 = vld [vmem:[#allocation4 + $0x28] sm:$0xff]
  %v5185 = vld [vmem:[#allocation4 + $0x30] sm:$0xff]
  %v5186 = vld [vmem:[#allocation4 + $0x38] sm:$0xff]
  %v5187 = vld [vmem:[#allocation4 + $0x40] sm:$0xff]
  %v5188 = vld [vmem:[#allocation4 + $0x48] sm:$0xff]
  %v5189 = vld [vmem:[#allocation4 + $0x50] sm:$0xff]
  %v5190 = vld [vmem:[#allocation4 + $0x58] sm:$0xff]
  %v5191 = vld [vmem:[#allocation4 + $0x60] sm:$0xff]
  %v5192 = vld [vmem:[#allocation4 + $0x68] sm:$0xff]
  %v5193 = vld [vmem:[#allocation4 + $0x70] sm:$0xff]
  %v5194 = vld [vmem:[#allocation4 + $0x78] sm:$0xff]
  %v5195 = vld [vmem:[#allocation4 + $0x80] sm:$0xff]
  %v5196 = vld [vmem:[#allocation4 + $0x88] sm:$0xff]
  %v5197 = vld [vmem:[#allocation4 + $0x90] sm:$0xff]
  %v5198 = vld [vmem:[#allocation4 + $0x98] sm:$0xff]
  %v5199 = vld [vmem:[#allocation4 + $0xa0] sm:$0xff]
  %v5200 = vld [vmem:[#allocation4 + $0xa8] sm:$0xff]
  %v5201 = vld [vmem:[#allocation4 + $0xb0] sm:$0xff]
  %v5202 = vld [vmem:[#allocation4 + $0xb8] sm:$0xff]
  %v5203 = vld [vmem:[#allocation4 + $0xc0] sm:$0xff]
  %v5204 = vld [vmem:[#allocation4 + $0xc8] sm:$0xff]
  %v5205 = vld [vmem:[#allocation4 + $0xd0] sm:$0xff]
  %v5206 = vld [vmem:[#allocation4 + $0xd8] sm:$0xff]
  %v5207 = vld [vmem:[#allocation4 + $0xe0] sm:$0xff]
  %v5208 = vld [vmem:[#allocation4 + $0xe8] sm:$0xff]
  %v5209 = vld [vmem:[#allocation4 + $0xf0] sm:$0xff]
  %v5210 = vld [vmem:[#allocation4 + $0xf8] sm:$0xff]
  %v5211 = vld [vmem:[#allocation4 + $0x100] sm:$0xff]
  %v5212 = vld [vmem:[#allocation4 + $0x108] sm:$0xff]
  %v5213 = vld [vmem:[#allocation4 + $0x110] sm:$0xff]
  %v5214 = vld [vmem:[#allocation4 + $0x118] sm:$0xff]
  %v5215 = vld [vmem:[#allocation4 + $0x120] sm:$0xff]
  %v5216 = vld [vmem:[#allocation4 + $0x128] sm:$0xff]
  %v5217 = vld [vmem:[#allocation4 + $0x130] sm:$0xff]
  %v5218 = vld [vmem:[#allocation4 + $0x138] sm:$0xff]
  %v5219 = vld [vmem:[#allocation4 + $0x140] sm:$0xff]
  %v5220 = vld [vmem:[#allocation4 + $0x148] sm:$0xff]
  %v5221 = vld [vmem:[#allocation4 + $0x150] sm:$0xff]
  %v5222 = vld [vmem:[#allocation4 + $0x158] sm:$0xff]
  %v5223 = vld [vmem:[#allocation4 + $0x160] sm:$0xff]
  %v5224 = vld [vmem:[#allocation4 + $0x168] sm:$0xff]
  %v5225 = vld [vmem:[#allocation4 + $0x170] sm:$0xff]
  %v5226 = vld [vmem:[#allocation4 + $0x178] sm:$0xff]
  %v5227 = vld [vmem:[#allocation4 + $0x180] sm:$0xff]
  %v5228 = vld [vmem:[#allocation4 + $0x188] sm:$0xff]
  %v5229 = vld [vmem:[#allocation4 + $0x190] sm:$0xff]
  %v5230 = vld [vmem:[#allocation4 + $0x198] sm:$0xff]
  %v5231 = vld [vmem:[#allocation4 + $0x1a0] sm:$0xff]
  %v5232 = vld [vmem:[#allocation4 + $0x1a8] sm:$0xff]
  %v5233 = vld [vmem:[#allocation4 + $0x1b0] sm:$0xff]
  %v5234 = vld [vmem:[#allocation4 + $0x1b8] sm:$0xff]
  %v5235 = vld [vmem:[#allocation4 + $0x1c0] sm:$0xff]
  %v5236 = vld [vmem:[#allocation4 + $0x1c8] sm:$0xff]
  %v5237 = vld [vmem:[#allocation4 + $0x1d0] sm:$0xff]
  %v5238 = vld [vmem:[#allocation4 + $0x1d8] sm:$0xff]
  %v5239 = vld [vmem:[#allocation4 + $0x1e0] sm:$0xff]
  %v5240 = vld [vmem:[#allocation4 + $0x1e8] sm:$0xff]
  %v5241 = vld [vmem:[#allocation4 + $0x1f0] sm:$0xff]
  %v5242 = vld [vmem:[#allocation4 + $0x1f8] sm:$0xff]
  %v5243 = vld [vmem:[#allocation4 + $0x200] sm:$0xff]
  %v5244 = vld [vmem:[#allocation4 + $0x208] sm:$0xff]
  %v5245 = vld [vmem:[#allocation4 + $0x210] sm:$0xff]
  %v5246 = vld [vmem:[#allocation4 + $0x218] sm:$0xff]
  %v5247 = vld [vmem:[#allocation4 + $0x220] sm:$0xff]
  %v5248 = vld [vmem:[#allocation4 + $0x228] sm:$0xff]
  %v5249 = vld [vmem:[#allocation4 + $0x230] sm:$0xff]
  %v5250 = vld [vmem:[#allocation4 + $0x238] sm:$0xff]
  %v5251 = vld [vmem:[#allocation4 + $0x240] sm:$0xff]
  %v5252 = vld [vmem:[#allocation4 + $0x248] sm:$0xff]
  %v5253 = vld [vmem:[#allocation4 + $0x250] sm:$0xff]
  %v5254 = vld [vmem:[#allocation4 + $0x258] sm:$0xff]
  %v5255 = vld [vmem:[#allocation4 + $0x260] sm:$0xff]
  %v5256 = vld [vmem:[#allocation4 + $0x268] sm:$0xff]
  %v5257 = vld [vmem:[#allocation4 + $0x270] sm:$0xff]
  %v5258 = vld [vmem:[#allocation4 + $0x278] sm:$0xff]
  %v5259 = vld [vmem:[#allocation4 + $0x280] sm:$0xff]
  %v5260 = vld [vmem:[#allocation4 + $0x288] sm:$0xff]
  %v5261 = vld [vmem:[#allocation4 + $0x290] sm:$0xff]
  %v5262 = vld [vmem:[#allocation4 + $0x298] sm:$0xff]
  %v5263 = vld [vmem:[#allocation4 + $0x2a0] sm:$0xff]
  %v5264 = vld [vmem:[#allocation4 + $0x2a8] sm:$0xff]
  %v5265 = vld [vmem:[#allocation4 + $0x2b0] sm:$0xff]
  %v5266 = vld [vmem:[#allocation4 + $0x2b8] sm:$0xff]
  %v5267 = vld [vmem:[#allocation4 + $0x2c0] sm:$0xff]
  %v5268 = vld [vmem:[#allocation4 + $0x2c8] sm:$0xff]
  %v5269 = vld [vmem:[#allocation4 + $0x2d0] sm:$0xff]
  %v5270 = vld [vmem:[#allocation4 + $0x2d8] sm:$0xff]
  %v5271 = vld [vmem:[#allocation4 + $0x2e0] sm:$0xff]
  %v5272 = vld [vmem:[#allocation4 + $0x2e8] sm:$0xff]
  %v5273 = vld [vmem:[#allocation4 + $0x2f0] sm:$0xff]
  %v5274 = vld [vmem:[#allocation4 + $0x2f8] sm:$0xff]
  %v5275 = vld [vmem:[#allocation4 + $0x300] sm:$0xff]
  %v5276 = vld [vmem:[#allocation4 + $0x308] sm:$0xff]
  %v5277 = vld [vmem:[#allocation4 + $0x310] sm:$0xff]
  %v5278 = vld [vmem:[#allocation4 + $0x318] sm:$0xff]
  %v5279 = vld [vmem:[#allocation4 + $0x320] sm:$0xff]
  %v5280 = vld [vmem:[#allocation4 + $0x328] sm:$0xff]
  %v5281 = vld [vmem:[#allocation4 + $0x330] sm:$0xff]
  %v5282 = vld [vmem:[#allocation4 + $0x338] sm:$0xff]
  %v5283 = vld [vmem:[#allocation4 + $0x340] sm:$0xff]
  %v5284 = vld [vmem:[#allocation4 + $0x348] sm:$0xff]
  %v5285 = vld [vmem:[#allocation4 + $0x350] sm:$0xff]
  %v5286 = vld [vmem:[#allocation4 + $0x358] sm:$0xff]
  %v5287 = vld [vmem:[#allocation4 + $0x360] sm:$0xff]
  %v5288 = vld [vmem:[#allocation4 + $0x368] sm:$0xff]
  %v5289 = vld [vmem:[#allocation4 + $0x370] sm:$0xff]
  %v5290 = vld [vmem:[#allocation4 + $0x378] sm:$0xff]
  %v5291 = vld [vmem:[#allocation4 + $0x380] sm:$0xff]
  %v5292 = vld [vmem:[#allocation4 + $0x388] sm:$0xff]
  %v5293 = vld [vmem:[#allocation4 + $0x390] sm:$0xff]
  %v5294 = vld [vmem:[#allocation4 + $0x398] sm:$0xff]
  %v5295 = vld [vmem:[#allocation4 + $0x3a0] sm:$0xff]
  %v5296 = vld [vmem:[#allocation4 + $0x3a8] sm:$0xff]
  %v5297 = vld [vmem:[#allocation4 + $0x3b0] sm:$0xff]
  %v5298 = vld [vmem:[#allocation4 + $0x3b8] sm:$0xff]
  %v5299 = vld [vmem:[#allocation4 + $0x3c0] sm:$0xff]
  %v5300 = vld [vmem:[#allocation4 + $0x3c8] sm:$0xff]
  %v5301 = vld [vmem:[#allocation4 + $0x3d0] sm:$0xff]
  %v5302 = vld [vmem:[#allocation4 + $0x3d8] sm:$0xff]
  %v5303 = vld [vmem:[#allocation4 + $0x3e0] sm:$0xff]
  %v5304 = vld [vmem:[#allocation4 + $0x3e8] sm:$0xff]
  %v5305 = vld [vmem:[#allocation4 + $0x3f0] sm:$0xff]
  %v5306 = vld [vmem:[#allocation4 + $0x3f8] sm:$0xff]
  %5308 = vst [vmem:[#allocation1] ss:$2 sm:$0xff] %v5147
  %v5309 = vld.sshfl [vmem:[#allocation1] sm:$0xff pattern:$0x75316420]
  %v5310 = vld.sshfl [vmem:[#allocation1 + $0x8] sm:$0xff pattern:$0x75316420]
  %v5312 = vsel %vm494, %v5310, 0
  %v5315 = vsel %vm494, %v5180, 0
  %v5318 = vsel %vm494, %v5182, 0
  %5320 = vmatpush.xpose.msra.mxu0 0.0
  %5321 = vmatpush.xpose.msra.mxu0 0.0
  %5322 = vmatpush.xpose.msra.mxu0 0.0
  %5323 = vmatpush.xpose.msra.mxu0 0.0
  %5324 = vmatpush.xpose.msra.mxu0 0.0
  %5325 = vmatpush.xpose.msra.mxu0 0.0
  %5326 = vmatpush.xpose.msra.mxu0 0.0
  %5327 = vmatpush.xpose.msra.mxu0 0.0
  %5328 = vmatpush.xpose.msra.mxu0 0.0
  %5329 = vmatpush.xpose.msra.mxu0 0.0
  %5330 = vmatpush.xpose.msra.mxu0 0.0
  %5331 = vmatpush.xpose.msra.mxu0 0.0
  %5332 = vmatpush.xpose.msra.mxu0 0.0
  %5333 = vmatpush.xpose.msra.mxu0 0.0
  %5334 = vmatpush.xpose.msra.mxu0 %v5181
  %5335 = vmatpush.xpose.msra.mxu0 %v5179
  %5336 = vmatmul.f32.gmra.mxu0 %v5309
  %v5337 = vpop.f32.mrf.mxu0
  %v5338 = vadd.f32 0.0, %v5337
  %5339 = vdwg.mxu0
  %5340 = vmatpush.xpose.msra.mxu0 0.0
  %5341 = vmatpush.xpose.msra.mxu0 0.0
  %5342 = vmatpush.xpose.msra.mxu0 0.0
  %5343 = vmatpush.xpose.msra.mxu0 0.0
  %5344 = vmatpush.xpose.msra.mxu0 0.0
  %5345 = vmatpush.xpose.msra.mxu0 0.0
  %5346 = vmatpush.xpose.msra.mxu0 0.0
  %5347 = vmatpush.xpose.msra.mxu0 0.0
  %5348 = vmatpush.xpose.msra.mxu0 0.0
  %5349 = vmatpush.xpose.msra.mxu0 0.0
  %5350 = vmatpush.xpose.msra.mxu0 0.0
  %5351 = vmatpush.xpose.msra.mxu0 0.0
  %5352 = vmatpush.xpose.msra.mxu0 0.0
  %5353 = vmatpush.xpose.msra.mxu0 0.0
  %5354 = vmatpush.xpose.msra.mxu0 %v5318
  %5355 = vmatpush.xpose.msra.mxu0 %v5315
  %5356 = vmatmul.f32.gmra.mxu0 %v5312
  %v5357 = vpop.f32.mrf.mxu0
  %v5358 = vadd.f32 %v5338, %v5357
  %5359 = vdwg.mxu0
  %5361 = vst [vmem:[#allocation1] ss:$2 sm:$0xff] %v5148
  %v5362 = vld.sshfl [vmem:[#allocation1] sm:$0xff pattern:$0x75316420]
  %v5363 = vld.sshfl [vmem:[#allocation1 + $0x8] sm:$0xff pattern:$0x75316420]
  %v5365 = vsel %vm494, %v5363, 0
  %v5368 = vsel %vm494, %v5184, 0
  %v5371 = vsel %vm494, %v5186, 0
  %5373 = vmatpush.xpose.msra.mxu0 0.0
  %5374 = vmatpush.xpose.msra.mxu0 0.0
  %5375 = vmatpush.xpose.msra.mxu0 0.0
  %5376 = vmatpush.xpose.msra.mxu0 0.0
  %5377 = vmatpush.xpose.msra.mxu0 0.0
  %5378 = vmatpush.xpose.msra.mxu0 0.0
  %5379 = vmatpush.xpose.msra.mxu0 0.0
  %5380 = vmatpush.xpose.msra.mxu0 0.0
  %5381 = vmatpush.xpose.msra.mxu0 0.0
  %5382 = vmatpush.xpose.msra.mxu0 0.0
  %5383 = vmatpush.xpose.msra.mxu0 0.0
  %5384 = vmatpush.xpose.msra.mxu0 0.0
  %5385 = vmatpush.xpose.msra.mxu0 0.0
  %5386 = vmatpush.xpose.msra.mxu0 0.0
  %5387 = vmatpush.xpose.msra.mxu0 %v5185
  %5388 = vmatpush.xpose.msra.mxu0 %v5183
  %5389 = vmatmul.f32.gmra.mxu0 %v5362
  %v5390 = vpop.f32.mrf.mxu0
  %v5391 = vadd.f32 0.0, %v5390
  %5392 = vdwg.mxu0
  %5393 = vmatpush.xpose.msra.mxu0 0.0
  %5394 = vmatpush.xpose.msra.mxu0 0.0
  %5395 = vmatpush.xpose.msra.mxu0 0.0
  %5396 = vmatpush.xpose.msra.mxu0 0.0
  %5397 = vmatpush.xpose.msra.mxu0 0.0
  %5398 = vmatpush.xpose.msra.mxu0 0.0
  %5399 = vmatpush.xpose.msra.mxu0 0.0
  %5400 = vmatpush.xpose.msra.mxu0 0.0
  %5401 = vmatpush.xpose.msra.mxu0 0.0
  %5402 = vmatpush.xpose.msra.mxu0 0.0
  %5403 = vmatpush.xpose.msra.mxu0 0.0
  %5404 = vmatpush.xpose.msra.mxu0 0.0
  %5405 = vmatpush.xpose.msra.mxu0 0.0
  %5406 = vmatpush.xpose.msra.mxu0 0.0
  %5407 = vmatpush.xpose.msra.mxu0 %v5371
  %5408 = vmatpush.xpose.msra.mxu0 %v5368
  %5409 = vmatmul.f32.gmra.mxu0 %v5365
  %v5410 = vpop.f32.mrf.mxu0
  %v5411 = vadd.f32 %v5391, %v5410
  %5412 = vdwg.mxu0
  %5414 = vst [vmem:[#allocation1] ss:$2 sm:$0xff] %v5149
  %v5415 = vld.sshfl [vmem:[#allocation1] sm:$0xff pattern:$0x75316420]
  %v5416 = vld.sshfl [vmem:[#allocation1 + $0x8] sm:$0xff pattern:$0x75316420]
  %v5418 = vsel %vm494, %v5416, 0
  %v5421 = vsel %vm494, %v5188, 0
  %v5424 = vsel %vm494, %v5190, 0
  %5426 = vmatpush.xpose.msra.mxu0 0.0
  %5427 = vmatpush.xpose.msra.mxu0 0.0
  %5428 = vmatpush.xpose.msra.mxu0 0.0
  %5429 = vmatpush.xpose.msra.mxu0 0.0
  %5430 = vmatpush.xpose.msra.mxu0 0.0
  %5431 = vmatpush.xpose.msra.mxu0 0.0
  %5432 = vmatpush.xpose.msra.mxu0 0.0
  %5433 = vmatpush.xpose.msra.mxu0 0.0
  %5434 = vmatpush.xpose.msra.mxu0 0.0
  %5435 = vmatpush.xpose.msra.mxu0 0.0
  %5436 = vmatpush.xpose.msra.mxu0 0.0
  %5437 = vmatpush.xpose.msra.mxu0 0.0
  %5438 = vmatpush.xpose.msra.mxu0 0.0
  %5439 = vmatpush.xpose.msra.mxu0 0.0
  %5440 = vmatpush.xpose.msra.mxu0 %v5189
  %5441 = vmatpush.xpose.msra.mxu0 %v5187
  %5442 = vmatmul.f32.gmra.mxu0 %v5415
  %v5443 = vpop.f32.mrf.mxu0
  %v5444 = vadd.f32 0.0, %v5443
  %5445 = vdwg.mxu0
  %5446 = vmatpush.xpose.msra.mxu0 0.0
  %5447 = vmatpush.xpose.msra.mxu0 0.0
  %5448 = vmatpush.xpose.msra.mxu0 0.0
  %5449 = vmatpush.xpose.msra.mxu0 0.0
  %5450 = vmatpush.xpose.msra.mxu0 0.0
  %5451 = vmatpush.xpose.msra.mxu0 0.0
  %5452 = vmatpush.xpose.msra.mxu0 0.0
  %5453 = vmatpush.xpose.msra.mxu0 0.0
  %5454 = vmatpush.xpose.msra.mxu0 0.0
  %5455 = vmatpush.xpose.msra.mxu0 0.0
  %5456 = vmatpush.xpose.msra.mxu0 0.0
  %5457 = vmatpush.xpose.msra.mxu0 0.0
  %5458 = vmatpush.xpose.msra.mxu0 0.0
  %5459 = vmatpush.xpose.msra.mxu0 0.0
  %5460 = vmatpush.xpose.msra.mxu0 %v5424
  %5461 = vmatpush.xpose.msra.mxu0 %v5421
  %5462 = vmatmul.f32.gmra.mxu0 %v5418
  %v5463 = vpop.f32.mrf.mxu0
  %v5464 = vadd.f32 %v5444, %v5463
  %5465 = vdwg.mxu0
  %5467 = vst [vmem:[#allocation1] ss:$2 sm:$0xff] %v5150
  %v5468 = vld.sshfl [vmem:[#allocation1] sm:$0xff pattern:$0x75316420]
  %v5469 = vld.sshfl [vmem:[#allocation1 + $0x8] sm:$0xff pattern:$0x75316420]
  %v5471 = vsel %vm494, %v5469, 0
  %v5474 = vsel %vm494, %v5192, 0
  %v5477 = vsel %vm494, %v5194, 0
  %5479 = vmatpush.xpose.msra.mxu0 0.0
  %5480 = vmatpush.xpose.msra.mxu0 0.0
  %5481 = vmatpush.xpose.msra.mxu0 0.0
  %5482 = vmatpush.xpose.msra.mxu0 0.0
  %5483 = vmatpush.xpose.msra.mxu0 0.0
  %5484 = vmatpush.xpose.msra.mxu0 0.0
  %5485 = vmatpush.xpose.msra.mxu0 0.0
  %5486 = vmatpush.xpose.msra.mxu0 0.0
  %5487 = vmatpush.xpose.msra.mxu0 0.0
  %5488 = vmatpush.xpose.msra.mxu0 0.0
  %5489 = vmatpush.xpose.msra.mxu0 0.0
  %5490 = vmatpush.xpose.msra.mxu0 0.0
  %5491 = vmatpush.xpose.msra.mxu0 0.0
  %5492 = vmatpush.xpose.msra.mxu0 0.0
  %5493 = vmatpush.xpose.msra.mxu0 %v5193
  %5494 = vmatpush.xpose.msra.mxu0 %v5191
  %5495 = vmatmul.f32.gmra.mxu0 %v5468
  %v5496 = vpop.f32.mrf.mxu0
  %v5497 = vadd.f32 0.0, %v5496
  %5498 = vdwg.mxu0
  %5499 = vmatpush.xpose.msra.mxu0 0.0
  %5500 = vmatpush.xpose.msra.mxu0 0.0
  %5501 = vmatpush.xpose.msra.mxu0 0.0
  %5502 = vmatpush.xpose.msra.mxu0 0.0
  %5503 = vmatpush.xpose.msra.mxu0 0.0
  %5504 = vmatpush.xpose.msra.mxu0 0.0
  %5505 = vmatpush.xpose.msra.mxu0 0.0
  %5506 = vmatpush.xpose.msra.mxu0 0.0
  %5507 = vmatpush.xpose.msra.mxu0 0.0
  %5508 = vmatpush.xpose.msra.mxu0 0.0
  %5509 = vmatpush.xpose.msra.mxu0 0.0
  %5510 = vmatpush.xpose.msra.mxu0 0.0
  %5511 = vmatpush.xpose.msra.mxu0 0.0
  %5512 = vmatpush.xpose.msra.mxu0 0.0
  %5513 = vmatpush.xpose.msra.mxu0 %v5477
  %5514 = vmatpush.xpose.msra.mxu0 %v5474
  %5515 = vmatmul.f32.gmra.mxu0 %v5471
  %v5516 = vpop.f32.mrf.mxu0
  %v5517 = vadd.f32 %v5497, %v5516
  %5518 = vdwg.mxu0
  %5520 = vst [vmem:[#allocation1] ss:$2 sm:$0xff] %v5151
  %v5521 = vld.sshfl [vmem:[#allocation1] sm:$0xff pattern:$0x75316420]
  %v5522 = vld.sshfl [vmem:[#allocation1 + $0x8] sm:$0xff pattern:$0x75316420]
  %v5524 = vsel %vm494, %v5522, 0
  %v5527 = vsel %vm494, %v5196, 0
  %v5530 = vsel %vm494, %v5198, 0
  %5532 = vmatpush.xpose.msra.mxu0 0.0
  %5533 = vmatpush.xpose.msra.mxu0 0.0
  %5534 = vmatpush.xpose.msra.mxu0 0.0
  %5535 = vmatpush.xpose.msra.mxu0 0.0
  %5536 = vmatpush.xpose.msra.mxu0 0.0
  %5537 = vmatpush.xpose.msra.mxu0 0.0
  %5538 = vmatpush.xpose.msra.mxu0 0.0
  %5539 = vmatpush.xpose.msra.mxu0 0.0
  %5540 = vmatpush.xpose.msra.mxu0 0.0
  %5541 = vmatpush.xpose.msra.mxu0 0.0
  %5542 = vmatpush.xpose.msra.mxu0 0.0
  %5543 = vmatpush.xpose.msra.mxu0 0.0
  %5544 = vmatpush.xpose.msra.mxu0 0.0
  %5545 = vmatpush.xpose.msra.mxu0 0.0
  %5546 = vmatpush.xpose.msra.mxu0 %v5197
  %5547 = vmatpush.xpose.msra.mxu0 %v5195
  %5548 = vmatmul.f32.gmra.mxu0 %v5521
  %v5549 = vpop.f32.mrf.mxu0
  %v5550 = vadd.f32 0.0, %v5549
  %5551 = vdwg.mxu0
  %5552 = vmatpush.xpose.msra.mxu0 0.0
  %5553 = vmatpush.xpose.msra.mxu0 0.0
  %5554 = vmatpush.xpose.msra.mxu0 0.0
  %5555 = vmatpush.xpose.msra.mxu0 0.0
  %5556 = vmatpush.xpose.msra.mxu0 0.0
  %5557 = vmatpush.xpose.msra.mxu0 0.0
  %5558 = vmatpush.xpose.msra.mxu0 0.0
  %5559 = vmatpush.xpose.msra.mxu0 0.0
  %5560 = vmatpush.xpose.msra.mxu0 0.0
  %5561 = vmatpush.xpose.msra.mxu0 0.0
  %5562 = vmatpush.xpose.msra.mxu0 0.0
  %5563 = vmatpush.xpose.msra.mxu0 0.0
  %5564 = vmatpush.xpose.msra.mxu0 0.0
  %5565 = vmatpush.xpose.msra.mxu0 0.0
  %5566 = vmatpush.xpose.msra.mxu0 %v5530
  %5567 = vmatpush.xpose.msra.mxu0 %v5527
  %5568 = vmatmul.f32.gmra.mxu0 %v5524
  %v5569 = vpop.f32.mrf.mxu0
  %v5570 = vadd.f32 %v5550, %v5569
  %5571 = vdwg.mxu0
  %5573 = vst [vmem:[#allocation1] ss:$2 sm:$0xff] %v5152
  %v5574 = vld.sshfl [vmem:[#allocation1] sm:$0xff pattern:$0x75316420]
  %v5575 = vld.sshfl [vmem:[#allocation1 + $0x8] sm:$0xff pattern:$0x75316420]
  %v5577 = vsel %vm494, %v5575, 0
  %v5580 = vsel %vm494, %v5200, 0
  %v5583 = vsel %vm494, %v5202, 0
  %5585 = vmatpush.xpose.msra.mxu0 0.0
  %5586 = vmatpush.xpose.msra.mxu0 0.0
  %5587 = vmatpush.xpose.msra.mxu0 0.0
  %5588 = vmatpush.xpose.msra.mxu0 0.0
  %5589 = vmatpush.xpose.msra.mxu0 0.0
  %5590 = vmatpush.xpose.msra.mxu0 0.0
  %5591 = vmatpush.xpose.msra.mxu0 0.0
  %5592 = vmatpush.xpose.msra.mxu0 0.0
  %5593 = vmatpush.xpose.msra.mxu0 0.0
  %5594 = vmatpush.xpose.msra.mxu0 0.0
  %5595 = vmatpush.xpose.msra.mxu0 0.0
  %5596 = vmatpush.xpose.msra.mxu0 0.0
  %5597 = vmatpush.xpose.msra.mxu0 0.0
  %5598 = vmatpush.xpose.msra.mxu0 0.0
  %5599 = vmatpush.xpose.msra.mxu0 %v5201
  %5600 = vmatpush.xpose.msra.mxu0 %v5199
  %5601 = vmatmul.f32.gmra.mxu0 %v5574
  %v5602 = vpop.f32.mrf.mxu0
  %v5603 = vadd.f32 0.0, %v5602
  %5604 = vdwg.mxu0
  %5605 = vmatpush.xpose.msra.mxu0 0.0
  %5606 = vmatpush.xpose.msra.mxu0 0.0
  %5607 = vmatpush.xpose.msra.mxu0 0.0
  %5608 = vmatpush.xpose.msra.mxu0 0.0
  %5609 = vmatpush.xpose.msra.mxu0 0.0
  %5610 = vmatpush.xpose.msra.mxu0 0.0
  %5611 = vmatpush.xpose.msra.mxu0 0.0
  %5612 = vmatpush.xpose.msra.mxu0 0.0
  %5613 = vmatpush.xpose.msra.mxu0 0.0
  %5614 = vmatpush.xpose.msra.mxu0 0.0
  %5615 = vmatpush.xpose.msra.mxu0 0.0
  %5616 = vmatpush.xpose.msra.mxu0 0.0
  %5617 = vmatpush.xpose.msra.mxu0 0.0
  %5618 = vmatpush.xpose.msra.mxu0 0.0
  %5619 = vmatpush.xpose.msra.mxu0 %v5583
  %5620 = vmatpush.xpose.msra.mxu0 %v5580
  %5621 = vmatmul.f32.gmra.mxu0 %v5577
  %v5622 = vpop.f32.mrf.mxu0
  %v5623 = vadd.f32 %v5603, %v5622
  %5624 = vdwg.mxu0
  %5626 = vst [vmem:[#allocation1] ss:$2 sm:$0xff] %v5153
  %v5627 = vld.sshfl [vmem:[#allocation1] sm:$0xff pattern:$0x75316420]
  %v5628 = vld.sshfl [vmem:[#allocation1 + $0x8] sm:$0xff pattern:$0x75316420]
  %v5630 = vsel %vm494, %v5628, 0
  %v5633 = vsel %vm494, %v5204, 0
  %v5636 = vsel %vm494, %v5206, 0
  %5638 = vmatpush.xpose.msra.mxu0 0.0
  %5639 = vmatpush.xpose.msra.mxu0 0.0
  %5640 = vmatpush.xpose.msra.mxu0 0.0
  %5641 = vmatpush.xpose.msra.mxu0 0.0
  %5642 = vmatpush.xpose.msra.mxu0 0.0
  %5643 = vmatpush.xpose.msra.mxu0 0.0
  %5644 = vmatpush.xpose.msra.mxu0 0.0
  %5645 = vmatpush.xpose.msra.mxu0 0.0
  %5646 = vmatpush.xpose.msra.mxu0 0.0
  %5647 = vmatpush.xpose.msra.mxu0 0.0
  %5648 = vmatpush.xpose.msra.mxu0 0.0
  %5649 = vmatpush.xpose.msra.mxu0 0.0
  %5650 = vmatpush.xpose.msra.mxu0 0.0
  %5651 = vmatpush.xpose.msra.mxu0 0.0
  %5652 = vmatpush.xpose.msra.mxu0 %v5205
  %5653 = vmatpush.xpose.msra.mxu0 %v5203
  %5654 = vmatmul.f32.gmra.mxu0 %v5627
  %v5655 = vpop.f32.mrf.mxu0
  %v5656 = vadd.f32 0.0, %v5655
  %5657 = vdwg.mxu0
  %5658 = vmatpush.xpose.msra.mxu0 0.0
  %5659 = vmatpush.xpose.msra.mxu0 0.0
  %5660 = vmatpush.xpose.msra.mxu0 0.0
  %5661 = vmatpush.xpose.msra.mxu0 0.0
  %5662 = vmatpush.xpose.msra.mxu0 0.0
  %5663 = vmatpush.xpose.msra.mxu0 0.0
  %5664 = vmatpush.xpose.msra.mxu0 0.0
  %5665 = vmatpush.xpose.msra.mxu0 0.0
  %5666 = vmatpush.xpose.msra.mxu0 0.0
  %5667 = vmatpush.xpose.msra.mxu0 0.0
  %5668 = vmatpush.xpose.msra.mxu0 0.0
  %5669 = vmatpush.xpose.msra.mxu0 0.0
  %5670 = vmatpush.xpose.msra.mxu0 0.0
  %5671 = vmatpush.xpose.msra.mxu0 0.0
  %5672 = vmatpush.xpose.msra.mxu0 %v5636
  %5673 = vmatpush.xpose.msra.mxu0 %v5633
  %5674 = vmatmul.f32.gmra.mxu0 %v5630
  %v5675 = vpop.f32.mrf.mxu0
  %v5676 = vadd.f32 %v5656, %v5675
  %5677 = vdwg.mxu0
  %5679 = vst [vmem:[#allocation1] ss:$2 sm:$0xff] %v5154
  %v5680 = vld.sshfl [vmem:[#allocation1] sm:$0xff pattern:$0x75316420]
  %v5681 = vld.sshfl [vmem:[#allocation1 + $0x8] sm:$0xff pattern:$0x75316420]
  %v5683 = vsel %vm494, %v5681, 0
  %v5686 = vsel %vm494, %v5208, 0
  %v5689 = vsel %vm494, %v5210, 0
  %5691 = vmatpush.xpose.msra.mxu0 0.0
  %5692 = vmatpush.xpose.msra.mxu0 0.0
  %5693 = vmatpush.xpose.msra.mxu0 0.0
  %5694 = vmatpush.xpose.msra.mxu0 0.0
  %5695 = vmatpush.xpose.msra.mxu0 0.0
  %5696 = vmatpush.xpose.msra.mxu0 0.0
  %5697 = vmatpush.xpose.msra.mxu0 0.0
  %5698 = vmatpush.xpose.msra.mxu0 0.0
  %5699 = vmatpush.xpose.msra.mxu0 0.0
  %5700 = vmatpush.xpose.msra.mxu0 0.0
  %5701 = vmatpush.xpose.msra.mxu0 0.0
  %5702 = vmatpush.xpose.msra.mxu0 0.0
  %5703 = vmatpush.xpose.msra.mxu0 0.0
  %5704 = vmatpush.xpose.msra.mxu0 0.0
  %5705 = vmatpush.xpose.msra.mxu0 %v5209
  %5706 = vmatpush.xpose.msra.mxu0 %v5207
  %5707 = vmatmul.f32.gmra.mxu0 %v5680
  %v5708 = vpop.f32.mrf.mxu0
  %v5709 = vadd.f32 0.0, %v5708
  %5710 = vdwg.mxu0
  %5711 = vmatpush.xpose.msra.mxu0 0.0
  %5712 = vmatpush.xpose.msra.mxu0 0.0
  %5713 = vmatpush.xpose.msra.mxu0 0.0
  %5714 = vmatpush.xpose.msra.mxu0 0.0
  %5715 = vmatpush.xpose.msra.mxu0 0.0
  %5716 = vmatpush.xpose.msra.mxu0 0.0
  %5717 = vmatpush.xpose.msra.mxu0 0.0
  %5718 = vmatpush.xpose.msra.mxu0 0.0
  %5719 = vmatpush.xpose.msra.mxu0 0.0
  %5720 = vmatpush.xpose.msra.mxu0 0.0
  %5721 = vmatpush.xpose.msra.mxu0 0.0
  %5722 = vmatpush.xpose.msra.mxu0 0.0
  %5723 = vmatpush.xpose.msra.mxu0 0.0
  %5724 = vmatpush.xpose.msra.mxu0 0.0
  %5725 = vmatpush.xpose.msra.mxu0 %v5689
  %5726 = vmatpush.xpose.msra.mxu0 %v5686
  %5727 = vmatmul.f32.gmra.mxu0 %v5683
  %v5728 = vpop.f32.mrf.mxu0
  %v5729 = vadd.f32 %v5709, %v5728
  %5730 = vdwg.mxu0
  %5732 = vst [vmem:[#allocation1] ss:$2 sm:$0xff] %v5155
  %v5733 = vld.sshfl [vmem:[#allocation1] sm:$0xff pattern:$0x75316420]
  %v5734 = vld.sshfl [vmem:[#allocation1 + $0x8] sm:$0xff pattern:$0x75316420]
  %v5736 = vsel %vm494, %v5734, 0
  %v5739 = vsel %vm494, %v5212, 0
  %v5742 = vsel %vm494, %v5214, 0
  %5744 = vmatpush.xpose.msra.mxu0 0.0
  %5745 = vmatpush.xpose.msra.mxu0 0.0
  %5746 = vmatpush.xpose.msra.mxu0 0.0
  %5747 = vmatpush.xpose.msra.mxu0 0.0
  %5748 = vmatpush.xpose.msra.mxu0 0.0
  %5749 = vmatpush.xpose.msra.mxu0 0.0
  %5750 = vmatpush.xpose.msra.mxu0 0.0
  %5751 = vmatpush.xpose.msra.mxu0 0.0
  %5752 = vmatpush.xpose.msra.mxu0 0.0
  %5753 = vmatpush.xpose.msra.mxu0 0.0
  %5754 = vmatpush.xpose.msra.mxu0 0.0
  %5755 = vmatpush.xpose.msra.mxu0 0.0
  %5756 = vmatpush.xpose.msra.mxu0 0.0
  %5757 = vmatpush.xpose.msra.mxu0 0.0
  %5758 = vmatpush.xpose.msra.mxu0 %v5213
  %5759 = vmatpush.xpose.msra.mxu0 %v5211
  %5760 = vmatmul.f32.gmra.mxu0 %v5733
  %v5761 = vpop.f32.mrf.mxu0
  %v5762 = vadd.f32 0.0, %v5761
  %5763 = vdwg.mxu0
  %5764 = vmatpush.xpose.msra.mxu0 0.0
  %5765 = vmatpush.xpose.msra.mxu0 0.0
  %5766 = vmatpush.xpose.msra.mxu0 0.0
  %5767 = vmatpush.xpose.msra.mxu0 0.0
  %5768 = vmatpush.xpose.msra.mxu0 0.0
  %5769 = vmatpush.xpose.msra.mxu0 0.0
  %5770 = vmatpush.xpose.msra.mxu0 0.0
  %5771 = vmatpush.xpose.msra.mxu0 0.0
  %5772 = vmatpush.xpose.msra.mxu0 0.0
  %5773 = vmatpush.xpose.msra.mxu0 0.0
  %5774 = vmatpush.xpose.msra.mxu0 0.0
  %5775 = vmatpush.xpose.msra.mxu0 0.0
  %5776 = vmatpush.xpose.msra.mxu0 0.0
  %5777 = vmatpush.xpose.msra.mxu0 0.0
  %5778 = vmatpush.xpose.msra.mxu0 %v5742
  %5779 = vmatpush.xpose.msra.mxu0 %v5739
  %5780 = vmatmul.f32.gmra.mxu0 %v5736
  %v5781 = vpop.f32.mrf.mxu0
  %v5782 = vadd.f32 %v5762, %v5781
  %5783 = vdwg.mxu0
  %5785 = vst [vmem:[#allocation1] ss:$2 sm:$0xff] %v5156
  %v5786 = vld.sshfl [vmem:[#allocation1] sm:$0xff pattern:$0x75316420]
  %v5787 = vld.sshfl [vmem:[#allocation1 + $0x8] sm:$0xff pattern:$0x75316420]
  %v5789 = vsel %vm494, %v5787, 0
  %v5792 = vsel %vm494, %v5216, 0
  %v5795 = vsel %vm494, %v5218, 0
  %5797 = vmatpush.xpose.msra.mxu0 0.0
  %5798 = vmatpush.xpose.msra.mxu0 0.0
  %5799 = vmatpush.xpose.msra.mxu0 0.0
  %5800 = vmatpush.xpose.msra.mxu0 0.0
  %5801 = vmatpush.xpose.msra.mxu0 0.0
  %5802 = vmatpush.xpose.msra.mxu0 0.0
  %5803 = vmatpush.xpose.msra.mxu0 0.0
  %5804 = vmatpush.xpose.msra.mxu0 0.0
  %5805 = vmatpush.xpose.msra.mxu0 0.0
  %5806 = vmatpush.xpose.msra.mxu0 0.0
  %5807 = vmatpush.xpose.msra.mxu0 0.0
  %5808 = vmatpush.xpose.msra.mxu0 0.0
  %5809 = vmatpush.xpose.msra.mxu0 0.0
  %5810 = vmatpush.xpose.msra.mxu0 0.0
  %5811 = vmatpush.xpose.msra.mxu0 %v5217
  %5812 = vmatpush.xpose.msra.mxu0 %v5215
  %5813 = vmatmul.f32.gmra.mxu0 %v5786
  %v5814 = vpop.f32.mrf.mxu0
  %v5815 = vadd.f32 0.0, %v5814
  %5816 = vdwg.mxu0
  %5817 = vmatpush.xpose.msra.mxu0 0.0
  %5818 = vmatpush.xpose.msra.mxu0 0.0
  %5819 = vmatpush.xpose.msra.mxu0 0.0
  %5820 = vmatpush.xpose.msra.mxu0 0.0
  %5821 = vmatpush.xpose.msra.mxu0 0.0
  %5822 = vmatpush.xpose.msra.mxu0 0.0
  %5823 = vmatpush.xpose.msra.mxu0 0.0
  %5824 = vmatpush.xpose.msra.mxu0 0.0
  %5825 = vmatpush.xpose.msra.mxu0 0.0
  %5826 = vmatpush.xpose.msra.mxu0 0.0
  %5827 = vmatpush.xpose.msra.mxu0 0.0
  %5828 = vmatpush.xpose.msra.mxu0 0.0
  %5829 = vmatpush.xpose.msra.mxu0 0.0
  %5830 = vmatpush.xpose.msra.mxu0 0.0
  %5831 = vmatpush.xpose.msra.mxu0 %v5795
  %5832 = vmatpush.xpose.msra.mxu0 %v5792
  %5833 = vmatmul.f32.gmra.mxu0 %v5789
  %v5834 = vpop.f32.mrf.mxu0
  %v5835 = vadd.f32 %v5815, %v5834
  %5836 = vdwg.mxu0
  %5838 = vst [vmem:[#allocation1] ss:$2 sm:$0xff] %v5157
  %v5839 = vld.sshfl [vmem:[#allocation1] sm:$0xff pattern:$0x75316420]
  %v5840 = vld.sshfl [vmem:[#allocation1 + $0x8] sm:$0xff pattern:$0x75316420]
  %v5842 = vsel %vm494, %v5840, 0
  %v5845 = vsel %vm494, %v5220, 0
  %v5848 = vsel %vm494, %v5222, 0
  %5850 = vmatpush.xpose.msra.mxu0 0.0
  %5851 = vmatpush.xpose.msra.mxu0 0.0
  %5852 = vmatpush.xpose.msra.mxu0 0.0
  %5853 = vmatpush.xpose.msra.mxu0 0.0
  %5854 = vmatpush.xpose.msra.mxu0 0.0
  %5855 = vmatpush.xpose.msra.mxu0 0.0
  %5856 = vmatpush.xpose.msra.mxu0 0.0
  %5857 = vmatpush.xpose.msra.mxu0 0.0
  %5858 = vmatpush.xpose.msra.mxu0 0.0
  %5859 = vmatpush.xpose.msra.mxu0 0.0
  %5860 = vmatpush.xpose.msra.mxu0 0.0
  %5861 = vmatpush.xpose.msra.mxu0 0.0
  %5862 = vmatpush.xpose.msra.mxu0 0.0
  %5863 = vmatpush.xpose.msra.mxu0 0.0
  %5864 = vmatpush.xpose.msra.mxu0 %v5221
  %5865 = vmatpush.xpose.msra.mxu0 %v5219
  %5866 = vmatmul.f32.gmra.mxu0 %v5839
  %v5867 = vpop.f32.mrf.mxu0
  %v5868 = vadd.f32 0.0, %v5867
  %5869 = vdwg.mxu0
  %5870 = vmatpush.xpose.msra.mxu0 0.0
  %5871 = vmatpush.xpose.msra.mxu0 0.0
  %5872 = vmatpush.xpose.msra.mxu0 0.0
  %5873 = vmatpush.xpose.msra.mxu0 0.0
  %5874 = vmatpush.xpose.msra.mxu0 0.0
  %5875 = vmatpush.xpose.msra.mxu0 0.0
  %5876 = vmatpush.xpose.msra.mxu0 0.0
  %5877 = vmatpush.xpose.msra.mxu0 0.0
  %5878 = vmatpush.xpose.msra.mxu0 0.0
  %5879 = vmatpush.xpose.msra.mxu0 0.0
  %5880 = vmatpush.xpose.msra.mxu0 0.0
  %5881 = vmatpush.xpose.msra.mxu0 0.0
  %5882 = vmatpush.xpose.msra.mxu0 0.0
  %5883 = vmatpush.xpose.msra.mxu0 0.0
  %5884 = vmatpush.xpose.msra.mxu0 %v5848
  %5885 = vmatpush.xpose.msra.mxu0 %v5845
  %5886 = vmatmul.f32.gmra.mxu0 %v5842
  %v5887 = vpop.f32.mrf.mxu0
  %v5888 = vadd.f32 %v5868, %v5887
  %5889 = vdwg.mxu0
  %5891 = vst [vmem:[#allocation1] ss:$2 sm:$0xff] %v5158
  %v5892 = vld.sshfl [vmem:[#allocation1] sm:$0xff pattern:$0x75316420]
  %v5893 = vld.sshfl [vmem:[#allocation1 + $0x8] sm:$0xff pattern:$0x75316420]
  %v5895 = vsel %vm494, %v5893, 0
  %v5898 = vsel %vm494, %v5224, 0
  %v5901 = vsel %vm494, %v5226, 0
  %5903 = vmatpush.xpose.msra.mxu0 0.0
  %5904 = vmatpush.xpose.msra.mxu0 0.0
  %5905 = vmatpush.xpose.msra.mxu0 0.0
  %5906 = vmatpush.xpose.msra.mxu0 0.0
  %5907 = vmatpush.xpose.msra.mxu0 0.0
  %5908 = vmatpush.xpose.msra.mxu0 0.0
  %5909 = vmatpush.xpose.msra.mxu0 0.0
  %5910 = vmatpush.xpose.msra.mxu0 0.0
  %5911 = vmatpush.xpose.msra.mxu0 0.0
  %5912 = vmatpush.xpose.msra.mxu0 0.0
  %5913 = vmatpush.xpose.msra.mxu0 0.0
  %5914 = vmatpush.xpose.msra.mxu0 0.0
  %5915 = vmatpush.xpose.msra.mxu0 0.0
  %5916 = vmatpush.xpose.msra.mxu0 0.0
  %5917 = vmatpush.xpose.msra.mxu0 %v5225
  %5918 = vmatpush.xpose.msra.mxu0 %v5223
  %5919 = vmatmul.f32.gmra.mxu0 %v5892
  %v5920 = vpop.f32.mrf.mxu0
  %v5921 = vadd.f32 0.0, %v5920
  %5922 = vdwg.mxu0
  %5923 = vmatpush.xpose.msra.mxu0 0.0
  %5924 = vmatpush.xpose.msra.mxu0 0.0
  %5925 = vmatpush.xpose.msra.mxu0 0.0
  %5926 = vmatpush.xpose.msra.mxu0 0.0
  %5927 = vmatpush.xpose.msra.mxu0 0.0
  %5928 = vmatpush.xpose.msra.mxu0 0.0
  %5929 = vmatpush.xpose.msra.mxu0 0.0
  %5930 = vmatpush.xpose.msra.mxu0 0.0
  %5931 = vmatpush.xpose.msra.mxu0 0.0
  %5932 = vmatpush.xpose.msra.mxu0 0.0
  %5933 = vmatpush.xpose.msra.mxu0 0.0
  %5934 = vmatpush.xpose.msra.mxu0 0.0
  %5935 = vmatpush.xpose.msra.mxu0 0.0
  %5936 = vmatpush.xpose.msra.mxu0 0.0
  %5937 = vmatpush.xpose.msra.mxu0 %v5901
  %5938 = vmatpush.xpose.msra.mxu0 %v5898
  %5939 = vmatmul.f32.gmra.mxu0 %v5895
  %v5940 = vpop.f32.mrf.mxu0
  %v5941 = vadd.f32 %v5921, %v5940
  %5942 = vdwg.mxu0
  %5944 = vst [vmem:[#allocation1] ss:$2 sm:$0xff] %v5159
  %v5945 = vld.sshfl [vmem:[#allocation1] sm:$0xff pattern:$0x75316420]
  %v5946 = vld.sshfl [vmem:[#allocation1 + $0x8] sm:$0xff pattern:$0x75316420]
  %v5948 = vsel %vm494, %v5946, 0
  %v5951 = vsel %vm494, %v5228, 0
  %v5954 = vsel %vm494, %v5230, 0
  %5956 = vmatpush.xpose.msra.mxu0 0.0
  %5957 = vmatpush.xpose.msra.mxu0 0.0
  %5958 = vmatpush.xpose.msra.mxu0 0.0
  %5959 = vmatpush.xpose.msra.mxu0 0.0
  %5960 = vmatpush.xpose.msra.mxu0 0.0
  %5961 = vmatpush.xpose.msra.mxu0 0.0
  %5962 = vmatpush.xpose.msra.mxu0 0.0
  %5963 = vmatpush.xpose.msra.mxu0 0.0
  %5964 = vmatpush.xpose.msra.mxu0 0.0
  %5965 = vmatpush.xpose.msra.mxu0 0.0
  %5966 = vmatpush.xpose.msra.mxu0 0.0
  %5967 = vmatpush.xpose.msra.mxu0 0.0
  %5968 = vmatpush.xpose.msra.mxu0 0.0
  %5969 = vmatpush.xpose.msra.mxu0 0.0
  %5970 = vmatpush.xpose.msra.mxu0 %v5229
  %5971 = vmatpush.xpose.msra.mxu0 %v5227
  %5972 = vmatmul.f32.gmra.mxu0 %v5945
  %v5973 = vpop.f32.mrf.mxu0
  %v5974 = vadd.f32 0.0, %v5973
  %5975 = vdwg.mxu0
  %5976 = vmatpush.xpose.msra.mxu0 0.0
  %5977 = vmatpush.xpose.msra.mxu0 0.0
  %5978 = vmatpush.xpose.msra.mxu0 0.0
  %5979 = vmatpush.xpose.msra.mxu0 0.0
  %5980 = vmatpush.xpose.msra.mxu0 0.0
  %5981 = vmatpush.xpose.msra.mxu0 0.0
  %5982 = vmatpush.xpose.msra.mxu0 0.0
  %5983 = vmatpush.xpose.msra.mxu0 0.0
  %5984 = vmatpush.xpose.msra.mxu0 0.0
  %5985 = vmatpush.xpose.msra.mxu0 0.0
  %5986 = vmatpush.xpose.msra.mxu0 0.0
  %5987 = vmatpush.xpose.msra.mxu0 0.0
  %5988 = vmatpush.xpose.msra.mxu0 0.0
  %5989 = vmatpush.xpose.msra.mxu0 0.0
  %5990 = vmatpush.xpose.msra.mxu0 %v5954
  %5991 = vmatpush.xpose.msra.mxu0 %v5951
  %5992 = vmatmul.f32.gmra.mxu0 %v5948
  %v5993 = vpop.f32.mrf.mxu0
  %v5994 = vadd.f32 %v5974, %v5993
  %5995 = vdwg.mxu0
  %5997 = vst [vmem:[#allocation1] ss:$2 sm:$0xff] %v5160
  %v5998 = vld.sshfl [vmem:[#allocation1] sm:$0xff pattern:$0x75316420]
  %v5999 = vld.sshfl [vmem:[#allocation1 + $0x8] sm:$0xff pattern:$0x75316420]
  %v6001 = vsel %vm494, %v5999, 0
  %v6004 = vsel %vm494, %v5232, 0
  %v6007 = vsel %vm494, %v5234, 0
  %6009 = vmatpush.xpose.msra.mxu0 0.0
  %6010 = vmatpush.xpose.msra.mxu0 0.0
  %6011 = vmatpush.xpose.msra.mxu0 0.0
  %6012 = vmatpush.xpose.msra.mxu0 0.0
  %6013 = vmatpush.xpose.msra.mxu0 0.0
  %6014 = vmatpush.xpose.msra.mxu0 0.0
  %6015 = vmatpush.xpose.msra.mxu0 0.0
  %6016 = vmatpush.xpose.msra.mxu0 0.0
  %6017 = vmatpush.xpose.msra.mxu0 0.0
  %6018 = vmatpush.xpose.msra.mxu0 0.0
  %6019 = vmatpush.xpose.msra.mxu0 0.0
  %6020 = vmatpush.xpose.msra.mxu0 0.0
  %6021 = vmatpush.xpose.msra.mxu0 0.0
  %6022 = vmatpush.xpose.msra.mxu0 0.0
  %6023 = vmatpush.xpose.msra.mxu0 %v5233
  %6024 = vmatpush.xpose.msra.mxu0 %v5231
  %6025 = vmatmul.f32.gmra.mxu0 %v5998
  %v6026 = vpop.f32.mrf.mxu0
  %v6027 = vadd.f32 0.0, %v6026
  %6028 = vdwg.mxu0
  %6029 = vmatpush.xpose.msra.mxu0 0.0
  %6030 = vmatpush.xpose.msra.mxu0 0.0
  %6031 = vmatpush.xpose.msra.mxu0 0.0
  %6032 = vmatpush.xpose.msra.mxu0 0.0
  %6033 = vmatpush.xpose.msra.mxu0 0.0
  %6034 = vmatpush.xpose.msra.mxu0 0.0
  %6035 = vmatpush.xpose.msra.mxu0 0.0
  %6036 = vmatpush.xpose.msra.mxu0 0.0
  %6037 = vmatpush.xpose.msra.mxu0 0.0
  %6038 = vmatpush.xpose.msra.mxu0 0.0
  %6039 = vmatpush.xpose.msra.mxu0 0.0
  %6040 = vmatpush.xpose.msra.mxu0 0.0
  %6041 = vmatpush.xpose.msra.mxu0 0.0
  %6042 = vmatpush.xpose.msra.mxu0 0.0
  %6043 = vmatpush.xpose.msra.mxu0 %v6007
  %6044 = vmatpush.xpose.msra.mxu0 %v6004
  %6045 = vmatmul.f32.gmra.mxu0 %v6001
  %v6046 = vpop.f32.mrf.mxu0
  %v6047 = vadd.f32 %v6027, %v6046
  %6048 = vdwg.mxu0
  %6050 = vst [vmem:[#allocation1] ss:$2 sm:$0xff] %v5161
  %v6051 = vld.sshfl [vmem:[#allocation1] sm:$0xff pattern:$0x75316420]
  %v6052 = vld.sshfl [vmem:[#allocation1 + $0x8] sm:$0xff pattern:$0x75316420]
  %v6054 = vsel %vm494, %v6052, 0
  %v6057 = vsel %vm494, %v5236, 0
  %v6060 = vsel %vm494, %v5238, 0
  %6062 = vmatpush.xpose.msra.mxu0 0.0
  %6063 = vmatpush.xpose.msra.mxu0 0.0
  %6064 = vmatpush.xpose.msra.mxu0 0.0
  %6065 = vmatpush.xpose.msra.mxu0 0.0
  %6066 = vmatpush.xpose.msra.mxu0 0.0
  %6067 = vmatpush.xpose.msra.mxu0 0.0
  %6068 = vmatpush.xpose.msra.mxu0 0.0
  %6069 = vmatpush.xpose.msra.mxu0 0.0
  %6070 = vmatpush.xpose.msra.mxu0 0.0
  %6071 = vmatpush.xpose.msra.mxu0 0.0
  %6072 = vmatpush.xpose.msra.mxu0 0.0
  %6073 = vmatpush.xpose.msra.mxu0 0.0
  %6074 = vmatpush.xpose.msra.mxu0 0.0
  %6075 = vmatpush.xpose.msra.mxu0 0.0
  %6076 = vmatpush.xpose.msra.mxu0 %v5237
  %6077 = vmatpush.xpose.msra.mxu0 %v5235
  %6078 = vmatmul.f32.gmra.mxu0 %v6051
  %v6079 = vpop.f32.mrf.mxu0
  %v6080 = vadd.f32 0.0, %v6079
  %6081 = vdwg.mxu0
  %6082 = vmatpush.xpose.msra.mxu0 0.0
  %6083 = vmatpush.xpose.msra.mxu0 0.0
  %6084 = vmatpush.xpose.msra.mxu0 0.0
  %6085 = vmatpush.xpose.msra.mxu0 0.0
  %6086 = vmatpush.xpose.msra.mxu0 0.0
  %6087 = vmatpush.xpose.msra.mxu0 0.0
  %6088 = vmatpush.xpose.msra.mxu0 0.0
  %6089 = vmatpush.xpose.msra.mxu0 0.0
  %6090 = vmatpush.xpose.msra.mxu0 0.0
  %6091 = vmatpush.xpose.msra.mxu0 0.0
  %6092 = vmatpush.xpose.msra.mxu0 0.0
  %6093 = vmatpush.xpose.msra.mxu0 0.0
  %6094 = vmatpush.xpose.msra.mxu0 0.0
  %6095 = vmatpush.xpose.msra.mxu0 0.0
  %6096 = vmatpush.xpose.msra.mxu0 %v6060
  %6097 = vmatpush.xpose.msra.mxu0 %v6057
  %6098 = vmatmul.f32.gmra.mxu0 %v6054
  %v6099 = vpop.f32.mrf.mxu0
  %v6100 = vadd.f32 %v6080, %v6099
  %6101 = vdwg.mxu0
  %6103 = vst [vmem:[#allocation1] ss:$2 sm:$0xff] %v5162
  %v6104 = vld.sshfl [vmem:[#allocation1] sm:$0xff pattern:$0x75316420]
  %v6105 = vld.sshfl [vmem:[#allocation1 + $0x8] sm:$0xff pattern:$0x75316420]
  %v6107 = vsel %vm494, %v6105, 0
  %v6110 = vsel %vm494, %v5240, 0
  %v6113 = vsel %vm494, %v5242, 0
  %6115 = vmatpush.xpose.msra.mxu0 0.0
  %6116 = vmatpush.xpose.msra.mxu0 0.0
  %6117 = vmatpush.xpose.msra.mxu0 0.0
  %6118 = vmatpush.xpose.msra.mxu0 0.0
  %6119 = vmatpush.xpose.msra.mxu0 0.0
  %6120 = vmatpush.xpose.msra.mxu0 0.0
  %6121 = vmatpush.xpose.msra.mxu0 0.0
  %6122 = vmatpush.xpose.msra.mxu0 0.0
  %6123 = vmatpush.xpose.msra.mxu0 0.0
  %6124 = vmatpush.xpose.msra.mxu0 0.0
  %6125 = vmatpush.xpose.msra.mxu0 0.0
  %6126 = vmatpush.xpose.msra.mxu0 0.0
  %6127 = vmatpush.xpose.msra.mxu0 0.0
  %6128 = vmatpush.xpose.msra.mxu0 0.0
  %6129 = vmatpush.xpose.msra.mxu0 %v5241
  %6130 = vmatpush.xpose.msra.mxu0 %v5239
  %6131 = vmatmul.f32.gmra.mxu0 %v6104
  %v6132 = vpop.f32.mrf.mxu0
  %v6133 = vadd.f32 0.0, %v6132
  %6134 = vdwg.mxu0
  %6135 = vmatpush.xpose.msra.mxu0 0.0
  %6136 = vmatpush.xpose.msra.mxu0 0.0
  %6137 = vmatpush.xpose.msra.mxu0 0.0
  %6138 = vmatpush.xpose.msra.mxu0 0.0
  %6139 = vmatpush.xpose.msra.mxu0 0.0
  %6140 = vmatpush.xpose.msra.mxu0 0.0
  %6141 = vmatpush.xpose.msra.mxu0 0.0
  %6142 = vmatpush.xpose.msra.mxu0 0.0
  %6143 = vmatpush.xpose.msra.mxu0 0.0
  %6144 = vmatpush.xpose.msra.mxu0 0.0
  %6145 = vmatpush.xpose.msra.mxu0 0.0
  %6146 = vmatpush.xpose.msra.mxu0 0.0
  %6147 = vmatpush.xpose.msra.mxu0 0.0
  %6148 = vmatpush.xpose.msra.mxu0 0.0
  %6149 = vmatpush.xpose.msra.mxu0 %v6113
  %6150 = vmatpush.xpose.msra.mxu0 %v6110
  %6151 = vmatmul.f32.gmra.mxu0 %v6107
  %v6152 = vpop.f32.mrf.mxu0
  %v6153 = vadd.f32 %v6133, %v6152
  %6154 = vdwg.mxu0
  %6156 = vst [vmem:[#allocation1] ss:$2 sm:$0xff] %v5163
  %v6157 = vld.sshfl [vmem:[#allocation1] sm:$0xff pattern:$0x75316420]
  %v6158 = vld.sshfl [vmem:[#allocation1 + $0x8] sm:$0xff pattern:$0x75316420]
  %v6160 = vsel %vm494, %v6158, 0
  %v6163 = vsel %vm494, %v5244, 0
  %v6166 = vsel %vm494, %v5246, 0
  %6168 = vmatpush.xpose.msra.mxu0 0.0
  %6169 = vmatpush.xpose.msra.mxu0 0.0
  %6170 = vmatpush.xpose.msra.mxu0 0.0
  %6171 = vmatpush.xpose.msra.mxu0 0.0
  %6172 = vmatpush.xpose.msra.mxu0 0.0
  %6173 = vmatpush.xpose.msra.mxu0 0.0
  %6174 = vmatpush.xpose.msra.mxu0 0.0
  %6175 = vmatpush.xpose.msra.mxu0 0.0
  %6176 = vmatpush.xpose.msra.mxu0 0.0
  %6177 = vmatpush.xpose.msra.mxu0 0.0
  %6178 = vmatpush.xpose.msra.mxu0 0.0
  %6179 = vmatpush.xpose.msra.mxu0 0.0
  %6180 = vmatpush.xpose.msra.mxu0 0.0
  %6181 = vmatpush.xpose.msra.mxu0 0.0
  %6182 = vmatpush.xpose.msra.mxu0 %v5245
  %6183 = vmatpush.xpose.msra.mxu0 %v5243
  %6184 = vmatmul.f32.gmra.mxu0 %v6157
  %v6185 = vpop.f32.mrf.mxu0
  %v6186 = vadd.f32 0.0, %v6185
  %6187 = vdwg.mxu0
  %6188 = vmatpush.xpose.msra.mxu0 0.0
  %6189 = vmatpush.xpose.msra.mxu0 0.0
  %6190 = vmatpush.xpose.msra.mxu0 0.0
  %6191 = vmatpush.xpose.msra.mxu0 0.0
  %6192 = vmatpush.xpose.msra.mxu0 0.0
  %6193 = vmatpush.xpose.msra.mxu0 0.0
  %6194 = vmatpush.xpose.msra.mxu0 0.0
  %6195 = vmatpush.xpose.msra.mxu0 0.0
  %6196 = vmatpush.xpose.msra.mxu0 0.0
  %6197 = vmatpush.xpose.msra.mxu0 0.0
  %6198 = vmatpush.xpose.msra.mxu0 0.0
  %6199 = vmatpush.xpose.msra.mxu0 0.0
  %6200 = vmatpush.xpose.msra.mxu0 0.0
  %6201 = vmatpush.xpose.msra.mxu0 0.0
  %6202 = vmatpush.xpose.msra.mxu0 %v6166
  %6203 = vmatpush.xpose.msra.mxu0 %v6163
  %6204 = vmatmul.f32.gmra.mxu0 %v6160
  %v6205 = vpop.f32.mrf.mxu0
  %v6206 = vadd.f32 %v6186, %v6205
  %6207 = vdwg.mxu0
  %6209 = vst [vmem:[#allocation1] ss:$2 sm:$0xff] %v5164
  %v6210 = vld.sshfl [vmem:[#allocation1] sm:$0xff pattern:$0x75316420]
  %v6211 = vld.sshfl [vmem:[#allocation1 + $0x8] sm:$0xff pattern:$0x75316420]
  %v6213 = vsel %vm494, %v6211, 0
  %v6216 = vsel %vm494, %v5248, 0
  %v6219 = vsel %vm494, %v5250, 0
  %6221 = vmatpush.xpose.msra.mxu0 0.0
  %6222 = vmatpush.xpose.msra.mxu0 0.0
  %6223 = vmatpush.xpose.msra.mxu0 0.0
  %6224 = vmatpush.xpose.msra.mxu0 0.0
  %6225 = vmatpush.xpose.msra.mxu0 0.0
  %6226 = vmatpush.xpose.msra.mxu0 0.0
  %6227 = vmatpush.xpose.msra.mxu0 0.0
  %6228 = vmatpush.xpose.msra.mxu0 0.0
  %6229 = vmatpush.xpose.msra.mxu0 0.0
  %6230 = vmatpush.xpose.msra.mxu0 0.0
  %6231 = vmatpush.xpose.msra.mxu0 0.0
  %6232 = vmatpush.xpose.msra.mxu0 0.0
  %6233 = vmatpush.xpose.msra.mxu0 0.0
  %6234 = vmatpush.xpose.msra.mxu0 0.0
  %6235 = vmatpush.xpose.msra.mxu0 %v5249
  %6236 = vmatpush.xpose.msra.mxu0 %v5247
  %6237 = vmatmul.f32.gmra.mxu0 %v6210
  %v6238 = vpop.f32.mrf.mxu0
  %v6239 = vadd.f32 0.0, %v6238
  %6240 = vdwg.mxu0
  %6241 = vmatpush.xpose.msra.mxu0 0.0
  %6242 = vmatpush.xpose.msra.mxu0 0.0
  %6243 = vmatpush.xpose.msra.mxu0 0.0
  %6244 = vmatpush.xpose.msra.mxu0 0.0
  %6245 = vmatpush.xpose.msra.mxu0 0.0
  %6246 = vmatpush.xpose.msra.mxu0 0.0
  %6247 = vmatpush.xpose.msra.mxu0 0.0
  %6248 = vmatpush.xpose.msra.mxu0 0.0
  %6249 = vmatpush.xpose.msra.mxu0 0.0
  %6250 = vmatpush.xpose.msra.mxu0 0.0
  %6251 = vmatpush.xpose.msra.mxu0 0.0
  %6252 = vmatpush.xpose.msra.mxu0 0.0
  %6253 = vmatpush.xpose.msra.mxu0 0.0
  %6254 = vmatpush.xpose.msra.mxu0 0.0
  %6255 = vmatpush.xpose.msra.mxu0 %v6219
  %6256 = vmatpush.xpose.msra.mxu0 %v6216
  %6257 = vmatmul.f32.gmra.mxu0 %v6213
  %v6258 = vpop.f32.mrf.mxu0
  %v6259 = vadd.f32 %v6239, %v6258
  %6260 = vdwg.mxu0
  %6262 = vst [vmem:[#allocation1] ss:$2 sm:$0xff] %v5165
  %v6263 = vld.sshfl [vmem:[#allocation1] sm:$0xff pattern:$0x75316420]
  %v6264 = vld.sshfl [vmem:[#allocation1 + $0x8] sm:$0xff pattern:$0x75316420]
  %v6266 = vsel %vm494, %v6264, 0
  %v6269 = vsel %vm494, %v5252, 0
  %v6272 = vsel %vm494, %v5254, 0
  %6274 = vmatpush.xpose.msra.mxu0 0.0
  %6275 = vmatpush.xpose.msra.mxu0 0.0
  %6276 = vmatpush.xpose.msra.mxu0 0.0
  %6277 = vmatpush.xpose.msra.mxu0 0.0
  %6278 = vmatpush.xpose.msra.mxu0 0.0
  %6279 = vmatpush.xpose.msra.mxu0 0.0
  %6280 = vmatpush.xpose.msra.mxu0 0.0
  %6281 = vmatpush.xpose.msra.mxu0 0.0
  %6282 = vmatpush.xpose.msra.mxu0 0.0
  %6283 = vmatpush.xpose.msra.mxu0 0.0
  %6284 = vmatpush.xpose.msra.mxu0 0.0
  %6285 = vmatpush.xpose.msra.mxu0 0.0
  %6286 = vmatpush.xpose.msra.mxu0 0.0
  %6287 = vmatpush.xpose.msra.mxu0 0.0
  %6288 = vmatpush.xpose.msra.mxu0 %v5253
  %6289 = vmatpush.xpose.msra.mxu0 %v5251
  %6290 = vmatmul.f32.gmra.mxu0 %v6263
  %v6291 = vpop.f32.mrf.mxu0
  %v6292 = vadd.f32 0.0, %v6291
  %6293 = vdwg.mxu0
  %6294 = vmatpush.xpose.msra.mxu0 0.0
  %6295 = vmatpush.xpose.msra.mxu0 0.0
  %6296 = vmatpush.xpose.msra.mxu0 0.0
  %6297 = vmatpush.xpose.msra.mxu0 0.0
  %6298 = vmatpush.xpose.msra.mxu0 0.0
  %6299 = vmatpush.xpose.msra.mxu0 0.0
  %6300 = vmatpush.xpose.msra.mxu0 0.0
  %6301 = vmatpush.xpose.msra.mxu0 0.0
  %6302 = vmatpush.xpose.msra.mxu0 0.0
  %6303 = vmatpush.xpose.msra.mxu0 0.0
  %6304 = vmatpush.xpose.msra.mxu0 0.0
  %6305 = vmatpush.xpose.msra.mxu0 0.0
  %6306 = vmatpush.xpose.msra.mxu0 0.0
  %6307 = vmatpush.xpose.msra.mxu0 0.0
  %6308 = vmatpush.xpose.msra.mxu0 %v6272
  %6309 = vmatpush.xpose.msra.mxu0 %v6269
  %6310 = vmatmul.f32.gmra.mxu0 %v6266
  %v6311 = vpop.f32.mrf.mxu0
  %v6312 = vadd.f32 %v6292, %v6311
  %6313 = vdwg.mxu0
  %6315 = vst [vmem:[#allocation1] ss:$2 sm:$0xff] %v5166
  %v6316 = vld.sshfl [vmem:[#allocation1] sm:$0xff pattern:$0x75316420]
  %v6317 = vld.sshfl [vmem:[#allocation1 + $0x8] sm:$0xff pattern:$0x75316420]
  %v6319 = vsel %vm494, %v6317, 0
  %v6322 = vsel %vm494, %v5256, 0
  %v6325 = vsel %vm494, %v5258, 0
  %6327 = vmatpush.xpose.msra.mxu0 0.0
  %6328 = vmatpush.xpose.msra.mxu0 0.0
  %6329 = vmatpush.xpose.msra.mxu0 0.0
  %6330 = vmatpush.xpose.msra.mxu0 0.0
  %6331 = vmatpush.xpose.msra.mxu0 0.0
  %6332 = vmatpush.xpose.msra.mxu0 0.0
  %6333 = vmatpush.xpose.msra.mxu0 0.0
  %6334 = vmatpush.xpose.msra.mxu0 0.0
  %6335 = vmatpush.xpose.msra.mxu0 0.0
  %6336 = vmatpush.xpose.msra.mxu0 0.0
  %6337 = vmatpush.xpose.msra.mxu0 0.0
  %6338 = vmatpush.xpose.msra.mxu0 0.0
  %6339 = vmatpush.xpose.msra.mxu0 0.0
  %6340 = vmatpush.xpose.msra.mxu0 0.0
  %6341 = vmatpush.xpose.msra.mxu0 %v5257
  %6342 = vmatpush.xpose.msra.mxu0 %v5255
  %6343 = vmatmul.f32.gmra.mxu0 %v6316
  %v6344 = vpop.f32.mrf.mxu0
  %v6345 = vadd.f32 0.0, %v6344
  %6346 = vdwg.mxu0
  %6347 = vmatpush.xpose.msra.mxu0 0.0
  %6348 = vmatpush.xpose.msra.mxu0 0.0
  %6349 = vmatpush.xpose.msra.mxu0 0.0
  %6350 = vmatpush.xpose.msra.mxu0 0.0
  %6351 = vmatpush.xpose.msra.mxu0 0.0
  %6352 = vmatpush.xpose.msra.mxu0 0.0
  %6353 = vmatpush.xpose.msra.mxu0 0.0
  %6354 = vmatpush.xpose.msra.mxu0 0.0
  %6355 = vmatpush.xpose.msra.mxu0 0.0
  %6356 = vmatpush.xpose.msra.mxu0 0.0
  %6357 = vmatpush.xpose.msra.mxu0 0.0
  %6358 = vmatpush.xpose.msra.mxu0 0.0
  %6359 = vmatpush.xpose.msra.mxu0 0.0
  %6360 = vmatpush.xpose.msra.mxu0 0.0
  %6361 = vmatpush.xpose.msra.mxu0 %v6325
  %6362 = vmatpush.xpose.msra.mxu0 %v6322
  %6363 = vmatmul.f32.gmra.mxu0 %v6319
  %v6364 = vpop.f32.mrf.mxu0
  %v6365 = vadd.f32 %v6345, %v6364
  %6366 = vdwg.mxu0
  %6368 = vst [vmem:[#allocation1] ss:$2 sm:$0xff] %v5167
  %v6369 = vld.sshfl [vmem:[#allocation1] sm:$0xff pattern:$0x75316420]
  %v6370 = vld.sshfl [vmem:[#allocation1 + $0x8] sm:$0xff pattern:$0x75316420]
  %v6372 = vsel %vm494, %v6370, 0
  %v6375 = vsel %vm494, %v5260, 0
  %v6378 = vsel %vm494, %v5262, 0
  %6380 = vmatpush.xpose.msra.mxu0 0.0
  %6381 = vmatpush.xpose.msra.mxu0 0.0
  %6382 = vmatpush.xpose.msra.mxu0 0.0
  %6383 = vmatpush.xpose.msra.mxu0 0.0
  %6384 = vmatpush.xpose.msra.mxu0 0.0
  %6385 = vmatpush.xpose.msra.mxu0 0.0
  %6386 = vmatpush.xpose.msra.mxu0 0.0
  %6387 = vmatpush.xpose.msra.mxu0 0.0
  %6388 = vmatpush.xpose.msra.mxu0 0.0
  %6389 = vmatpush.xpose.msra.mxu0 0.0
  %6390 = vmatpush.xpose.msra.mxu0 0.0
  %6391 = vmatpush.xpose.msra.mxu0 0.0
  %6392 = vmatpush.xpose.msra.mxu0 0.0
  %6393 = vmatpush.xpose.msra.mxu0 0.0
  %6394 = vmatpush.xpose.msra.mxu0 %v5261
  %6395 = vmatpush.xpose.msra.mxu0 %v5259
  %6396 = vmatmul.f32.gmra.mxu0 %v6369
  %v6397 = vpop.f32.mrf.mxu0
  %v6398 = vadd.f32 0.0, %v6397
  %6399 = vdwg.mxu0
  %6400 = vmatpush.xpose.msra.mxu0 0.0
  %6401 = vmatpush.xpose.msra.mxu0 0.0
  %6402 = vmatpush.xpose.msra.mxu0 0.0
  %6403 = vmatpush.xpose.msra.mxu0 0.0
  %6404 = vmatpush.xpose.msra.mxu0 0.0
  %6405 = vmatpush.xpose.msra.mxu0 0.0
  %6406 = vmatpush.xpose.msra.mxu0 0.0
  %6407 = vmatpush.xpose.msra.mxu0 0.0
  %6408 = vmatpush.xpose.msra.mxu0 0.0
  %6409 = vmatpush.xpose.msra.mxu0 0.0
  %6410 = vmatpush.xpose.msra.mxu0 0.0
  %6411 = vmatpush.xpose.msra.mxu0 0.0
  %6412 = vmatpush.xpose.msra.mxu0 0.0
  %6413 = vmatpush.xpose.msra.mxu0 0.0
  %6414 = vmatpush.xpose.msra.mxu0 %v6378
  %6415 = vmatpush.xpose.msra.mxu0 %v6375
  %6416 = vmatmul.f32.gmra.mxu0 %v6372
  %v6417 = vpop.f32.mrf.mxu0
  %v6418 = vadd.f32 %v6398, %v6417
  %6419 = vdwg.mxu0
  %6421 = vst [vmem:[#allocation1] ss:$2 sm:$0xff] %v5168
  %v6422 = vld.sshfl [vmem:[#allocation1] sm:$0xff pattern:$0x75316420]
  %v6423 = vld.sshfl [vmem:[#allocation1 + $0x8] sm:$0xff pattern:$0x75316420]
  %v6425 = vsel %vm494, %v6423, 0
  %v6428 = vsel %vm494, %v5264, 0
  %v6431 = vsel %vm494, %v5266, 0
  %6433 = vmatpush.xpose.msra.mxu0 0.0
  %6434 = vmatpush.xpose.msra.mxu0 0.0
  %6435 = vmatpush.xpose.msra.mxu0 0.0
  %6436 = vmatpush.xpose.msra.mxu0 0.0
  %6437 = vmatpush.xpose.msra.mxu0 0.0
  %6438 = vmatpush.xpose.msra.mxu0 0.0
  %6439 = vmatpush.xpose.msra.mxu0 0.0
  %6440 = vmatpush.xpose.msra.mxu0 0.0
  %6441 = vmatpush.xpose.msra.mxu0 0.0
  %6442 = vmatpush.xpose.msra.mxu0 0.0
  %6443 = vmatpush.xpose.msra.mxu0 0.0
  %6444 = vmatpush.xpose.msra.mxu0 0.0
  %6445 = vmatpush.xpose.msra.mxu0 0.0
  %6446 = vmatpush.xpose.msra.mxu0 0.0
  %6447 = vmatpush.xpose.msra.mxu0 %v5265
  %6448 = vmatpush.xpose.msra.mxu0 %v5263
  %6449 = vmatmul.f32.gmra.mxu0 %v6422
  %v6450 = vpop.f32.mrf.mxu0
  %v6451 = vadd.f32 0.0, %v6450
  %6452 = vdwg.mxu0
  %6453 = vmatpush.xpose.msra.mxu0 0.0
  %6454 = vmatpush.xpose.msra.mxu0 0.0
  %6455 = vmatpush.xpose.msra.mxu0 0.0
  %6456 = vmatpush.xpose.msra.mxu0 0.0
  %6457 = vmatpush.xpose.msra.mxu0 0.0
  %6458 = vmatpush.xpose.msra.mxu0 0.0
  %6459 = vmatpush.xpose.msra.mxu0 0.0
  %6460 = vmatpush.xpose.msra.mxu0 0.0
  %6461 = vmatpush.xpose.msra.mxu0 0.0
  %6462 = vmatpush.xpose.msra.mxu0 0.0
  %6463 = vmatpush.xpose.msra.mxu0 0.0
  %6464 = vmatpush.xpose.msra.mxu0 0.0
  %6465 = vmatpush.xpose.msra.mxu0 0.0
  %6466 = vmatpush.xpose.msra.mxu0 0.0
  %6467 = vmatpush.xpose.msra.mxu0 %v6431
  %6468 = vmatpush.xpose.msra.mxu0 %v6428
  %6469 = vmatmul.f32.gmra.mxu0 %v6425
  %v6470 = vpop.f32.mrf.mxu0
  %v6471 = vadd.f32 %v6451, %v6470
  %6472 = vdwg.mxu0
  %6474 = vst [vmem:[#allocation1] ss:$2 sm:$0xff] %v5169
  %v6475 = vld.sshfl [vmem:[#allocation1] sm:$0xff pattern:$0x75316420]
  %v6476 = vld.sshfl [vmem:[#allocation1 + $0x8] sm:$0xff pattern:$0x75316420]
  %v6478 = vsel %vm494, %v6476, 0
  %v6481 = vsel %vm494, %v5268, 0
  %v6484 = vsel %vm494, %v5270, 0
  %6486 = vmatpush.xpose.msra.mxu0 0.0
  %6487 = vmatpush.xpose.msra.mxu0 0.0
  %6488 = vmatpush.xpose.msra.mxu0 0.0
  %6489 = vmatpush.xpose.msra.mxu0 0.0
  %6490 = vmatpush.xpose.msra.mxu0 0.0
  %6491 = vmatpush.xpose.msra.mxu0 0.0
  %6492 = vmatpush.xpose.msra.mxu0 0.0
  %6493 = vmatpush.xpose.msra.mxu0 0.0
  %6494 = vmatpush.xpose.msra.mxu0 0.0
  %6495 = vmatpush.xpose.msra.mxu0 0.0
  %6496 = vmatpush.xpose.msra.mxu0 0.0
  %6497 = vmatpush.xpose.msra.mxu0 0.0
  %6498 = vmatpush.xpose.msra.mxu0 0.0
  %6499 = vmatpush.xpose.msra.mxu0 0.0
  %6500 = vmatpush.xpose.msra.mxu0 %v5269
  %6501 = vmatpush.xpose.msra.mxu0 %v5267
  %6502 = vmatmul.f32.gmra.mxu0 %v6475
  %v6503 = vpop.f32.mrf.mxu0
  %v6504 = vadd.f32 0.0, %v6503
  %6505 = vdwg.mxu0
  %6506 = vmatpush.xpose.msra.mxu0 0.0
  %6507 = vmatpush.xpose.msra.mxu0 0.0
  %6508 = vmatpush.xpose.msra.mxu0 0.0
  %6509 = vmatpush.xpose.msra.mxu0 0.0
  %6510 = vmatpush.xpose.msra.mxu0 0.0
  %6511 = vmatpush.xpose.msra.mxu0 0.0
  %6512 = vmatpush.xpose.msra.mxu0 0.0
  %6513 = vmatpush.xpose.msra.mxu0 0.0
  %6514 = vmatpush.xpose.msra.mxu0 0.0
  %6515 = vmatpush.xpose.msra.mxu0 0.0
  %6516 = vmatpush.xpose.msra.mxu0 0.0
  %6517 = vmatpush.xpose.msra.mxu0 0.0
  %6518 = vmatpush.xpose.msra.mxu0 0.0
  %6519 = vmatpush.xpose.msra.mxu0 0.0
  %6520 = vmatpush.xpose.msra.mxu0 %v6484
  %6521 = vmatpush.xpose.msra.mxu0 %v6481
  %6522 = vmatmul.f32.gmra.mxu0 %v6478
  %v6523 = vpop.f32.mrf.mxu0
  %v6524 = vadd.f32 %v6504, %v6523
  %6525 = vdwg.mxu0
  %6527 = vst [vmem:[#allocation1] ss:$2 sm:$0xff] %v5170
  %v6528 = vld.sshfl [vmem:[#allocation1] sm:$0xff pattern:$0x75316420]
  %v6529 = vld.sshfl [vmem:[#allocation1 + $0x8] sm:$0xff pattern:$0x75316420]
  %v6531 = vsel %vm494, %v6529, 0
  %v6534 = vsel %vm494, %v5272, 0
  %v6537 = vsel %vm494, %v5274, 0
  %6539 = vmatpush.xpose.msra.mxu0 0.0
  %6540 = vmatpush.xpose.msra.mxu0 0.0
  %6541 = vmatpush.xpose.msra.mxu0 0.0
  %6542 = vmatpush.xpose.msra.mxu0 0.0
  %6543 = vmatpush.xpose.msra.mxu0 0.0
  %6544 = vmatpush.xpose.msra.mxu0 0.0
  %6545 = vmatpush.xpose.msra.mxu0 0.0
  %6546 = vmatpush.xpose.msra.mxu0 0.0
  %6547 = vmatpush.xpose.msra.mxu0 0.0
  %6548 = vmatpush.xpose.msra.mxu0 0.0
  %6549 = vmatpush.xpose.msra.mxu0 0.0
  %6550 = vmatpush.xpose.msra.mxu0 0.0
  %6551 = vmatpush.xpose.msra.mxu0 0.0
  %6552 = vmatpush.xpose.msra.mxu0 0.0
  %6553 = vmatpush.xpose.msra.mxu0 %v5273
  %6554 = vmatpush.xpose.msra.mxu0 %v5271
  %6555 = vmatmul.f32.gmra.mxu0 %v6528
  %v6556 = vpop.f32.mrf.mxu0
  %v6557 = vadd.f32 0.0, %v6556
  %6558 = vdwg.mxu0
  %6559 = vmatpush.xpose.msra.mxu0 0.0
  %6560 = vmatpush.xpose.msra.mxu0 0.0
  %6561 = vmatpush.xpose.msra.mxu0 0.0
  %6562 = vmatpush.xpose.msra.mxu0 0.0
  %6563 = vmatpush.xpose.msra.mxu0 0.0
  %6564 = vmatpush.xpose.msra.mxu0 0.0
  %6565 = vmatpush.xpose.msra.mxu0 0.0
  %6566 = vmatpush.xpose.msra.mxu0 0.0
  %6567 = vmatpush.xpose.msra.mxu0 0.0
  %6568 = vmatpush.xpose.msra.mxu0 0.0
  %6569 = vmatpush.xpose.msra.mxu0 0.0
  %6570 = vmatpush.xpose.msra.mxu0 0.0
  %6571 = vmatpush.xpose.msra.mxu0 0.0
  %6572 = vmatpush.xpose.msra.mxu0 0.0
  %6573 = vmatpush.xpose.msra.mxu0 %v6537
  %6574 = vmatpush.xpose.msra.mxu0 %v6534
  %6575 = vmatmul.f32.gmra.mxu0 %v6531
  %v6576 = vpop.f32.mrf.mxu0
  %v6577 = vadd.f32 %v6557, %v6576
  %6578 = vdwg.mxu0
  %6580 = vst [vmem:[#allocation1] ss:$2 sm:$0xff] %v5171
  %v6581 = vld.sshfl [vmem:[#allocation1] sm:$0xff pattern:$0x75316420]
  %v6582 = vld.sshfl [vmem:[#allocation1 + $0x8] sm:$0xff pattern:$0x75316420]
  %v6584 = vsel %vm494, %v6582, 0
  %v6587 = vsel %vm494, %v5276, 0
  %v6590 = vsel %vm494, %v5278, 0
  %6592 = vmatpush.xpose.msra.mxu0 0.0
  %6593 = vmatpush.xpose.msra.mxu0 0.0
  %6594 = vmatpush.xpose.msra.mxu0 0.0
  %6595 = vmatpush.xpose.msra.mxu0 0.0
  %6596 = vmatpush.xpose.msra.mxu0 0.0
  %6597 = vmatpush.xpose.msra.mxu0 0.0
  %6598 = vmatpush.xpose.msra.mxu0 0.0
  %6599 = vmatpush.xpose.msra.mxu0 0.0
  %6600 = vmatpush.xpose.msra.mxu0 0.0
  %6601 = vmatpush.xpose.msra.mxu0 0.0
  %6602 = vmatpush.xpose.msra.mxu0 0.0
  %6603 = vmatpush.xpose.msra.mxu0 0.0
  %6604 = vmatpush.xpose.msra.mxu0 0.0
  %6605 = vmatpush.xpose.msra.mxu0 0.0
  %6606 = vmatpush.xpose.msra.mxu0 %v5277
  %6607 = vmatpush.xpose.msra.mxu0 %v5275
  %6608 = vmatmul.f32.gmra.mxu0 %v6581
  %v6609 = vpop.f32.mrf.mxu0
  %v6610 = vadd.f32 0.0, %v6609
  %6611 = vdwg.mxu0
  %6612 = vmatpush.xpose.msra.mxu0 0.0
  %6613 = vmatpush.xpose.msra.mxu0 0.0
  %6614 = vmatpush.xpose.msra.mxu0 0.0
  %6615 = vmatpush.xpose.msra.mxu0 0.0
  %6616 = vmatpush.xpose.msra.mxu0 0.0
  %6617 = vmatpush.xpose.msra.mxu0 0.0
  %6618 = vmatpush.xpose.msra.mxu0 0.0
  %6619 = vmatpush.xpose.msra.mxu0 0.0
  %6620 = vmatpush.xpose.msra.mxu0 0.0
  %6621 = vmatpush.xpose.msra.mxu0 0.0
  %6622 = vmatpush.xpose.msra.mxu0 0.0
  %6623 = vmatpush.xpose.msra.mxu0 0.0
  %6624 = vmatpush.xpose.msra.mxu0 0.0
  %6625 = vmatpush.xpose.msra.mxu0 0.0
  %6626 = vmatpush.xpose.msra.mxu0 %v6590
  %6627 = vmatpush.xpose.msra.mxu0 %v6587
  %6628 = vmatmul.f32.gmra.mxu0 %v6584
  %v6629 = vpop.f32.mrf.mxu0
  %v6630 = vadd.f32 %v6610, %v6629
  %6631 = vdwg.mxu0
  %6633 = vst [vmem:[#allocation1] ss:$2 sm:$0xff] %v5172
  %v6634 = vld.sshfl [vmem:[#allocation1] sm:$0xff pattern:$0x75316420]
  %v6635 = vld.sshfl [vmem:[#allocation1 + $0x8] sm:$0xff pattern:$0x75316420]
  %v6637 = vsel %vm494, %v6635, 0
  %v6640 = vsel %vm494, %v5280, 0
  %v6643 = vsel %vm494, %v5282, 0
  %6645 = vmatpush.xpose.msra.mxu0 0.0
  %6646 = vmatpush.xpose.msra.mxu0 0.0
  %6647 = vmatpush.xpose.msra.mxu0 0.0
  %6648 = vmatpush.xpose.msra.mxu0 0.0
  %6649 = vmatpush.xpose.msra.mxu0 0.0
  %6650 = vmatpush.xpose.msra.mxu0 0.0
  %6651 = vmatpush.xpose.msra.mxu0 0.0
  %6652 = vmatpush.xpose.msra.mxu0 0.0
  %6653 = vmatpush.xpose.msra.mxu0 0.0
  %6654 = vmatpush.xpose.msra.mxu0 0.0
  %6655 = vmatpush.xpose.msra.mxu0 0.0
  %6656 = vmatpush.xpose.msra.mxu0 0.0
  %6657 = vmatpush.xpose.msra.mxu0 0.0
  %6658 = vmatpush.xpose.msra.mxu0 0.0
  %6659 = vmatpush.xpose.msra.mxu0 %v5281
  %6660 = vmatpush.xpose.msra.mxu0 %v5279
  %6661 = vmatmul.f32.gmra.mxu0 %v6634
  %v6662 = vpop.f32.mrf.mxu0
  %v6663 = vadd.f32 0.0, %v6662
  %6664 = vdwg.mxu0
  %6665 = vmatpush.xpose.msra.mxu0 0.0
  %6666 = vmatpush.xpose.msra.mxu0 0.0
  %6667 = vmatpush.xpose.msra.mxu0 0.0
  %6668 = vmatpush.xpose.msra.mxu0 0.0
  %6669 = vmatpush.xpose.msra.mxu0 0.0
  %6670 = vmatpush.xpose.msra.mxu0 0.0
  %6671 = vmatpush.xpose.msra.mxu0 0.0
  %6672 = vmatpush.xpose.msra.mxu0 0.0
  %6673 = vmatpush.xpose.msra.mxu0 0.0
  %6674 = vmatpush.xpose.msra.mxu0 0.0
  %6675 = vmatpush.xpose.msra.mxu0 0.0
  %6676 = vmatpush.xpose.msra.mxu0 0.0
  %6677 = vmatpush.xpose.msra.mxu0 0.0
  %6678 = vmatpush.xpose.msra.mxu0 0.0
  %6679 = vmatpush.xpose.msra.mxu0 %v6643
  %6680 = vmatpush.xpose.msra.mxu0 %v6640
  %6681 = vmatmul.f32.gmra.mxu0 %v6637
  %v6682 = vpop.f32.mrf.mxu0
  %v6683 = vadd.f32 %v6663, %v6682
  %6684 = vdwg.mxu0
  %6686 = vst [vmem:[#allocation1] ss:$2 sm:$0xff] %v5173
  %v6687 = vld.sshfl [vmem:[#allocation1] sm:$0xff pattern:$0x75316420]
  %v6688 = vld.sshfl [vmem:[#allocation1 + $0x8] sm:$0xff pattern:$0x75316420]
  %v6690 = vsel %vm494, %v6688, 0
  %v6693 = vsel %vm494, %v5284, 0
  %v6696 = vsel %vm494, %v5286, 0
  %6698 = vmatpush.xpose.msra.mxu0 0.0
  %6699 = vmatpush.xpose.msra.mxu0 0.0
  %6700 = vmatpush.xpose.msra.mxu0 0.0
  %6701 = vmatpush.xpose.msra.mxu0 0.0
  %6702 = vmatpush.xpose.msra.mxu0 0.0
  %6703 = vmatpush.xpose.msra.mxu0 0.0
  %6704 = vmatpush.xpose.msra.mxu0 0.0
  %6705 = vmatpush.xpose.msra.mxu0 0.0
  %6706 = vmatpush.xpose.msra.mxu0 0.0
  %6707 = vmatpush.xpose.msra.mxu0 0.0
  %6708 = vmatpush.xpose.msra.mxu0 0.0
  %6709 = vmatpush.xpose.msra.mxu0 0.0
  %6710 = vmatpush.xpose.msra.mxu0 0.0
  %6711 = vmatpush.xpose.msra.mxu0 0.0
  %6712 = vmatpush.xpose.msra.mxu0 %v5285
  %6713 = vmatpush.xpose.msra.mxu0 %v5283
  %6714 = vmatmul.f32.gmra.mxu0 %v6687
  %v6715 = vpop.f32.mrf.mxu0
  %v6716 = vadd.f32 0.0, %v6715
  %6717 = vdwg.mxu0
  %6718 = vmatpush.xpose.msra.mxu0 0.0
  %6719 = vmatpush.xpose.msra.mxu0 0.0
  %6720 = vmatpush.xpose.msra.mxu0 0.0
  %6721 = vmatpush.xpose.msra.mxu0 0.0
  %6722 = vmatpush.xpose.msra.mxu0 0.0
  %6723 = vmatpush.xpose.msra.mxu0 0.0
  %6724 = vmatpush.xpose.msra.mxu0 0.0
  %6725 = vmatpush.xpose.msra.mxu0 0.0
  %6726 = vmatpush.xpose.msra.mxu0 0.0
  %6727 = vmatpush.xpose.msra.mxu0 0.0
  %6728 = vmatpush.xpose.msra.mxu0 0.0
  %6729 = vmatpush.xpose.msra.mxu0 0.0
  %6730 = vmatpush.xpose.msra.mxu0 0.0
  %6731 = vmatpush.xpose.msra.mxu0 0.0
  %6732 = vmatpush.xpose.msra.mxu0 %v6696
  %6733 = vmatpush.xpose.msra.mxu0 %v6693
  %6734 = vmatmul.f32.gmra.mxu0 %v6690
  %v6735 = vpop.f32.mrf.mxu0
  %v6736 = vadd.f32 %v6716, %v6735
  %6737 = vdwg.mxu0
  %6739 = vst [vmem:[#allocation1] ss:$2 sm:$0xff] %v5174
  %v6740 = vld.sshfl [vmem:[#allocation1] sm:$0xff pattern:$0x75316420]
  %v6741 = vld.sshfl [vmem:[#allocation1 + $0x8] sm:$0xff pattern:$0x75316420]
  %v6743 = vsel %vm494, %v6741, 0
  %v6746 = vsel %vm494, %v5288, 0
  %v6749 = vsel %vm494, %v5290, 0
  %6751 = vmatpush.xpose.msra.mxu0 0.0
  %6752 = vmatpush.xpose.msra.mxu0 0.0
  %6753 = vmatpush.xpose.msra.mxu0 0.0
  %6754 = vmatpush.xpose.msra.mxu0 0.0
  %6755 = vmatpush.xpose.msra.mxu0 0.0
  %6756 = vmatpush.xpose.msra.mxu0 0.0
  %6757 = vmatpush.xpose.msra.mxu0 0.0
  %6758 = vmatpush.xpose.msra.mxu0 0.0
  %6759 = vmatpush.xpose.msra.mxu0 0.0
  %6760 = vmatpush.xpose.msra.mxu0 0.0
  %6761 = vmatpush.xpose.msra.mxu0 0.0
  %6762 = vmatpush.xpose.msra.mxu0 0.0
  %6763 = vmatpush.xpose.msra.mxu0 0.0
  %6764 = vmatpush.xpose.msra.mxu0 0.0
  %6765 = vmatpush.xpose.msra.mxu0 %v5289
  %6766 = vmatpush.xpose.msra.mxu0 %v5287
  %6767 = vmatmul.f32.gmra.mxu0 %v6740
  %v6768 = vpop.f32.mrf.mxu0
  %v6769 = vadd.f32 0.0, %v6768
  %6770 = vdwg.mxu0
  %6771 = vmatpush.xpose.msra.mxu0 0.0
  %6772 = vmatpush.xpose.msra.mxu0 0.0
  %6773 = vmatpush.xpose.msra.mxu0 0.0
  %6774 = vmatpush.xpose.msra.mxu0 0.0
  %6775 = vmatpush.xpose.msra.mxu0 0.0
  %6776 = vmatpush.xpose.msra.mxu0 0.0
  %6777 = vmatpush.xpose.msra.mxu0 0.0
  %6778 = vmatpush.xpose.msra.mxu0 0.0
  %6779 = vmatpush.xpose.msra.mxu0 0.0
  %6780 = vmatpush.xpose.msra.mxu0 0.0
  %6781 = vmatpush.xpose.msra.mxu0 0.0
  %6782 = vmatpush.xpose.msra.mxu0 0.0
  %6783 = vmatpush.xpose.msra.mxu0 0.0
  %6784 = vmatpush.xpose.msra.mxu0 0.0
  %6785 = vmatpush.xpose.msra.mxu0 %v6749
  %6786 = vmatpush.xpose.msra.mxu0 %v6746
  %6787 = vmatmul.f32.gmra.mxu0 %v6743
  %v6788 = vpop.f32.mrf.mxu0
  %v6789 = vadd.f32 %v6769, %v6788
  %6790 = vdwg.mxu0
  %6792 = vst [vmem:[#allocation1] ss:$2 sm:$0xff] %v5175
  %v6793 = vld.sshfl [vmem:[#allocation1] sm:$0xff pattern:$0x75316420]
  %v6794 = vld.sshfl [vmem:[#allocation1 + $0x8] sm:$0xff pattern:$0x75316420]
  %v6796 = vsel %vm494, %v6794, 0
  %v6799 = vsel %vm494, %v5292, 0
  %v6802 = vsel %vm494, %v5294, 0
  %6804 = vmatpush.xpose.msra.mxu0 0.0
  %6805 = vmatpush.xpose.msra.mxu0 0.0
  %6806 = vmatpush.xpose.msra.mxu0 0.0
  %6807 = vmatpush.xpose.msra.mxu0 0.0
  %6808 = vmatpush.xpose.msra.mxu0 0.0
  %6809 = vmatpush.xpose.msra.mxu0 0.0
  %6810 = vmatpush.xpose.msra.mxu0 0.0
  %6811 = vmatpush.xpose.msra.mxu0 0.0
  %6812 = vmatpush.xpose.msra.mxu0 0.0
  %6813 = vmatpush.xpose.msra.mxu0 0.0
  %6814 = vmatpush.xpose.msra.mxu0 0.0
  %6815 = vmatpush.xpose.msra.mxu0 0.0
  %6816 = vmatpush.xpose.msra.mxu0 0.0
  %6817 = vmatpush.xpose.msra.mxu0 0.0
  %6818 = vmatpush.xpose.msra.mxu0 %v5293
  %6819 = vmatpush.xpose.msra.mxu0 %v5291
  %6820 = vmatmul.f32.gmra.mxu0 %v6793
  %v6821 = vpop.f32.mrf.mxu0
  %v6822 = vadd.f32 0.0, %v6821
  %6823 = vdwg.mxu0
  %6824 = vmatpush.xpose.msra.mxu0 0.0
  %6825 = vmatpush.xpose.msra.mxu0 0.0
  %6826 = vmatpush.xpose.msra.mxu0 0.0
  %6827 = vmatpush.xpose.msra.mxu0 0.0
  %6828 = vmatpush.xpose.msra.mxu0 0.0
  %6829 = vmatpush.xpose.msra.mxu0 0.0
  %6830 = vmatpush.xpose.msra.mxu0 0.0
  %6831 = vmatpush.xpose.msra.mxu0 0.0
  %6832 = vmatpush.xpose.msra.mxu0 0.0
  %6833 = vmatpush.xpose.msra.mxu0 0.0
  %6834 = vmatpush.xpose.msra.mxu0 0.0
  %6835 = vmatpush.xpose.msra.mxu0 0.0
  %6836 = vmatpush.xpose.msra.mxu0 0.0
  %6837 = vmatpush.xpose.msra.mxu0 0.0
  %6838 = vmatpush.xpose.msra.mxu0 %v6802
  %6839 = vmatpush.xpose.msra.mxu0 %v6799
  %6840 = vmatmul.f32.gmra.mxu0 %v6796
  %v6841 = vpop.f32.mrf.mxu0
  %v6842 = vadd.f32 %v6822, %v6841
  %6843 = vdwg.mxu0
  %6845 = vst [vmem:[#allocation1] ss:$2 sm:$0xff] %v5176
  %v6846 = vld.sshfl [vmem:[#allocation1] sm:$0xff pattern:$0x75316420]
  %v6847 = vld.sshfl [vmem:[#allocation1 + $0x8] sm:$0xff pattern:$0x75316420]
  %v6849 = vsel %vm494, %v6847, 0
  %v6852 = vsel %vm494, %v5296, 0
  %v6855 = vsel %vm494, %v5298, 0
  %6857 = vmatpush.xpose.msra.mxu0 0.0
  %6858 = vmatpush.xpose.msra.mxu0 0.0
  %6859 = vmatpush.xpose.msra.mxu0 0.0
  %6860 = vmatpush.xpose.msra.mxu0 0.0
  %6861 = vmatpush.xpose.msra.mxu0 0.0
  %6862 = vmatpush.xpose.msra.mxu0 0.0
  %6863 = vmatpush.xpose.msra.mxu0 0.0
  %6864 = vmatpush.xpose.msra.mxu0 0.0
  %6865 = vmatpush.xpose.msra.mxu0 0.0
  %6866 = vmatpush.xpose.msra.mxu0 0.0
  %6867 = vmatpush.xpose.msra.mxu0 0.0
  %6868 = vmatpush.xpose.msra.mxu0 0.0
  %6869 = vmatpush.xpose.msra.mxu0 0.0
  %6870 = vmatpush.xpose.msra.mxu0 0.0
  %6871 = vmatpush.xpose.msra.mxu0 %v5297
  %6872 = vmatpush.xpose.msra.mxu0 %v5295
  %6873 = vmatmul.f32.gmra.mxu0 %v6846
  %v6874 = vpop.f32.mrf.mxu0
  %v6875 = vadd.f32 0.0, %v6874
  %6876 = vdwg.mxu0
  %6877 = vmatpush.xpose.msra.mxu0 0.0
  %6878 = vmatpush.xpose.msra.mxu0 0.0
  %6879 = vmatpush.xpose.msra.mxu0 0.0
  %6880 = vmatpush.xpose.msra.mxu0 0.0
  %6881 = vmatpush.xpose.msra.mxu0 0.0
  %6882 = vmatpush.xpose.msra.mxu0 0.0
  %6883 = vmatpush.xpose.msra.mxu0 0.0
  %6884 = vmatpush.xpose.msra.mxu0 0.0
  %6885 = vmatpush.xpose.msra.mxu0 0.0
  %6886 = vmatpush.xpose.msra.mxu0 0.0
  %6887 = vmatpush.xpose.msra.mxu0 0.0
  %6888 = vmatpush.xpose.msra.mxu0 0.0
  %6889 = vmatpush.xpose.msra.mxu0 0.0
  %6890 = vmatpush.xpose.msra.mxu0 0.0
  %6891 = vmatpush.xpose.msra.mxu0 %v6855
  %6892 = vmatpush.xpose.msra.mxu0 %v6852
  %6893 = vmatmul.f32.gmra.mxu0 %v6849
  %v6894 = vpop.f32.mrf.mxu0
  %v6895 = vadd.f32 %v6875, %v6894
  %6896 = vdwg.mxu0
  %6898 = vst [vmem:[#allocation1] ss:$2 sm:$0xff] %v5177
  %v6899 = vld.sshfl [vmem:[#allocation1] sm:$0xff pattern:$0x75316420]
  %v6900 = vld.sshfl [vmem:[#allocation1 + $0x8] sm:$0xff pattern:$0x75316420]
  %v6902 = vsel %vm494, %v6900, 0
  %v6905 = vsel %vm494, %v5300, 0
  %v6908 = vsel %vm494, %v5302, 0
  %6910 = vmatpush.xpose.msra.mxu0 0.0
  %6911 = vmatpush.xpose.msra.mxu0 0.0
  %6912 = vmatpush.xpose.msra.mxu0 0.0
  %6913 = vmatpush.xpose.msra.mxu0 0.0
  %6914 = vmatpush.xpose.msra.mxu0 0.0
  %6915 = vmatpush.xpose.msra.mxu0 0.0
  %6916 = vmatpush.xpose.msra.mxu0 0.0
  %6917 = vmatpush.xpose.msra.mxu0 0.0
  %6918 = vmatpush.xpose.msra.mxu0 0.0
  %6919 = vmatpush.xpose.msra.mxu0 0.0
  %6920 = vmatpush.xpose.msra.mxu0 0.0
  %6921 = vmatpush.xpose.msra.mxu0 0.0
  %6922 = vmatpush.xpose.msra.mxu0 0.0
  %6923 = vmatpush.xpose.msra.mxu0 0.0
  %6924 = vmatpush.xpose.msra.mxu0 %v5301
  %6925 = vmatpush.xpose.msra.mxu0 %v5299
  %6926 = vmatmul.f32.gmra.mxu0 %v6899
  %v6927 = vpop.f32.mrf.mxu0
  %v6928 = vadd.f32 0.0, %v6927
  %6929 = vdwg.mxu0
  %6930 = vmatpush.xpose.msra.mxu0 0.0
  %6931 = vmatpush.xpose.msra.mxu0 0.0
  %6932 = vmatpush.xpose.msra.mxu0 0.0
  %6933 = vmatpush.xpose.msra.mxu0 0.0
  %6934 = vmatpush.xpose.msra.mxu0 0.0
  %6935 = vmatpush.xpose.msra.mxu0 0.0
  %6936 = vmatpush.xpose.msra.mxu0 0.0
  %6937 = vmatpush.xpose.msra.mxu0 0.0
  %6938 = vmatpush.xpose.msra.mxu0 0.0
  %6939 = vmatpush.xpose.msra.mxu0 0.0
  %6940 = vmatpush.xpose.msra.mxu0 0.0
  %6941 = vmatpush.xpose.msra.mxu0 0.0
  %6942 = vmatpush.xpose.msra.mxu0 0.0
  %6943 = vmatpush.xpose.msra.mxu0 0.0
  %6944 = vmatpush.xpose.msra.mxu0 %v6908
  %6945 = vmatpush.xpose.msra.mxu0 %v6905
  %6946 = vmatmul.f32.gmra.mxu0 %v6902
  %v6947 = vpop.f32.mrf.mxu0
  %v6948 = vadd.f32 %v6928, %v6947
  %6949 = vdwg.mxu0
  %6951 = vst [vmem:[#allocation1] ss:$2 sm:$0xff] %v5178
  %v6952 = vld.sshfl [vmem:[#allocation1] sm:$0xff pattern:$0x75316420]
  %v6953 = vld.sshfl [vmem:[#allocation1 + $0x8] sm:$0xff pattern:$0x75316420]
  %v6955 = vsel %vm494, %v6953, 0
  %v6958 = vsel %vm494, %v5304, 0
  %v6961 = vsel %vm494, %v5306, 0
  %6963 = vmatpush.xpose.msra.mxu0 0.0
  %6964 = vmatpush.xpose.msra.mxu0 0.0
  %6965 = vmatpush.xpose.msra.mxu0 0.0
  %6966 = vmatpush.xpose.msra.mxu0 0.0
  %6967 = vmatpush.xpose.msra.mxu0 0.0
  %6968 = vmatpush.xpose.msra.mxu0 0.0
  %6969 = vmatpush.xpose.msra.mxu0 0.0
  %6970 = vmatpush.xpose.msra.mxu0 0.0
  %6971 = vmatpush.xpose.msra.mxu0 0.0
  %6972 = vmatpush.xpose.msra.mxu0 0.0
  %6973 = vmatpush.xpose.msra.mxu0 0.0
  %6974 = vmatpush.xpose.msra.mxu0 0.0
  %6975 = vmatpush.xpose.msra.mxu0 0.0
  %6976 = vmatpush.xpose.msra.mxu0 0.0
  %6977 = vmatpush.xpose.msra.mxu0 %v5305
  %6978 = vmatpush.xpose.msra.mxu0 %v5303
  %6979 = vmatmul.f32.gmra.mxu0 %v6952
  %v6980 = vpop.f32.mrf.mxu0
  %v6981 = vadd.f32 0.0, %v6980
  %6982 = vdwg.mxu0
  %6983 = vmatpush.xpose.msra.mxu0 0.0
  %6984 = vmatpush.xpose.msra.mxu0 0.0
  %6985 = vmatpush.xpose.msra.mxu0 0.0
  %6986 = vmatpush.xpose.msra.mxu0 0.0
  %6987 = vmatpush.xpose.msra.mxu0 0.0
  %6988 = vmatpush.xpose.msra.mxu0 0.0
  %6989 = vmatpush.xpose.msra.mxu0 0.0
  %6990 = vmatpush.xpose.msra.mxu0 0.0
  %6991 = vmatpush.xpose.msra.mxu0 0.0
  %6992 = vmatpush.xpose.msra.mxu0 0.0
  %6993 = vmatpush.xpose.msra.mxu0 0.0
  %6994 = vmatpush.xpose.msra.mxu0 0.0
  %6995 = vmatpush.xpose.msra.mxu0 0.0
  %6996 = vmatpush.xpose.msra.mxu0 0.0
  %6997 = vmatpush.xpose.msra.mxu0 %v6961
  %6998 = vmatpush.xpose.msra.mxu0 %v6958
  %6999 = vmatmul.f32.gmra.mxu0 %v6955
  %v7000 = vpop.f32.mrf.mxu0
  %v7001 = vadd.f32 %v6981, %v7000
  %7002 = vdwg.mxu0
  %v7003 = vadd.f32 %v5115, %v5358
  %v7004 = vadd.f32 %v5116, %v5411
  %v7005 = vadd.f32 %v5117, %v5464
  %v7006 = vadd.f32 %v5118, %v5517
  %v7007 = vadd.f32 %v5119, %v5570
  %v7008 = vadd.f32 %v5120, %v5623
  %v7009 = vadd.f32 %v5121, %v5676
  %v7010 = vadd.f32 %v5122, %v5729
  %v7011 = vadd.f32 %v5123, %v5782
  %v7012 = vadd.f32 %v5124, %v5835
  %v7013 = vadd.f32 %v5125, %v5888
  %v7014 = vadd.f32 %v5126, %v5941
  %v7015 = vadd.f32 %v5127, %v5994
  %v7016 = vadd.f32 %v5128, %v6047
  %v7017 = vadd.f32 %v5129, %v6100
  %v7018 = vadd.f32 %v5130, %v6153
  %v7019 = vadd.f32 %v5131, %v6206
  %v7020 = vadd.f32 %v5132, %v6259
  %v7021 = vadd.f32 %v5133, %v6312
  %v7022 = vadd.f32 %v5134, %v6365
  %v7023 = vadd.f32 %v5135, %v6418
  %v7024 = vadd.f32 %v5136, %v6471
  %v7025 = vadd.f32 %v5137, %v6524
  %v7026 = vadd.f32 %v5138, %v6577
  %v7027 = vadd.f32 %v5139, %v6630
  %v7028 = vadd.f32 %v5140, %v6683
  %v7029 = vadd.f32 %v5141, %v6736
  %v7030 = vadd.f32 %v5142, %v6789
  %v7031 = vadd.f32 %v5143, %v6842
  %v7032 = vadd.f32 %v5144, %v6895
  %v7033 = vadd.f32 %v5145, %v6948
  %v7034 = vadd.f32 %v5146, %v7001
  %vm7035 = vcmask 124928
  %7036 = vst.msk [vmem:[%s5] sm:$0x7] %vm7035, %v7003
  %7037 = vst.msk [vmem:[%s5 + $0x4] sm:$0x7] %vm7035, %v7004
  %7038 = vst.msk [vmem:[%s5 + $0x8] sm:$0x7] %vm7035, %v7005
  %7039 = vst.msk [vmem:[%s5 + $0xc] sm:$0x7] %vm7035, %v7006
  %7040 = vst.msk [vmem:[%s5 + $0x10] sm:$0x7] %vm7035, %v7007
  %7041 = vst.msk [vmem:[%s5 + $0x14] sm:$0x7] %vm7035, %v7008
  %7042 = vst.msk [vmem:[%s5 + $0x18] sm:$0x7] %vm7035, %v7009
  %7043 = vst.msk [vmem:[%s5 + $0x1c] sm:$0x7] %vm7035, %v7010
  %7044 = vst.msk [vmem:[%s5 + $0x20] sm:$0x7] %vm7035, %v7011
  %7045 = vst.msk [vmem:[%s5 + $0x24] sm:$0x7] %vm7035, %v7012
  %7046 = vst.msk [vmem:[%s5 + $0x28] sm:$0x7] %vm7035, %v7013
  %7047 = vst.msk [vmem:[%s5 + $0x2c] sm:$0x7] %vm7035, %v7014
  %7048 = vst.msk [vmem:[%s5 + $0x30] sm:$0x7] %vm7035, %v7015
  %7049 = vst.msk [vmem:[%s5 + $0x34] sm:$0x7] %vm7035, %v7016
  %7050 = vst.msk [vmem:[%s5 + $0x38] sm:$0x7] %vm7035, %v7017
  %7051 = vst.msk [vmem:[%s5 + $0x3c] sm:$0x7] %vm7035, %v7018
  %7052 = vst.msk [vmem:[%s5 + $0x40] sm:$0x7] %vm7035, %v7019
  %7053 = vst.msk [vmem:[%s5 + $0x44] sm:$0x7] %vm7035, %v7020
  %7054 = vst.msk [vmem:[%s5 + $0x48] sm:$0x7] %vm7035, %v7021
  %7055 = vst.msk [vmem:[%s5 + $0x4c] sm:$0x7] %vm7035, %v7022
  %7056 = vst.msk [vmem:[%s5 + $0x50] sm:$0x7] %vm7035, %v7023
  %7057 = vst.msk [vmem:[%s5 + $0x54] sm:$0x7] %vm7035, %v7024
  %7058 = vst.msk [vmem:[%s5 + $0x58] sm:$0x7] %vm7035, %v7025
  %7059 = vst.msk [vmem:[%s5 + $0x5c] sm:$0x7] %vm7035, %v7026
  %7060 = vst.msk [vmem:[%s5 + $0x60] sm:$0x7] %vm7035, %v7027
  %7061 = vst.msk [vmem:[%s5 + $0x64] sm:$0x7] %vm7035, %v7028
  %7062 = vst.msk [vmem:[%s5 + $0x68] sm:$0x7] %vm7035, %v7029
  %7063 = vst.msk [vmem:[%s5 + $0x6c] sm:$0x7] %vm7035, %v7030
  %7064 = vst.msk [vmem:[%s5 + $0x70] sm:$0x7] %vm7035, %v7031
  %7065 = vst.msk [vmem:[%s5 + $0x74] sm:$0x7] %vm7035, %v7032
  %7066 = vst.msk [vmem:[%s5 + $0x78] sm:$0x7] %vm7035, %v7033
  %7067 = vst.msk [vmem:[%s5 + $0x7c] sm:$0x7] %vm7035, %v7034
  // Predicated region
  $region22: #{model_forward.1} parent=0 // pred_check
    _
  $region23: #{model_forward.1} parent=0 // pred_check_branch
    %7069 = sbr.rel (0) target = $region25
  $region24: #{model_forward.1} parent=0 // pred_region
    _
  $region25: #{model_forward.1} parent=0 // pred_fallthru
    _
  // Predicated region
  $region26: #{model_forward.1} parent=0 // pred_check
    _
  $region27: #{model_forward.1} parent=0 // pred_check_branch
    %7071 = sbr.rel (0) target = $region29
  $region28: #{model_forward.1} parent=0 // pred_region
    _
  $region29: #{model_forward.1} parent=0 // pred_fallthru
    _

</llo_original>
